<compile_context>
chip_gen: v6e
topology: v6e:2x2x1
jax: 0.10.0
libtpu: 0.0.40
codegen_flags: <defaults>
</compile_context>

<pallas_src>
import functools
import math

import jax
import jax.numpy as jnp
from jax.experimental import pallas as pl
from jax.experimental.pallas import tpu as pltpu

_NEG_INF = -1e9
_VMEM_LIMIT = 48 * 1024 * 1024  # <= v7x 64 MiB physical; ample on v5e/v6e (128 MiB)


# ------------------------------- helpers -------------------------------------

def _round_up(x, m):
    return (x + m - 1) // m * m


def _pick_tile(n, candidates):
    for c in candidates:
        if c <= n and n % c == 0:
            return c
    return n


def _pad2(a, rows, cols, value=0.0):
    r, c = a.shape
    if r == rows and c == cols:
        return a
    return jnp.pad(a, ((0, rows - r), (0, cols - c)), constant_values=value)


def _layernorm_rows(y, gamma, beta, real_n, n_pad, eps):
    """LayerNorm over the last dim of y (f32). Padded columns of y must be zero."""
    inv_n = 1.0 / real_n
    mean = jnp.sum(y, axis=-1, keepdims=True) * inv_n
    if n_pad == real_n:
        d = y - mean
    else:  # mask padded columns out of the variance
        col = jax.lax.broadcasted_iota(jnp.int32, y.shape, y.ndim - 1)
        d = jnp.where(col < real_n, y - mean, 0.0)
    var = jnp.sum(d * d, axis=-1, keepdims=True) * inv_n
    return (y - mean) * jax.lax.rsqrt(var + eps) * gamma + beta


# --------------------------- tiled matmul kernels -----------------------------

def _matmul_kernel(x_ref, w_ref, b_ref, o_ref, acc_ref, *,
                   activation, rhs_transposed, out_scale):
    @pl.when(pl.program_id(2) == 0)
    def _():
        acc_ref[...] = jnp.zeros_like(acc_ref)

    if rhs_transposed:  # w block is (tn, tk); contract last dims of both
        acc_ref[...] += jax.lax.dot_general(
            x_ref[...], w_ref[...], (((1,), (1,)), ((), ())),
            preferred_element_type=jnp.float32)
    else:
        acc_ref[...] += jnp.dot(x_ref[...], w_ref[...],
                                preferred_element_type=jnp.float32)

    @pl.when(pl.program_id(2) == pl.num_programs(2) - 1)
    def _():
        y = acc_ref[...] + b_ref[...]
        if activation == "relu":
            y = jnp.maximum(y, 0.0)
        if out_scale is not None:
            y = y * out_scale
        o_ref[...] = y.astype(o_ref.dtype)


def linear(x, w, b=None, *, activation=None, rhs_transposed=False,
           out_dtype=jnp.bfloat16, out_scale=None):
    """y = act(x @ W (+ b)) [* out_scale].  x:(M,K); W:(K,N), or (N,K) if rhs_transposed."""
    M, K = x.shape
    N = w.shape[0] if rhs_transposed else w.shape[1]

    Mp = _round_up(M, 8)
    Kp = _round_up(K, 128)
    Np = _round_up(N, 128)
    tm = _pick_tile(Mp, (256, 128, 64, 32, 16, 8))
    tk = _pick_tile(Kp, (512, 256, 128))
    tn = _pick_tile(Np, (512, 256, 128))

    x_p = _pad2(x, Mp, Kp)
    if rhs_transposed:
        w_p = _pad2(w, Np, Kp)
        w_spec = pl.BlockSpec((tn, tk), lambda i, j, k: (j, k))
    else:
        w_p = _pad2(w, Kp, Np)
        w_spec = pl.BlockSpec((tk, tn), lambda i, j, k: (k, j))
    b_full = (jnp.zeros((1, N), jnp.float32) if b is None
              else b.reshape(1, N).astype(jnp.float32))
    b_p = _pad2(b_full, 1, Np)

    out = pl.pallas_call(
        functools.partial(_matmul_kernel, activation=activation,
                          rhs_transposed=rhs_transposed, out_scale=out_scale),
        out_shape=jax.ShapeDtypeStruct((Mp, Np), out_dtype),
        grid=(Mp // tm, Np // tn, Kp // tk),
        in_specs=[pl.BlockSpec((tm, tk), lambda i, j, k: (i, k)),
                  w_spec,
                  pl.BlockSpec((1, tn), lambda i, j, k: (0, j))],
        out_specs=pl.BlockSpec((tm, tn), lambda i, j, k: (i, j)),
        scratch_shapes=[pltpu.VMEM((tm, tn), jnp.float32)],
        compiler_params=pltpu.CompilerParams(
            dimension_semantics=("parallel", "parallel", "arbitrary"),
            vmem_limit_bytes=_VMEM_LIMIT),
    )(x_p, w_p, b_p)
    return out[:M, :N]


def _matmul_res_ln_kernel(x_ref, w_ref, b_ref, r_ref, g_ref, bt_ref, o_ref,
                          acc_ref, *, eps, real_n, n_pad):
    @pl.when(pl.program_id(1) == 0)
    def _():
        acc_ref[...] = jnp.zeros_like(acc_ref)

    acc_ref[...] += jnp.dot(x_ref[...], w_ref[...],
                            preferred_element_type=jnp.float32)

    @pl.when(pl.program_id(1) == pl.num_programs(1) - 1)
    def _():
        y = acc_ref[...] + b_ref[...] + r_ref[...].astype(jnp.float32)
        o = _layernorm_rows(y, g_ref[...], bt_ref[...], real_n, n_pad, eps)
        o_ref[...] = o.astype(o_ref.dtype)


def linear_residual_ln(x, w, b, residual, gamma, beta, *, real_n, eps=1e-6,
                       out_dtype=jnp.bfloat16):
    """LayerNorm(x @ W (+ b) + residual) over the (real) last dim; the full N row
    lives in one tile so the LN epilogue fuses into the matmul."""
    M, K = x.shape
    N = w.shape[1]                 # already a padded, 128-aligned width
    Mp = _round_up(M, 8)
    Kp = _round_up(K, 128)
    tm = _pick_tile(Mp, (256, 128, 64, 32, 16, 8))
    tk = _pick_tile(Kp, (512, 256, 128))

    x_p = _pad2(x, Mp, Kp)
    w_p = _pad2(w, Kp, N)
    r_p = _pad2(residual, Mp, N)
    b_p = (jnp.zeros((1, N), jnp.float32) if b is None
           else b.reshape(1, N).astype(jnp.float32))
    g_p = gamma.reshape(1, N).astype(jnp.float32)
    bt_p = beta.reshape(1, N).astype(jnp.float32)

    out = pl.pallas_call(
        functools.partial(_matmul_res_ln_kernel, eps=eps, real_n=real_n, n_pad=N),
        out_shape=jax.ShapeDtypeStruct((Mp, N), out_dtype),
        grid=(Mp // tm, Kp // tk),
        in_specs=[pl.BlockSpec((tm, tk), lambda i, k: (i, k)),
                  pl.BlockSpec((tk, N), lambda i, k: (k, 0)),
                  pl.BlockSpec((1, N), lambda i, k: (0, 0)),
                  pl.BlockSpec((tm, N), lambda i, k: (i, 0)),
                  pl.BlockSpec((1, N), lambda i, k: (0, 0)),
                  pl.BlockSpec((1, N), lambda i, k: (0, 0))],
        out_specs=pl.BlockSpec((tm, N), lambda i, k: (i, 0)),
        scratch_shapes=[pltpu.VMEM((tm, N), jnp.float32)],
        compiler_params=pltpu.CompilerParams(
            dimension_semantics=("parallel", "arbitrary"),
            vmem_limit_bytes=_VMEM_LIMIT),
    )(x_p, w_p, b_p, r_p, g_p, bt_p)
    return out[:M]


# ------------------------------ add + LayerNorm -------------------------------

def _add_ln_kernel(x_ref, r_ref, g_ref, b_ref, o_ref, *, eps, real_n, n_pad):
    y = x_ref[...].astype(jnp.float32) + r_ref[...].astype(jnp.float32)
    o = _layernorm_rows(y, g_ref[...], b_ref[...], real_n, n_pad, eps)
    o_ref[...] = o.astype(o_ref.dtype)


def add_layernorm(x, r, gamma, beta, *, real_n, eps=1e-6, out_dtype=jnp.bfloat16):
    """LayerNorm_lastdim(x + r). x, r: (M, N padded); gamma, beta: (N,)."""
    M, N = x.shape
    Mp = _round_up(M, 8)
    tm = _pick_tile(Mp, (512, 256, 128, 64, 32, 16, 8))
    x_p = _pad2(x, Mp, N)
    r_p = _pad2(r, Mp, N)
    g = gamma.reshape(1, N).astype(jnp.float32)
    bt = beta.reshape(1, N).astype(jnp.float32)
    out = pl.pallas_call(
        functools.partial(_add_ln_kernel, eps=eps, real_n=real_n, n_pad=N),
        out_shape=jax.ShapeDtypeStruct((Mp, N), out_dtype),
        grid=(Mp // tm,),
        in_specs=[pl.BlockSpec((tm, N), lambda i: (i, 0)),
                  pl.BlockSpec((tm, N), lambda i: (i, 0)),
                  pl.BlockSpec((1, N), lambda i: (0, 0)),
                  pl.BlockSpec((1, N), lambda i: (0, 0))],
        out_specs=pl.BlockSpec((tm, N), lambda i: (i, 0)),
        compiler_params=pltpu.CompilerParams(
            dimension_semantics=("parallel",),
            vmem_limit_bytes=_VMEM_LIMIT),
    )(x_p, r_p, g, bt)
    return out[:M]


# --------------------------- attention (flash-style) --------------------------

def _flash_kernel(q_ref, k_ref, v_ref, kb_ref, o_ref, m_sc, l_sc, acc_sc, *,
                  num_heads, head_dim, causal, tq, ts, d_real, d_pad):
    qi = pl.program_id(1)
    si = pl.program_id(2)

    @pl.when(si == 0)
    def _():
        m_sc[...] = jnp.full(m_sc.shape, -1e30, jnp.float32)
        l_sc[...] = jnp.zeros(l_sc.shape, jnp.float32)
        acc_sc[...] = jnp.zeros(acc_sc.shape, jnp.float32)

    def update():
        kb = kb_ref[0]                                   # (1, ts) f32 key pad bias
        if causal:
            q_pos = qi * tq + jax.lax.broadcasted_iota(jnp.int32, (tq, ts), 0)
            k_pos = si * ts + jax.lax.broadcasted_iota(jnp.int32, (tq, ts), 1)
            cbias = jnp.where(q_pos >= k_pos, 0.0, _NEG_INF).astype(jnp.float32)
        for h in range(num_heads):
            c0 = h * head_dim
            qh = q_ref[0, :, c0:c0 + head_dim]            # (tq, dk) bf16 (pre-scaled)
            kh = k_ref[0, :, c0:c0 + head_dim]            # (ts, dk)
            vh = v_ref[0, :, c0:c0 + head_dim]            # (ts, dk)
            s = jax.lax.dot_general(qh, kh, (((1,), (1,)), ((), ())),
                                    preferred_element_type=jnp.float32)  # (tq, ts)
            s = s + kb
            if causal:
                s = s + cbias
            m_prev = m_sc[h]                              # (tq, 128) lane-dense stats
            m_next = jnp.maximum(m_prev, jnp.max(s, axis=-1, keepdims=True))
            alpha = jnp.exp(m_prev - m_next)              # (tq, 128)
            p = jnp.exp(s - m_next[:, :1])                # (tq, ts)
            l_sc[h] = alpha * l_sc[h] + jnp.sum(p, axis=-1, keepdims=True)
            m_sc[h] = m_next
            pv = jax.lax.dot_general(p.astype(vh.dtype), vh,
                                     (((1,), (0,)), ((), ())),
                                     preferred_element_type=jnp.float32)  # (tq, dk)
            acc_sc[:, c0:c0 + head_dim] = (alpha[:, :1] * acc_sc[:, c0:c0 + head_dim]
                                           + pv)

    if causal:
        # skip KV blocks that are entirely above the diagonal for this Q tile
        pl.when(si * ts <= qi * tq + (tq - 1))(update)
    else:
        update()

    @pl.when(si == pl.num_programs(2) - 1)
    def _():
        if d_pad > d_real:
            o_ref[0, :, d_real:] = jnp.zeros((tq, d_pad - d_real), o_ref.dtype)
        for h in range(num_heads):
            c0 = h * head_dim
            inv = pl.reciprocal(l_sc[h, :, :1], approx=True)    # (tq, 1)
            o_ref[0, :, c0:c0 + head_dim] = (
                acc_sc[:, c0:c0 + head_dim] * inv).astype(o_ref.dtype)


def flash_attention(q_arr, q_col, k_arr, k_col, v_arr, v_col, key_valid, *,
                    num_heads, head_dim, causal, d_pad,
                    q_block=256, kv_block=512, out_dtype=jnp.bfloat16):
    """Flash attention reading Q/K/V straight out of fused projection outputs.

    q_arr: (B, T, nq*d_pad); k_arr/v_arr: (B, S, nk*d_pad); *_col selects which
    d_pad-wide column block holds Q / K / V.  key_valid: (B, S) bool pad mask.
    Returns (B, T, d_pad) bf16.
    """
    B, T = q_arr.shape[0], q_arr.shape[1]
    S = k_arr.shape[1]
    d_real = num_heads * head_dim

    Tp = _round_up(T, 8)
    Sp = _round_up(S, 128)
    tq = _pick_tile(Tp, (q_block, 128, 64, 32, 16, 8))
    ts = _pick_tile(Sp, (kv_block, 256, 128))

    # per-key additive bias (B, 1, Sp): 0 = attend, -1e9 = padding key
    kb = jnp.where(key_valid, 0.0, _NEG_INF).astype(jnp.float32)
    kb = jnp.pad(kb, ((0, 0), (0, Sp - S)), constant_values=_NEG_INF)[:, None, :]

    if q_arr is k_arr:                      # fused self-attention QKV array
        if Sp != S:
            q_arr = k_arr = v_arr = jnp.pad(q_arr, ((0, 0), (0, Sp - S), (0, 0)))
    else:
        if Tp != T:
            q_arr = jnp.pad(q_arr, ((0, 0), (0, Tp - T), (0, 0)))
        if Sp != S:
            k_arr = jnp.pad(k_arr, ((0, 0), (0, Sp - S), (0, 0)))
            v_arr = jnp.pad(v_arr, ((0, 0), (0, Sp - S), (0, 0)))

    out = pl.pallas_call(
        functools.partial(_flash_kernel, num_heads=num_heads, head_dim=head_dim,
                          causal=causal, tq=tq, ts=ts, d_real=d_real, d_pad=d_pad),
        out_shape=jax.ShapeDtypeStruct((B, Tp, d_pad), out_dtype),
        grid=(B, Tp // tq, Sp // ts),
        in_specs=[
            pl.BlockSpec((1, tq, d_pad), lambda b, i, j: (b, i, q_col)),
            pl.BlockSpec((1, ts, d_pad), lambda b, i, j: (b, j, k_col)),
            pl.BlockSpec((1, ts, d_pad), lambda b, i, j: (b, j, v_col)),
            pl.BlockSpec((1, 1, ts), lambda b, i, j: (b, 0, j)),
        ],
        out_specs=pl.BlockSpec((1, tq, d_pad), lambda b, i, j: (b, i, 0)),
        scratch_shapes=[pltpu.VMEM((num_heads, tq, 128), jnp.float32),
                        pltpu.VMEM((num_heads, tq, 128), jnp.float32),
                        pltpu.VMEM((tq, d_pad), jnp.float32)],
        compiler_params=pltpu.CompilerParams(
            dimension_semantics=("parallel", "parallel", "arbitrary"),
            vmem_limit_bytes=_VMEM_LIMIT),
    )(q_arr, k_arr, v_arr, kb)
    if Tp != T:
        out = out[:, :T]
    return out


# ------------------------------ model pieces ----------------------------------

def self_attention_sublayer(p, x, key_valid, *, num_heads, d_model, causal):
    B, T, Dp = x.shape
    dk = d_model // num_heads
    xf = x.reshape(B * T, Dp)
    qkv = linear(xf, p["wqkv"]).reshape(B, T, 3 * Dp)     # Q columns pre-scaled
    ctx = flash_attention(qkv, 0, qkv, 1, qkv, 2, key_valid,
                          num_heads=num_heads, head_dim=dk,
                          causal=causal, d_pad=Dp)
    ctx = ctx.reshape(B * T, Dp)
    out = linear_residual_ln(ctx, p["wo"], None, xf, p["ln_g"], p["ln_b"],
                             real_n=d_model)
    return out.reshape(B, T, Dp)


def cross_attention_sublayer(p, x, mem, key_valid, *, num_heads, d_model):
    B, T, Dp = x.shape
    S = mem.shape[1]
    dk = d_model // num_heads
    xf = x.reshape(B * T, Dp)
    q = linear(xf, p["wq"]).reshape(B, T, Dp)             # pre-scaled
    kv = linear(mem.reshape(B * S, Dp), p["wkv"]).reshape(B, S, 2 * Dp)
    ctx = flash_attention(q, 0, kv, 0, kv, 1, key_valid,
                          num_heads=num_heads, head_dim=dk,
                          causal=False, d_pad=Dp)
    ctx = ctx.reshape(B * T, Dp)
    out = linear_residual_ln(ctx, p["wo"], None, xf, p["ln_g"], p["ln_b"],
                             real_n=d_model)
    return out.reshape(B, T, Dp)


def ffn_sublayer(p, x, *, d_model):
    B, T, Dp = x.shape
    xf = x.reshape(B * T, Dp)
    h = linear(xf, p["w1"], p["b1"], activation="relu")
    out = linear_residual_ln(h, p["w2"], p["b2"], xf, p["ln_g"], p["ln_b"],
                             real_n=d_model)
    return out.reshape(B, T, Dp)


def transformer_forward(params, src_seq, tgt_seq, *, src_pad_idx, tgt_pad_idx,
                        num_heads, d_model, vocab, scale_prj):
    B, S = src_seq.shape
    _, T = tgt_seq.shape
    emb_w = params["embedding"]     # (Vp, Dp) bf16, shared src/tgt/projection
    pe = params["pos_table"]        # (n_position, Dp) f32
    Dp = emb_w.shape[1]

    # per-key pad masks (get_pad_mask); causal part is generated in-kernel
    src_valid = src_seq != src_pad_idx      # (B, S) bool
    tgt_valid = tgt_seq != tgt_pad_idx      # (B, T) bool

    # ----- Encoder -----
    src_emb = jnp.take(emb_w, src_seq, axis=0).reshape(B * S, Dp)
    pos_s = jnp.broadcast_to(pe[:S][None], (B, S, Dp)).reshape(B * S, Dp)
    enc = add_layernorm(src_emb, pos_s, params["enc"]["ln_g"],
                        params["enc"]["ln_b"], real_n=d_model).reshape(B, S, Dp)
    for lp in params["enc"]["layers"]:
        enc = self_attention_sublayer(lp["attn"], enc, src_valid,
                                      num_heads=num_heads, d_model=d_model,
                                      causal=False)
        enc = ffn_sublayer(lp["ffn"], enc, d_model=d_model)

    # ----- Decoder -----
    tgt_emb = jnp.take(emb_w, tgt_seq, axis=0).reshape(B * T, Dp)
    pos_t = jnp.broadcast_to(pe[:T][None], (B, T, Dp)).reshape(B * T, Dp)
    dec = add_layernorm(tgt_emb, pos_t, params["dec"]["ln_g"],
                        params["dec"]["ln_b"], real_n=d_model).reshape(B, T, Dp)
    for lp in params["dec"]["layers"]:
        dec = self_attention_sublayer(lp["self_attn"], dec, tgt_valid,
                                      num_heads=num_heads, d_model=d_model,
                                      causal=True)
        dec = cross_attention_sublayer(lp["cross_attn"], dec, enc, src_valid,
                                       num_heads=num_heads, d_model=d_model)
        dec = ffn_sublayer(lp["ffn"], dec, d_model=d_model)

    # tied-embedding projection: contract against emb_w (Vp, Dp) directly
    logits = linear(dec.reshape(B * T, Dp), emb_w, rhs_transposed=True,
                    out_dtype=jnp.float32,
                    out_scale=(d_model ** -0.5) if scale_prj else None)
    return logits[:, :vocab]                                 # (B*T, vocab)


# ------------------------------ parameters ------------------------------------

def _xavier(key, shape):
    fan_in, fan_out = shape
    limit = math.sqrt(6.0 / (fan_in + fan_out))
    return jax.random.uniform(key, shape, jnp.float32, -limit, limit)


def _make_pos_table(n_position, d_hidden):
    position = jnp.arange(n_position, dtype=jnp.float32)[:, None]
    div_term = jnp.exp(jnp.arange(0, d_hidden, 2, dtype=jnp.float32)
                       * (-math.log(10000.0) / d_hidden))
    pe = jnp.zeros((n_position, d_hidden), jnp.float32)
    pe = pe.at[:, 0::2].set(jnp.sin(position * div_term))
    pe = pe.at[:, 1::2].set(jnp.cos(position * div_term))
    return pe


def init_params(key, vocab, d_model, d_ff, n_layers, n_position):
    """Raw f32 parameters with the PyTorch module's natural shapes."""
    keys = iter(jax.random.split(key, 16 * n_layers + 8))

    def ln():
        return {"g": jnp.ones((d_model,), jnp.float32),
                "b": jnp.zeros((d_model,), jnp.float32)}

    def attn():
        return {"wq": _xavier(next(keys), (d_model, d_model)),
                "wk": _xavier(next(keys), (d_model, d_model)),
                "wv": _xavier(next(keys), (d_model, d_model)),
                "wo": _xavier(next(keys), (d_model, d_model)),
                "ln": ln()}

    def ffn():
        return {"w1": _xavier(next(keys), (d_model, d_ff)),
                "b1": jnp.zeros((d_ff,), jnp.float32),
                "w2": _xavier(next(keys), (d_ff, d_model)),
                "b2": jnp.zeros((d_model,), jnp.float32),
                "ln": ln()}

    return {
        "embedding": _xavier(next(keys), (vocab, d_model)),
        "pos_table": _make_pos_table(n_position, d_model),
        "enc": {"ln": ln(),
                "layers": [{"attn": attn(), "ffn": ffn()} for _ in range(n_layers)]},
        "dec": {"ln": ln(),
                "layers": [{"self_attn": attn(), "cross_attn": attn(), "ffn": ffn()}
                           for _ in range(n_layers)]},
    }


def prepare_params(raw, *, num_heads, d_model, d_ff, vocab):
    """One-time padding to 128 multiples, QKV/KV fusion, 1/sqrt(dk) folding, bf16 cast."""
    Dp = _round_up(d_model, 128)
    Fp = _round_up(d_ff, 128)
    Vp = _round_up(vocab, 128)
    scale = 1.0 / math.sqrt(d_model // num_heads)
    bf16 = jnp.bfloat16

    def pw(w, r, c):
        return _pad2(w, r, c).astype(bf16)

    def pv(v, n):
        return jnp.pad(v, (0, n - v.shape[0])).astype(jnp.float32)

    def p_ln(ln):
        return pv(ln["g"], Dp), pv(ln["b"], Dp)

    def p_self(a):
        g, b = p_ln(a["ln"])
        wqkv = jnp.concatenate([pw(a["wq"] * scale, Dp, Dp),
                                pw(a["wk"], Dp, Dp),
                                pw(a["wv"], Dp, Dp)], axis=1)
        return {"wqkv": wqkv, "wo": pw(a["wo"], Dp, Dp), "ln_g": g, "ln_b": b}

    def p_cross(a):
        g, b = p_ln(a["ln"])
        wkv = jnp.concatenate([pw(a["wk"], Dp, Dp), pw(a["wv"], Dp, Dp)], axis=1)
        return {"wq": pw(a["wq"] * scale, Dp, Dp), "wkv": wkv,
                "wo": pw(a["wo"], Dp, Dp), "ln_g": g, "ln_b": b}

    def p_ffn(f):
        g, b = p_ln(f["ln"])
        return {"w1": pw(f["w1"], Dp, Fp), "b1": pv(f["b1"], Fp),
                "w2": pw(f["w2"], Fp, Dp), "b2": pv(f["b2"], Dp),
                "ln_g": g, "ln_b": b}

    enc_g, enc_b = p_ln(raw["enc"]["ln"])
    dec_g, dec_b = p_ln(raw["dec"]["ln"])
    return {
        "embedding": pw(raw["embedding"], Vp, Dp),
        "pos_table": _pad2(raw["pos_table"], raw["pos_table"].shape[0], Dp),
        "enc": {"ln_g": enc_g, "ln_b": enc_b,
                "layers": [{"attn": p_self(l["attn"]), "ffn": p_ffn(l["ffn"])}
                           for l in raw["enc"]["layers"]]},
        "dec": {"ln_g": dec_g, "ln_b": dec_b,
                "layers": [{"self_attn": p_self(l["self_attn"]),
                            "cross_attn": p_cross(l["cross_attn"]),
                            "ffn": p_ffn(l["ffn"])} for l in raw["dec"]["layers"]]},
    }


# ---------------------------------- main ---------------------------------------

if __name__ == "__main__":
    # small config: shared src/tgt vocab (weight tying), d_model == embed_size
    B, SRC_LEN, TGT_LEN = 2, 8, 8
    VOCAB = 16
    D_MODEL = 32
    D_FF = 64
    N_LAYERS = 2
    NUM_HEADS = 4
    PAD_IDX = 0

    key = jax.random.PRNGKey(0)
    kp, ks, kt = jax.random.split(key, 3)
    raw = init_params(kp, VOCAB, D_MODEL, D_FF, N_LAYERS, n_position=200)
    params = prepare_params(raw, num_heads=NUM_HEADS, d_model=D_MODEL,
                            d_ff=D_FF, vocab=VOCAB)

    src_seq = jax.random.randint(ks, (B, SRC_LEN), 1, VOCAB, dtype=jnp.int32)
    tgt_seq = jax.random.randint(kt, (B, TGT_LEN), 1, VOCAB, dtype=jnp.int32)
    # introduce some padding to exercise the masks
    src_seq = src_seq.at[:, -2:].set(PAD_IDX)
    tgt_seq = tgt_seq.at[:, -1:].set(PAD_IDX)

    fwd = jax.jit(functools.partial(
        transformer_forward, src_pad_idx=PAD_IDX, tgt_pad_idx=PAD_IDX,
        num_heads=NUM_HEADS, d_model=D_MODEL, vocab=VOCAB, scale_prj=True))

    # TODO(synk): dropout layers are identity here (eval-mode forward semantics).
    logits = fwd(params, src_seq, tgt_seq)
    jax.block_until_ready(logits)

    assert logits.shape == (B * TGT_LEN, VOCAB), logits.shape
    assert bool(jnp.all(jnp.isfinite(logits)))
    print("KERNEL_OK")
</pallas_src>

<mosaic_0001>
module attributes {stable_mosaic.version = 11 : i64} {
  func.func @_matmul_res_ln_kernel(%arg0: i32, %arg1: i32, %arg2: memref<16x128xbf16, #tpu.memory_space<vmem>>, %arg3: memref<128x128xbf16, #tpu.memory_space<vmem>>, %arg4: memref<1x128xf32, #tpu.memory_space<vmem>>, %arg5: memref<16x128xbf16, #tpu.memory_space<vmem>>, %arg6: memref<1x128xf32, #tpu.memory_space<vmem>>, %arg7: memref<1x128xf32, #tpu.memory_space<vmem>>, %arg8: memref<16x128xbf16, #tpu.memory_space<vmem>>, %arg9: memref<16x128xf32, #tpu.memory_space<vmem>>) attributes {dimension_semantics = [#tpu.dimension_semantics<parallel>, #tpu.dimension_semantics<arbitrary>], iteration_bounds = array<i64: 1, 1>, scalar_prefetch = 0 : i64, scratch_operands = 1 : i64, tpu.core_type = #tpu.core_type<tc>, window_params = [{transform_indices = @transform_0, window_bounds = array<i64: 16, 128>}, {transform_indices = @transform_1, window_bounds = array<i64: 128, 128>}, {pipeline_mode = #tpu.pipeline_mode<synchronous>, transform_indices = @transform_2, window_bounds = array<i64: 1, 128>}, {transform_indices = @transform_3, window_bounds = array<i64: 16, 128>}, {pipeline_mode = #tpu.pipeline_mode<synchronous>, transform_indices = @transform_4, window_bounds = array<i64: 1, 128>}, {pipeline_mode = #tpu.pipeline_mode<synchronous>, transform_indices = @transform_5, window_bounds = array<i64: 1, 128>}, {transform_indices = @transform_6, window_bounds = array<i64: 16, 128>}]} {
    %c0_i32 = arith.constant 0 : i32
    %0 = arith.cmpi eq, %arg1, %c0_i32 : i32
    %1 = arith.extui %0 : i1 to i32
    %c0_i32_0 = arith.constant 0 : i32
    %2 = arith.cmpi ne, %1, %c0_i32_0 : i32
    scf.if %2 {
      %cst_10 = arith.constant 0.000000e+00 : f32
      %12 = vector.broadcast %cst_10 : f32 to vector<16x128xf32>
      %c0_11 = arith.constant 0 : index
      %c0_12 = arith.constant 0 : index
      %13 = vector.load %arg9[%c0_11, %c0_12] : memref<16x128xf32, #tpu.memory_space<vmem>>, vector<16x128xf32>
      tpu.vector_store %arg9[%c0_11, %c0_12], %12 {strides = array<i32>} : memref<16x128xf32, #tpu.memory_space<vmem>>, vector<16x128xf32>,
    } else {
    }
    %c0 = arith.constant 0 : index
    %c0_1 = arith.constant 0 : index
    %3 = vector.load %arg9[%c0, %c0_1] : memref<16x128xf32, #tpu.memory_space<vmem>>, vector<16x128xf32>
    %c0_2 = arith.constant 0 : index
    %c0_3 = arith.constant 0 : index
    %4 = vector.load %arg2[%c0_2, %c0_3] : memref<16x128xbf16, #tpu.memory_space<vmem>>, vector<16x128xbf16>
    %c0_4 = arith.constant 0 : index
    %c0_5 = arith.constant 0 : index
    %5 = vector.load %arg3[%c0_4, %c0_5] : memref<128x128xbf16, #tpu.memory_space<vmem>>, vector<128x128xbf16>
    %cst = arith.constant dense<0.000000e+00> : vector<16x128xf32>
    %6 = tpu.matmul %4, %5, %cst {dimension_numbers = #tpu.dot_dimension_numbers<[1], [0], [0], [1], [0, 0, 1, 1], [], []>} : vector<16x128xbf16>, vector<128x128xbf16>, vector<16x128xf32> -> vector<16x128xf32>
    %7 = arith.addf %3, %6 : vector<16x128xf32>
    %c0_6 = arith.constant 0 : index
    %c0_7 = arith.constant 0 : index
    %8 = vector.load %arg9[%c0_6, %c0_7] : memref<16x128xf32, #tpu.memory_space<vmem>>, vector<16x128xf32>
    tpu.vector_store %arg9[%c0_6, %c0_7], %7 {strides = array<i32>} : memref<16x128xf32, #tpu.memory_space<vmem>>, vector<16x128xf32>,
    %c0_i32_8 = arith.constant 0 : i32
    %9 = arith.cmpi eq, %arg1, %c0_i32_8 : i32
    %10 = arith.extui %9 : i1 to i32
    %c0_i32_9 = arith.constant 0 : i32
    %11 = arith.cmpi ne, %10, %c0_i32_9 : i32
    scf.if %11 {
      %c0_10 = arith.constant 0 : index
      %c0_11 = arith.constant 0 : index
      %12 = vector.load %arg9[%c0_10, %c0_11] : memref<16x128xf32, #tpu.memory_space<vmem>>, vector<16x128xf32>
      %c0_12 = arith.constant 0 : index
      %c0_13 = arith.constant 0 : index
      %13 = vector.load %arg4[%c0_12, %c0_13] : memref<1x128xf32, #tpu.memory_space<vmem>>, vector<1x128xf32>
      %14 = vector.broadcast %13 : vector<1x128xf32> to vector<16x128xf32>
      %15 = arith.addf %12, %14 : vector<16x128xf32>
      %c0_14 = arith.constant 0 : index
      %c0_15 = arith.constant 0 : index
      %16 = vector.load %arg5[%c0_14, %c0_15] : memref<16x128xbf16, #tpu.memory_space<vmem>>, vector<16x128xbf16>
      %17 = arith.extf %16 : vector<16x128xbf16> to vector<16x128xf32>
      %18 = arith.addf %15, %17 : vector<16x128xf32>
      %c0_16 = arith.constant 0 : index
      %c0_17 = arith.constant 0 : index
      %19 = vector.load %arg6[%c0_16, %c0_17] : memref<1x128xf32, #tpu.memory_space<vmem>>, vector<1x128xf32>
      %c0_18 = arith.constant 0 : index
      %c0_19 = arith.constant 0 : index
      %20 = vector.load %arg7[%c0_18, %c0_19] : memref<1x128xf32, #tpu.memory_space<vmem>>, vector<1x128xf32>
      %cst_20 = arith.constant dense<0.000000e+00> : vector<16xf32>
      %21 = vector.multi_reduction <add>, %18, %cst_20 [1] : vector<16x128xf32> to vector<16xf32>
      %22 = vector.shape_cast %21 : vector<16xf32> to vector<16x1xf32>
      %cst_21 = arith.constant 3.125000e-02 : f32
      %23 = vector.broadcast %cst_21 : f32 to vector<16x1xf32>
      %24 = arith.mulf %22, %23 : vector<16x1xf32>
      %25 = tpu.iota {dimensions = array<i32: 1>} : vector<16x128xi32>
      %c32_i32 = arith.constant 32 : i32
      %26 = vector.broadcast %c32_i32 : i32 to vector<16x128xi32>
      %27 = arith.cmpi slt, %25, %26 : vector<16x128xi32>
      %28 = vector.broadcast %24 : vector<16x1xf32> to vector<16x128xf32>
      %29 = arith.subf %18, %28 : vector<16x128xf32>
      %cst_22 = arith.constant 0.000000e+00 : f32
      %30 = vector.broadcast %cst_22 : f32 to vector<16x128xf32>
      %31 = arith.select %27, %29, %30 : vector<16x128xi1>, vector<16x128xf32>
      %32 = arith.mulf %31, %31 : vector<16x128xf32>
      %cst_23 = arith.constant dense<0.000000e+00> : vector<16xf32>
      %33 = vector.multi_reduction <add>, %32, %cst_23 [1] : vector<16x128xf32> to vector<16xf32>
      %34 = vector.shape_cast %33 : vector<16xf32> to vector<16x1xf32>
      %cst_24 = arith.constant 3.125000e-02 : f32
      %35 = vector.broadcast %cst_24 : f32 to vector<16x1xf32>
      %36 = arith.mulf %34, %35 : vector<16x1xf32>
      %37 = vector.broadcast %24 : vector<16x1xf32> to vector<16x128xf32>
      %38 = arith.subf %18, %37 : vector<16x128xf32>
      %cst_25 = arith.constant 9.99999997E-7 : f32
      %39 = vector.broadcast %cst_25 : f32 to vector<16x1xf32>
      %40 = arith.addf %36, %39 : vector<16x1xf32>
      %41 = math.rsqrt %40 : vector<16x1xf32>
      %42 = vector.broadcast %41 : vector<16x1xf32> to vector<16x128xf32>
      %43 = arith.mulf %38, %42 : vector<16x128xf32>
      %44 = vector.broadcast %19 : vector<1x128xf32> to vector<16x128xf32>
      %45 = arith.mulf %43, %44 : vector<16x128xf32>
      %46 = vector.broadcast %20 : vector<1x128xf32> to vector<16x128xf32>
      %47 = arith.addf %45, %46 : vector<16x128xf32>
      %48 = arith.truncf %47 : vector<16x128xf32> to vector<16x128xbf16>
      %c0_26 = arith.constant 0 : index
      %c0_27 = arith.constant 0 : index
      %49 = vector.load %arg8[%c0_26, %c0_27] : memref<16x128xbf16, #tpu.memory_space<vmem>>, vector<16x128xbf16>
      tpu.vector_store %arg8[%c0_26, %c0_27], %48 {strides = array<i32>} : memref<16x128xbf16, #tpu.memory_space<vmem>>, vector<16x128xbf16>,
    } else {
    }
    return
  }
  func.func @transform_0(%arg0: i32, %arg1: i32) -> (i32, i32) {
    %c0_i32 = arith.constant 0 : i32
    return %arg0, %arg1 : i32, i32
  }
  func.func @transform_1(%arg0: i32, %arg1: i32) -> (i32, i32) {
    %c0_i32 = arith.constant 0 : i32
    %c0_i32_0 = arith.constant 0 : i32
    return %arg1, %c0_i32 : i32, i32
  }
  func.func @transform_2(%arg0: i32, %arg1: i32) -> (i32, i32) {
    %c0_i32 = arith.constant 0 : i32
    %c0_i32_0 = arith.constant 0 : i32
    %c0_i32_1 = arith.constant 0 : i32
    return %c0_i32, %c0_i32_0 : i32, i32
  }
  func.func @transform_3(%arg0: i32, %arg1: i32) -> (i32, i32) {
    %c0_i32 = arith.constant 0 : i32
    %c0_i32_0 = arith.constant 0 : i32
    return %arg0, %c0_i32 : i32, i32
  }
  func.func @transform_4(%arg0: i32, %arg1: i32) -> (i32, i32) {
    %c0_i32 = arith.constant 0 : i32
    %c0_i32_0 = arith.constant 0 : i32
    %c0_i32_1 = arith.constant 0 : i32
    return %c0_i32, %c0_i32_0 : i32, i32
  }
  func.func @transform_5(%arg0: i32, %arg1: i32) -> (i32, i32) {
    %c0_i32 = arith.constant 0 : i32
    %c0_i32_0 = arith.constant 0 : i32
    %c0_i32_1 = arith.constant 0 : i32
    return %c0_i32, %c0_i32_0 : i32, i32
  }
  func.func @transform_6(%arg0: i32, %arg1: i32) -> (i32, i32) {
    %c0_i32 = arith.constant 0 : i32
    %c0_i32_0 = arith.constant 0 : i32
    return %arg0, %c0_i32 : i32, i32
  }
}

module attributes {stable_mosaic.version = 11 : i64} {
  func.func @_matmul_kernel(%arg0: i32, %arg1: i32, %arg2: i32, %arg3: memref<16x128xbf16, #tpu.memory_space<vmem>>, %arg4: memref<128x128xbf16, #tpu.memory_space<vmem>>, %arg5: memref<1x128xf32, #tpu.memory_space<vmem>>, %arg6: memref<16x128xbf16, #tpu.memory_space<vmem>>, %arg7: memref<16x128xf32, #tpu.memory_space<vmem>>) attributes {dimension_semantics = [#tpu.dimension_semantics<parallel>, #tpu.dimension_semantics<parallel>, #tpu.dimension_semantics<arbitrary>], iteration_bounds = array<i64: 1, 3, 1>, scalar_prefetch = 0 : i64, scratch_operands = 1 : i64, tpu.core_type = #tpu.core_type<tc>, window_params = [{transform_indices = @transform_0, window_bounds = array<i64: 16, 128>}, {transform_indices = @transform_1, window_bounds = array<i64: 128, 128>}, {transform_indices = @transform_2, window_bounds = array<i64: 1, 128>}, {transform_indices = @transform_3, window_bounds = array<i64: 16, 128>}]} {
    %c0_i32 = arith.constant 0 : i32
    %0 = arith.cmpi eq, %arg2, %c0_i32 : i32
    %1 = arith.extui %0 : i1 to i32
    %c0_i32_0 = arith.constant 0 : i32
    %2 = arith.cmpi ne, %1, %c0_i32_0 : i32
    scf.if %2 {
      %cst_10 = arith.constant 0.000000e+00 : f32
      %12 = vector.broadcast %cst_10 : f32 to vector<16x128xf32>
      %c0_11 = arith.constant 0 : index
      %c0_12 = arith.constant 0 : index
      %13 = vector.load %arg7[%c0_11, %c0_12] : memref<16x128xf32, #tpu.memory_space<vmem>>, vector<16x128xf32>
      tpu.vector_store %arg7[%c0_11, %c0_12], %12 {strides = array<i32>} : memref<16x128xf32, #tpu.memory_space<vmem>>, vector<16x128xf32>,
    } else {
    }
    %c0 = arith.constant 0 : index
    %c0_1 = arith.constant 0 : index
    %3 = vector.load %arg7[%c0, %c0_1] : memref<16x128xf32, #tpu.memory_space<vmem>>, vector<16x128xf32>
    %c0_2 = arith.constant 0 : index
    %c0_3 = arith.constant 0 : index
    %4 = vector.load %arg3[%c0_2, %c0_3] : memref<16x128xbf16, #tpu.memory_space<vmem>>, vector<16x128xbf16>
    %c0_4 = arith.constant 0 : index
    %c0_5 = arith.constant 0 : index
    %5 = vector.load %arg4[%c0_4, %c0_5] : memref<128x128xbf16, #tpu.memory_space<vmem>>, vector<128x128xbf16>
    %cst = arith.constant dense<0.000000e+00> : vector<16x128xf32>
    %6 = tpu.matmul %4, %5, %cst {dimension_numbers = #tpu.dot_dimension_numbers<[1], [0], [0], [1], [0, 0, 1, 1], [], []>} : vector<16x128xbf16>, vector<128x128xbf16>, vector<16x128xf32> -> vector<16x128xf32>
    %7 = arith.addf %3, %6 : vector<16x128xf32>
    %c0_6 = arith.constant 0 : index
    %c0_7 = arith.constant 0 : index
    %8 = vector.load %arg7[%c0_6, %c0_7] : memref<16x128xf32, #tpu.memory_space<vmem>>, vector<16x128xf32>
    tpu.vector_store %arg7[%c0_6, %c0_7], %7 {strides = array<i32>} : memref<16x128xf32, #tpu.memory_space<vmem>>, vector<16x128xf32>,
    %c0_i32_8 = arith.constant 0 : i32
    %9 = arith.cmpi eq, %arg2, %c0_i32_8 : i32
    %10 = arith.extui %9 : i1 to i32
    %c0_i32_9 = arith.constant 0 : i32
    %11 = arith.cmpi ne, %10, %c0_i32_9 : i32
    scf.if %11 {
      %c0_10 = arith.constant 0 : index
      %c0_11 = arith.constant 0 : index
      %12 = vector.load %arg7[%c0_10, %c0_11] : memref<16x128xf32, #tpu.memory_space<vmem>>, vector<16x128xf32>
      %c0_12 = arith.constant 0 : index
      %c0_13 = arith.constant 0 : index
      %13 = vector.load %arg5[%c0_12, %c0_13] : memref<1x128xf32, #tpu.memory_space<vmem>>, vector<1x128xf32>
      %14 = vector.broadcast %13 : vector<1x128xf32> to vector<16x128xf32>
      %15 = arith.addf %12, %14 : vector<16x128xf32>
      %16 = arith.truncf %15 : vector<16x128xf32> to vector<16x128xbf16>
      %c0_14 = arith.constant 0 : index
      %c0_15 = arith.constant 0 : index
      %17 = vector.load %arg6[%c0_14, %c0_15] : memref<16x128xbf16, #tpu.memory_space<vmem>>, vector<16x128xbf16>
      tpu.vector_store %arg6[%c0_14, %c0_15], %16 {strides = array<i32>} : memref<16x128xbf16, #tpu.memory_space<vmem>>, vector<16x128xbf16>,
    } else {
    }
    return
  }
  func.func @transform_0(%arg0: i32, %arg1: i32, %arg2: i32) -> (i32, i32) {
    %c0_i32 = arith.constant 0 : i32
    return %arg0, %arg2 : i32, i32
  }
  func.func @transform_1(%arg0: i32, %arg1: i32, %arg2: i32) -> (i32, i32) {
    %c0_i32 = arith.constant 0 : i32
    return %arg2, %arg1 : i32, i32
  }
  func.func @transform_2(%arg0: i32, %arg1: i32, %arg2: i32) -> (i32, i32) {
    %c0_i32 = arith.constant 0 : i32
    %c0_i32_0 = arith.constant 0 : i32
    return %c0_i32, %arg1 : i32, i32
  }
  func.func @transform_3(%arg0: i32, %arg1: i32, %arg2: i32) -> (i32, i32) {
    %c0_i32 = arith.constant 0 : i32
    return %arg0, %arg1 : i32, i32
  }
}

module attributes {stable_mosaic.version = 11 : i64} {
  func.func @_add_ln_kernel(%arg0: i32, %arg1: memref<16x128xbf16, #tpu.memory_space<vmem>>, %arg2: memref<16x128xf32, #tpu.memory_space<vmem>>, %arg3: memref<1x128xf32, #tpu.memory_space<vmem>>, %arg4: memref<1x128xf32, #tpu.memory_space<vmem>>, %arg5: memref<16x128xbf16, #tpu.memory_space<vmem>>) attributes {dimension_semantics = [#tpu.dimension_semantics<parallel>], iteration_bounds = array<i64: 1>, scalar_prefetch = 0 : i64, scratch_operands = 0 : i64, tpu.core_type = #tpu.core_type<tc>, window_params = [{transform_indices = @transform_0, window_bounds = array<i64: 16, 128>}, {transform_indices = @transform_1, window_bounds = array<i64: 16, 128>}, {pipeline_mode = #tpu.pipeline_mode<synchronous>, transform_indices = @transform_2, window_bounds = array<i64: 1, 128>}, {pipeline_mode = #tpu.pipeline_mode<synchronous>, transform_indices = @transform_3, window_bounds = array<i64: 1, 128>}, {transform_indices = @transform_4, window_bounds = array<i64: 16, 128>}]} {
    %c0 = arith.constant 0 : index
    %c0_0 = arith.constant 0 : index
    %0 = vector.load %arg1[%c0, %c0_0] : memref<16x128xbf16, #tpu.memory_space<vmem>>, vector<16x128xbf16>
    %1 = arith.extf %0 : vector<16x128xbf16> to vector<16x128xf32>
    %c0_1 = arith.constant 0 : index
    %c0_2 = arith.constant 0 : index
    %2 = vector.load %arg2[%c0_1, %c0_2] : memref<16x128xf32, #tpu.memory_space<vmem>>, vector<16x128xf32>
    %3 = arith.addf %1, %2 : vector<16x128xf32>
    %c0_3 = arith.constant 0 : index
    %c0_4 = arith.constant 0 : index
    %4 = vector.load %arg3[%c0_3, %c0_4] : memref<1x128xf32, #tpu.memory_space<vmem>>, vector<1x128xf32>
    %c0_5 = arith.constant 0 : index
    %c0_6 = arith.constant 0 : index
    %5 = vector.load %arg4[%c0_5, %c0_6] : memref<1x128xf32, #tpu.memory_space<vmem>>, vector<1x128xf32>
    %cst = arith.constant dense<0.000000e+00> : vector<16xf32>
    %6 = vector.multi_reduction <add>, %3, %cst [1] : vector<16x128xf32> to vector<16xf32>
    %7 = vector.shape_cast %6 : vector<16xf32> to vector<16x1xf32>
    %cst_7 = arith.constant 3.125000e-02 : f32
    %8 = vector.broadcast %cst_7 : f32 to vector<16x1xf32>
    %9 = arith.mulf %7, %8 : vector<16x1xf32>
    %10 = tpu.iota {dimensions = array<i32: 1>} : vector<16x128xi32>
    %c32_i32 = arith.constant 32 : i32
    %11 = vector.broadcast %c32_i32 : i32 to vector<16x128xi32>
    %12 = arith.cmpi slt, %10, %11 : vector<16x128xi32>
    %13 = vector.broadcast %9 : vector<16x1xf32> to vector<16x128xf32>
    %14 = arith.subf %3, %13 : vector<16x128xf32>
    %cst_8 = arith.constant 0.000000e+00 : f32
    %15 = vector.broadcast %cst_8 : f32 to vector<16x128xf32>
    %16 = arith.select %12, %14, %15 : vector<16x128xi1>, vector<16x128xf32>
    %17 = arith.mulf %16, %16 : vector<16x128xf32>
    %cst_9 = arith.constant dense<0.000000e+00> : vector<16xf32>
    %18 = vector.multi_reduction <add>, %17, %cst_9 [1] : vector<16x128xf32> to vector<16xf32>
    %19 = vector.shape_cast %18 : vector<16xf32> to vector<16x1xf32>
    %cst_10 = arith.constant 3.125000e-02 : f32
    %20 = vector.broadcast %cst_10 : f32 to vector<16x1xf32>
    %21 = arith.mulf %19, %20 : vector<16x1xf32>
    %22 = vector.broadcast %9 : vector<16x1xf32> to vector<16x128xf32>
    %23 = arith.subf %3, %22 : vector<16x128xf32>
    %cst_11 = arith.constant 9.99999997E-7 : f32
    %24 = vector.broadcast %cst_11 : f32 to vector<16x1xf32>
    %25 = arith.addf %21, %24 : vector<16x1xf32>
    %26 = math.rsqrt %25 : vector<16x1xf32>
    %27 = vector.broadcast %26 : vector<16x1xf32> to vector<16x128xf32>
    %28 = arith.mulf %23, %27 : vector<16x128xf32>
    %29 = vector.broadcast %4 : vector<1x128xf32> to vector<16x128xf32>
    %30 = arith.mulf %28, %29 : vector<16x128xf32>
    %31 = vector.broadcast %5 : vector<1x128xf32> to vector<16x128xf32>
    %32 = arith.addf %30, %31 : vector<16x128xf32>
    %33 = arith.truncf %32 : vector<16x128xf32> to vector<16x128xbf16>
    %c0_12 = arith.constant 0 : index
    %c0_13 = arith.constant 0 : index
    %34 = vector.load %arg5[%c0_12, %c0_13] : memref<16x128xbf16, #tpu.memory_space<vmem>>, vector<16x128xbf16>
    tpu.vector_store %arg5[%c0_12, %c0_13], %33 {strides = array<i32>} : memref<16x128xbf16, #tpu.memory_space<vmem>>, vector<16x128xbf16>,
    return
  }
  func.func @transform_0(%arg0: i32) -> (i32, i32) {
    %c0_i32 = arith.constant 0 : i32
    %c0_i32_0 = arith.constant 0 : i32
    return %arg0, %c0_i32 : i32, i32
  }
  func.func @transform_1(%arg0: i32) -> (i32, i32) {
    %c0_i32 = arith.constant 0 : i32
    %c0_i32_0 = arith.constant 0 : i32
    return %arg0, %c0_i32 : i32, i32
  }
  func.func @transform_2(%arg0: i32) -> (i32, i32) {
    %c0_i32 = arith.constant 0 : i32
    %c0_i32_0 = arith.constant 0 : i32
    %c0_i32_1 = arith.constant 0 : i32
    return %c0_i32, %c0_i32_0 : i32, i32
  }
  func.func @transform_3(%arg0: i32) -> (i32, i32) {
    %c0_i32 = arith.constant 0 : i32
    %c0_i32_0 = arith.constant 0 : i32
    %c0_i32_1 = arith.constant 0 : i32
    return %c0_i32, %c0_i32_0 : i32, i32
  }
  func.func @transform_4(%arg0: i32) -> (i32, i32) {
    %c0_i32 = arith.constant 0 : i32
    %c0_i32_0 = arith.constant 0 : i32
    return %arg0, %c0_i32 : i32, i32
  }
}

module attributes {stable_mosaic.version = 11 : i64} {
  func.func @_flash_kernel(%arg0: i32, %arg1: i32, %arg2: i32, %arg3: memref<1x8x128xbf16, #tpu.memory_space<vmem>>, %arg4: memref<1x128x128xbf16, #tpu.memory_space<vmem>>, %arg5: memref<1x128x128xbf16, #tpu.memory_space<vmem>>, %arg6: memref<1x1x128xf32, #tpu.memory_space<vmem>>, %arg7: memref<1x8x128xbf16, #tpu.memory_space<vmem>>, %arg8: memref<4x8x128xf32, #tpu.memory_space<vmem>>, %arg9: memref<4x8x128xf32, #tpu.memory_space<vmem>>, %arg10: memref<8x128xf32, #tpu.memory_space<vmem>>) attributes {dimension_semantics = [#tpu.dimension_semantics<parallel>, #tpu.dimension_semantics<parallel>, #tpu.dimension_semantics<arbitrary>], iteration_bounds = array<i64: 2, 1, 1>, scalar_prefetch = 0 : i64, scratch_operands = 3 : i64, tpu.core_type = #tpu.core_type<tc>, window_params = [{transform_indices = @transform_0, window_bounds = array<i64: 1, 8, 128>}, {transform_indices = @transform_1, window_bounds = array<i64: 1, 128, 128>}, {transform_indices = @transform_2, window_bounds = array<i64: 1, 128, 128>}, {transform_indices = @transform_3, window_bounds = array<i64: 1, 1, 128>}, {transform_indices = @transform_4, window_bounds = array<i64: 1, 8, 128>}]} {
    %c0_i32 = arith.constant 0 : i32
    %0 = arith.cmpi eq, %arg2, %c0_i32 : i32
    %1 = arith.extui %0 : i1 to i32
    %c0_i32_0 = arith.constant 0 : i32
    %2 = arith.cmpi ne, %1, %c0_i32_0 : i32
    scf.if %2 {
      %cst = arith.constant -1.000000e+30 : f32
      %12 = vector.broadcast %cst : f32 to vector<4x8x128xf32>
      %c0 = arith.constant 0 : index
      %c0_4 = arith.constant 0 : index
      %c0_5 = arith.constant 0 : index
      %13 = vector.load %arg8[%c0, %c0_4, %c0_5] : memref<4x8x128xf32, #tpu.memory_space<vmem>>, vector<4x8x128xf32>
      tpu.vector_store %arg8[%c0, %c0_4, %c0_5], %12 {strides = array<i32>} : memref<4x8x128xf32, #tpu.memory_space<vmem>>, vector<4x8x128xf32>,
      %cst_6 = arith.constant 0.000000e+00 : f32
      %14 = vector.broadcast %cst_6 : f32 to vector<4x8x128xf32>
      %c0_7 = arith.constant 0 : index
      %c0_8 = arith.constant 0 : index
      %c0_9 = arith.constant 0 : index
      %15 = vector.load %arg9[%c0_7, %c0_8, %c0_9] : memref<4x8x128xf32, #tpu.memory_space<vmem>>, vector<4x8x128xf32>
      tpu.vector_store %arg9[%c0_7, %c0_8, %c0_9], %14 {strides = array<i32>} : memref<4x8x128xf32, #tpu.memory_space<vmem>>, vector<4x8x128xf32>,
      %cst_10 = arith.constant 0.000000e+00 : f32
      %16 = vector.broadcast %cst_10 : f32 to vector<8x128xf32>
      %c0_11 = arith.constant 0 : index
      %c0_12 = arith.constant 0 : index
      %17 = vector.load %arg10[%c0_11, %c0_12] : memref<8x128xf32, #tpu.memory_space<vmem>>, vector<8x128xf32>
      tpu.vector_store %arg10[%c0_11, %c0_12], %16 {strides = array<i32>} : memref<8x128xf32, #tpu.memory_space<vmem>>, vector<8x128xf32>,
    } else {
    }
    %c128_i32 = arith.constant 128 : i32
    %3 = arith.muli %arg2, %c128_i32 : i32
    %c8_i32 = arith.constant 8 : i32
    %4 = arith.muli %arg1, %c8_i32 : i32
    %c7_i32 = arith.constant 7 : i32
    %5 = arith.addi %4, %c7_i32 : i32
    %6 = arith.cmpi sle, %3, %5 : i32
    %7 = arith.extui %6 : i1 to i32
    %c0_i32_1 = arith.constant 0 : i32
    %8 = arith.cmpi ne, %7, %c0_i32_1 : i32
    scf.if %8 {
      %c0 = arith.constant 0 : index
      %c0_4 = arith.constant 0 : index
      %c0_5 = arith.constant 0 : index
      %12 = vector.load %arg6[%c0, %c0_4, %c0_5] : memref<1x1x128xf32, #tpu.memory_space<vmem>>, vector<1x1x128xf32>
      %13 = vector.shape_cast %12 : vector<1x1x128xf32> to vector<1x128xf32>
      %c8_i32_6 = arith.constant 8 : i32
      %14 = arith.muli %arg1, %c8_i32_6 : i32
      %15 = tpu.iota {dimensions = array<i32: 0>} : vector<8x128xi32>
      %16 = vector.broadcast %14 : i32 to vector<8x128xi32>
      %17 = arith.addi %16, %15 : vector<8x128xi32>
      %c128_i32_7 = arith.constant 128 : i32
      %18 = arith.muli %arg2, %c128_i32_7 : i32
      %19 = tpu.iota {dimensions = array<i32: 1>} : vector<8x128xi32>
      %20 = vector.broadcast %18 : i32 to vector<8x128xi32>
      %21 = arith.addi %20, %19 : vector<8x128xi32>
      %22 = arith.cmpi sge, %17, %21 : vector<8x128xi32>
      %cst = arith.constant 0.000000e+00 : f32
      %cst_8 = arith.constant -1.000000e+09 : f32
      %23 = vector.broadcast %cst : f32 to vector<8x128xf32>
      %24 = vector.broadcast %cst_8 : f32 to vector<8x128xf32>
      %25 = arith.select %22, %23, %24 : vector<8x128xi1>, vector<8x128xf32>
      %c0_9 = arith.constant 0 : index
      %c0_10 = arith.constant 0 : index
      %c0_11 = arith.constant 0 : index
      %26 = vector.load %arg3[%c0_9, %c0_10, %c0_11] : memref<1x8x128xbf16, #tpu.memory_space<vmem>>, vector<1x8x8xbf16>
      %27 = vector.shape_cast %26 : vector<1x8x8xbf16> to vector<8x8xbf16>
      %c0_12 = arith.constant 0 : index
      %c0_13 = arith.constant 0 : index
      %c0_14 = arith.constant 0 : index
      %28 = vector.load %arg4[%c0_12, %c0_13, %c0_14] : memref<1x128x128xbf16, #tpu.memory_space<vmem>>, vector<1x128x8xbf16>
      %29 = vector.shape_cast %28 : vector<1x128x8xbf16> to vector<128x8xbf16>
      %c0_15 = arith.constant 0 : index
      %c0_16 = arith.constant 0 : index
      %c0_17 = arith.constant 0 : index
      %30 = vector.load %arg5[%c0_15, %c0_16, %c0_17] : memref<1x128x128xbf16, #tpu.memory_space<vmem>>, vector<1x128x8xbf16>
      %31 = vector.shape_cast %30 : vector<1x128x8xbf16> to vector<128x8xbf16>
      %cst_18 = arith.constant dense<0.000000e+00> : vector<8x128xf32>
      %32 = tpu.matmul %27, %29, %cst_18 {dimension_numbers = #tpu.dot_dimension_numbers<[1], [1], [0], [0], [0, 0, 1, 0], [], []>} : vector<8x8xbf16>, vector<128x8xbf16>, vector<8x128xf32> -> vector<8x128xf32>
      %33 = vector.broadcast %13 : vector<1x128xf32> to vector<8x128xf32>
      %34 = arith.addf %32, %33 : vector<8x128xf32>
      %35 = arith.addf %34, %25 : vector<8x128xf32>
      %c0_19 = arith.constant 0 : index
      %c0_20 = arith.constant 0 : index
      %c0_21 = arith.constant 0 : index
      %36 = vector.load %arg8[%c0_19, %c0_20, %c0_21] : memref<4x8x128xf32, #tpu.memory_space<vmem>>, vector<1x8x128xf32>
      %37 = vector.shape_cast %36 : vector<1x8x128xf32> to vector<8x128xf32>
      %cst_22 = arith.constant dense<0xFF800000> : vector<8xf32>
      %38 = vector.multi_reduction <maximumf>, %35, %cst_22 [1] : vector<8x128xf32> to vector<8xf32>
      %39 = vector.shape_cast %38 : vector<8xf32> to vector<8x1xf32>
      %40 = vector.broadcast %39 : vector<8x1xf32> to vector<8x128xf32>
      %41 = arith.maximumf %37, %40 : vector<8x128xf32>
      %42 = arith.subf %37, %41 : vector<8x128xf32>
      %43 = math.exp %42 : vector<8x128xf32>
      %44 = vector.extract_strided_slice %41 {offsets = [0, 0], sizes = [8, 1], strides = [1, 1]} : vector<8x128xf32> to vector<8x1xf32>
      %45 = vector.broadcast %44 : vector<8x1xf32> to vector<8x128xf32>
      %46 = arith.subf %35, %45 : vector<8x128xf32>
      %47 = math.exp %46 : vector<8x128xf32>
      %c0_23 = arith.constant 0 : index
      %c0_24 = arith.constant 0 : index
      %c0_25 = arith.constant 0 : index
      %48 = vector.load %arg9[%c0_23, %c0_24, %c0_25] : memref<4x8x128xf32, #tpu.memory_space<vmem>>, vector<1x8x128xf32>
      %49 = vector.shape_cast %48 : vector<1x8x128xf32> to vector<8x128xf32>
      %50 = arith.mulf %43, %49 : vector<8x128xf32>
      %cst_26 = arith.constant dense<0.000000e+00> : vector<8xf32>
      %51 = vector.multi_reduction <add>, %47, %cst_26 [1] : vector<8x128xf32> to vector<8xf32>
      %52 = vector.shape_cast %51 : vector<8xf32> to vector<8x1xf32>
      %53 = vector.broadcast %52 : vector<8x1xf32> to vector<8x128xf32>
      %54 = arith.addf %50, %53 : vector<8x128xf32>
      %c0_27 = arith.constant 0 : index
      %c0_28 = arith.constant 0 : index
      %c0_29 = arith.constant 0 : index
      %55 = vector.load %arg9[%c0_27, %c0_28, %c0_29] : memref<4x8x128xf32, #tpu.memory_space<vmem>>, vector<1x8x128xf32>
      %56 = vector.shape_cast %55 : vector<1x8x128xf32> to vector<8x128xf32>
      %57 = vector.shape_cast %54 : vector<8x128xf32> to vector<1x8x128xf32>
      tpu.vector_store %arg9[%c0_27, %c0_28, %c0_29], %57 {strides = array<i32>} : memref<4x8x128xf32, #tpu.memory_space<vmem>>, vector<1x8x128xf32>,
      %c0_30 = arith.constant 0 : index
      %c0_31 = arith.constant 0 : index
      %c0_32 = arith.constant 0 : index
      %58 = vector.load %arg8[%c0_30, %c0_31, %c0_32] : memref<4x8x128xf32, #tpu.memory_space<vmem>>, vector<1x8x128xf32>
      %59 = vector.shape_cast %58 : vector<1x8x128xf32> to vector<8x128xf32>
      %60 = vector.shape_cast %41 : vector<8x128xf32> to vector<1x8x128xf32>
      tpu.vector_store %arg8[%c0_30, %c0_31, %c0_32], %60 {strides = array<i32>} : memref<4x8x128xf32, #tpu.memory_space<vmem>>, vector<1x8x128xf32>,
      %61 = arith.truncf %47 : vector<8x128xf32> to vector<8x128xbf16>
      %cst_33 = arith.constant dense<0.000000e+00> : vector<8x8xf32>
      %62 = tpu.matmul %61, %31, %cst_33 {dimension_numbers = #tpu.dot_dimension_numbers<[1], [0], [0], [1], [0, 0, 1, 1], [], []>} : vector<8x128xbf16>, vector<128x8xbf16>, vector<8x8xf32> -> vector<8x8xf32>
      %63 = vector.extract_strided_slice %43 {offsets = [0, 0], sizes = [8, 1], strides = [1, 1]} : vector<8x128xf32> to vector<8x1xf32>
      %c0_34 = arith.constant 0 : index
      %c0_35 = arith.constant 0 : index
      %64 = vector.load %arg10[%c0_34, %c0_35] : memref<8x128xf32, #tpu.memory_space<vmem>>, vector<8x8xf32>
      %65 = vector.broadcast %63 : vector<8x1xf32> to vector<8x8xf32>
      %66 = arith.mulf %65, %64 : vector<8x8xf32>
      %67 = arith.addf %66, %62 : vector<8x8xf32>
      %c0_36 = arith.constant 0 : index
      %c0_37 = arith.constant 0 : index
      %68 = vector.load %arg10[%c0_36, %c0_37] : memref<8x128xf32, #tpu.memory_space<vmem>>, vector<8x8xf32>
      tpu.vector_store %arg10[%c0_36, %c0_37], %67 {strides = array<i32>} : memref<8x128xf32, #tpu.memory_space<vmem>>, vector<8x8xf32>,
      %c0_38 = arith.constant 0 : index
      %c0_39 = arith.constant 0 : index
      %c8 = arith.constant 8 : index
      %69 = vector.load %arg3[%c0_38, %c0_39, %c8] : memref<1x8x128xbf16, #tpu.memory_space<vmem>>, vector<1x8x8xbf16>
      %70 = vector.shape_cast %69 : vector<1x8x8xbf16> to vector<8x8xbf16>
      %c0_40 = arith.constant 0 : index
      %c0_41 = arith.constant 0 : index
      %c8_42 = arith.constant 8 : index
      %71 = vector.load %arg4[%c0_40, %c0_41, %c8_42] : memref<1x128x128xbf16, #tpu.memory_space<vmem>>, vector<1x128x8xbf16>
      %72 = vector.shape_cast %71 : vector<1x128x8xbf16> to vector<128x8xbf16>
      %c0_43 = arith.constant 0 : index
      %c0_44 = arith.constant 0 : index
      %c8_45 = arith.constant 8 : index
      %73 = vector.load %arg5[%c0_43, %c0_44, %c8_45] : memref<1x128x128xbf16, #tpu.memory_space<vmem>>, vector<1x128x8xbf16>
      %74 = vector.shape_cast %73 : vector<1x128x8xbf16> to vector<128x8xbf16>
      %cst_46 = arith.constant dense<0.000000e+00> : vector<8x128xf32>
      %75 = tpu.matmul %70, %72, %cst_46 {dimension_numbers = #tpu.dot_dimension_numbers<[1], [1], [0], [0], [0, 0, 1, 0], [], []>} : vector<8x8xbf16>, vector<128x8xbf16>, vector<8x128xf32> -> vector<8x128xf32>
      %76 = vector.broadcast %13 : vector<1x128xf32> to vector<8x128xf32>
      %77 = arith.addf %75, %76 : vector<8x128xf32>
      %78 = arith.addf %77, %25 : vector<8x128xf32>
      %c1 = arith.constant 1 : index
      %c0_47 = arith.constant 0 : index
      %c0_48 = arith.constant 0 : index
      %79 = vector.load %arg8[%c1, %c0_47, %c0_48] : memref<4x8x128xf32, #tpu.memory_space<vmem>>, vector<1x8x128xf32>
      %80 = vector.shape_cast %79 : vector<1x8x128xf32> to vector<8x128xf32>
      %cst_49 = arith.constant dense<0xFF800000> : vector<8xf32>
      %81 = vector.multi_reduction <maximumf>, %78, %cst_49 [1] : vector<8x128xf32> to vector<8xf32>
      %82 = vector.shape_cast %81 : vector<8xf32> to vector<8x1xf32>
      %83 = vector.broadcast %82 : vector<8x1xf32> to vector<8x128xf32>
      %84 = arith.maximumf %80, %83 : vector<8x128xf32>
      %85 = arith.subf %80, %84 : vector<8x128xf32>
      %86 = math.exp %85 : vector<8x128xf32>
      %87 = vector.extract_strided_slice %84 {offsets = [0, 0], sizes = [8, 1], strides = [1, 1]} : vector<8x128xf32> to vector<8x1xf32>
      %88 = vector.broadcast %87 : vector<8x1xf32> to vector<8x128xf32>
      %89 = arith.subf %78, %88 : vector<8x128xf32>
      %90 = math.exp %89 : vector<8x128xf32>
      %c1_50 = arith.constant 1 : index
      %c0_51 = arith.constant 0 : index
      %c0_52 = arith.constant 0 : index
      %91 = vector.load %arg9[%c1_50, %c0_51, %c0_52] : memref<4x8x128xf32, #tpu.memory_space<vmem>>, vector<1x8x128xf32>
      %92 = vector.shape_cast %91 : vector<1x8x128xf32> to vector<8x128xf32>
      %93 = arith.mulf %86, %92 : vector<8x128xf32>
      %cst_53 = arith.constant dense<0.000000e+00> : vector<8xf32>
      %94 = vector.multi_reduction <add>, %90, %cst_53 [1] : vector<8x128xf32> to vector<8xf32>
      %95 = vector.shape_cast %94 : vector<8xf32> to vector<8x1xf32>
      %96 = vector.broadcast %95 : vector<8x1xf32> to vector<8x128xf32>
      %97 = arith.addf %93, %96 : vector<8x128xf32>
      %c1_54 = arith.constant 1 : index
      %c0_55 = arith.constant 0 : index
      %c0_56 = arith.constant 0 : index
      %98 = vector.load %arg9[%c1_54, %c0_55, %c0_56] : memref<4x8x128xf32, #tpu.memory_space<vmem>>, vector<1x8x128xf32>
      %99 = vector.shape_cast %98 : vector<1x8x128xf32> to vector<8x128xf32>
      %100 = vector.shape_cast %97 : vector<8x128xf32> to vector<1x8x128xf32>
      tpu.vector_store %arg9[%c1_54, %c0_55, %c0_56], %100 {strides = array<i32>} : memref<4x8x128xf32, #tpu.memory_space<vmem>>, vector<1x8x128xf32>,
      %c1_57 = arith.constant 1 : index
      %c0_58 = arith.constant 0 : index
      %c0_59 = arith.constant 0 : index
      %101 = vector.load %arg8[%c1_57, %c0_58, %c0_59] : memref<4x8x128xf32, #tpu.memory_space<vmem>>, vector<1x8x128xf32>
      %102 = vector.shape_cast %101 : vector<1x8x128xf32> to vector<8x128xf32>
      %103 = vector.shape_cast %84 : vector<8x128xf32> to vector<1x8x128xf32>
      tpu.vector_store %arg8[%c1_57, %c0_58, %c0_59], %103 {strides = array<i32>} : memref<4x8x128xf32, #tpu.memory_space<vmem>>, vector<1x8x128xf32>,
      %104 = arith.truncf %90 : vector<8x128xf32> to vector<8x128xbf16>
      %cst_60 = arith.constant dense<0.000000e+00> : vector<8x8xf32>
      %105 = tpu.matmul %104, %74, %cst_60 {dimension_numbers = #tpu.dot_dimension_numbers<[1], [0], [0], [1], [0, 0, 1, 1], [], []>} : vector<8x128xbf16>, vector<128x8xbf16>, vector<8x8xf32> -> vector<8x8xf32>
      %106 = vector.extract_strided_slice %86 {offsets = [0, 0], sizes = [8, 1], strides = [1, 1]} : vector<8x128xf32> to vector<8x1xf32>
      %c0_61 = arith.constant 0 : index
      %c8_62 = arith.constant 8 : index
      %107 = vector.load %arg10[%c0_61, %c8_62] : memref<8x128xf32, #tpu.memory_space<vmem>>, vector<8x8xf32>
      %108 = vector.broadcast %106 : vector<8x1xf32> to vector<8x8xf32>
      %109 = arith.mulf %108, %107 : vector<8x8xf32>
      %110 = arith.addf %109, %105 : vector<8x8xf32>
      %c0_63 = arith.constant 0 : index
      %c8_64 = arith.constant 8 : index
      %111 = vector.load %arg10[%c0_63, %c8_64] : memref<8x128xf32, #tpu.memory_space<vmem>>, vector<8x8xf32>
      tpu.vector_store %arg10[%c0_63, %c8_64], %110 {strides = array<i32>} : memref<8x128xf32, #tpu.memory_space<vmem>>, vector<8x8xf32>,
      %c0_65 = arith.constant 0 : index
      %c0_66 = arith.constant 0 : index
      %c16 = arith.constant 16 : index
      %112 = vector.load %arg3[%c0_65, %c0_66, %c16] : memref<1x8x128xbf16, #tpu.memory_space<vmem>>, vector<1x8x8xbf16>
      %113 = vector.shape_cast %112 : vector<1x8x8xbf16> to vector<8x8xbf16>
      %c0_67 = arith.constant 0 : index
      %c0_68 = arith.constant 0 : index
      %c16_69 = arith.constant 16 : index
      %114 = vector.load %arg4[%c0_67, %c0_68, %c16_69] : memref<1x128x128xbf16, #tpu.memory_space<vmem>>, vector<1x128x8xbf16>
      %115 = vector.shape_cast %114 : vector<1x128x8xbf16> to vector<128x8xbf16>
      %c0_70 = arith.constant 0 : index
      %c0_71 = arith.constant 0 : index
      %c16_72 = arith.constant 16 : index
      %116 = vector.load %arg5[%c0_70, %c0_71, %c16_72] : memref<1x128x128xbf16, #tpu.memory_space<vmem>>, vector<1x128x8xbf16>
      %117 = vector.shape_cast %116 : vector<1x128x8xbf16> to vector<128x8xbf16>
      %cst_73 = arith.constant dense<0.000000e+00> : vector<8x128xf32>
      %118 = tpu.matmul %113, %115, %cst_73 {dimension_numbers = #tpu.dot_dimension_numbers<[1], [1], [0], [0], [0, 0, 1, 0], [], []>} : vector<8x8xbf16>, vector<128x8xbf16>, vector<8x128xf32> -> vector<8x128xf32>
      %119 = vector.broadcast %13 : vector<1x128xf32> to vector<8x128xf32>
      %120 = arith.addf %118, %119 : vector<8x128xf32>
      %121 = arith.addf %120, %25 : vector<8x128xf32>
      %c2 = arith.constant 2 : index
      %c0_74 = arith.constant 0 : index
      %c0_75 = arith.constant 0 : index
      %122 = vector.load %arg8[%c2, %c0_74, %c0_75] : memref<4x8x128xf32, #tpu.memory_space<vmem>>, vector<1x8x128xf32>
      %123 = vector.shape_cast %122 : vector<1x8x128xf32> to vector<8x128xf32>
      %cst_76 = arith.constant dense<0xFF800000> : vector<8xf32>
      %124 = vector.multi_reduction <maximumf>, %121, %cst_76 [1] : vector<8x128xf32> to vector<8xf32>
      %125 = vector.shape_cast %124 : vector<8xf32> to vector<8x1xf32>
      %126 = vector.broadcast %125 : vector<8x1xf32> to vector<8x128xf32>
      %127 = arith.maximumf %123, %126 : vector<8x128xf32>
      %128 = arith.subf %123, %127 : vector<8x128xf32>
      %129 = math.exp %128 : vector<8x128xf32>
      %130 = vector.extract_strided_slice %127 {offsets = [0, 0], sizes = [8, 1], strides = [1, 1]} : vector<8x128xf32> to vector<8x1xf32>
      %131 = vector.broadcast %130 : vector<8x1xf32> to vector<8x128xf32>
      %132 = arith.subf %121, %131 : vector<8x128xf32>
      %133 = math.exp %132 : vector<8x128xf32>
      %c2_77 = arith.constant 2 : index
      %c0_78 = arith.constant 0 : index
      %c0_79 = arith.constant 0 : index
      %134 = vector.load %arg9[%c2_77, %c0_78, %c0_79] : memref<4x8x128xf32, #tpu.memory_space<vmem>>, vector<1x8x128xf32>
      %135 = vector.shape_cast %134 : vector<1x8x128xf32> to vector<8x128xf32>
      %136 = arith.mulf %129, %135 : vector<8x128xf32>
      %cst_80 = arith.constant dense<0.000000e+00> : vector<8xf32>
      %137 = vector.multi_reduction <add>, %133, %cst_80 [1] : vector<8x128xf32> to vector<8xf32>
      %138 = vector.shape_cast %137 : vector<8xf32> to vector<8x1xf32>
      %139 = vector.broadcast %138 : vector<8x1xf32> to vector<8x128xf32>
      %140 = arith.addf %136, %139 : vector<8x128xf32>
      %c2_81 = arith.constant 2 : index
      %c0_82 = arith.constant 0 : index
      %c0_83 = arith.constant 0 : index
      %141 = vector.load %arg9[%c2_81, %c0_82, %c0_83] : memref<4x8x128xf32, #tpu.memory_space<vmem>>, vector<1x8x128xf32>
      %142 = vector.shape_cast %141 : vector<1x8x128xf32> to vector<8x128xf32>
      %143 = vector.shape_cast %140 : vector<8x128xf32> to vector<1x8x128xf32>
      tpu.vector_store %arg9[%c2_81, %c0_82, %c0_83], %143 {strides = array<i32>} : memref<4x8x128xf32, #tpu.memory_space<vmem>>, vector<1x8x128xf32>,
      %c2_84 = arith.constant 2 : index
      %c0_85 = arith.constant 0 : index
      %c0_86 = arith.constant 0 : index
      %144 = vector.load %arg8[%c2_84, %c0_85, %c0_86] : memref<4x8x128xf32, #tpu.memory_space<vmem>>, vector<1x8x128xf32>
      %145 = vector.shape_cast %144 : vector<1x8x128xf32> to vector<8x128xf32>
      %146 = vector.shape_cast %127 : vector<8x128xf32> to vector<1x8x128xf32>
      tpu.vector_store %arg8[%c2_84, %c0_85, %c0_86], %146 {strides = array<i32>} : memref<4x8x128xf32, #tpu.memory_space<vmem>>, vector<1x8x128xf32>,
      %147 = arith.truncf %133 : vector<8x128xf32> to vector<8x128xbf16>
      %cst_87 = arith.constant dense<0.000000e+00> : vector<8x8xf32>
      %148 = tpu.matmul %147, %117, %cst_87 {dimension_numbers = #tpu.dot_dimension_numbers<[1], [0], [0], [1], [0, 0, 1, 1], [], []>} : vector<8x128xbf16>, vector<128x8xbf16>, vector<8x8xf32> -> vector<8x8xf32>
      %149 = vector.extract_strided_slice %129 {offsets = [0, 0], sizes = [8, 1], strides = [1, 1]} : vector<8x128xf32> to vector<8x1xf32>
      %c0_88 = arith.constant 0 : index
      %c16_89 = arith.constant 16 : index
      %150 = vector.load %arg10[%c0_88, %c16_89] : memref<8x128xf32, #tpu.memory_space<vmem>>, vector<8x8xf32>
      %151 = vector.broadcast %149 : vector<8x1xf32> to vector<8x8xf32>
      %152 = arith.mulf %151, %150 : vector<8x8xf32>
      %153 = arith.addf %152, %148 : vector<8x8xf32>
      %c0_90 = arith.constant 0 : index
      %c16_91 = arith.constant 16 : index
      %154 = vector.load %arg10[%c0_90, %c16_91] : memref<8x128xf32, #tpu.memory_space<vmem>>, vector<8x8xf32>
      tpu.vector_store %arg10[%c0_90, %c16_91], %153 {strides = array<i32>} : memref<8x128xf32, #tpu.memory_space<vmem>>, vector<8x8xf32>,
      %c0_92 = arith.constant 0 : index
      %c0_93 = arith.constant 0 : index
      %c24 = arith.constant 24 : index
      %155 = vector.load %arg3[%c0_92, %c0_93, %c24] : memref<1x8x128xbf16, #tpu.memory_space<vmem>>, vector<1x8x8xbf16>
      %156 = vector.shape_cast %155 : vector<1x8x8xbf16> to vector<8x8xbf16>
      %c0_94 = arith.constant 0 : index
      %c0_95 = arith.constant 0 : index
      %c24_96 = arith.constant 24 : index
      %157 = vector.load %arg4[%c0_94, %c0_95, %c24_96] : memref<1x128x128xbf16, #tpu.memory_space<vmem>>, vector<1x128x8xbf16>
      %158 = vector.shape_cast %157 : vector<1x128x8xbf16> to vector<128x8xbf16>
      %c0_97 = arith.constant 0 : index
      %c0_98 = arith.constant 0 : index
      %c24_99 = arith.constant 24 : index
      %159 = vector.load %arg5[%c0_97, %c0_98, %c24_99] : memref<1x128x128xbf16, #tpu.memory_space<vmem>>, vector<1x128x8xbf16>
      %160 = vector.shape_cast %159 : vector<1x128x8xbf16> to vector<128x8xbf16>
      %cst_100 = arith.constant dense<0.000000e+00> : vector<8x128xf32>
      %161 = tpu.matmul %156, %158, %cst_100 {dimension_numbers = #tpu.dot_dimension_numbers<[1], [1], [0], [0], [0, 0, 1, 0], [], []>} : vector<8x8xbf16>, vector<128x8xbf16>, vector<8x128xf32> -> vector<8x128xf32>
      %162 = vector.broadcast %13 : vector<1x128xf32> to vector<8x128xf32>
      %163 = arith.addf %161, %162 : vector<8x128xf32>
      %164 = arith.addf %163, %25 : vector<8x128xf32>
      %c3 = arith.constant 3 : index
      %c0_101 = arith.constant 0 : index
      %c0_102 = arith.constant 0 : index
      %165 = vector.load %arg8[%c3, %c0_101, %c0_102] : memref<4x8x128xf32, #tpu.memory_space<vmem>>, vector<1x8x128xf32>
      %166 = vector.shape_cast %165 : vector<1x8x128xf32> to vector<8x128xf32>
      %cst_103 = arith.constant dense<0xFF800000> : vector<8xf32>
      %167 = vector.multi_reduction <maximumf>, %164, %cst_103 [1] : vector<8x128xf32> to vector<8xf32>
      %168 = vector.shape_cast %167 : vector<8xf32> to vector<8x1xf32>
      %169 = vector.broadcast %168 : vector<8x1xf32> to vector<8x128xf32>
      %170 = arith.maximumf %166, %169 : vector<8x128xf32>
      %171 = arith.subf %166, %170 : vector<8x128xf32>
      %172 = math.exp %171 : vector<8x128xf32>
      %173 = vector.extract_strided_slice %170 {offsets = [0, 0], sizes = [8, 1], strides = [1, 1]} : vector<8x128xf32> to vector<8x1xf32>
      %174 = vector.broadcast %173 : vector<8x1xf32> to vector<8x128xf32>
      %175 = arith.subf %164, %174 : vector<8x128xf32>
      %176 = math.exp %175 : vector<8x128xf32>
      %c3_104 = arith.constant 3 : index
      %c0_105 = arith.constant 0 : index
      %c0_106 = arith.constant 0 : index
      %177 = vector.load %arg9[%c3_104, %c0_105, %c0_106] : memref<4x8x128xf32, #tpu.memory_space<vmem>>, vector<1x8x128xf32>
      %178 = vector.shape_cast %177 : vector<1x8x128xf32> to vector<8x128xf32>
      %179 = arith.mulf %172, %178 : vector<8x128xf32>
      %cst_107 = arith.constant dense<0.000000e+00> : vector<8xf32>
      %180 = vector.multi_reduction <add>, %176, %cst_107 [1] : vector<8x128xf32> to vector<8xf32>
      %181 = vector.shape_cast %180 : vector<8xf32> to vector<8x1xf32>
      %182 = vector.broadcast %181 : vector<8x1xf32> to vector<8x128xf32>
      %183 = arith.addf %179, %182 : vector<8x128xf32>
      %c3_108 = arith.constant 3 : index
      %c0_109 = arith.constant 0 : index
      %c0_110 = arith.constant 0 : index
      %184 = vector.load %arg9[%c3_108, %c0_109, %c0_110] : memref<4x8x128xf32, #tpu.memory_space<vmem>>, vector<1x8x128xf32>
      %185 = vector.shape_cast %184 : vector<1x8x128xf32> to vector<8x128xf32>
      %186 = vector.shape_cast %183 : vector<8x128xf32> to vector<1x8x128xf32>
      tpu.vector_store %arg9[%c3_108, %c0_109, %c0_110], %186 {strides = array<i32>} : memref<4x8x128xf32, #tpu.memory_space<vmem>>, vector<1x8x128xf32>,
      %c3_111 = arith.constant 3 : index
      %c0_112 = arith.constant 0 : index
      %c0_113 = arith.constant 0 : index
      %187 = vector.load %arg8[%c3_111, %c0_112, %c0_113] : memref<4x8x128xf32, #tpu.memory_space<vmem>>, vector<1x8x128xf32>
      %188 = vector.shape_cast %187 : vector<1x8x128xf32> to vector<8x128xf32>
      %189 = vector.shape_cast %170 : vector<8x128xf32> to vector<1x8x128xf32>
      tpu.vector_store %arg8[%c3_111, %c0_112, %c0_113], %189 {strides = array<i32>} : memref<4x8x128xf32, #tpu.memory_space<vmem>>, vector<1x8x128xf32>,
      %190 = arith.truncf %176 : vector<8x128xf32> to vector<8x128xbf16>
      %cst_114 = arith.constant dense<0.000000e+00> : vector<8x8xf32>
      %191 = tpu.matmul %190, %160, %cst_114 {dimension_numbers = #tpu.dot_dimension_numbers<[1], [0], [0], [1], [0, 0, 1, 1], [], []>} : vector<8x128xbf16>, vector<128x8xbf16>, vector<8x8xf32> -> vector<8x8xf32>
      %192 = vector.extract_strided_slice %172 {offsets = [0, 0], sizes = [8, 1], strides = [1, 1]} : vector<8x128xf32> to vector<8x1xf32>
      %c0_115 = arith.constant 0 : index
      %c24_116 = arith.constant 24 : index
      %193 = vector.load %arg10[%c0_115, %c24_116] : memref<8x128xf32, #tpu.memory_space<vmem>>, vector<8x8xf32>
      %194 = vector.broadcast %192 : vector<8x1xf32> to vector<8x8xf32>
      %195 = arith.mulf %194, %193 : vector<8x8xf32>
      %196 = arith.addf %195, %191 : vector<8x8xf32>
      %c0_117 = arith.constant 0 : index
      %c24_118 = arith.constant 24 : index
      %197 = vector.load %arg10[%c0_117, %c24_118] : memref<8x128xf32, #tpu.memory_space<vmem>>, vector<8x8xf32>
      tpu.vector_store %arg10[%c0_117, %c24_118], %196 {strides = array<i32>} : memref<8x128xf32, #tpu.memory_space<vmem>>, vector<8x8xf32>,
    } else {
    }
    %c0_i32_2 = arith.constant 0 : i32
    %9 = arith.cmpi eq, %arg2, %c0_i32_2 : i32
    %10 = arith.extui %9 : i1 to i32
    %c0_i32_3 = arith.constant 0 : i32
    %11 = arith.cmpi ne, %10, %c0_i32_3 : i32
    scf.if %11 {
      %cst = arith.constant 0.000000e+00 : bf16
      %12 = vector.broadcast %cst : bf16 to vector<8x96xbf16>
      %c0 = arith.constant 0 : index
      %c0_4 = arith.constant 0 : index
      %c32 = arith.constant 32 : index
      %13 = vector.load %arg7[%c0, %c0_4, %c32] : memref<1x8x128xbf16, #tpu.memory_space<vmem>>, vector<1x8x96xbf16>
      %14 = vector.shape_cast %13 : vector<1x8x96xbf16> to vector<8x96xbf16>
      %15 = vector.shape_cast %12 : vector<8x96xbf16> to vector<1x8x96xbf16>
      tpu.vector_store %arg7[%c0, %c0_4, %c32], %15 {strides = array<i32>} : memref<1x8x128xbf16, #tpu.memory_space<vmem>>, vector<1x8x96xbf16>,
      %c0_5 = arith.constant 0 : index
      %c0_6 = arith.constant 0 : index
      %c0_7 = arith.constant 0 : index
      %16 = vector.load %arg9[%c0_5, %c0_6, %c0_7] : memref<4x8x128xf32, #tpu.memory_space<vmem>>, vector<1x8x1xf32>
      %17 = vector.shape_cast %16 : vector<1x8x1xf32> to vector<8x1xf32>
      %18 = tpu.reciprocal %17 {approx = true} : vector<8x1xf32> -> vector<8x1xf32>
      %c0_8 = arith.constant 0 : index
      %c0_9 = arith.constant 0 : index
      %19 = vector.load %arg10[%c0_8, %c0_9] : memref<8x128xf32, #tpu.memory_space<vmem>>, vector<8x8xf32>
      %20 = vector.broadcast %18 : vector<8x1xf32> to vector<8x8xf32>
      %21 = arith.mulf %19, %20 : vector<8x8xf32>
      %22 = arith.truncf %21 : vector<8x8xf32> to vector<8x8xbf16>
      %c0_10 = arith.constant 0 : index
      %c0_11 = arith.constant 0 : index
      %c0_12 = arith.constant 0 : index
      %23 = vector.load %arg7[%c0_10, %c0_11, %c0_12] : memref<1x8x128xbf16, #tpu.memory_space<vmem>>, vector<1x8x8xbf16>
      %24 = vector.shape_cast %23 : vector<1x8x8xbf16> to vector<8x8xbf16>
      %25 = vector.shape_cast %22 : vector<8x8xbf16> to vector<1x8x8xbf16>
      tpu.vector_store %arg7[%c0_10, %c0_11, %c0_12], %25 {strides = array<i32>} : memref<1x8x128xbf16, #tpu.memory_space<vmem>>, vector<1x8x8xbf16>,
      %c1 = arith.constant 1 : index
      %c0_13 = arith.constant 0 : index
      %c0_14 = arith.constant 0 : index
      %26 = vector.load %arg9[%c1, %c0_13, %c0_14] : memref<4x8x128xf32, #tpu.memory_space<vmem>>, vector<1x8x1xf32>
      %27 = vector.shape_cast %26 : vector<1x8x1xf32> to vector<8x1xf32>
      %28 = tpu.reciprocal %27 {approx = true} : vector<8x1xf32> -> vector<8x1xf32>
      %c0_15 = arith.constant 0 : index
      %c8 = arith.constant 8 : index
      %29 = vector.load %arg10[%c0_15, %c8] : memref<8x128xf32, #tpu.memory_space<vmem>>, vector<8x8xf32>
      %30 = vector.broadcast %28 : vector<8x1xf32> to vector<8x8xf32>
      %31 = arith.mulf %29, %30 : vector<8x8xf32>
      %32 = arith.truncf %31 : vector<8x8xf32> to vector<8x8xbf16>
      %c0_16 = arith.constant 0 : index
      %c0_17 = arith.constant 0 : index
      %c8_18 = arith.constant 8 : index
      %33 = vector.load %arg7[%c0_16, %c0_17, %c8_18] : memref<1x8x128xbf16, #tpu.memory_space<vmem>>, vector<1x8x8xbf16>
      %34 = vector.shape_cast %33 : vector<1x8x8xbf16> to vector<8x8xbf16>
      %35 = vector.shape_cast %32 : vector<8x8xbf16> to vector<1x8x8xbf16>
      tpu.vector_store %arg7[%c0_16, %c0_17, %c8_18], %35 {strides = array<i32>} : memref<1x8x128xbf16, #tpu.memory_space<vmem>>, vector<1x8x8xbf16>,
      %c2 = arith.constant 2 : index
      %c0_19 = arith.constant 0 : index
      %c0_20 = arith.constant 0 : index
      %36 = vector.load %arg9[%c2, %c0_19, %c0_20] : memref<4x8x128xf32, #tpu.memory_space<vmem>>, vector<1x8x1xf32>
      %37 = vector.shape_cast %36 : vector<1x8x1xf32> to vector<8x1xf32>
      %38 = tpu.reciprocal %37 {approx = true} : vector<8x1xf32> -> vector<8x1xf32>
      %c0_21 = arith.constant 0 : index
      %c16 = arith.constant 16 : index
      %39 = vector.load %arg10[%c0_21, %c16] : memref<8x128xf32, #tpu.memory_space<vmem>>, vector<8x8xf32>
      %40 = vector.broadcast %38 : vector<8x1xf32> to vector<8x8xf32>
      %41 = arith.mulf %39, %40 : vector<8x8xf32>
      %42 = arith.truncf %41 : vector<8x8xf32> to vector<8x8xbf16>
      %c0_22 = arith.constant 0 : index
      %c0_23 = arith.constant 0 : index
      %c16_24 = arith.constant 16 : index
      %43 = vector.load %arg7[%c0_22, %c0_23, %c16_24] : memref<1x8x128xbf16, #tpu.memory_space<vmem>>, vector<1x8x8xbf16>
      %44 = vector.shape_cast %43 : vector<1x8x8xbf16> to vector<8x8xbf16>
      %45 = vector.shape_cast %42 : vector<8x8xbf16> to vector<1x8x8xbf16>
      tpu.vector_store %arg7[%c0_22, %c0_23, %c16_24], %45 {strides = array<i32>} : memref<1x8x128xbf16, #tpu.memory_space<vmem>>, vector<1x8x8xbf16>,
      %c3 = arith.constant 3 : index
      %c0_25 = arith.constant 0 : index
      %c0_26 = arith.constant 0 : index
      %46 = vector.load %arg9[%c3, %c0_25, %c0_26] : memref<4x8x128xf32, #tpu.memory_space<vmem>>, vector<1x8x1xf32>
      %47 = vector.shape_cast %46 : vector<1x8x1xf32> to vector<8x1xf32>
      %48 = tpu.reciprocal %47 {approx = true} : vector<8x1xf32> -> vector<8x1xf32>
      %c0_27 = arith.constant 0 : index
      %c24 = arith.constant 24 : index
      %49 = vector.load %arg10[%c0_27, %c24] : memref<8x128xf32, #tpu.memory_space<vmem>>, vector<8x8xf32>
      %50 = vector.broadcast %48 : vector<8x1xf32> to vector<8x8xf32>
      %51 = arith.mulf %49, %50 : vector<8x8xf32>
      %52 = arith.truncf %51 : vector<8x8xf32> to vector<8x8xbf16>
      %c0_28 = arith.constant 0 : index
      %c0_29 = arith.constant 0 : index
      %c24_30 = arith.constant 24 : index
      %53 = vector.load %arg7[%c0_28, %c0_29, %c24_30] : memref<1x8x128xbf16, #tpu.memory_space<vmem>>, vector<1x8x8xbf16>
      %54 = vector.shape_cast %53 : vector<1x8x8xbf16> to vector<8x8xbf16>
      %55 = vector.shape_cast %52 : vector<8x8xbf16> to vector<1x8x8xbf16>
      tpu.vector_store %arg7[%c0_28, %c0_29, %c24_30], %55 {strides = array<i32>} : memref<1x8x128xbf16, #tpu.memory_space<vmem>>, vector<1x8x8xbf16>,
    } else {
    }
    return
  }
  func.func @transform_0(%arg0: i32, %arg1: i32, %arg2: i32) -> (i32, i32, i32) {
    %c0_i32 = arith.constant 0 : i32
    %c0_i32_0 = arith.constant 0 : i32
    return %arg0, %arg1, %c0_i32 : i32, i32, i32
  }
  func.func @transform_1(%arg0: i32, %arg1: i32, %arg2: i32) -> (i32, i32, i32) {
    %c1_i32 = arith.constant 1 : i32
    %c0_i32 = arith.constant 0 : i32
    return %arg0, %arg2, %c1_i32 : i32, i32, i32
  }
  func.func @transform_2(%arg0: i32, %arg1: i32, %arg2: i32) -> (i32, i32, i32) {
    %c2_i32 = arith.constant 2 : i32
    %c0_i32 = arith.constant 0 : i32
    return %arg0, %arg2, %c2_i32 : i32, i32, i32
  }
  func.func @transform_3(%arg0: i32, %arg1: i32, %arg2: i32) -> (i32, i32, i32) {
    %c0_i32 = arith.constant 0 : i32
    %c0_i32_0 = arith.constant 0 : i32
    return %arg0, %c0_i32, %arg2 : i32, i32, i32
  }
  func.func @transform_4(%arg0: i32, %arg1: i32, %arg2: i32) -> (i32, i32, i32) {
    %c0_i32 = arith.constant 0 : i32
    %c0_i32_0 = arith.constant 0 : i32
    return %arg0, %arg1, %c0_i32 : i32, i32, i32
  }
}

module attributes {stable_mosaic.version = 11 : i64} {
  func.func @_matmul_kernel(%arg0: i32, %arg1: i32, %arg2: i32, %arg3: memref<16x128xbf16, #tpu.memory_space<vmem>>, %arg4: memref<128x128xbf16, #tpu.memory_space<vmem>>, %arg5: memref<1x128xf32, #tpu.memory_space<vmem>>, %arg6: memref<16x128xbf16, #tpu.memory_space<vmem>>, %arg7: memref<16x128xf32, #tpu.memory_space<vmem>>) attributes {dimension_semantics = [#tpu.dimension_semantics<parallel>, #tpu.dimension_semantics<parallel>, #tpu.dimension_semantics<arbitrary>], iteration_bounds = array<i64: 1, 1, 1>, scalar_prefetch = 0 : i64, scratch_operands = 1 : i64, tpu.core_type = #tpu.core_type<tc>, window_params = [{transform_indices = @transform_0, window_bounds = array<i64: 16, 128>}, {transform_indices = @transform_1, window_bounds = array<i64: 128, 128>}, {transform_indices = @transform_2, window_bounds = array<i64: 1, 128>}, {transform_indices = @transform_3, window_bounds = array<i64: 16, 128>}]} {
    %c0_i32 = arith.constant 0 : i32
    %0 = arith.cmpi eq, %arg2, %c0_i32 : i32
    %1 = arith.extui %0 : i1 to i32
    %c0_i32_0 = arith.constant 0 : i32
    %2 = arith.cmpi ne, %1, %c0_i32_0 : i32
    scf.if %2 {
      %cst_10 = arith.constant 0.000000e+00 : f32
      %12 = vector.broadcast %cst_10 : f32 to vector<16x128xf32>
      %c0_11 = arith.constant 0 : index
      %c0_12 = arith.constant 0 : index
      %13 = vector.load %arg7[%c0_11, %c0_12] : memref<16x128xf32, #tpu.memory_space<vmem>>, vector<16x128xf32>
      tpu.vector_store %arg7[%c0_11, %c0_12], %12 {strides = array<i32>} : memref<16x128xf32, #tpu.memory_space<vmem>>, vector<16x128xf32>,
    } else {
    }
    %c0 = arith.constant 0 : index
    %c0_1 = arith.constant 0 : index
    %3 = vector.load %arg7[%c0, %c0_1] : memref<16x128xf32, #tpu.memory_space<vmem>>, vector<16x128xf32>
    %c0_2 = arith.constant 0 : index
    %c0_3 = arith.constant 0 : index
    %4 = vector.load %arg3[%c0_2, %c0_3] : memref<16x128xbf16, #tpu.memory_space<vmem>>, vector<16x128xbf16>
    %c0_4 = arith.constant 0 : index
    %c0_5 = arith.constant 0 : index
    %5 = vector.load %arg4[%c0_4, %c0_5] : memref<128x128xbf16, #tpu.memory_space<vmem>>, vector<128x128xbf16>
    %cst = arith.constant dense<0.000000e+00> : vector<16x128xf32>
    %6 = tpu.matmul %4, %5, %cst {dimension_numbers = #tpu.dot_dimension_numbers<[1], [0], [0], [1], [0, 0, 1, 1], [], []>} : vector<16x128xbf16>, vector<128x128xbf16>, vector<16x128xf32> -> vector<16x128xf32>
    %7 = arith.addf %3, %6 : vector<16x128xf32>
    %c0_6 = arith.constant 0 : index
    %c0_7 = arith.constant 0 : index
    %8 = vector.load %arg7[%c0_6, %c0_7] : memref<16x128xf32, #tpu.memory_space<vmem>>, vector<16x128xf32>
    tpu.vector_store %arg7[%c0_6, %c0_7], %7 {strides = array<i32>} : memref<16x128xf32, #tpu.memory_space<vmem>>, vector<16x128xf32>,
    %c0_i32_8 = arith.constant 0 : i32
    %9 = arith.cmpi eq, %arg2, %c0_i32_8 : i32
    %10 = arith.extui %9 : i1 to i32
    %c0_i32_9 = arith.constant 0 : i32
    %11 = arith.cmpi ne, %10, %c0_i32_9 : i32
    scf.if %11 {
      %c0_10 = arith.constant 0 : index
      %c0_11 = arith.constant 0 : index
      %12 = vector.load %arg7[%c0_10, %c0_11] : memref<16x128xf32, #tpu.memory_space<vmem>>, vector<16x128xf32>
      %c0_12 = arith.constant 0 : index
      %c0_13 = arith.constant 0 : index
      %13 = vector.load %arg5[%c0_12, %c0_13] : memref<1x128xf32, #tpu.memory_space<vmem>>, vector<1x128xf32>
      %14 = vector.broadcast %13 : vector<1x128xf32> to vector<16x128xf32>
      %15 = arith.addf %12, %14 : vector<16x128xf32>
      %16 = arith.truncf %15 : vector<16x128xf32> to vector<16x128xbf16>
      %c0_14 = arith.constant 0 : index
      %c0_15 = arith.constant 0 : index
      %17 = vector.load %arg6[%c0_14, %c0_15] : memref<16x128xbf16, #tpu.memory_space<vmem>>, vector<16x128xbf16>
      tpu.vector_store %arg6[%c0_14, %c0_15], %16 {strides = array<i32>} : memref<16x128xbf16, #tpu.memory_space<vmem>>, vector<16x128xbf16>,
    } else {
    }
    return
  }
  func.func @transform_0(%arg0: i32, %arg1: i32, %arg2: i32) -> (i32, i32) {
    %c0_i32 = arith.constant 0 : i32
    return %arg0, %arg2 : i32, i32
  }
  func.func @transform_1(%arg0: i32, %arg1: i32, %arg2: i32) -> (i32, i32) {
    %c0_i32 = arith.constant 0 : i32
    return %arg2, %arg1 : i32, i32
  }
  func.func @transform_2(%arg0: i32, %arg1: i32, %arg2: i32) -> (i32, i32) {
    %c0_i32 = arith.constant 0 : i32
    %c0_i32_0 = arith.constant 0 : i32
    return %c0_i32, %arg1 : i32, i32
  }
  func.func @transform_3(%arg0: i32, %arg1: i32, %arg2: i32) -> (i32, i32) {
    %c0_i32 = arith.constant 0 : i32
    return %arg0, %arg1 : i32, i32
  }
}

module attributes {stable_mosaic.version = 11 : i64} {
  func.func @_add_ln_kernel(%arg0: i32, %arg1: memref<16x128xbf16, #tpu.memory_space<vmem>>, %arg2: memref<16x128xf32, #tpu.memory_space<vmem>>, %arg3: memref<1x128xf32, #tpu.memory_space<vmem>>, %arg4: memref<1x128xf32, #tpu.memory_space<vmem>>, %arg5: memref<16x128xbf16, #tpu.memory_space<vmem>>) attributes {dimension_semantics = [#tpu.dimension_semantics<parallel>], iteration_bounds = array<i64: 1>, scalar_prefetch = 0 : i64, scratch_operands = 0 : i64, tpu.core_type = #tpu.core_type<tc>, window_params = [{transform_indices = @transform_0, window_bounds = array<i64: 16, 128>}, {transform_indices = @transform_1, window_bounds = array<i64: 16, 128>}, {pipeline_mode = #tpu.pipeline_mode<synchronous>, transform_indices = @transform_2, window_bounds = array<i64: 1, 128>}, {pipeline_mode = #tpu.pipeline_mode<synchronous>, transform_indices = @transform_3, window_bounds = array<i64: 1, 128>}, {transform_indices = @transform_4, window_bounds = array<i64: 16, 128>}]} {
    %c0 = arith.constant 0 : index
    %c0_0 = arith.constant 0 : index
    %0 = vector.load %arg1[%c0, %c0_0] : memref<16x128xbf16, #tpu.memory_space<vmem>>, vector<16x128xbf16>
    %1 = arith.extf %0 : vector<16x128xbf16> to vector<16x128xf32>
    %c0_1 = arith.constant 0 : index
    %c0_2 = arith.constant 0 : index
    %2 = vector.load %arg2[%c0_1, %c0_2] : memref<16x128xf32, #tpu.memory_space<vmem>>, vector<16x128xf32>
    %3 = arith.addf %1, %2 : vector<16x128xf32>
    %c0_3 = arith.constant 0 : index
    %c0_4 = arith.constant 0 : index
    %4 = vector.load %arg3[%c0_3, %c0_4] : memref<1x128xf32, #tpu.memory_space<vmem>>, vector<1x128xf32>
    %c0_5 = arith.constant 0 : index
    %c0_6 = arith.constant 0 : index
    %5 = vector.load %arg4[%c0_5, %c0_6] : memref<1x128xf32, #tpu.memory_space<vmem>>, vector<1x128xf32>
    %cst = arith.constant dense<0.000000e+00> : vector<16xf32>
    %6 = vector.multi_reduction <add>, %3, %cst [1] : vector<16x128xf32> to vector<16xf32>
    %7 = vector.shape_cast %6 : vector<16xf32> to vector<16x1xf32>
    %cst_7 = arith.constant 3.125000e-02 : f32
    %8 = vector.broadcast %cst_7 : f32 to vector<16x1xf32>
    %9 = arith.mulf %7, %8 : vector<16x1xf32>
    %10 = tpu.iota {dimensions = array<i32: 1>} : vector<16x128xi32>
    %c32_i32 = arith.constant 32 : i32
    %11 = vector.broadcast %c32_i32 : i32 to vector<16x128xi32>
    %12 = arith.cmpi slt, %10, %11 : vector<16x128xi32>
    %13 = vector.broadcast %9 : vector<16x1xf32> to vector<16x128xf32>
    %14 = arith.subf %3, %13 : vector<16x128xf32>
    %cst_8 = arith.constant 0.000000e+00 : f32
    %15 = vector.broadcast %cst_8 : f32 to vector<16x128xf32>
    %16 = arith.select %12, %14, %15 : vector<16x128xi1>, vector<16x128xf32>
    %17 = arith.mulf %16, %16 : vector<16x128xf32>
    %cst_9 = arith.constant dense<0.000000e+00> : vector<16xf32>
    %18 = vector.multi_reduction <add>, %17, %cst_9 [1] : vector<16x128xf32> to vector<16xf32>
    %19 = vector.shape_cast %18 : vector<16xf32> to vector<16x1xf32>
    %cst_10 = arith.constant 3.125000e-02 : f32
    %20 = vector.broadcast %cst_10 : f32 to vector<16x1xf32>
    %21 = arith.mulf %19, %20 : vector<16x1xf32>
    %22 = vector.broadcast %9 : vector<16x1xf32> to vector<16x128xf32>
    %23 = arith.subf %3, %22 : vector<16x128xf32>
    %cst_11 = arith.constant 9.99999997E-7 : f32
    %24 = vector.broadcast %cst_11 : f32 to vector<16x1xf32>
    %25 = arith.addf %21, %24 : vector<16x1xf32>
    %26 = math.rsqrt %25 : vector<16x1xf32>
    %27 = vector.broadcast %26 : vector<16x1xf32> to vector<16x128xf32>
    %28 = arith.mulf %23, %27 : vector<16x128xf32>
    %29 = vector.broadcast %4 : vector<1x128xf32> to vector<16x128xf32>
    %30 = arith.mulf %28, %29 : vector<16x128xf32>
    %31 = vector.broadcast %5 : vector<1x128xf32> to vector<16x128xf32>
    %32 = arith.addf %30, %31 : vector<16x128xf32>
    %33 = arith.truncf %32 : vector<16x128xf32> to vector<16x128xbf16>
    %c0_12 = arith.constant 0 : index
    %c0_13 = arith.constant 0 : index
    %34 = vector.load %arg5[%c0_12, %c0_13] : memref<16x128xbf16, #tpu.memory_space<vmem>>, vector<16x128xbf16>
    tpu.vector_store %arg5[%c0_12, %c0_13], %33 {strides = array<i32>} : memref<16x128xbf16, #tpu.memory_space<vmem>>, vector<16x128xbf16>,
    return
  }
  func.func @transform_0(%arg0: i32) -> (i32, i32) {
    %c0_i32 = arith.constant 0 : i32
    %c0_i32_0 = arith.constant 0 : i32
    return %arg0, %c0_i32 : i32, i32
  }
  func.func @transform_1(%arg0: i32) -> (i32, i32) {
    %c0_i32 = arith.constant 0 : i32
    %c0_i32_0 = arith.constant 0 : i32
    return %arg0, %c0_i32 : i32, i32
  }
  func.func @transform_2(%arg0: i32) -> (i32, i32) {
    %c0_i32 = arith.constant 0 : i32
    %c0_i32_0 = arith.constant 0 : i32
    %c0_i32_1 = arith.constant 0 : i32
    return %c0_i32, %c0_i32_0 : i32, i32
  }
  func.func @transform_3(%arg0: i32) -> (i32, i32) {
    %c0_i32 = arith.constant 0 : i32
    %c0_i32_0 = arith.constant 0 : i32
    %c0_i32_1 = arith.constant 0 : i32
    return %c0_i32, %c0_i32_0 : i32, i32
  }
  func.func @transform_4(%arg0: i32) -> (i32, i32) {
    %c0_i32 = arith.constant 0 : i32
    %c0_i32_0 = arith.constant 0 : i32
    return %arg0, %c0_i32 : i32, i32
  }
}

module attributes {stable_mosaic.version = 11 : i64} {
  func.func @_matmul_kernel(%arg0: i32, %arg1: i32, %arg2: i32, %arg3: memref<16x128xbf16, #tpu.memory_space<vmem>>, %arg4: memref<128x128xbf16, #tpu.memory_space<vmem>>, %arg5: memref<1x128xf32, #tpu.memory_space<vmem>>, %arg6: memref<16x128xbf16, #tpu.memory_space<vmem>>, %arg7: memref<16x128xf32, #tpu.memory_space<vmem>>) attributes {dimension_semantics = [#tpu.dimension_semantics<parallel>, #tpu.dimension_semantics<parallel>, #tpu.dimension_semantics<arbitrary>], iteration_bounds = array<i64: 1, 1, 1>, scalar_prefetch = 0 : i64, scratch_operands = 1 : i64, tpu.core_type = #tpu.core_type<tc>, window_params = [{transform_indices = @transform_0, window_bounds = array<i64: 16, 128>}, {transform_indices = @transform_1, window_bounds = array<i64: 128, 128>}, {transform_indices = @transform_2, window_bounds = array<i64: 1, 128>}, {transform_indices = @transform_3, window_bounds = array<i64: 16, 128>}]} {
    %c0_i32 = arith.constant 0 : i32
    %0 = arith.cmpi eq, %arg2, %c0_i32 : i32
    %1 = arith.extui %0 : i1 to i32
    %c0_i32_0 = arith.constant 0 : i32
    %2 = arith.cmpi ne, %1, %c0_i32_0 : i32
    scf.if %2 {
      %cst_10 = arith.constant 0.000000e+00 : f32
      %12 = vector.broadcast %cst_10 : f32 to vector<16x128xf32>
      %c0_11 = arith.constant 0 : index
      %c0_12 = arith.constant 0 : index
      %13 = vector.load %arg7[%c0_11, %c0_12] : memref<16x128xf32, #tpu.memory_space<vmem>>, vector<16x128xf32>
      tpu.vector_store %arg7[%c0_11, %c0_12], %12 {strides = array<i32>} : memref<16x128xf32, #tpu.memory_space<vmem>>, vector<16x128xf32>,
    } else {
    }
    %c0 = arith.constant 0 : index
    %c0_1 = arith.constant 0 : index
    %3 = vector.load %arg7[%c0, %c0_1] : memref<16x128xf32, #tpu.memory_space<vmem>>, vector<16x128xf32>
    %c0_2 = arith.constant 0 : index
    %c0_3 = arith.constant 0 : index
    %4 = vector.load %arg3[%c0_2, %c0_3] : memref<16x128xbf16, #tpu.memory_space<vmem>>, vector<16x128xbf16>
    %c0_4 = arith.constant 0 : index
    %c0_5 = arith.constant 0 : index
    %5 = vector.load %arg4[%c0_4, %c0_5] : memref<128x128xbf16, #tpu.memory_space<vmem>>, vector<128x128xbf16>
    %cst = arith.constant dense<0.000000e+00> : vector<16x128xf32>
    %6 = tpu.matmul %4, %5, %cst {dimension_numbers = #tpu.dot_dimension_numbers<[1], [0], [0], [1], [0, 0, 1, 1], [], []>} : vector<16x128xbf16>, vector<128x128xbf16>, vector<16x128xf32> -> vector<16x128xf32>
    %7 = arith.addf %3, %6 : vector<16x128xf32>
    %c0_6 = arith.constant 0 : index
    %c0_7 = arith.constant 0 : index
    %8 = vector.load %arg7[%c0_6, %c0_7] : memref<16x128xf32, #tpu.memory_space<vmem>>, vector<16x128xf32>
    tpu.vector_store %arg7[%c0_6, %c0_7], %7 {strides = array<i32>} : memref<16x128xf32, #tpu.memory_space<vmem>>, vector<16x128xf32>,
    %c0_i32_8 = arith.constant 0 : i32
    %9 = arith.cmpi eq, %arg2, %c0_i32_8 : i32
    %10 = arith.extui %9 : i1 to i32
    %c0_i32_9 = arith.constant 0 : i32
    %11 = arith.cmpi ne, %10, %c0_i32_9 : i32
    scf.if %11 {
      %c0_10 = arith.constant 0 : index
      %c0_11 = arith.constant 0 : index
      %12 = vector.load %arg7[%c0_10, %c0_11] : memref<16x128xf32, #tpu.memory_space<vmem>>, vector<16x128xf32>
      %c0_12 = arith.constant 0 : index
      %c0_13 = arith.constant 0 : index
      %13 = vector.load %arg5[%c0_12, %c0_13] : memref<1x128xf32, #tpu.memory_space<vmem>>, vector<1x128xf32>
      %14 = vector.broadcast %13 : vector<1x128xf32> to vector<16x128xf32>
      %15 = arith.addf %12, %14 : vector<16x128xf32>
      %cst_14 = arith.constant 0.000000e+00 : f32
      %16 = vector.broadcast %cst_14 : f32 to vector<16x128xf32>
      %17 = arith.maximumf %15, %16 : vector<16x128xf32>
      %18 = arith.truncf %17 : vector<16x128xf32> to vector<16x128xbf16>
      %c0_15 = arith.constant 0 : index
      %c0_16 = arith.constant 0 : index
      %19 = vector.load %arg6[%c0_15, %c0_16] : memref<16x128xbf16, #tpu.memory_space<vmem>>, vector<16x128xbf16>
      tpu.vector_store %arg6[%c0_15, %c0_16], %18 {strides = array<i32>} : memref<16x128xbf16, #tpu.memory_space<vmem>>, vector<16x128xbf16>,
    } else {
    }
    return
  }
  func.func @transform_0(%arg0: i32, %arg1: i32, %arg2: i32) -> (i32, i32) {
    %c0_i32 = arith.constant 0 : i32
    return %arg0, %arg2 : i32, i32
  }
  func.func @transform_1(%arg0: i32, %arg1: i32, %arg2: i32) -> (i32, i32) {
    %c0_i32 = arith.constant 0 : i32
    return %arg2, %arg1 : i32, i32
  }
  func.func @transform_2(%arg0: i32, %arg1: i32, %arg2: i32) -> (i32, i32) {
    %c0_i32 = arith.constant 0 : i32
    %c0_i32_0 = arith.constant 0 : i32
    return %c0_i32, %arg1 : i32, i32
  }
  func.func @transform_3(%arg0: i32, %arg1: i32, %arg2: i32) -> (i32, i32) {
    %c0_i32 = arith.constant 0 : i32
    return %arg0, %arg1 : i32, i32
  }
}

module attributes {stable_mosaic.version = 11 : i64} {
  func.func @_matmul_kernel(%arg0: i32, %arg1: i32, %arg2: i32, %arg3: memref<16x128xbf16, #tpu.memory_space<vmem>>, %arg4: memref<128x256xbf16, #tpu.memory_space<vmem>>, %arg5: memref<1x256xf32, #tpu.memory_space<vmem>>, %arg6: memref<16x256xbf16, #tpu.memory_space<vmem>>, %arg7: memref<16x256xf32, #tpu.memory_space<vmem>>) attributes {dimension_semantics = [#tpu.dimension_semantics<parallel>, #tpu.dimension_semantics<parallel>, #tpu.dimension_semantics<arbitrary>], iteration_bounds = array<i64: 1, 1, 1>, scalar_prefetch = 0 : i64, scratch_operands = 1 : i64, tpu.core_type = #tpu.core_type<tc>, window_params = [{transform_indices = @transform_0, window_bounds = array<i64: 16, 128>}, {transform_indices = @transform_1, window_bounds = array<i64: 128, 256>}, {transform_indices = @transform_2, window_bounds = array<i64: 1, 256>}, {transform_indices = @transform_3, window_bounds = array<i64: 16, 256>}]} {
    %c0_i32 = arith.constant 0 : i32
    %0 = arith.cmpi eq, %arg2, %c0_i32 : i32
    %1 = arith.extui %0 : i1 to i32
    %c0_i32_0 = arith.constant 0 : i32
    %2 = arith.cmpi ne, %1, %c0_i32_0 : i32
    scf.if %2 {
      %cst_10 = arith.constant 0.000000e+00 : f32
      %12 = vector.broadcast %cst_10 : f32 to vector<16x256xf32>
      %c0_11 = arith.constant 0 : index
      %c0_12 = arith.constant 0 : index
      %13 = vector.load %arg7[%c0_11, %c0_12] : memref<16x256xf32, #tpu.memory_space<vmem>>, vector<16x256xf32>
      tpu.vector_store %arg7[%c0_11, %c0_12], %12 {strides = array<i32>} : memref<16x256xf32, #tpu.memory_space<vmem>>, vector<16x256xf32>,
    } else {
    }
    %c0 = arith.constant 0 : index
    %c0_1 = arith.constant 0 : index
    %3 = vector.load %arg7[%c0, %c0_1] : memref<16x256xf32, #tpu.memory_space<vmem>>, vector<16x256xf32>
    %c0_2 = arith.constant 0 : index
    %c0_3 = arith.constant 0 : index
    %4 = vector.load %arg3[%c0_2, %c0_3] : memref<16x128xbf16, #tpu.memory_space<vmem>>, vector<16x128xbf16>
    %c0_4 = arith.constant 0 : index
    %c0_5 = arith.constant 0 : index
    %5 = vector.load %arg4[%c0_4, %c0_5] : memref<128x256xbf16, #tpu.memory_space<vmem>>, vector<128x256xbf16>
    %cst = arith.constant dense<0.000000e+00> : vector<16x256xf32>
    %6 = tpu.matmul %4, %5, %cst {dimension_numbers = #tpu.dot_dimension_numbers<[1], [0], [0], [1], [0, 0, 1, 1], [], []>} : vector<16x128xbf16>, vector<128x256xbf16>, vector<16x256xf32> -> vector<16x256xf32>
    %7 = arith.addf %3, %6 : vector<16x256xf32>
    %c0_6 = arith.constant 0 : index
    %c0_7 = arith.constant 0 : index
    %8 = vector.load %arg7[%c0_6, %c0_7] : memref<16x256xf32, #tpu.memory_space<vmem>>, vector<16x256xf32>
    tpu.vector_store %arg7[%c0_6, %c0_7], %7 {strides = array<i32>} : memref<16x256xf32, #tpu.memory_space<vmem>>, vector<16x256xf32>,
    %c0_i32_8 = arith.constant 0 : i32
    %9 = arith.cmpi eq, %arg2, %c0_i32_8 : i32
    %10 = arith.extui %9 : i1 to i32
    %c0_i32_9 = arith.constant 0 : i32
    %11 = arith.cmpi ne, %10, %c0_i32_9 : i32
    scf.if %11 {
      %c0_10 = arith.constant 0 : index
      %c0_11 = arith.constant 0 : index
      %12 = vector.load %arg7[%c0_10, %c0_11] : memref<16x256xf32, #tpu.memory_space<vmem>>, vector<16x256xf32>
      %c0_12 = arith.constant 0 : index
      %c0_13 = arith.constant 0 : index
      %13 = vector.load %arg5[%c0_12, %c0_13] : memref<1x256xf32, #tpu.memory_space<vmem>>, vector<1x256xf32>
      %14 = vector.broadcast %13 : vector<1x256xf32> to vector<16x256xf32>
      %15 = arith.addf %12, %14 : vector<16x256xf32>
      %16 = arith.truncf %15 : vector<16x256xf32> to vector<16x256xbf16>
      %c0_14 = arith.constant 0 : index
      %c0_15 = arith.constant 0 : index
      %17 = vector.load %arg6[%c0_14, %c0_15] : memref<16x256xbf16, #tpu.memory_space<vmem>>, vector<16x256xbf16>
      tpu.vector_store %arg6[%c0_14, %c0_15], %16 {strides = array<i32>} : memref<16x256xbf16, #tpu.memory_space<vmem>>, vector<16x256xbf16>,
    } else {
    }
    return
  }
  func.func @transform_0(%arg0: i32, %arg1: i32, %arg2: i32) -> (i32, i32) {
    %c0_i32 = arith.constant 0 : i32
    return %arg0, %arg2 : i32, i32
  }
  func.func @transform_1(%arg0: i32, %arg1: i32, %arg2: i32) -> (i32, i32) {
    %c0_i32 = arith.constant 0 : i32
    return %arg2, %arg1 : i32, i32
  }
  func.func @transform_2(%arg0: i32, %arg1: i32, %arg2: i32) -> (i32, i32) {
    %c0_i32 = arith.constant 0 : i32
    %c0_i32_0 = arith.constant 0 : i32
    return %c0_i32, %arg1 : i32, i32
  }
  func.func @transform_3(%arg0: i32, %arg1: i32, %arg2: i32) -> (i32, i32) {
    %c0_i32 = arith.constant 0 : i32
    return %arg0, %arg1 : i32, i32
  }
}

module attributes {stable_mosaic.version = 11 : i64} {
  func.func @_flash_kernel(%arg0: i32, %arg1: i32, %arg2: i32, %arg3: memref<1x8x128xbf16, #tpu.memory_space<vmem>>, %arg4: memref<1x128x128xbf16, #tpu.memory_space<vmem>>, %arg5: memref<1x128x128xbf16, #tpu.memory_space<vmem>>, %arg6: memref<1x1x128xf32, #tpu.memory_space<vmem>>, %arg7: memref<1x8x128xbf16, #tpu.memory_space<vmem>>, %arg8: memref<4x8x128xf32, #tpu.memory_space<vmem>>, %arg9: memref<4x8x128xf32, #tpu.memory_space<vmem>>, %arg10: memref<8x128xf32, #tpu.memory_space<vmem>>) attributes {dimension_semantics = [#tpu.dimension_semantics<parallel>, #tpu.dimension_semantics<parallel>, #tpu.dimension_semantics<arbitrary>], iteration_bounds = array<i64: 2, 1, 1>, scalar_prefetch = 0 : i64, scratch_operands = 3 : i64, tpu.core_type = #tpu.core_type<tc>, window_params = [{transform_indices = @transform_0, window_bounds = array<i64: 1, 8, 128>}, {transform_indices = @transform_1, window_bounds = array<i64: 1, 128, 128>}, {transform_indices = @transform_2, window_bounds = array<i64: 1, 128, 128>}, {transform_indices = @transform_3, window_bounds = array<i64: 1, 1, 128>}, {transform_indices = @transform_4, window_bounds = array<i64: 1, 8, 128>}]} {
    %c0_i32 = arith.constant 0 : i32
    %0 = arith.cmpi eq, %arg2, %c0_i32 : i32
    %1 = arith.extui %0 : i1 to i32
    %c0_i32_0 = arith.constant 0 : i32
    %2 = arith.cmpi ne, %1, %c0_i32_0 : i32
    scf.if %2 {
      %cst_114 = arith.constant -1.000000e+30 : f32
      %176 = vector.broadcast %cst_114 : f32 to vector<4x8x128xf32>
      %c0_115 = arith.constant 0 : index
      %c0_116 = arith.constant 0 : index
      %c0_117 = arith.constant 0 : index
      %177 = vector.load %arg8[%c0_115, %c0_116, %c0_117] : memref<4x8x128xf32, #tpu.memory_space<vmem>>, vector<4x8x128xf32>
      tpu.vector_store %arg8[%c0_115, %c0_116, %c0_117], %176 {strides = array<i32>} : memref<4x8x128xf32, #tpu.memory_space<vmem>>, vector<4x8x128xf32>,
      %cst_118 = arith.constant 0.000000e+00 : f32
      %178 = vector.broadcast %cst_118 : f32 to vector<4x8x128xf32>
      %c0_119 = arith.constant 0 : index
      %c0_120 = arith.constant 0 : index
      %c0_121 = arith.constant 0 : index
      %179 = vector.load %arg9[%c0_119, %c0_120, %c0_121] : memref<4x8x128xf32, #tpu.memory_space<vmem>>, vector<4x8x128xf32>
      tpu.vector_store %arg9[%c0_119, %c0_120, %c0_121], %178 {strides = array<i32>} : memref<4x8x128xf32, #tpu.memory_space<vmem>>, vector<4x8x128xf32>,
      %cst_122 = arith.constant 0.000000e+00 : f32
      %180 = vector.broadcast %cst_122 : f32 to vector<8x128xf32>
      %c0_123 = arith.constant 0 : index
      %c0_124 = arith.constant 0 : index
      %181 = vector.load %arg10[%c0_123, %c0_124] : memref<8x128xf32, #tpu.memory_space<vmem>>, vector<8x128xf32>
      tpu.vector_store %arg10[%c0_123, %c0_124], %180 {strides = array<i32>} : memref<8x128xf32, #tpu.memory_space<vmem>>, vector<8x128xf32>,
    } else {
    }
    %c0 = arith.constant 0 : index
    %c0_1 = arith.constant 0 : index
    %c0_2 = arith.constant 0 : index
    %3 = vector.load %arg6[%c0, %c0_1, %c0_2] : memref<1x1x128xf32, #tpu.memory_space<vmem>>, vector<1x1x128xf32>
    %4 = vector.shape_cast %3 : vector<1x1x128xf32> to vector<1x128xf32>
    %c0_3 = arith.constant 0 : index
    %c0_4 = arith.constant 0 : index
    %c0_5 = arith.constant 0 : index
    %5 = vector.load %arg3[%c0_3, %c0_4, %c0_5] : memref<1x8x128xbf16, #tpu.memory_space<vmem>>, vector<1x8x8xbf16>
    %6 = vector.shape_cast %5 : vector<1x8x8xbf16> to vector<8x8xbf16>
    %c0_6 = arith.constant 0 : index
    %c0_7 = arith.constant 0 : index
    %c0_8 = arith.constant 0 : index
    %7 = vector.load %arg4[%c0_6, %c0_7, %c0_8] : memref<1x128x128xbf16, #tpu.memory_space<vmem>>, vector<1x128x8xbf16>
    %8 = vector.shape_cast %7 : vector<1x128x8xbf16> to vector<128x8xbf16>
    %c0_9 = arith.constant 0 : index
    %c0_10 = arith.constant 0 : index
    %c0_11 = arith.constant 0 : index
    %9 = vector.load %arg5[%c0_9, %c0_10, %c0_11] : memref<1x128x128xbf16, #tpu.memory_space<vmem>>, vector<1x128x8xbf16>
    %10 = vector.shape_cast %9 : vector<1x128x8xbf16> to vector<128x8xbf16>
    %cst = arith.constant dense<0.000000e+00> : vector<8x128xf32>
    %11 = tpu.matmul %6, %8, %cst {dimension_numbers = #tpu.dot_dimension_numbers<[1], [1], [0], [0], [0, 0, 1, 0], [], []>} : vector<8x8xbf16>, vector<128x8xbf16>, vector<8x128xf32> -> vector<8x128xf32>
    %12 = vector.broadcast %4 : vector<1x128xf32> to vector<8x128xf32>
    %13 = arith.addf %11, %12 : vector<8x128xf32>
    %c0_12 = arith.constant 0 : index
    %c0_13 = arith.constant 0 : index
    %c0_14 = arith.constant 0 : index
    %14 = vector.load %arg8[%c0_12, %c0_13, %c0_14] : memref<4x8x128xf32, #tpu.memory_space<vmem>>, vector<1x8x128xf32>
    %15 = vector.shape_cast %14 : vector<1x8x128xf32> to vector<8x128xf32>
    %cst_15 = arith.constant dense<0xFF800000> : vector<8xf32>
    %16 = vector.multi_reduction <maximumf>, %13, %cst_15 [1] : vector<8x128xf32> to vector<8xf32>
    %17 = vector.shape_cast %16 : vector<8xf32> to vector<8x1xf32>
    %18 = vector.broadcast %17 : vector<8x1xf32> to vector<8x128xf32>
    %19 = arith.maximumf %15, %18 : vector<8x128xf32>
    %20 = arith.subf %15, %19 : vector<8x128xf32>
    %21 = math.exp %20 : vector<8x128xf32>
    %22 = vector.extract_strided_slice %19 {offsets = [0, 0], sizes = [8, 1], strides = [1, 1]} : vector<8x128xf32> to vector<8x1xf32>
    %23 = vector.broadcast %22 : vector<8x1xf32> to vector<8x128xf32>
    %24 = arith.subf %13, %23 : vector<8x128xf32>
    %25 = math.exp %24 : vector<8x128xf32>
    %c0_16 = arith.constant 0 : index
    %c0_17 = arith.constant 0 : index
    %c0_18 = arith.constant 0 : index
    %26 = vector.load %arg9[%c0_16, %c0_17, %c0_18] : memref<4x8x128xf32, #tpu.memory_space<vmem>>, vector<1x8x128xf32>
    %27 = vector.shape_cast %26 : vector<1x8x128xf32> to vector<8x128xf32>
    %28 = arith.mulf %21, %27 : vector<8x128xf32>
    %cst_19 = arith.constant dense<0.000000e+00> : vector<8xf32>
    %29 = vector.multi_reduction <add>, %25, %cst_19 [1] : vector<8x128xf32> to vector<8xf32>
    %30 = vector.shape_cast %29 : vector<8xf32> to vector<8x1xf32>
    %31 = vector.broadcast %30 : vector<8x1xf32> to vector<8x128xf32>
    %32 = arith.addf %28, %31 : vector<8x128xf32>
    %c0_20 = arith.constant 0 : index
    %c0_21 = arith.constant 0 : index
    %c0_22 = arith.constant 0 : index
    %33 = vector.load %arg9[%c0_20, %c0_21, %c0_22] : memref<4x8x128xf32, #tpu.memory_space<vmem>>, vector<1x8x128xf32>
    %34 = vector.shape_cast %33 : vector<1x8x128xf32> to vector<8x128xf32>
    %35 = vector.shape_cast %32 : vector<8x128xf32> to vector<1x8x128xf32>
    tpu.vector_store %arg9[%c0_20, %c0_21, %c0_22], %35 {strides = array<i32>} : memref<4x8x128xf32, #tpu.memory_space<vmem>>, vector<1x8x128xf32>,
    %c0_23 = arith.constant 0 : index
    %c0_24 = arith.constant 0 : index
    %c0_25 = arith.constant 0 : index
    %36 = vector.load %arg8[%c0_23, %c0_24, %c0_25] : memref<4x8x128xf32, #tpu.memory_space<vmem>>, vector<1x8x128xf32>
    %37 = vector.shape_cast %36 : vector<1x8x128xf32> to vector<8x128xf32>
    %38 = vector.shape_cast %19 : vector<8x128xf32> to vector<1x8x128xf32>
    tpu.vector_store %arg8[%c0_23, %c0_24, %c0_25], %38 {strides = array<i32>} : memref<4x8x128xf32, #tpu.memory_space<vmem>>, vector<1x8x128xf32>,
    %39 = arith.truncf %25 : vector<8x128xf32> to vector<8x128xbf16>
    %cst_26 = arith.constant dense<0.000000e+00> : vector<8x8xf32>
    %40 = tpu.matmul %39, %10, %cst_26 {dimension_numbers = #tpu.dot_dimension_numbers<[1], [0], [0], [1], [0, 0, 1, 1], [], []>} : vector<8x128xbf16>, vector<128x8xbf16>, vector<8x8xf32> -> vector<8x8xf32>
    %41 = vector.extract_strided_slice %21 {offsets = [0, 0], sizes = [8, 1], strides = [1, 1]} : vector<8x128xf32> to vector<8x1xf32>
    %c0_27 = arith.constant 0 : index
    %c0_28 = arith.constant 0 : index
    %42 = vector.load %arg10[%c0_27, %c0_28] : memref<8x128xf32, #tpu.memory_space<vmem>>, vector<8x8xf32>
    %43 = vector.broadcast %41 : vector<8x1xf32> to vector<8x8xf32>
    %44 = arith.mulf %43, %42 : vector<8x8xf32>
    %45 = arith.addf %44, %40 : vector<8x8xf32>
    %c0_29 = arith.constant 0 : index
    %c0_30 = arith.constant 0 : index
    %46 = vector.load %arg10[%c0_29, %c0_30] : memref<8x128xf32, #tpu.memory_space<vmem>>, vector<8x8xf32>
    tpu.vector_store %arg10[%c0_29, %c0_30], %45 {strides = array<i32>} : memref<8x128xf32, #tpu.memory_space<vmem>>, vector<8x8xf32>,
    %c0_31 = arith.constant 0 : index
    %c0_32 = arith.constant 0 : index
    %c8 = arith.constant 8 : index
    %47 = vector.load %arg3[%c0_31, %c0_32, %c8] : memref<1x8x128xbf16, #tpu.memory_space<vmem>>, vector<1x8x8xbf16>
    %48 = vector.shape_cast %47 : vector<1x8x8xbf16> to vector<8x8xbf16>
    %c0_33 = arith.constant 0 : index
    %c0_34 = arith.constant 0 : index
    %c8_35 = arith.constant 8 : index
    %49 = vector.load %arg4[%c0_33, %c0_34, %c8_35] : memref<1x128x128xbf16, #tpu.memory_space<vmem>>, vector<1x128x8xbf16>
    %50 = vector.shape_cast %49 : vector<1x128x8xbf16> to vector<128x8xbf16>
    %c0_36 = arith.constant 0 : index
    %c0_37 = arith.constant 0 : index
    %c8_38 = arith.constant 8 : index
    %51 = vector.load %arg5[%c0_36, %c0_37, %c8_38] : memref<1x128x128xbf16, #tpu.memory_space<vmem>>, vector<1x128x8xbf16>
    %52 = vector.shape_cast %51 : vector<1x128x8xbf16> to vector<128x8xbf16>
    %cst_39 = arith.constant dense<0.000000e+00> : vector<8x128xf32>
    %53 = tpu.matmul %48, %50, %cst_39 {dimension_numbers = #tpu.dot_dimension_numbers<[1], [1], [0], [0], [0, 0, 1, 0], [], []>} : vector<8x8xbf16>, vector<128x8xbf16>, vector<8x128xf32> -> vector<8x128xf32>
    %54 = vector.broadcast %4 : vector<1x128xf32> to vector<8x128xf32>
    %55 = arith.addf %53, %54 : vector<8x128xf32>
    %c1 = arith.constant 1 : index
    %c0_40 = arith.constant 0 : index
    %c0_41 = arith.constant 0 : index
    %56 = vector.load %arg8[%c1, %c0_40, %c0_41] : memref<4x8x128xf32, #tpu.memory_space<vmem>>, vector<1x8x128xf32>
    %57 = vector.shape_cast %56 : vector<1x8x128xf32> to vector<8x128xf32>
    %cst_42 = arith.constant dense<0xFF800000> : vector<8xf32>
    %58 = vector.multi_reduction <maximumf>, %55, %cst_42 [1] : vector<8x128xf32> to vector<8xf32>
    %59 = vector.shape_cast %58 : vector<8xf32> to vector<8x1xf32>
    %60 = vector.broadcast %59 : vector<8x1xf32> to vector<8x128xf32>
    %61 = arith.maximumf %57, %60 : vector<8x128xf32>
    %62 = arith.subf %57, %61 : vector<8x128xf32>
    %63 = math.exp %62 : vector<8x128xf32>
    %64 = vector.extract_strided_slice %61 {offsets = [0, 0], sizes = [8, 1], strides = [1, 1]} : vector<8x128xf32> to vector<8x1xf32>
    %65 = vector.broadcast %64 : vector<8x1xf32> to vector<8x128xf32>
    %66 = arith.subf %55, %65 : vector<8x128xf32>
    %67 = math.exp %66 : vector<8x128xf32>
    %c1_43 = arith.constant 1 : index
    %c0_44 = arith.constant 0 : index
    %c0_45 = arith.constant 0 : index
    %68 = vector.load %arg9[%c1_43, %c0_44, %c0_45] : memref<4x8x128xf32, #tpu.memory_space<vmem>>, vector<1x8x128xf32>
    %69 = vector.shape_cast %68 : vector<1x8x128xf32> to vector<8x128xf32>
    %70 = arith.mulf %63, %69 : vector<8x128xf32>
    %cst_46 = arith.constant dense<0.000000e+00> : vector<8xf32>
    %71 = vector.multi_reduction <add>, %67, %cst_46 [1] : vector<8x128xf32> to vector<8xf32>
    %72 = vector.shape_cast %71 : vector<8xf32> to vector<8x1xf32>
    %73 = vector.broadcast %72 : vector<8x1xf32> to vector<8x128xf32>
    %74 = arith.addf %70, %73 : vector<8x128xf32>
    %c1_47 = arith.constant 1 : index
    %c0_48 = arith.constant 0 : index
    %c0_49 = arith.constant 0 : index
    %75 = vector.load %arg9[%c1_47, %c0_48, %c0_49] : memref<4x8x128xf32, #tpu.memory_space<vmem>>, vector<1x8x128xf32>
    %76 = vector.shape_cast %75 : vector<1x8x128xf32> to vector<8x128xf32>
    %77 = vector.shape_cast %74 : vector<8x128xf32> to vector<1x8x128xf32>
    tpu.vector_store %arg9[%c1_47, %c0_48, %c0_49], %77 {strides = array<i32>} : memref<4x8x128xf32, #tpu.memory_space<vmem>>, vector<1x8x128xf32>,
    %c1_50 = arith.constant 1 : index
    %c0_51 = arith.constant 0 : index
    %c0_52 = arith.constant 0 : index
    %78 = vector.load %arg8[%c1_50, %c0_51, %c0_52] : memref<4x8x128xf32, #tpu.memory_space<vmem>>, vector<1x8x128xf32>
    %79 = vector.shape_cast %78 : vector<1x8x128xf32> to vector<8x128xf32>
    %80 = vector.shape_cast %61 : vector<8x128xf32> to vector<1x8x128xf32>
    tpu.vector_store %arg8[%c1_50, %c0_51, %c0_52], %80 {strides = array<i32>} : memref<4x8x128xf32, #tpu.memory_space<vmem>>, vector<1x8x128xf32>,
    %81 = arith.truncf %67 : vector<8x128xf32> to vector<8x128xbf16>
    %cst_53 = arith.constant dense<0.000000e+00> : vector<8x8xf32>
    %82 = tpu.matmul %81, %52, %cst_53 {dimension_numbers = #tpu.dot_dimension_numbers<[1], [0], [0], [1], [0, 0, 1, 1], [], []>} : vector<8x128xbf16>, vector<128x8xbf16>, vector<8x8xf32> -> vector<8x8xf32>
    %83 = vector.extract_strided_slice %63 {offsets = [0, 0], sizes = [8, 1], strides = [1, 1]} : vector<8x128xf32> to vector<8x1xf32>
    %c0_54 = arith.constant 0 : index
    %c8_55 = arith.constant 8 : index
    %84 = vector.load %arg10[%c0_54, %c8_55] : memref<8x128xf32, #tpu.memory_space<vmem>>, vector<8x8xf32>
    %85 = vector.broadcast %83 : vector<8x1xf32> to vector<8x8xf32>
    %86 = arith.mulf %85, %84 : vector<8x8xf32>
    %87 = arith.addf %86, %82 : vector<8x8xf32>
    %c0_56 = arith.constant 0 : index
    %c8_57 = arith.constant 8 : index
    %88 = vector.load %arg10[%c0_56, %c8_57] : memref<8x128xf32, #tpu.memory_space<vmem>>, vector<8x8xf32>
    tpu.vector_store %arg10[%c0_56, %c8_57], %87 {strides = array<i32>} : memref<8x128xf32, #tpu.memory_space<vmem>>, vector<8x8xf32>,
    %c0_58 = arith.constant 0 : index
    %c0_59 = arith.constant 0 : index
    %c16 = arith.constant 16 : index
    %89 = vector.load %arg3[%c0_58, %c0_59, %c16] : memref<1x8x128xbf16, #tpu.memory_space<vmem>>, vector<1x8x8xbf16>
    %90 = vector.shape_cast %89 : vector<1x8x8xbf16> to vector<8x8xbf16>
    %c0_60 = arith.constant 0 : index
    %c0_61 = arith.constant 0 : index
    %c16_62 = arith.constant 16 : index
    %91 = vector.load %arg4[%c0_60, %c0_61, %c16_62] : memref<1x128x128xbf16, #tpu.memory_space<vmem>>, vector<1x128x8xbf16>
    %92 = vector.shape_cast %91 : vector<1x128x8xbf16> to vector<128x8xbf16>
    %c0_63 = arith.constant 0 : index
    %c0_64 = arith.constant 0 : index
    %c16_65 = arith.constant 16 : index
    %93 = vector.load %arg5[%c0_63, %c0_64, %c16_65] : memref<1x128x128xbf16, #tpu.memory_space<vmem>>, vector<1x128x8xbf16>
    %94 = vector.shape_cast %93 : vector<1x128x8xbf16> to vector<128x8xbf16>
    %cst_66 = arith.constant dense<0.000000e+00> : vector<8x128xf32>
    %95 = tpu.matmul %90, %92, %cst_66 {dimension_numbers = #tpu.dot_dimension_numbers<[1], [1], [0], [0], [0, 0, 1, 0], [], []>} : vector<8x8xbf16>, vector<128x8xbf16>, vector<8x128xf32> -> vector<8x128xf32>
    %96 = vector.broadcast %4 : vector<1x128xf32> to vector<8x128xf32>
    %97 = arith.addf %95, %96 : vector<8x128xf32>
    %c2 = arith.constant 2 : index
    %c0_67 = arith.constant 0 : index
    %c0_68 = arith.constant 0 : index
    %98 = vector.load %arg8[%c2, %c0_67, %c0_68] : memref<4x8x128xf32, #tpu.memory_space<vmem>>, vector<1x8x128xf32>
    %99 = vector.shape_cast %98 : vector<1x8x128xf32> to vector<8x128xf32>
    %cst_69 = arith.constant dense<0xFF800000> : vector<8xf32>
    %100 = vector.multi_reduction <maximumf>, %97, %cst_69 [1] : vector<8x128xf32> to vector<8xf32>
    %101 = vector.shape_cast %100 : vector<8xf32> to vector<8x1xf32>
    %102 = vector.broadcast %101 : vector<8x1xf32> to vector<8x128xf32>
    %103 = arith.maximumf %99, %102 : vector<8x128xf32>
    %104 = arith.subf %99, %103 : vector<8x128xf32>
    %105 = math.exp %104 : vector<8x128xf32>
    %106 = vector.extract_strided_slice %103 {offsets = [0, 0], sizes = [8, 1], strides = [1, 1]} : vector<8x128xf32> to vector<8x1xf32>
    %107 = vector.broadcast %106 : vector<8x1xf32> to vector<8x128xf32>
    %108 = arith.subf %97, %107 : vector<8x128xf32>
    %109 = math.exp %108 : vector<8x128xf32>
    %c2_70 = arith.constant 2 : index
    %c0_71 = arith.constant 0 : index
    %c0_72 = arith.constant 0 : index
    %110 = vector.load %arg9[%c2_70, %c0_71, %c0_72] : memref<4x8x128xf32, #tpu.memory_space<vmem>>, vector<1x8x128xf32>
    %111 = vector.shape_cast %110 : vector<1x8x128xf32> to vector<8x128xf32>
    %112 = arith.mulf %105, %111 : vector<8x128xf32>
    %cst_73 = arith.constant dense<0.000000e+00> : vector<8xf32>
    %113 = vector.multi_reduction <add>, %109, %cst_73 [1] : vector<8x128xf32> to vector<8xf32>
    %114 = vector.shape_cast %113 : vector<8xf32> to vector<8x1xf32>
    %115 = vector.broadcast %114 : vector<8x1xf32> to vector<8x128xf32>
    %116 = arith.addf %112, %115 : vector<8x128xf32>
    %c2_74 = arith.constant 2 : index
    %c0_75 = arith.constant 0 : index
    %c0_76 = arith.constant 0 : index
    %117 = vector.load %arg9[%c2_74, %c0_75, %c0_76] : memref<4x8x128xf32, #tpu.memory_space<vmem>>, vector<1x8x128xf32>
    %118 = vector.shape_cast %117 : vector<1x8x128xf32> to vector<8x128xf32>
    %119 = vector.shape_cast %116 : vector<8x128xf32> to vector<1x8x128xf32>
    tpu.vector_store %arg9[%c2_74, %c0_75, %c0_76], %119 {strides = array<i32>} : memref<4x8x128xf32, #tpu.memory_space<vmem>>, vector<1x8x128xf32>,
    %c2_77 = arith.constant 2 : index
    %c0_78 = arith.constant 0 : index
    %c0_79 = arith.constant 0 : index
    %120 = vector.load %arg8[%c2_77, %c0_78, %c0_79] : memref<4x8x128xf32, #tpu.memory_space<vmem>>, vector<1x8x128xf32>
    %121 = vector.shape_cast %120 : vector<1x8x128xf32> to vector<8x128xf32>
    %122 = vector.shape_cast %103 : vector<8x128xf32> to vector<1x8x128xf32>
    tpu.vector_store %arg8[%c2_77, %c0_78, %c0_79], %122 {strides = array<i32>} : memref<4x8x128xf32, #tpu.memory_space<vmem>>, vector<1x8x128xf32>,
    %123 = arith.truncf %109 : vector<8x128xf32> to vector<8x128xbf16>
    %cst_80 = arith.constant dense<0.000000e+00> : vector<8x8xf32>
    %124 = tpu.matmul %123, %94, %cst_80 {dimension_numbers = #tpu.dot_dimension_numbers<[1], [0], [0], [1], [0, 0, 1, 1], [], []>} : vector<8x128xbf16>, vector<128x8xbf16>, vector<8x8xf32> -> vector<8x8xf32>
    %125 = vector.extract_strided_slice %105 {offsets = [0, 0], sizes = [8, 1], strides = [1, 1]} : vector<8x128xf32> to vector<8x1xf32>
    %c0_81 = arith.constant 0 : index
    %c16_82 = arith.constant 16 : index
    %126 = vector.load %arg10[%c0_81, %c16_82] : memref<8x128xf32, #tpu.memory_space<vmem>>, vector<8x8xf32>
    %127 = vector.broadcast %125 : vector<8x1xf32> to vector<8x8xf32>
    %128 = arith.mulf %127, %126 : vector<8x8xf32>
    %129 = arith.addf %128, %124 : vector<8x8xf32>
    %c0_83 = arith.constant 0 : index
    %c16_84 = arith.constant 16 : index
    %130 = vector.load %arg10[%c0_83, %c16_84] : memref<8x128xf32, #tpu.memory_space<vmem>>, vector<8x8xf32>
    tpu.vector_store %arg10[%c0_83, %c16_84], %129 {strides = array<i32>} : memref<8x128xf32, #tpu.memory_space<vmem>>, vector<8x8xf32>,
    %c0_85 = arith.constant 0 : index
    %c0_86 = arith.constant 0 : index
    %c24 = arith.constant 24 : index
    %131 = vector.load %arg3[%c0_85, %c0_86, %c24] : memref<1x8x128xbf16, #tpu.memory_space<vmem>>, vector<1x8x8xbf16>
    %132 = vector.shape_cast %131 : vector<1x8x8xbf16> to vector<8x8xbf16>
    %c0_87 = arith.constant 0 : index
    %c0_88 = arith.constant 0 : index
    %c24_89 = arith.constant 24 : index
    %133 = vector.load %arg4[%c0_87, %c0_88, %c24_89] : memref<1x128x128xbf16, #tpu.memory_space<vmem>>, vector<1x128x8xbf16>
    %134 = vector.shape_cast %133 : vector<1x128x8xbf16> to vector<128x8xbf16>
    %c0_90 = arith.constant 0 : index
    %c0_91 = arith.constant 0 : index
    %c24_92 = arith.constant 24 : index
    %135 = vector.load %arg5[%c0_90, %c0_91, %c24_92] : memref<1x128x128xbf16, #tpu.memory_space<vmem>>, vector<1x128x8xbf16>
    %136 = vector.shape_cast %135 : vector<1x128x8xbf16> to vector<128x8xbf16>
    %cst_93 = arith.constant dense<0.000000e+00> : vector<8x128xf32>
    %137 = tpu.matmul %132, %134, %cst_93 {dimension_numbers = #tpu.dot_dimension_numbers<[1], [1], [0], [0], [0, 0, 1, 0], [], []>} : vector<8x8xbf16>, vector<128x8xbf16>, vector<8x128xf32> -> vector<8x128xf32>
    %138 = vector.broadcast %4 : vector<1x128xf32> to vector<8x128xf32>
    %139 = arith.addf %137, %138 : vector<8x128xf32>
    %c3 = arith.constant 3 : index
    %c0_94 = arith.constant 0 : index
    %c0_95 = arith.constant 0 : index
    %140 = vector.load %arg8[%c3, %c0_94, %c0_95] : memref<4x8x128xf32, #tpu.memory_space<vmem>>, vector<1x8x128xf32>
    %141 = vector.shape_cast %140 : vector<1x8x128xf32> to vector<8x128xf32>
    %cst_96 = arith.constant dense<0xFF800000> : vector<8xf32>
    %142 = vector.multi_reduction <maximumf>, %139, %cst_96 [1] : vector<8x128xf32> to vector<8xf32>
    %143 = vector.shape_cast %142 : vector<8xf32> to vector<8x1xf32>
    %144 = vector.broadcast %143 : vector<8x1xf32> to vector<8x128xf32>
    %145 = arith.maximumf %141, %144 : vector<8x128xf32>
    %146 = arith.subf %141, %145 : vector<8x128xf32>
    %147 = math.exp %146 : vector<8x128xf32>
    %148 = vector.extract_strided_slice %145 {offsets = [0, 0], sizes = [8, 1], strides = [1, 1]} : vector<8x128xf32> to vector<8x1xf32>
    %149 = vector.broadcast %148 : vector<8x1xf32> to vector<8x128xf32>
    %150 = arith.subf %139, %149 : vector<8x128xf32>
    %151 = math.exp %150 : vector<8x128xf32>
    %c3_97 = arith.constant 3 : index
    %c0_98 = arith.constant 0 : index
    %c0_99 = arith.constant 0 : index
    %152 = vector.load %arg9[%c3_97, %c0_98, %c0_99] : memref<4x8x128xf32, #tpu.memory_space<vmem>>, vector<1x8x128xf32>
    %153 = vector.shape_cast %152 : vector<1x8x128xf32> to vector<8x128xf32>
    %154 = arith.mulf %147, %153 : vector<8x128xf32>
    %cst_100 = arith.constant dense<0.000000e+00> : vector<8xf32>
    %155 = vector.multi_reduction <add>, %151, %cst_100 [1] : vector<8x128xf32> to vector<8xf32>
    %156 = vector.shape_cast %155 : vector<8xf32> to vector<8x1xf32>
    %157 = vector.broadcast %156 : vector<8x1xf32> to vector<8x128xf32>
    %158 = arith.addf %154, %157 : vector<8x128xf32>
    %c3_101 = arith.constant 3 : index
    %c0_102 = arith.constant 0 : index
    %c0_103 = arith.constant 0 : index
    %159 = vector.load %arg9[%c3_101, %c0_102, %c0_103] : memref<4x8x128xf32, #tpu.memory_space<vmem>>, vector<1x8x128xf32>
    %160 = vector.shape_cast %159 : vector<1x8x128xf32> to vector<8x128xf32>
    %161 = vector.shape_cast %158 : vector<8x128xf32> to vector<1x8x128xf32>
    tpu.vector_store %arg9[%c3_101, %c0_102, %c0_103], %161 {strides = array<i32>} : memref<4x8x128xf32, #tpu.memory_space<vmem>>, vector<1x8x128xf32>,
    %c3_104 = arith.constant 3 : index
    %c0_105 = arith.constant 0 : index
    %c0_106 = arith.constant 0 : index
    %162 = vector.load %arg8[%c3_104, %c0_105, %c0_106] : memref<4x8x128xf32, #tpu.memory_space<vmem>>, vector<1x8x128xf32>
    %163 = vector.shape_cast %162 : vector<1x8x128xf32> to vector<8x128xf32>
    %164 = vector.shape_cast %145 : vector<8x128xf32> to vector<1x8x128xf32>
    tpu.vector_store %arg8[%c3_104, %c0_105, %c0_106], %164 {strides = array<i32>} : memref<4x8x128xf32, #tpu.memory_space<vmem>>, vector<1x8x128xf32>,
    %165 = arith.truncf %151 : vector<8x128xf32> to vector<8x128xbf16>
    %cst_107 = arith.constant dense<0.000000e+00> : vector<8x8xf32>
    %166 = tpu.matmul %165, %136, %cst_107 {dimension_numbers = #tpu.dot_dimension_numbers<[1], [0], [0], [1], [0, 0, 1, 1], [], []>} : vector<8x128xbf16>, vector<128x8xbf16>, vector<8x8xf32> -> vector<8x8xf32>
    %167 = vector.extract_strided_slice %147 {offsets = [0, 0], sizes = [8, 1], strides = [1, 1]} : vector<8x128xf32> to vector<8x1xf32>
    %c0_108 = arith.constant 0 : index
    %c24_109 = arith.constant 24 : index
    %168 = vector.load %arg10[%c0_108, %c24_109] : memref<8x128xf32, #tpu.memory_space<vmem>>, vector<8x8xf32>
    %169 = vector.broadcast %167 : vector<8x1xf32> to vector<8x8xf32>
    %170 = arith.mulf %169, %168 : vector<8x8xf32>
    %171 = arith.addf %170, %166 : vector<8x8xf32>
    %c0_110 = arith.constant 0 : index
    %c24_111 = arith.constant 24 : index
    %172 = vector.load %arg10[%c0_110, %c24_111] : memref<8x128xf32, #tpu.memory_space<vmem>>, vector<8x8xf32>
    tpu.vector_store %arg10[%c0_110, %c24_111], %171 {strides = array<i32>} : memref<8x128xf32, #tpu.memory_space<vmem>>, vector<8x8xf32>,
    %c0_i32_112 = arith.constant 0 : i32
    %173 = arith.cmpi eq, %arg2, %c0_i32_112 : i32
    %174 = arith.extui %173 : i1 to i32
    %c0_i32_113 = arith.constant 0 : i32
    %175 = arith.cmpi ne, %174, %c0_i32_113 : i32
    scf.if %175 {
      %cst_114 = arith.constant 0.000000e+00 : bf16
      %176 = vector.broadcast %cst_114 : bf16 to vector<8x96xbf16>
      %c0_115 = arith.constant 0 : index
      %c0_116 = arith.constant 0 : index
      %c32 = arith.constant 32 : index
      %177 = vector.load %arg7[%c0_115, %c0_116, %c32] : memref<1x8x128xbf16, #tpu.memory_space<vmem>>, vector<1x8x96xbf16>
      %178 = vector.shape_cast %177 : vector<1x8x96xbf16> to vector<8x96xbf16>
      %179 = vector.shape_cast %176 : vector<8x96xbf16> to vector<1x8x96xbf16>
      tpu.vector_store %arg7[%c0_115, %c0_116, %c32], %179 {strides = array<i32>} : memref<1x8x128xbf16, #tpu.memory_space<vmem>>, vector<1x8x96xbf16>,
      %c0_117 = arith.constant 0 : index
      %c0_118 = arith.constant 0 : index
      %c0_119 = arith.constant 0 : index
      %180 = vector.load %arg9[%c0_117, %c0_118, %c0_119] : memref<4x8x128xf32, #tpu.memory_space<vmem>>, vector<1x8x1xf32>
      %181 = vector.shape_cast %180 : vector<1x8x1xf32> to vector<8x1xf32>
      %182 = tpu.reciprocal %181 {approx = true} : vector<8x1xf32> -> vector<8x1xf32>
      %c0_120 = arith.constant 0 : index
      %c0_121 = arith.constant 0 : index
      %183 = vector.load %arg10[%c0_120, %c0_121] : memref<8x128xf32, #tpu.memory_space<vmem>>, vector<8x8xf32>
      %184 = vector.broadcast %182 : vector<8x1xf32> to vector<8x8xf32>
      %185 = arith.mulf %183, %184 : vector<8x8xf32>
      %186 = arith.truncf %185 : vector<8x8xf32> to vector<8x8xbf16>
      %c0_122 = arith.constant 0 : index
      %c0_123 = arith.constant 0 : index
      %c0_124 = arith.constant 0 : index
      %187 = vector.load %arg7[%c0_122, %c0_123, %c0_124] : memref<1x8x128xbf16, #tpu.memory_space<vmem>>, vector<1x8x8xbf16>
      %188 = vector.shape_cast %187 : vector<1x8x8xbf16> to vector<8x8xbf16>
      %189 = vector.shape_cast %186 : vector<8x8xbf16> to vector<1x8x8xbf16>
      tpu.vector_store %arg7[%c0_122, %c0_123, %c0_124], %189 {strides = array<i32>} : memref<1x8x128xbf16, #tpu.memory_space<vmem>>, vector<1x8x8xbf16>,
      %c1_125 = arith.constant 1 : index
      %c0_126 = arith.constant 0 : index
      %c0_127 = arith.constant 0 : index
      %190 = vector.load %arg9[%c1_125, %c0_126, %c0_127] : memref<4x8x128xf32, #tpu.memory_space<vmem>>, vector<1x8x1xf32>
      %191 = vector.shape_cast %190 : vector<1x8x1xf32> to vector<8x1xf32>
      %192 = tpu.reciprocal %191 {approx = true} : vector<8x1xf32> -> vector<8x1xf32>
      %c0_128 = arith.constant 0 : index
      %c8_129 = arith.constant 8 : index
      %193 = vector.load %arg10[%c0_128, %c8_129] : memref<8x128xf32, #tpu.memory_space<vmem>>, vector<8x8xf32>
      %194 = vector.broadcast %192 : vector<8x1xf32> to vector<8x8xf32>
      %195 = arith.mulf %193, %194 : vector<8x8xf32>
      %196 = arith.truncf %195 : vector<8x8xf32> to vector<8x8xbf16>
      %c0_130 = arith.constant 0 : index
      %c0_131 = arith.constant 0 : index
      %c8_132 = arith.constant 8 : index
      %197 = vector.load %arg7[%c0_130, %c0_131, %c8_132] : memref<1x8x128xbf16, #tpu.memory_space<vmem>>, vector<1x8x8xbf16>
      %198 = vector.shape_cast %197 : vector<1x8x8xbf16> to vector<8x8xbf16>
      %199 = vector.shape_cast %196 : vector<8x8xbf16> to vector<1x8x8xbf16>
      tpu.vector_store %arg7[%c0_130, %c0_131, %c8_132], %199 {strides = array<i32>} : memref<1x8x128xbf16, #tpu.memory_space<vmem>>, vector<1x8x8xbf16>,
      %c2_133 = arith.constant 2 : index
      %c0_134 = arith.constant 0 : index
      %c0_135 = arith.constant 0 : index
      %200 = vector.load %arg9[%c2_133, %c0_134, %c0_135] : memref<4x8x128xf32, #tpu.memory_space<vmem>>, vector<1x8x1xf32>
      %201 = vector.shape_cast %200 : vector<1x8x1xf32> to vector<8x1xf32>
      %202 = tpu.reciprocal %201 {approx = true} : vector<8x1xf32> -> vector<8x1xf32>
      %c0_136 = arith.constant 0 : index
      %c16_137 = arith.constant 16 : index
      %203 = vector.load %arg10[%c0_136, %c16_137] : memref<8x128xf32, #tpu.memory_space<vmem>>, vector<8x8xf32>
      %204 = vector.broadcast %202 : vector<8x1xf32> to vector<8x8xf32>
      %205 = arith.mulf %203, %204 : vector<8x8xf32>
      %206 = arith.truncf %205 : vector<8x8xf32> to vector<8x8xbf16>
      %c0_138 = arith.constant 0 : index
      %c0_139 = arith.constant 0 : index
      %c16_140 = arith.constant 16 : index
      %207 = vector.load %arg7[%c0_138, %c0_139, %c16_140] : memref<1x8x128xbf16, #tpu.memory_space<vmem>>, vector<1x8x8xbf16>
      %208 = vector.shape_cast %207 : vector<1x8x8xbf16> to vector<8x8xbf16>
      %209 = vector.shape_cast %206 : vector<8x8xbf16> to vector<1x8x8xbf16>
      tpu.vector_store %arg7[%c0_138, %c0_139, %c16_140], %209 {strides = array<i32>} : memref<1x8x128xbf16, #tpu.memory_space<vmem>>, vector<1x8x8xbf16>,
      %c3_141 = arith.constant 3 : index
      %c0_142 = arith.constant 0 : index
      %c0_143 = arith.constant 0 : index
      %210 = vector.load %arg9[%c3_141, %c0_142, %c0_143] : memref<4x8x128xf32, #tpu.memory_space<vmem>>, vector<1x8x1xf32>
      %211 = vector.shape_cast %210 : vector<1x8x1xf32> to vector<8x1xf32>
      %212 = tpu.reciprocal %211 {approx = true} : vector<8x1xf32> -> vector<8x1xf32>
      %c0_144 = arith.constant 0 : index
      %c24_145 = arith.constant 24 : index
      %213 = vector.load %arg10[%c0_144, %c24_145] : memref<8x128xf32, #tpu.memory_space<vmem>>, vector<8x8xf32>
      %214 = vector.broadcast %212 : vector<8x1xf32> to vector<8x8xf32>
      %215 = arith.mulf %213, %214 : vector<8x8xf32>
      %216 = arith.truncf %215 : vector<8x8xf32> to vector<8x8xbf16>
      %c0_146 = arith.constant 0 : index
      %c0_147 = arith.constant 0 : index
      %c24_148 = arith.constant 24 : index
      %217 = vector.load %arg7[%c0_146, %c0_147, %c24_148] : memref<1x8x128xbf16, #tpu.memory_space<vmem>>, vector<1x8x8xbf16>
      %218 = vector.shape_cast %217 : vector<1x8x8xbf16> to vector<8x8xbf16>
      %219 = vector.shape_cast %216 : vector<8x8xbf16> to vector<1x8x8xbf16>
      tpu.vector_store %arg7[%c0_146, %c0_147, %c24_148], %219 {strides = array<i32>} : memref<1x8x128xbf16, #tpu.memory_space<vmem>>, vector<1x8x8xbf16>,
    } else {
    }
    return
  }
  func.func @transform_0(%arg0: i32, %arg1: i32, %arg2: i32) -> (i32, i32, i32) {
    %c0_i32 = arith.constant 0 : i32
    %c0_i32_0 = arith.constant 0 : i32
    return %arg0, %arg1, %c0_i32 : i32, i32, i32
  }
  func.func @transform_1(%arg0: i32, %arg1: i32, %arg2: i32) -> (i32, i32, i32) {
    %c1_i32 = arith.constant 1 : i32
    %c0_i32 = arith.constant 0 : i32
    return %arg0, %arg2, %c1_i32 : i32, i32, i32
  }
  func.func @transform_2(%arg0: i32, %arg1: i32, %arg2: i32) -> (i32, i32, i32) {
    %c2_i32 = arith.constant 2 : i32
    %c0_i32 = arith.constant 0 : i32
    return %arg0, %arg2, %c2_i32 : i32, i32, i32
  }
  func.func @transform_3(%arg0: i32, %arg1: i32, %arg2: i32) -> (i32, i32, i32) {
    %c0_i32 = arith.constant 0 : i32
    %c0_i32_0 = arith.constant 0 : i32
    return %arg0, %c0_i32, %arg2 : i32, i32, i32
  }
  func.func @transform_4(%arg0: i32, %arg1: i32, %arg2: i32) -> (i32, i32, i32) {
    %c0_i32 = arith.constant 0 : i32
    %c0_i32_0 = arith.constant 0 : i32
    return %arg0, %arg1, %c0_i32 : i32, i32, i32
  }
}

module attributes {stable_mosaic.version = 11 : i64} {
  func.func @_matmul_kernel(%arg0: i32, %arg1: i32, %arg2: i32, %arg3: memref<16x128xbf16, #tpu.memory_space<vmem>>, %arg4: memref<128x128xbf16, #tpu.memory_space<vmem>>, %arg5: memref<1x128xf32, #tpu.memory_space<vmem>>, %arg6: memref<16x128xf32, #tpu.memory_space<vmem>>, %arg7: memref<16x128xf32, #tpu.memory_space<vmem>>) attributes {dimension_semantics = [#tpu.dimension_semantics<parallel>, #tpu.dimension_semantics<parallel>, #tpu.dimension_semantics<arbitrary>], iteration_bounds = array<i64: 1, 1, 1>, scalar_prefetch = 0 : i64, scratch_operands = 1 : i64, tpu.core_type = #tpu.core_type<tc>, window_params = [{transform_indices = @transform_0, window_bounds = array<i64: 16, 128>}, {transform_indices = @transform_1, window_bounds = array<i64: 128, 128>}, {transform_indices = @transform_2, window_bounds = array<i64: 1, 128>}, {transform_indices = @transform_3, window_bounds = array<i64: 16, 128>}]} {
    %c0_i32 = arith.constant 0 : i32
    %0 = arith.cmpi eq, %arg2, %c0_i32 : i32
    %1 = arith.extui %0 : i1 to i32
    %c0_i32_0 = arith.constant 0 : i32
    %2 = arith.cmpi ne, %1, %c0_i32_0 : i32
    scf.if %2 {
      %cst_10 = arith.constant 0.000000e+00 : f32
      %12 = vector.broadcast %cst_10 : f32 to vector<16x128xf32>
      %c0_11 = arith.constant 0 : index
      %c0_12 = arith.constant 0 : index
      %13 = vector.load %arg7[%c0_11, %c0_12] : memref<16x128xf32, #tpu.memory_space<vmem>>, vector<16x128xf32>
      tpu.vector_store %arg7[%c0_11, %c0_12], %12 {strides = array<i32>} : memref<16x128xf32, #tpu.memory_space<vmem>>, vector<16x128xf32>,
    } else {
    }
    %c0 = arith.constant 0 : index
    %c0_1 = arith.constant 0 : index
    %3 = vector.load %arg7[%c0, %c0_1] : memref<16x128xf32, #tpu.memory_space<vmem>>, vector<16x128xf32>
    %c0_2 = arith.constant 0 : index
    %c0_3 = arith.constant 0 : index
    %4 = vector.load %arg3[%c0_2, %c0_3] : memref<16x128xbf16, #tpu.memory_space<vmem>>, vector<16x128xbf16>
    %c0_4 = arith.constant 0 : index
    %c0_5 = arith.constant 0 : index
    %5 = vector.load %arg4[%c0_4, %c0_5] : memref<128x128xbf16, #tpu.memory_space<vmem>>, vector<128x128xbf16>
    %cst = arith.constant dense<0.000000e+00> : vector<16x128xf32>
    %6 = tpu.matmul %4, %5, %cst {dimension_numbers = #tpu.dot_dimension_numbers<[1], [1], [0], [0], [0, 0, 1, 0], [], []>} : vector<16x128xbf16>, vector<128x128xbf16>, vector<16x128xf32> -> vector<16x128xf32>
    %7 = arith.addf %3, %6 : vector<16x128xf32>
    %c0_6 = arith.constant 0 : index
    %c0_7 = arith.constant 0 : index
    %8 = vector.load %arg7[%c0_6, %c0_7] : memref<16x128xf32, #tpu.memory_space<vmem>>, vector<16x128xf32>
    tpu.vector_store %arg7[%c0_6, %c0_7], %7 {strides = array<i32>} : memref<16x128xf32, #tpu.memory_space<vmem>>, vector<16x128xf32>,
    %c0_i32_8 = arith.constant 0 : i32
    %9 = arith.cmpi eq, %arg2, %c0_i32_8 : i32
    %10 = arith.extui %9 : i1 to i32
    %c0_i32_9 = arith.constant 0 : i32
    %11 = arith.cmpi ne, %10, %c0_i32_9 : i32
    scf.if %11 {
      %c0_10 = arith.constant 0 : index
      %c0_11 = arith.constant 0 : index
      %12 = vector.load %arg7[%c0_10, %c0_11] : memref<16x128xf32, #tpu.memory_space<vmem>>, vector<16x128xf32>
      %c0_12 = arith.constant 0 : index
      %c0_13 = arith.constant 0 : index
      %13 = vector.load %arg5[%c0_12, %c0_13] : memref<1x128xf32, #tpu.memory_space<vmem>>, vector<1x128xf32>
      %14 = vector.broadcast %13 : vector<1x128xf32> to vector<16x128xf32>
      %15 = arith.addf %12, %14 : vector<16x128xf32>
      %cst_14 = arith.constant 0.176776692 : f32
      %16 = vector.broadcast %cst_14 : f32 to vector<16x128xf32>
      %17 = arith.mulf %15, %16 : vector<16x128xf32>
      %c0_15 = arith.constant 0 : index
      %c0_16 = arith.constant 0 : index
      %18 = vector.load %arg6[%c0_15, %c0_16] : memref<16x128xf32, #tpu.memory_space<vmem>>, vector<16x128xf32>
      tpu.vector_store %arg6[%c0_15, %c0_16], %17 {strides = array<i32>} : memref<16x128xf32, #tpu.memory_space<vmem>>, vector<16x128xf32>,
    } else {
    }
    return
  }
  func.func @transform_0(%arg0: i32, %arg1: i32, %arg2: i32) -> (i32, i32) {
    %c0_i32 = arith.constant 0 : i32
    return %arg0, %arg2 : i32, i32
  }
  func.func @transform_1(%arg0: i32, %arg1: i32, %arg2: i32) -> (i32, i32) {
    %c0_i32 = arith.constant 0 : i32
    return %arg1, %arg2 : i32, i32
  }
  func.func @transform_2(%arg0: i32, %arg1: i32, %arg2: i32) -> (i32, i32) {
    %c0_i32 = arith.constant 0 : i32
    %c0_i32_0 = arith.constant 0 : i32
    return %c0_i32, %arg1 : i32, i32
  }
  func.func @transform_3(%arg0: i32, %arg1: i32, %arg2: i32) -> (i32, i32) {
    %c0_i32 = arith.constant 0 : i32
    return %arg0, %arg1 : i32, i32
  }
}

module attributes {stable_mosaic.version = 11 : i64} {
  func.func @_flash_kernel(%arg0: i32, %arg1: i32, %arg2: i32, %arg3: memref<1x8x128xbf16, #tpu.memory_space<vmem>>, %arg4: memref<1x128x128xbf16, #tpu.memory_space<vmem>>, %arg5: memref<1x128x128xbf16, #tpu.memory_space<vmem>>, %arg6: memref<1x1x128xf32, #tpu.memory_space<vmem>>, %arg7: memref<1x8x128xbf16, #tpu.memory_space<vmem>>, %arg8: memref<4x8x128xf32, #tpu.memory_space<vmem>>, %arg9: memref<4x8x128xf32, #tpu.memory_space<vmem>>, %arg10: memref<8x128xf32, #tpu.memory_space<vmem>>) attributes {dimension_semantics = [#tpu.dimension_semantics<parallel>, #tpu.dimension_semantics<parallel>, #tpu.dimension_semantics<arbitrary>], iteration_bounds = array<i64: 2, 1, 1>, scalar_prefetch = 0 : i64, scratch_operands = 3 : i64, tpu.core_type = #tpu.core_type<tc>, window_params = [{transform_indices = @transform_0, window_bounds = array<i64: 1, 8, 128>}, {transform_indices = @transform_1, window_bounds = array<i64: 1, 128, 128>}, {transform_indices = @transform_2, window_bounds = array<i64: 1, 128, 128>}, {transform_indices = @transform_3, window_bounds = array<i64: 1, 1, 128>}, {transform_indices = @transform_4, window_bounds = array<i64: 1, 8, 128>}]} {
    %c0_i32 = arith.constant 0 : i32
    %0 = arith.cmpi eq, %arg2, %c0_i32 : i32
    %1 = arith.extui %0 : i1 to i32
    %c0_i32_0 = arith.constant 0 : i32
    %2 = arith.cmpi ne, %1, %c0_i32_0 : i32
    scf.if %2 {
      %cst_114 = arith.constant -1.000000e+30 : f32
      %176 = vector.broadcast %cst_114 : f32 to vector<4x8x128xf32>
      %c0_115 = arith.constant 0 : index
      %c0_116 = arith.constant 0 : index
      %c0_117 = arith.constant 0 : index
      %177 = vector.load %arg8[%c0_115, %c0_116, %c0_117] : memref<4x8x128xf32, #tpu.memory_space<vmem>>, vector<4x8x128xf32>
      tpu.vector_store %arg8[%c0_115, %c0_116, %c0_117], %176 {strides = array<i32>} : memref<4x8x128xf32, #tpu.memory_space<vmem>>, vector<4x8x128xf32>,
      %cst_118 = arith.constant 0.000000e+00 : f32
      %178 = vector.broadcast %cst_118 : f32 to vector<4x8x128xf32>
      %c0_119 = arith.constant 0 : index
      %c0_120 = arith.constant 0 : index
      %c0_121 = arith.constant 0 : index
      %179 = vector.load %arg9[%c0_119, %c0_120, %c0_121] : memref<4x8x128xf32, #tpu.memory_space<vmem>>, vector<4x8x128xf32>
      tpu.vector_store %arg9[%c0_119, %c0_120, %c0_121], %178 {strides = array<i32>} : memref<4x8x128xf32, #tpu.memory_space<vmem>>, vector<4x8x128xf32>,
      %cst_122 = arith.constant 0.000000e+00 : f32
      %180 = vector.broadcast %cst_122 : f32 to vector<8x128xf32>
      %c0_123 = arith.constant 0 : index
      %c0_124 = arith.constant 0 : index
      %181 = vector.load %arg10[%c0_123, %c0_124] : memref<8x128xf32, #tpu.memory_space<vmem>>, vector<8x128xf32>
      tpu.vector_store %arg10[%c0_123, %c0_124], %180 {strides = array<i32>} : memref<8x128xf32, #tpu.memory_space<vmem>>, vector<8x128xf32>,
    } else {
    }
    %c0 = arith.constant 0 : index
    %c0_1 = arith.constant 0 : index
    %c0_2 = arith.constant 0 : index
    %3 = vector.load %arg6[%c0, %c0_1, %c0_2] : memref<1x1x128xf32, #tpu.memory_space<vmem>>, vector<1x1x128xf32>
    %4 = vector.shape_cast %3 : vector<1x1x128xf32> to vector<1x128xf32>
    %c0_3 = arith.constant 0 : index
    %c0_4 = arith.constant 0 : index
    %c0_5 = arith.constant 0 : index
    %5 = vector.load %arg3[%c0_3, %c0_4, %c0_5] : memref<1x8x128xbf16, #tpu.memory_space<vmem>>, vector<1x8x8xbf16>
    %6 = vector.shape_cast %5 : vector<1x8x8xbf16> to vector<8x8xbf16>
    %c0_6 = arith.constant 0 : index
    %c0_7 = arith.constant 0 : index
    %c0_8 = arith.constant 0 : index
    %7 = vector.load %arg4[%c0_6, %c0_7, %c0_8] : memref<1x128x128xbf16, #tpu.memory_space<vmem>>, vector<1x128x8xbf16>
    %8 = vector.shape_cast %7 : vector<1x128x8xbf16> to vector<128x8xbf16>
    %c0_9 = arith.constant 0 : index
    %c0_10 = arith.constant 0 : index
    %c0_11 = arith.constant 0 : index
    %9 = vector.load %arg5[%c0_9, %c0_10, %c0_11] : memref<1x128x128xbf16, #tpu.memory_space<vmem>>, vector<1x128x8xbf16>
    %10 = vector.shape_cast %9 : vector<1x128x8xbf16> to vector<128x8xbf16>
    %cst = arith.constant dense<0.000000e+00> : vector<8x128xf32>
    %11 = tpu.matmul %6, %8, %cst {dimension_numbers = #tpu.dot_dimension_numbers<[1], [1], [0], [0], [0, 0, 1, 0], [], []>} : vector<8x8xbf16>, vector<128x8xbf16>, vector<8x128xf32> -> vector<8x128xf32>
    %12 = vector.broadcast %4 : vector<1x128xf32> to vector<8x128xf32>
    %13 = arith.addf %11, %12 : vector<8x128xf32>
    %c0_12 = arith.constant 0 : index
    %c0_13 = arith.constant 0 : index
    %c0_14 = arith.constant 0 : index
    %14 = vector.load %arg8[%c0_12, %c0_13, %c0_14] : memref<4x8x128xf32, #tpu.memory_space<vmem>>, vector<1x8x128xf32>
    %15 = vector.shape_cast %14 : vector<1x8x128xf32> to vector<8x128xf32>
    %cst_15 = arith.constant dense<0xFF800000> : vector<8xf32>
    %16 = vector.multi_reduction <maximumf>, %13, %cst_15 [1] : vector<8x128xf32> to vector<8xf32>
    %17 = vector.shape_cast %16 : vector<8xf32> to vector<8x1xf32>
    %18 = vector.broadcast %17 : vector<8x1xf32> to vector<8x128xf32>
    %19 = arith.maximumf %15, %18 : vector<8x128xf32>
    %20 = arith.subf %15, %19 : vector<8x128xf32>
    %21 = math.exp %20 : vector<8x128xf32>
    %22 = vector.extract_strided_slice %19 {offsets = [0, 0], sizes = [8, 1], strides = [1, 1]} : vector<8x128xf32> to vector<8x1xf32>
    %23 = vector.broadcast %22 : vector<8x1xf32> to vector<8x128xf32>
    %24 = arith.subf %13, %23 : vector<8x128xf32>
    %25 = math.exp %24 : vector<8x128xf32>
    %c0_16 = arith.constant 0 : index
    %c0_17 = arith.constant 0 : index
    %c0_18 = arith.constant 0 : index
    %26 = vector.load %arg9[%c0_16, %c0_17, %c0_18] : memref<4x8x128xf32, #tpu.memory_space<vmem>>, vector<1x8x128xf32>
    %27 = vector.shape_cast %26 : vector<1x8x128xf32> to vector<8x128xf32>
    %28 = arith.mulf %21, %27 : vector<8x128xf32>
    %cst_19 = arith.constant dense<0.000000e+00> : vector<8xf32>
    %29 = vector.multi_reduction <add>, %25, %cst_19 [1] : vector<8x128xf32> to vector<8xf32>
    %30 = vector.shape_cast %29 : vector<8xf32> to vector<8x1xf32>
    %31 = vector.broadcast %30 : vector<8x1xf32> to vector<8x128xf32>
    %32 = arith.addf %28, %31 : vector<8x128xf32>
    %c0_20 = arith.constant 0 : index
    %c0_21 = arith.constant 0 : index
    %c0_22 = arith.constant 0 : index
    %33 = vector.load %arg9[%c0_20, %c0_21, %c0_22] : memref<4x8x128xf32, #tpu.memory_space<vmem>>, vector<1x8x128xf32>
    %34 = vector.shape_cast %33 : vector<1x8x128xf32> to vector<8x128xf32>
    %35 = vector.shape_cast %32 : vector<8x128xf32> to vector<1x8x128xf32>
    tpu.vector_store %arg9[%c0_20, %c0_21, %c0_22], %35 {strides = array<i32>} : memref<4x8x128xf32, #tpu.memory_space<vmem>>, vector<1x8x128xf32>,
    %c0_23 = arith.constant 0 : index
    %c0_24 = arith.constant 0 : index
    %c0_25 = arith.constant 0 : index
    %36 = vector.load %arg8[%c0_23, %c0_24, %c0_25] : memref<4x8x128xf32, #tpu.memory_space<vmem>>, vector<1x8x128xf32>
    %37 = vector.shape_cast %36 : vector<1x8x128xf32> to vector<8x128xf32>
    %38 = vector.shape_cast %19 : vector<8x128xf32> to vector<1x8x128xf32>
    tpu.vector_store %arg8[%c0_23, %c0_24, %c0_25], %38 {strides = array<i32>} : memref<4x8x128xf32, #tpu.memory_space<vmem>>, vector<1x8x128xf32>,
    %39 = arith.truncf %25 : vector<8x128xf32> to vector<8x128xbf16>
    %cst_26 = arith.constant dense<0.000000e+00> : vector<8x8xf32>
    %40 = tpu.matmul %39, %10, %cst_26 {dimension_numbers = #tpu.dot_dimension_numbers<[1], [0], [0], [1], [0, 0, 1, 1], [], []>} : vector<8x128xbf16>, vector<128x8xbf16>, vector<8x8xf32> -> vector<8x8xf32>
    %41 = vector.extract_strided_slice %21 {offsets = [0, 0], sizes = [8, 1], strides = [1, 1]} : vector<8x128xf32> to vector<8x1xf32>
    %c0_27 = arith.constant 0 : index
    %c0_28 = arith.constant 0 : index
    %42 = vector.load %arg10[%c0_27, %c0_28] : memref<8x128xf32, #tpu.memory_space<vmem>>, vector<8x8xf32>
    %43 = vector.broadcast %41 : vector<8x1xf32> to vector<8x8xf32>
    %44 = arith.mulf %43, %42 : vector<8x8xf32>
    %45 = arith.addf %44, %40 : vector<8x8xf32>
    %c0_29 = arith.constant 0 : index
    %c0_30 = arith.constant 0 : index
    %46 = vector.load %arg10[%c0_29, %c0_30] : memref<8x128xf32, #tpu.memory_space<vmem>>, vector<8x8xf32>
    tpu.vector_store %arg10[%c0_29, %c0_30], %45 {strides = array<i32>} : memref<8x128xf32, #tpu.memory_space<vmem>>, vector<8x8xf32>,
    %c0_31 = arith.constant 0 : index
    %c0_32 = arith.constant 0 : index
    %c8 = arith.constant 8 : index
    %47 = vector.load %arg3[%c0_31, %c0_32, %c8] : memref<1x8x128xbf16, #tpu.memory_space<vmem>>, vector<1x8x8xbf16>
    %48 = vector.shape_cast %47 : vector<1x8x8xbf16> to vector<8x8xbf16>
    %c0_33 = arith.constant 0 : index
    %c0_34 = arith.constant 0 : index
    %c8_35 = arith.constant 8 : index
    %49 = vector.load %arg4[%c0_33, %c0_34, %c8_35] : memref<1x128x128xbf16, #tpu.memory_space<vmem>>, vector<1x128x8xbf16>
    %50 = vector.shape_cast %49 : vector<1x128x8xbf16> to vector<128x8xbf16>
    %c0_36 = arith.constant 0 : index
    %c0_37 = arith.constant 0 : index
    %c8_38 = arith.constant 8 : index
    %51 = vector.load %arg5[%c0_36, %c0_37, %c8_38] : memref<1x128x128xbf16, #tpu.memory_space<vmem>>, vector<1x128x8xbf16>
    %52 = vector.shape_cast %51 : vector<1x128x8xbf16> to vector<128x8xbf16>
    %cst_39 = arith.constant dense<0.000000e+00> : vector<8x128xf32>
    %53 = tpu.matmul %48, %50, %cst_39 {dimension_numbers = #tpu.dot_dimension_numbers<[1], [1], [0], [0], [0, 0, 1, 0], [], []>} : vector<8x8xbf16>, vector<128x8xbf16>, vector<8x128xf32> -> vector<8x128xf32>
    %54 = vector.broadcast %4 : vector<1x128xf32> to vector<8x128xf32>
    %55 = arith.addf %53, %54 : vector<8x128xf32>
    %c1 = arith.constant 1 : index
    %c0_40 = arith.constant 0 : index
    %c0_41 = arith.constant 0 : index
    %56 = vector.load %arg8[%c1, %c0_40, %c0_41] : memref<4x8x128xf32, #tpu.memory_space<vmem>>, vector<1x8x128xf32>
    %57 = vector.shape_cast %56 : vector<1x8x128xf32> to vector<8x128xf32>
    %cst_42 = arith.constant dense<0xFF800000> : vector<8xf32>
    %58 = vector.multi_reduction <maximumf>, %55, %cst_42 [1] : vector<8x128xf32> to vector<8xf32>
    %59 = vector.shape_cast %58 : vector<8xf32> to vector<8x1xf32>
    %60 = vector.broadcast %59 : vector<8x1xf32> to vector<8x128xf32>
    %61 = arith.maximumf %57, %60 : vector<8x128xf32>
    %62 = arith.subf %57, %61 : vector<8x128xf32>
    %63 = math.exp %62 : vector<8x128xf32>
    %64 = vector.extract_strided_slice %61 {offsets = [0, 0], sizes = [8, 1], strides = [1, 1]} : vector<8x128xf32> to vector<8x1xf32>
    %65 = vector.broadcast %64 : vector<8x1xf32> to vector<8x128xf32>
    %66 = arith.subf %55, %65 : vector<8x128xf32>
    %67 = math.exp %66 : vector<8x128xf32>
    %c1_43 = arith.constant 1 : index
    %c0_44 = arith.constant 0 : index
    %c0_45 = arith.constant 0 : index
    %68 = vector.load %arg9[%c1_43, %c0_44, %c0_45] : memref<4x8x128xf32, #tpu.memory_space<vmem>>, vector<1x8x128xf32>
    %69 = vector.shape_cast %68 : vector<1x8x128xf32> to vector<8x128xf32>
    %70 = arith.mulf %63, %69 : vector<8x128xf32>
    %cst_46 = arith.constant dense<0.000000e+00> : vector<8xf32>
    %71 = vector.multi_reduction <add>, %67, %cst_46 [1] : vector<8x128xf32> to vector<8xf32>
    %72 = vector.shape_cast %71 : vector<8xf32> to vector<8x1xf32>
    %73 = vector.broadcast %72 : vector<8x1xf32> to vector<8x128xf32>
    %74 = arith.addf %70, %73 : vector<8x128xf32>
    %c1_47 = arith.constant 1 : index
    %c0_48 = arith.constant 0 : index
    %c0_49 = arith.constant 0 : index
    %75 = vector.load %arg9[%c1_47, %c0_48, %c0_49] : memref<4x8x128xf32, #tpu.memory_space<vmem>>, vector<1x8x128xf32>
    %76 = vector.shape_cast %75 : vector<1x8x128xf32> to vector<8x128xf32>
    %77 = vector.shape_cast %74 : vector<8x128xf32> to vector<1x8x128xf32>
    tpu.vector_store %arg9[%c1_47, %c0_48, %c0_49], %77 {strides = array<i32>} : memref<4x8x128xf32, #tpu.memory_space<vmem>>, vector<1x8x128xf32>,
    %c1_50 = arith.constant 1 : index
    %c0_51 = arith.constant 0 : index
    %c0_52 = arith.constant 0 : index
    %78 = vector.load %arg8[%c1_50, %c0_51, %c0_52] : memref<4x8x128xf32, #tpu.memory_space<vmem>>, vector<1x8x128xf32>
    %79 = vector.shape_cast %78 : vector<1x8x128xf32> to vector<8x128xf32>
    %80 = vector.shape_cast %61 : vector<8x128xf32> to vector<1x8x128xf32>
    tpu.vector_store %arg8[%c1_50, %c0_51, %c0_52], %80 {strides = array<i32>} : memref<4x8x128xf32, #tpu.memory_space<vmem>>, vector<1x8x128xf32>,
    %81 = arith.truncf %67 : vector<8x128xf32> to vector<8x128xbf16>
    %cst_53 = arith.constant dense<0.000000e+00> : vector<8x8xf32>
    %82 = tpu.matmul %81, %52, %cst_53 {dimension_numbers = #tpu.dot_dimension_numbers<[1], [0], [0], [1], [0, 0, 1, 1], [], []>} : vector<8x128xbf16>, vector<128x8xbf16>, vector<8x8xf32> -> vector<8x8xf32>
    %83 = vector.extract_strided_slice %63 {offsets = [0, 0], sizes = [8, 1], strides = [1, 1]} : vector<8x128xf32> to vector<8x1xf32>
    %c0_54 = arith.constant 0 : index
    %c8_55 = arith.constant 8 : index
    %84 = vector.load %arg10[%c0_54, %c8_55] : memref<8x128xf32, #tpu.memory_space<vmem>>, vector<8x8xf32>
    %85 = vector.broadcast %83 : vector<8x1xf32> to vector<8x8xf32>
    %86 = arith.mulf %85, %84 : vector<8x8xf32>
    %87 = arith.addf %86, %82 : vector<8x8xf32>
    %c0_56 = arith.constant 0 : index
    %c8_57 = arith.constant 8 : index
    %88 = vector.load %arg10[%c0_56, %c8_57] : memref<8x128xf32, #tpu.memory_space<vmem>>, vector<8x8xf32>
    tpu.vector_store %arg10[%c0_56, %c8_57], %87 {strides = array<i32>} : memref<8x128xf32, #tpu.memory_space<vmem>>, vector<8x8xf32>,
    %c0_58 = arith.constant 0 : index
    %c0_59 = arith.constant 0 : index
    %c16 = arith.constant 16 : index
    %89 = vector.load %arg3[%c0_58, %c0_59, %c16] : memref<1x8x128xbf16, #tpu.memory_space<vmem>>, vector<1x8x8xbf16>
    %90 = vector.shape_cast %89 : vector<1x8x8xbf16> to vector<8x8xbf16>
    %c0_60 = arith.constant 0 : index
    %c0_61 = arith.constant 0 : index
    %c16_62 = arith.constant 16 : index
    %91 = vector.load %arg4[%c0_60, %c0_61, %c16_62] : memref<1x128x128xbf16, #tpu.memory_space<vmem>>, vector<1x128x8xbf16>
    %92 = vector.shape_cast %91 : vector<1x128x8xbf16> to vector<128x8xbf16>
    %c0_63 = arith.constant 0 : index
    %c0_64 = arith.constant 0 : index
    %c16_65 = arith.constant 16 : index
    %93 = vector.load %arg5[%c0_63, %c0_64, %c16_65] : memref<1x128x128xbf16, #tpu.memory_space<vmem>>, vector<1x128x8xbf16>
    %94 = vector.shape_cast %93 : vector<1x128x8xbf16> to vector<128x8xbf16>
    %cst_66 = arith.constant dense<0.000000e+00> : vector<8x128xf32>
    %95 = tpu.matmul %90, %92, %cst_66 {dimension_numbers = #tpu.dot_dimension_numbers<[1], [1], [0], [0], [0, 0, 1, 0], [], []>} : vector<8x8xbf16>, vector<128x8xbf16>, vector<8x128xf32> -> vector<8x128xf32>
    %96 = vector.broadcast %4 : vector<1x128xf32> to vector<8x128xf32>
    %97 = arith.addf %95, %96 : vector<8x128xf32>
    %c2 = arith.constant 2 : index
    %c0_67 = arith.constant 0 : index
    %c0_68 = arith.constant 0 : index
    %98 = vector.load %arg8[%c2, %c0_67, %c0_68] : memref<4x8x128xf32, #tpu.memory_space<vmem>>, vector<1x8x128xf32>
    %99 = vector.shape_cast %98 : vector<1x8x128xf32> to vector<8x128xf32>
    %cst_69 = arith.constant dense<0xFF800000> : vector<8xf32>
    %100 = vector.multi_reduction <maximumf>, %97, %cst_69 [1] : vector<8x128xf32> to vector<8xf32>
    %101 = vector.shape_cast %100 : vector<8xf32> to vector<8x1xf32>
    %102 = vector.broadcast %101 : vector<8x1xf32> to vector<8x128xf32>
    %103 = arith.maximumf %99, %102 : vector<8x128xf32>
    %104 = arith.subf %99, %103 : vector<8x128xf32>
    %105 = math.exp %104 : vector<8x128xf32>
    %106 = vector.extract_strided_slice %103 {offsets = [0, 0], sizes = [8, 1], strides = [1, 1]} : vector<8x128xf32> to vector<8x1xf32>
    %107 = vector.broadcast %106 : vector<8x1xf32> to vector<8x128xf32>
    %108 = arith.subf %97, %107 : vector<8x128xf32>
    %109 = math.exp %108 : vector<8x128xf32>
    %c2_70 = arith.constant 2 : index
    %c0_71 = arith.constant 0 : index
    %c0_72 = arith.constant 0 : index
    %110 = vector.load %arg9[%c2_70, %c0_71, %c0_72] : memref<4x8x128xf32, #tpu.memory_space<vmem>>, vector<1x8x128xf32>
    %111 = vector.shape_cast %110 : vector<1x8x128xf32> to vector<8x128xf32>
    %112 = arith.mulf %105, %111 : vector<8x128xf32>
    %cst_73 = arith.constant dense<0.000000e+00> : vector<8xf32>
    %113 = vector.multi_reduction <add>, %109, %cst_73 [1] : vector<8x128xf32> to vector<8xf32>
    %114 = vector.shape_cast %113 : vector<8xf32> to vector<8x1xf32>
    %115 = vector.broadcast %114 : vector<8x1xf32> to vector<8x128xf32>
    %116 = arith.addf %112, %115 : vector<8x128xf32>
    %c2_74 = arith.constant 2 : index
    %c0_75 = arith.constant 0 : index
    %c0_76 = arith.constant 0 : index
    %117 = vector.load %arg9[%c2_74, %c0_75, %c0_76] : memref<4x8x128xf32, #tpu.memory_space<vmem>>, vector<1x8x128xf32>
    %118 = vector.shape_cast %117 : vector<1x8x128xf32> to vector<8x128xf32>
    %119 = vector.shape_cast %116 : vector<8x128xf32> to vector<1x8x128xf32>
    tpu.vector_store %arg9[%c2_74, %c0_75, %c0_76], %119 {strides = array<i32>} : memref<4x8x128xf32, #tpu.memory_space<vmem>>, vector<1x8x128xf32>,
    %c2_77 = arith.constant 2 : index
    %c0_78 = arith.constant 0 : index
    %c0_79 = arith.constant 0 : index
    %120 = vector.load %arg8[%c2_77, %c0_78, %c0_79] : memref<4x8x128xf32, #tpu.memory_space<vmem>>, vector<1x8x128xf32>
    %121 = vector.shape_cast %120 : vector<1x8x128xf32> to vector<8x128xf32>
    %122 = vector.shape_cast %103 : vector<8x128xf32> to vector<1x8x128xf32>
    tpu.vector_store %arg8[%c2_77, %c0_78, %c0_79], %122 {strides = array<i32>} : memref<4x8x128xf32, #tpu.memory_space<vmem>>, vector<1x8x128xf32>,
    %123 = arith.truncf %109 : vector<8x128xf32> to vector<8x128xbf16>
    %cst_80 = arith.constant dense<0.000000e+00> : vector<8x8xf32>
    %124 = tpu.matmul %123, %94, %cst_80 {dimension_numbers = #tpu.dot_dimension_numbers<[1], [0], [0], [1], [0, 0, 1, 1], [], []>} : vector<8x128xbf16>, vector<128x8xbf16>, vector<8x8xf32> -> vector<8x8xf32>
    %125 = vector.extract_strided_slice %105 {offsets = [0, 0], sizes = [8, 1], strides = [1, 1]} : vector<8x128xf32> to vector<8x1xf32>
    %c0_81 = arith.constant 0 : index
    %c16_82 = arith.constant 16 : index
    %126 = vector.load %arg10[%c0_81, %c16_82] : memref<8x128xf32, #tpu.memory_space<vmem>>, vector<8x8xf32>
    %127 = vector.broadcast %125 : vector<8x1xf32> to vector<8x8xf32>
    %128 = arith.mulf %127, %126 : vector<8x8xf32>
    %129 = arith.addf %128, %124 : vector<8x8xf32>
    %c0_83 = arith.constant 0 : index
    %c16_84 = arith.constant 16 : index
    %130 = vector.load %arg10[%c0_83, %c16_84] : memref<8x128xf32, #tpu.memory_space<vmem>>, vector<8x8xf32>
    tpu.vector_store %arg10[%c0_83, %c16_84], %129 {strides = array<i32>} : memref<8x128xf32, #tpu.memory_space<vmem>>, vector<8x8xf32>,
    %c0_85 = arith.constant 0 : index
    %c0_86 = arith.constant 0 : index
    %c24 = arith.constant 24 : index
    %131 = vector.load %arg3[%c0_85, %c0_86, %c24] : memref<1x8x128xbf16, #tpu.memory_space<vmem>>, vector<1x8x8xbf16>
    %132 = vector.shape_cast %131 : vector<1x8x8xbf16> to vector<8x8xbf16>
    %c0_87 = arith.constant 0 : index
    %c0_88 = arith.constant 0 : index
    %c24_89 = arith.constant 24 : index
    %133 = vector.load %arg4[%c0_87, %c0_88, %c24_89] : memref<1x128x128xbf16, #tpu.memory_space<vmem>>, vector<1x128x8xbf16>
    %134 = vector.shape_cast %133 : vector<1x128x8xbf16> to vector<128x8xbf16>
    %c0_90 = arith.constant 0 : index
    %c0_91 = arith.constant 0 : index
    %c24_92 = arith.constant 24 : index
    %135 = vector.load %arg5[%c0_90, %c0_91, %c24_92] : memref<1x128x128xbf16, #tpu.memory_space<vmem>>, vector<1x128x8xbf16>
    %136 = vector.shape_cast %135 : vector<1x128x8xbf16> to vector<128x8xbf16>
    %cst_93 = arith.constant dense<0.000000e+00> : vector<8x128xf32>
    %137 = tpu.matmul %132, %134, %cst_93 {dimension_numbers = #tpu.dot_dimension_numbers<[1], [1], [0], [0], [0, 0, 1, 0], [], []>} : vector<8x8xbf16>, vector<128x8xbf16>, vector<8x128xf32> -> vector<8x128xf32>
    %138 = vector.broadcast %4 : vector<1x128xf32> to vector<8x128xf32>
    %139 = arith.addf %137, %138 : vector<8x128xf32>
    %c3 = arith.constant 3 : index
    %c0_94 = arith.constant 0 : index
    %c0_95 = arith.constant 0 : index
    %140 = vector.load %arg8[%c3, %c0_94, %c0_95] : memref<4x8x128xf32, #tpu.memory_space<vmem>>, vector<1x8x128xf32>
    %141 = vector.shape_cast %140 : vector<1x8x128xf32> to vector<8x128xf32>
    %cst_96 = arith.constant dense<0xFF800000> : vector<8xf32>
    %142 = vector.multi_reduction <maximumf>, %139, %cst_96 [1] : vector<8x128xf32> to vector<8xf32>
    %143 = vector.shape_cast %142 : vector<8xf32> to vector<8x1xf32>
    %144 = vector.broadcast %143 : vector<8x1xf32> to vector<8x128xf32>
    %145 = arith.maximumf %141, %144 : vector<8x128xf32>
    %146 = arith.subf %141, %145 : vector<8x128xf32>
    %147 = math.exp %146 : vector<8x128xf32>
    %148 = vector.extract_strided_slice %145 {offsets = [0, 0], sizes = [8, 1], strides = [1, 1]} : vector<8x128xf32> to vector<8x1xf32>
    %149 = vector.broadcast %148 : vector<8x1xf32> to vector<8x128xf32>
    %150 = arith.subf %139, %149 : vector<8x128xf32>
    %151 = math.exp %150 : vector<8x128xf32>
    %c3_97 = arith.constant 3 : index
    %c0_98 = arith.constant 0 : index
    %c0_99 = arith.constant 0 : index
    %152 = vector.load %arg9[%c3_97, %c0_98, %c0_99] : memref<4x8x128xf32, #tpu.memory_space<vmem>>, vector<1x8x128xf32>
    %153 = vector.shape_cast %152 : vector<1x8x128xf32> to vector<8x128xf32>
    %154 = arith.mulf %147, %153 : vector<8x128xf32>
    %cst_100 = arith.constant dense<0.000000e+00> : vector<8xf32>
    %155 = vector.multi_reduction <add>, %151, %cst_100 [1] : vector<8x128xf32> to vector<8xf32>
    %156 = vector.shape_cast %155 : vector<8xf32> to vector<8x1xf32>
    %157 = vector.broadcast %156 : vector<8x1xf32> to vector<8x128xf32>
    %158 = arith.addf %154, %157 : vector<8x128xf32>
    %c3_101 = arith.constant 3 : index
    %c0_102 = arith.constant 0 : index
    %c0_103 = arith.constant 0 : index
    %159 = vector.load %arg9[%c3_101, %c0_102, %c0_103] : memref<4x8x128xf32, #tpu.memory_space<vmem>>, vector<1x8x128xf32>
    %160 = vector.shape_cast %159 : vector<1x8x128xf32> to vector<8x128xf32>
    %161 = vector.shape_cast %158 : vector<8x128xf32> to vector<1x8x128xf32>
    tpu.vector_store %arg9[%c3_101, %c0_102, %c0_103], %161 {strides = array<i32>} : memref<4x8x128xf32, #tpu.memory_space<vmem>>, vector<1x8x128xf32>,
    %c3_104 = arith.constant 3 : index
    %c0_105 = arith.constant 0 : index
    %c0_106 = arith.constant 0 : index
    %162 = vector.load %arg8[%c3_104, %c0_105, %c0_106] : memref<4x8x128xf32, #tpu.memory_space<vmem>>, vector<1x8x128xf32>
    %163 = vector.shape_cast %162 : vector<1x8x128xf32> to vector<8x128xf32>
    %164 = vector.shape_cast %145 : vector<8x128xf32> to vector<1x8x128xf32>
    tpu.vector_store %arg8[%c3_104, %c0_105, %c0_106], %164 {strides = array<i32>} : memref<4x8x128xf32, #tpu.memory_space<vmem>>, vector<1x8x128xf32>,
    %165 = arith.truncf %151 : vector<8x128xf32> to vector<8x128xbf16>
    %cst_107 = arith.constant dense<0.000000e+00> : vector<8x8xf32>
    %166 = tpu.matmul %165, %136, %cst_107 {dimension_numbers = #tpu.dot_dimension_numbers<[1], [0], [0], [1], [0, 0, 1, 1], [], []>} : vector<8x128xbf16>, vector<128x8xbf16>, vector<8x8xf32> -> vector<8x8xf32>
    %167 = vector.extract_strided_slice %147 {offsets = [0, 0], sizes = [8, 1], strides = [1, 1]} : vector<8x128xf32> to vector<8x1xf32>
    %c0_108 = arith.constant 0 : index
    %c24_109 = arith.constant 24 : index
    %168 = vector.load %arg10[%c0_108, %c24_109] : memref<8x128xf32, #tpu.memory_space<vmem>>, vector<8x8xf32>
    %169 = vector.broadcast %167 : vector<8x1xf32> to vector<8x8xf32>
    %170 = arith.mulf %169, %168 : vector<8x8xf32>
    %171 = arith.addf %170, %166 : vector<8x8xf32>
    %c0_110 = arith.constant 0 : index
    %c24_111 = arith.constant 24 : index
    %172 = vector.load %arg10[%c0_110, %c24_111] : memref<8x128xf32, #tpu.memory_space<vmem>>, vector<8x8xf32>
    tpu.vector_store %arg10[%c0_110, %c24_111], %171 {strides = array<i32>} : memref<8x128xf32, #tpu.memory_space<vmem>>, vector<8x8xf32>,
    %c0_i32_112 = arith.constant 0 : i32
    %173 = arith.cmpi eq, %arg2, %c0_i32_112 : i32
    %174 = arith.extui %173 : i1 to i32
    %c0_i32_113 = arith.constant 0 : i32
    %175 = arith.cmpi ne, %174, %c0_i32_113 : i32
    scf.if %175 {
      %cst_114 = arith.constant 0.000000e+00 : bf16
      %176 = vector.broadcast %cst_114 : bf16 to vector<8x96xbf16>
      %c0_115 = arith.constant 0 : index
      %c0_116 = arith.constant 0 : index
      %c32 = arith.constant 32 : index
      %177 = vector.load %arg7[%c0_115, %c0_116, %c32] : memref<1x8x128xbf16, #tpu.memory_space<vmem>>, vector<1x8x96xbf16>
      %178 = vector.shape_cast %177 : vector<1x8x96xbf16> to vector<8x96xbf16>
      %179 = vector.shape_cast %176 : vector<8x96xbf16> to vector<1x8x96xbf16>
      tpu.vector_store %arg7[%c0_115, %c0_116, %c32], %179 {strides = array<i32>} : memref<1x8x128xbf16, #tpu.memory_space<vmem>>, vector<1x8x96xbf16>,
      %c0_117 = arith.constant 0 : index
      %c0_118 = arith.constant 0 : index
      %c0_119 = arith.constant 0 : index
      %180 = vector.load %arg9[%c0_117, %c0_118, %c0_119] : memref<4x8x128xf32, #tpu.memory_space<vmem>>, vector<1x8x1xf32>
      %181 = vector.shape_cast %180 : vector<1x8x1xf32> to vector<8x1xf32>
      %182 = tpu.reciprocal %181 {approx = true} : vector<8x1xf32> -> vector<8x1xf32>
      %c0_120 = arith.constant 0 : index
      %c0_121 = arith.constant 0 : index
      %183 = vector.load %arg10[%c0_120, %c0_121] : memref<8x128xf32, #tpu.memory_space<vmem>>, vector<8x8xf32>
      %184 = vector.broadcast %182 : vector<8x1xf32> to vector<8x8xf32>
      %185 = arith.mulf %183, %184 : vector<8x8xf32>
      %186 = arith.truncf %185 : vector<8x8xf32> to vector<8x8xbf16>
      %c0_122 = arith.constant 0 : index
      %c0_123 = arith.constant 0 : index
      %c0_124 = arith.constant 0 : index
      %187 = vector.load %arg7[%c0_122, %c0_123, %c0_124] : memref<1x8x128xbf16, #tpu.memory_space<vmem>>, vector<1x8x8xbf16>
      %188 = vector.shape_cast %187 : vector<1x8x8xbf16> to vector<8x8xbf16>
      %189 = vector.shape_cast %186 : vector<8x8xbf16> to vector<1x8x8xbf16>
      tpu.vector_store %arg7[%c0_122, %c0_123, %c0_124], %189 {strides = array<i32>} : memref<1x8x128xbf16, #tpu.memory_space<vmem>>, vector<1x8x8xbf16>,
      %c1_125 = arith.constant 1 : index
      %c0_126 = arith.constant 0 : index
      %c0_127 = arith.constant 0 : index
      %190 = vector.load %arg9[%c1_125, %c0_126, %c0_127] : memref<4x8x128xf32, #tpu.memory_space<vmem>>, vector<1x8x1xf32>
      %191 = vector.shape_cast %190 : vector<1x8x1xf32> to vector<8x1xf32>
      %192 = tpu.reciprocal %191 {approx = true} : vector<8x1xf32> -> vector<8x1xf32>
      %c0_128 = arith.constant 0 : index
      %c8_129 = arith.constant 8 : index
      %193 = vector.load %arg10[%c0_128, %c8_129] : memref<8x128xf32, #tpu.memory_space<vmem>>, vector<8x8xf32>
      %194 = vector.broadcast %192 : vector<8x1xf32> to vector<8x8xf32>
      %195 = arith.mulf %193, %194 : vector<8x8xf32>
      %196 = arith.truncf %195 : vector<8x8xf32> to vector<8x8xbf16>
      %c0_130 = arith.constant 0 : index
      %c0_131 = arith.constant 0 : index
      %c8_132 = arith.constant 8 : index
      %197 = vector.load %arg7[%c0_130, %c0_131, %c8_132] : memref<1x8x128xbf16, #tpu.memory_space<vmem>>, vector<1x8x8xbf16>
      %198 = vector.shape_cast %197 : vector<1x8x8xbf16> to vector<8x8xbf16>
      %199 = vector.shape_cast %196 : vector<8x8xbf16> to vector<1x8x8xbf16>
      tpu.vector_store %arg7[%c0_130, %c0_131, %c8_132], %199 {strides = array<i32>} : memref<1x8x128xbf16, #tpu.memory_space<vmem>>, vector<1x8x8xbf16>,
      %c2_133 = arith.constant 2 : index
      %c0_134 = arith.constant 0 : index
      %c0_135 = arith.constant 0 : index
      %200 = vector.load %arg9[%c2_133, %c0_134, %c0_135] : memref<4x8x128xf32, #tpu.memory_space<vmem>>, vector<1x8x1xf32>
      %201 = vector.shape_cast %200 : vector<1x8x1xf32> to vector<8x1xf32>
      %202 = tpu.reciprocal %201 {approx = true} : vector<8x1xf32> -> vector<8x1xf32>
      %c0_136 = arith.constant 0 : index
      %c16_137 = arith.constant 16 : index
      %203 = vector.load %arg10[%c0_136, %c16_137] : memref<8x128xf32, #tpu.memory_space<vmem>>, vector<8x8xf32>
      %204 = vector.broadcast %202 : vector<8x1xf32> to vector<8x8xf32>
      %205 = arith.mulf %203, %204 : vector<8x8xf32>
      %206 = arith.truncf %205 : vector<8x8xf32> to vector<8x8xbf16>
      %c0_138 = arith.constant 0 : index
      %c0_139 = arith.constant 0 : index
      %c16_140 = arith.constant 16 : index
      %207 = vector.load %arg7[%c0_138, %c0_139, %c16_140] : memref<1x8x128xbf16, #tpu.memory_space<vmem>>, vector<1x8x8xbf16>
      %208 = vector.shape_cast %207 : vector<1x8x8xbf16> to vector<8x8xbf16>
      %209 = vector.shape_cast %206 : vector<8x8xbf16> to vector<1x8x8xbf16>
      tpu.vector_store %arg7[%c0_138, %c0_139, %c16_140], %209 {strides = array<i32>} : memref<1x8x128xbf16, #tpu.memory_space<vmem>>, vector<1x8x8xbf16>,
      %c3_141 = arith.constant 3 : index
      %c0_142 = arith.constant 0 : index
      %c0_143 = arith.constant 0 : index
      %210 = vector.load %arg9[%c3_141, %c0_142, %c0_143] : memref<4x8x128xf32, #tpu.memory_space<vmem>>, vector<1x8x1xf32>
      %211 = vector.shape_cast %210 : vector<1x8x1xf32> to vector<8x1xf32>
      %212 = tpu.reciprocal %211 {approx = true} : vector<8x1xf32> -> vector<8x1xf32>
      %c0_144 = arith.constant 0 : index
      %c24_145 = arith.constant 24 : index
      %213 = vector.load %arg10[%c0_144, %c24_145] : memref<8x128xf32, #tpu.memory_space<vmem>>, vector<8x8xf32>
      %214 = vector.broadcast %212 : vector<8x1xf32> to vector<8x8xf32>
      %215 = arith.mulf %213, %214 : vector<8x8xf32>
      %216 = arith.truncf %215 : vector<8x8xf32> to vector<8x8xbf16>
      %c0_146 = arith.constant 0 : index
      %c0_147 = arith.constant 0 : index
      %c24_148 = arith.constant 24 : index
      %217 = vector.load %arg7[%c0_146, %c0_147, %c24_148] : memref<1x8x128xbf16, #tpu.memory_space<vmem>>, vector<1x8x8xbf16>
      %218 = vector.shape_cast %217 : vector<1x8x8xbf16> to vector<8x8xbf16>
      %219 = vector.shape_cast %216 : vector<8x8xbf16> to vector<1x8x8xbf16>
      tpu.vector_store %arg7[%c0_146, %c0_147, %c24_148], %219 {strides = array<i32>} : memref<1x8x128xbf16, #tpu.memory_space<vmem>>, vector<1x8x8xbf16>,
    } else {
    }
    return
  }
  func.func @transform_0(%arg0: i32, %arg1: i32, %arg2: i32) -> (i32, i32, i32) {
    %c0_i32 = arith.constant 0 : i32
    %c0_i32_0 = arith.constant 0 : i32
    return %arg0, %arg1, %c0_i32 : i32, i32, i32
  }
  func.func @transform_1(%arg0: i32, %arg1: i32, %arg2: i32) -> (i32, i32, i32) {
    %c0_i32 = arith.constant 0 : i32
    %c0_i32_0 = arith.constant 0 : i32
    return %arg0, %arg2, %c0_i32 : i32, i32, i32
  }
  func.func @transform_2(%arg0: i32, %arg1: i32, %arg2: i32) -> (i32, i32, i32) {
    %c1_i32 = arith.constant 1 : i32
    %c0_i32 = arith.constant 0 : i32
    return %arg0, %arg2, %c1_i32 : i32, i32, i32
  }
  func.func @transform_3(%arg0: i32, %arg1: i32, %arg2: i32) -> (i32, i32, i32) {
    %c0_i32 = arith.constant 0 : i32
    %c0_i32_0 = arith.constant 0 : i32
    return %arg0, %c0_i32, %arg2 : i32, i32, i32
  }
  func.func @transform_4(%arg0: i32, %arg1: i32, %arg2: i32) -> (i32, i32, i32) {
    %c0_i32 = arith.constant 0 : i32
    %c0_i32_0 = arith.constant 0 : i32
    return %arg0, %arg1, %c0_i32 : i32, i32, i32
  }
}

</mosaic_0001>

<llo_original>
// kernel: transformer_forward.42
$region0: #{transformer_forward.42}
  #allocation0 [shape = 'u32[]', space=smem, size = 0x4, offset = 0x4, fixed_abs, tag = 'smem constant byte address 0x4 - core index']
  #allocation1 [shape = 'u32[144,128]{1,0:T(1,128)}', space=vmem, size = 0x12000, scoped, tag = 'internal scratch']
  %s0 = inlined_call_operand.vmem [shape: bf16[16,128], index: 0, kind: input, shape index: {}]
  %s1 = inlined_call_operand.vmem [shape: f32[16,128], index: 1, kind: input, shape index: {}]
  %s2 = inlined_call_operand.vmem [shape: f32[1,128], index: 2, kind: input, shape index: {}]
  %s3 = inlined_call_operand.hbm [shape: f32[1,128], index: 3, kind: input, shape index: {}]
  %s4 = inlined_call_operand.vmem [shape: bf16[16,128], index: 4, kind: output, shape index: {}]
  %s5 = sld [smem:[#allocation0]]
  $region30: #{transformer_forward.42} parent=0
    _
  %s7 = ssub.s32 1, %s5
  %s8 = scalar_select 0, %s7, %s5
  $region1: #{transformer_forward.42} parent=0
    #allocation2 [shape = 'u8[512]{0}', space=vmem, size = 0x400, scoped, tag = 'input window, operand 3, single buffered']
    #allocation3 [shape = 's32[1]{0}', space=sflag, size = 0x4, scoped, tag = 'scoped memory for transformer_forward.42']
    %9 = vsyncpa [#allocation3], 0
    // Predicated region
    $region2: #{transformer_forward.42} parent=1 // pred_check
      _
    $region3: #{transformer_forward.42} parent=1 // pred_check_branch
      %11 = sbr.rel (0) target = $region5
    $region4: #{transformer_forward.42} parent=1 // pred_region
      _
    $region5: #{transformer_forward.42} parent=1 // pred_fallthru
      _
    // Predicated region
    $region6: #{transformer_forward.42} parent=1 // pred_check
      _
    $region7: #{transformer_forward.42} parent=1 // pred_check_branch
      %13 = sbr.rel (0) target = $region9
    $region8: #{transformer_forward.42} parent=1 // pred_region
      _
    $region9: #{transformer_forward.42} parent=1 // pred_fallthru
      _
    // Predicated region
    $region10: #{transformer_forward.42} parent=1 // pred_check
      _
    $region11: #{transformer_forward.42} parent=1 // pred_check_branch
      %15 = sbr.rel (0) target = $region13
    $region12: #{transformer_forward.42} parent=1 // pred_region
      _
    $region13: #{transformer_forward.42} parent=1 // pred_fallthru
      _
    // Predicated region
    $region14: #{transformer_forward.42} parent=1 // pred_check
      _
    $region15: #{transformer_forward.42} parent=1 // pred_check_branch
      %17 = sbr.rel (0) target = $region17
    $region16: #{transformer_forward.42} parent=1 // pred_region
      %s19 = ssub.s32 16, 16
      %20 = vsyncadd [#allocation3], %s19
      %s22 = sshll.u32 [#allocation2], 4
      %s23 = int_to_ptr.vmem [resolvable:$true] %s22
      %25 = dma.hbm_to_vmem [thread:$0]  %s3, 16, %s23, [#allocation3]
    $region17: #{transformer_forward.42} parent=1 // pred_fallthru
      _
    // Predicated region
    $region18: #{transformer_forward.42} parent=1 // pred_check
      _
    $region19: #{transformer_forward.42} parent=1 // pred_check_branch
      %27 = sbr.rel (0) target = $region21
    $region20: #{transformer_forward.42} parent=1 // pred_region
      %28 = dma.done [#allocation3], 16
    $region21: #{transformer_forward.42} parent=1 // pred_fallthru
      _
    %v29 = vld [vmem:[%s0] sm:$0xf]
    %v30 = vld [vmem:[%s0 + $0x4] sm:$0xf]
    %v31 = vunpack.c.l.bf16 %v29
    %v32 = vunpack.c.l.bf16 %v30
    %v33 = vld [vmem:[%s1] sm:$0xff]
    %v34 = vld [vmem:[%s1 + $0x8] sm:$0xff]
    %v35 = vadd.f32 %v31, %v33
    %v36 = vadd.f32 %v32, %v34
    %v37 = vld [vmem:[%s2] sm:$0x1]
    %v38 = vld [vmem:[#allocation2] sm:$0x1]
    %39 = vadd.xlane.f32.xlu0 %v35
    %v40 = vpop.xlane.xlu0 %39
    %41 = vadd.xlane.f32.xlu0 %v36
    %v42 = vpop.xlane.xlu0 %41
    %v43 = vmul.f32 %v40, 0.03125
    %v44 = vmul.f32 %v42, 0.03125
    %v45 = vlaneseq
    %v46 = vand.u32 %v45, 127
    %vm47 = vcmp.lt.s32.totalorder %v46, 32
    %v48 = vsub.f32 %v35, %v43
    %v49 = vsub.f32 %v36, %v44
    %v50 = vsel %vm47, %v48, 0.0
    %v51 = vsel %vm47, %v49, 0.0
    %v52 = vmul.f32 %v50, %v50
    %v53 = vmul.f32 %v51, %v51
    %54 = vadd.xlane.f32.xlu0 %v52
    %v55 = vpop.xlane.xlu0 %54
    %56 = vadd.xlane.f32.xlu0 %v53
    %v57 = vpop.xlane.xlu0 %56
    %v58 = vmul.f32 %v55, 0.03125
    %v59 = vmul.f32 %v57, 0.03125
    %v60 = vadd.f32 %v58, 1e-06
    %v61 = vadd.f32 %v59, 1e-06
    %v62 = vrsqrt.pop %v60
    %v63 = vrsqrt.pop %v61
    %v64 = vmul.f32 %v48, %v62
    %v65 = vmul.f32 %v49, %v63
    %v67 = vlaneseq
    %v68 = vshrl.u32 %v67, 7
    %v69 = vsub.s32 0, %v68
    %v70 = vrot.slane %v37, %v69
    %v72 = vmul.f32 %v64, %v70
    %v73 = vmul.f32 %v65, %v70
    %v75 = vlaneseq
    %v76 = vshrl.u32 %v75, 7
    %v77 = vsub.s32 0, %v76
    %v78 = vrot.slane %v38, %v77
    %v80 = vadd.f32 %v72, %v78
    %v81 = vadd.f32 %v73, %v78
    %v82 = vpack.c.bf16 %v81, %v80
    %v84 = vunpack.c.l.b16 %v82
    %v85 = vunpack.c.h.b16 %v82
    %v86 = vpack.c.b16 %v84, %v84
    %v87 = vpack.c.b16 %v85, %v85
    %90 = vst [vmem:[%s4] sm:$0xf] %v86
    %91 = vst [vmem:[%s4 + $0x4] sm:$0xf] %v87
    // Predicated region
    $region22: #{transformer_forward.42} parent=1 // pred_check
      _
    $region23: #{transformer_forward.42} parent=1 // pred_check_branch
      %93 = sbr.rel (0) target = $region25
    $region24: #{transformer_forward.42} parent=1 // pred_region
      _
    $region25: #{transformer_forward.42} parent=1 // pred_fallthru
      _
    // Predicated region
    $region26: #{transformer_forward.42} parent=1 // pred_check
      _
    $region27: #{transformer_forward.42} parent=1 // pred_check_branch
      %95 = sbr.rel (0) target = $region29
    $region28: #{transformer_forward.42} parent=1 // pred_region
      _
    $region29: #{transformer_forward.42} parent=1 // pred_fallthru
      _
    %96 = vsyncpa [#allocation3], 1

// kernel: transformer_forward.45
$region0: #{transformer_forward.45}
  #allocation0 [shape = 'u32[]', space=smem, size = 0x4, offset = 0x4, fixed_abs, tag = 'smem constant byte address 0x4 - core index']
  #allocation1 [shape = 'u32[144,128]{1,0:T(1,128)}', space=vmem, size = 0x12000, scoped, tag = 'internal scratch']
  #allocation2 [shape = 'f32[16,128]{1,0:T(8,128)}', space=vmem, size = 0x2000, scoped, tag = 'scratch operand']
  %s0 = inlined_call_operand.vmem [shape: bf16[16,128], index: 0, kind: input, shape index: {}]
  %s1 = inlined_call_operand.vmem [shape: bf16[128,128], index: 1, kind: input, shape index: {}]
  %s2 = inlined_call_operand.vmem [shape: f32[1,128], index: 2, kind: input, shape index: {}]
  %s3 = inlined_call_operand.vmem [shape: bf16[16,128], index: 3, kind: input, shape index: {}]
  %s4 = inlined_call_operand.vmem [shape: f32[1,128], index: 4, kind: input, shape index: {}]
  %s5 = inlined_call_operand.vmem [shape: f32[1,128], index: 5, kind: input, shape index: {}]
  %s6 = inlined_call_operand.vmem [shape: bf16[16,128], index: 6, kind: output, shape index: {}]
  %s7 = sld [smem:[#allocation0]]
  $region42: #{transformer_forward.45} parent=0
    _
  %s9 = ssub.s32 1, %s7
  %s10 = scalar_select 0, %s9, %s7
  // Predicated region
  $region2: #{transformer_forward.45} parent=0 // pred_check
    _
  $region3: #{transformer_forward.45} parent=0 // pred_check_branch
    %12 = sbr.rel (0) target = $region5
  $region4: #{transformer_forward.45} parent=0 // pred_region
    _
  $region5: #{transformer_forward.45} parent=0 // pred_fallthru
    _
  // Predicated region
  $region6: #{transformer_forward.45} parent=0 // pred_check
    _
  $region7: #{transformer_forward.45} parent=0 // pred_check_branch
    %14 = sbr.rel (0) target = $region9
  $region8: #{transformer_forward.45} parent=0 // pred_region
    _
  $region9: #{transformer_forward.45} parent=0 // pred_fallthru
    _
  // Predicated region
  $region10: #{transformer_forward.45} parent=0 // pred_check
    _
  $region11: #{transformer_forward.45} parent=0 // pred_check_branch
    %16 = sbr.rel (0) target = $region13
  $region12: #{transformer_forward.45} parent=0 // pred_region
    _
  $region13: #{transformer_forward.45} parent=0 // pred_fallthru
    _
  // Predicated region
  $region14: #{transformer_forward.45} parent=0 // pred_check
    _
  $region15: #{transformer_forward.45} parent=0 // pred_check_branch
    %18 = sbr.rel (0) target = $region17
  $region16: #{transformer_forward.45} parent=0 // pred_region
    _
  $region17: #{transformer_forward.45} parent=0 // pred_fallthru
    _
  // Predicated region
  $region18: #{transformer_forward.45} parent=0 // pred_check
    _
  $region19: #{transformer_forward.45} parent=0 // pred_check_branch
    %20 = sbr.rel (0) target = $region21
  $region20: #{transformer_forward.45} parent=0 // pred_region
    _
  $region21: #{transformer_forward.45} parent=0 // pred_fallthru
    _
  // Predicated region
  $region22: #{transformer_forward.45} parent=0 // pred_check
    _
  $region23: #{transformer_forward.45} parent=0 // pred_check_branch
    %22 = sbr.rel (0) target = $region25
  $region24: #{transformer_forward.45} parent=0 // pred_region
    _
  $region25: #{transformer_forward.45} parent=0 // pred_fallthru
    _
  %p24 = scmp.eq.s32.totalorder 0, 0
  // Predicated region
  $region26: #{transformer_forward.45} parent=0 // pred_check
    %p25 = pneg %p24
  $region27: #{transformer_forward.45} parent=0 // pred_check_branch
    %27 = sbr.rel (%p25) target = $region29
  $region28: #{transformer_forward.45} parent=0 // pred_region
    %28 = vst [vmem:[#allocation2] sm:$0xff] 0.0
    %29 = vst [vmem:[#allocation2 + $0x8] sm:$0xff] 0.0
  $region29: #{transformer_forward.45} parent=0 // pred_fallthru
    _
  %v30 = vld [vmem:[#allocation2] sm:$0xff]
  %v31 = vld [vmem:[#allocation2 + $0x8] sm:$0xff]
  %v32 = vld [vmem:[%s0] sm:$0xf]
  %v33 = vld [vmem:[%s0 + $0x4] sm:$0xf]
  %v34 = vld [vmem:[%s1] sm:$0xf]
  %v35 = vld [vmem:[%s1 + $0x4] sm:$0xf]
  %v36 = vld [vmem:[%s1 + $0x8] sm:$0xf]
  %v37 = vld [vmem:[%s1 + $0xc] sm:$0xf]
  %v38 = vld [vmem:[%s1 + $0x10] sm:$0xf]
  %v39 = vld [vmem:[%s1 + $0x14] sm:$0xf]
  %v40 = vld [vmem:[%s1 + $0x18] sm:$0xf]
  %v41 = vld [vmem:[%s1 + $0x1c] sm:$0xf]
  %v42 = vld [vmem:[%s1 + $0x20] sm:$0xf]
  %v43 = vld [vmem:[%s1 + $0x24] sm:$0xf]
  %v44 = vld [vmem:[%s1 + $0x28] sm:$0xf]
  %v45 = vld [vmem:[%s1 + $0x2c] sm:$0xf]
  %v46 = vld [vmem:[%s1 + $0x30] sm:$0xf]
  %v47 = vld [vmem:[%s1 + $0x34] sm:$0xf]
  %v48 = vld [vmem:[%s1 + $0x38] sm:$0xf]
  %v49 = vld [vmem:[%s1 + $0x3c] sm:$0xf]
  %v52 = vunpack.c.l.b16 %v32
  %v53 = vunpack.c.l.b16 %v33
  %v54 = vpack.c.b16 %v53, %v52
  %v72 = vunpack.c.l.b16 %v34
  %v73 = vunpack.c.l.b16 %v35
  %v74 = vunpack.c.l.b16 %v36
  %v75 = vunpack.c.l.b16 %v37
  %v76 = vunpack.c.l.b16 %v38
  %v77 = vunpack.c.l.b16 %v39
  %v78 = vunpack.c.l.b16 %v40
  %v79 = vunpack.c.l.b16 %v41
  %v80 = vunpack.c.l.b16 %v42
  %v81 = vunpack.c.l.b16 %v43
  %v82 = vunpack.c.l.b16 %v44
  %v83 = vunpack.c.l.b16 %v45
  %v84 = vunpack.c.l.b16 %v46
  %v85 = vunpack.c.l.b16 %v47
  %v86 = vunpack.c.l.b16 %v48
  %v87 = vunpack.c.l.b16 %v49
  %v88 = vpack.c.b16 %v73, %v72
  %v89 = vpack.c.b16 %v75, %v74
  %v90 = vpack.c.b16 %v77, %v76
  %v91 = vpack.c.b16 %v79, %v78
  %v92 = vpack.c.b16 %v81, %v80
  %v93 = vpack.c.b16 %v83, %v82
  %v94 = vpack.c.b16 %v85, %v84
  %v95 = vpack.c.b16 %v87, %v86
  %104 = vmatprep.subr.bf16.mxu0 0
  %105 = vmatpush1.bf16.msra.mxu0 %v95
  %106 = vmatprep.subr.bf16.mxu0 0
  %107 = vmatpush1.bf16.msra.mxu0 %v94
  %108 = vmatprep.subr.bf16.mxu0 0
  %109 = vmatpush1.bf16.msra.mxu0 %v93
  %110 = vmatprep.subr.bf16.mxu0 0
  %111 = vmatpush1.bf16.msra.mxu0 %v92
  %112 = vmatprep.subr.bf16.mxu0 0
  %113 = vmatpush1.bf16.msra.mxu0 %v91
  %114 = vmatprep.subr.bf16.mxu0 0
  %115 = vmatpush1.bf16.msra.mxu0 %v90
  %116 = vmatprep.subr.bf16.mxu0 0
  %117 = vmatpush1.bf16.msra.mxu0 %v89
  %118 = vmatprep.subr.bf16.mxu0 0
  %119 = vmatpush1.bf16.msra.mxu0 %v88
  %120 = vmatprep.subr.bf16.mxu0 0
  %121 = vmatpush2.bf16.msra.mxu0 0
  %122 = vmatprep.subr.bf16.mxu0 0
  %123 = vmatpush2.bf16.msra.mxu0 0
  %124 = vmatprep.subr.bf16.mxu0 0
  %125 = vmatpush2.bf16.msra.mxu0 0
  %126 = vmatprep.subr.bf16.mxu0 0
  %127 = vmatpush2.bf16.msra.mxu0 0
  %128 = vmatprep.subr.bf16.mxu0 0
  %129 = vmatpush2.bf16.msra.mxu0 0
  %130 = vmatprep.subr.bf16.mxu0 0
  %131 = vmatpush2.bf16.msra.mxu0 0
  %132 = vmatprep.subr.bf16.mxu0 0
  %133 = vmatpush2.bf16.msra.mxu0 0
  %134 = vmatprep.subr.bf16.mxu0 0
  %135 = vmatpush2.bf16.msra.mxu0 0
  %136 = vmatprep.mubr.bf16.mxu0 0
  %137 = vmatmul.mubr.bf16.gmra.mxu0 %v54
  %v138 = vpop.f32.mrf.mxu0
  %v139 = vadd.f32 0.0, %v138
  %v140 = vpop.f32.mrf.mxu0
  %v141 = vpop.f32.mrf.mxu0
  %v142 = vadd.f32 0.0, %v141
  %v143 = vpop.f32.mrf.mxu0
  %144 = vdwg.mxu0
  %v145 = vadd.f32 %v30, %v139
  %v146 = vadd.f32 %v31, %v142
  %147 = vst [vmem:[#allocation2] sm:$0xff] %v145
  %148 = vst [vmem:[#allocation2 + $0x8] sm:$0xff] %v146
  // Predicated region
  $region30: #{transformer_forward.45} parent=0 // pred_check
    %p149 = pneg %p24
  $region31: #{transformer_forward.45} parent=0 // pred_check_branch
    %151 = sbr.rel (%p149) target = $region33
  $region32: #{transformer_forward.45} parent=0 // pred_region
    %v152 = vld [vmem:[#allocation2] sm:$0xff]
    %v153 = vld [vmem:[#allocation2 + $0x8] sm:$0xff]
    %v154 = vld [vmem:[%s2] sm:$0x1]
    %v156 = vlaneseq
    %v157 = vshrl.u32 %v156, 7
    %v158 = vsub.s32 0, %v157
    %v159 = vrot.slane %v154, %v158
    %v161 = vadd.f32 %v152, %v159
    %v162 = vadd.f32 %v153, %v159
    %v163 = vld [vmem:[%s3] sm:$0xf]
    %v164 = vld [vmem:[%s3 + $0x4] sm:$0xf]
    %v165 = vunpack.c.l.bf16 %v163
    %v166 = vunpack.c.l.bf16 %v164
    %v167 = vadd.f32 %v161, %v165
    %v168 = vadd.f32 %v162, %v166
    %v169 = vld [vmem:[%s4] sm:$0x1]
    %v170 = vld [vmem:[%s5] sm:$0x1]
    %171 = vadd.xlane.f32.xlu0 %v167
    %v172 = vpop.xlane.xlu0 %171
    %173 = vadd.xlane.f32.xlu0 %v168
    %v174 = vpop.xlane.xlu0 %173
    %v175 = vmul.f32 %v172, 0.03125
    %v176 = vmul.f32 %v174, 0.03125
    %v177 = vlaneseq
    %v178 = vand.u32 %v177, 127
    %vm179 = vcmp.lt.s32.totalorder %v178, 32
    %v180 = vsub.f32 %v167, %v175
    %v181 = vsub.f32 %v168, %v176
    %v182 = vsel %vm179, %v180, 0.0
    %v183 = vsel %vm179, %v181, 0.0
    %v184 = vmul.f32 %v182, %v182
    %v185 = vmul.f32 %v183, %v183
    %186 = vadd.xlane.f32.xlu0 %v184
    %v187 = vpop.xlane.xlu0 %186
    %188 = vadd.xlane.f32.xlu0 %v185
    %v189 = vpop.xlane.xlu0 %188
    %v190 = vmul.f32 %v187, 0.03125
    %v191 = vmul.f32 %v189, 0.03125
    %v192 = vadd.f32 %v190, 1e-06
    %v193 = vadd.f32 %v191, 1e-06
    %v194 = vrsqrt.pop %v192
    %v195 = vrsqrt.pop %v193
    %v196 = vmul.f32 %v180, %v194
    %v197 = vmul.f32 %v181, %v195
    %v199 = vlaneseq
    %v200 = vshrl.u32 %v199, 7
    %v201 = vsub.s32 0, %v200
    %v202 = vrot.slane %v169, %v201
    %v204 = vmul.f32 %v196, %v202
    %v205 = vmul.f32 %v197, %v202
    %v207 = vlaneseq
    %v208 = vshrl.u32 %v207, 7
    %v209 = vsub.s32 0, %v208
    %v210 = vrot.slane %v170, %v209
    %v212 = vadd.f32 %v204, %v210
    %v213 = vadd.f32 %v205, %v210
    %v214 = vpack.c.bf16 %v213, %v212
    %v216 = vunpack.c.l.b16 %v214
    %v217 = vunpack.c.h.b16 %v214
    %v218 = vpack.c.b16 %v216, %v216
    %v219 = vpack.c.b16 %v217, %v217
    %222 = vst [vmem:[%s6] sm:$0xf] %v218
    %223 = vst [vmem:[%s6 + $0x4] sm:$0xf] %v219
  $region33: #{transformer_forward.45} parent=0 // pred_fallthru
    _
  // Predicated region
  $region34: #{transformer_forward.45} parent=0 // pred_check
    _
  $region35: #{transformer_forward.45} parent=0 // pred_check_branch
    %225 = sbr.rel (0) target = $region37
  $region36: #{transformer_forward.45} parent=0 // pred_region
    _
  $region37: #{transformer_forward.45} parent=0 // pred_fallthru
    _
  // Predicated region
  $region38: #{transformer_forward.45} parent=0 // pred_check
    _
  $region39: #{transformer_forward.45} parent=0 // pred_check_branch
    %227 = sbr.rel (0) target = $region41
  $region40: #{transformer_forward.45} parent=0 // pred_region
    _
  $region41: #{transformer_forward.45} parent=0 // pred_fallthru
    _

// kernel: transformer_forward.43
$region0: #{transformer_forward.43}
  #allocation0 [shape = 'u32[]', space=smem, size = 0x4, offset = 0x4, fixed_abs, tag = 'smem constant byte address 0x4 - core index']
  #allocation1 [shape = 'u32[144,128]{1,0:T(1,128)}', space=vmem, size = 0x12000, scoped, tag = 'internal scratch']
  #allocation2 [shape = 'f32[16,128]{1,0:T(8,128)}', space=vmem, size = 0x2000, scoped, tag = 'scratch operand']
  %s0 = inlined_call_operand.vmem [shape: bf16[16,128], index: 0, kind: input, shape index: {}]
  %s1 = inlined_call_operand.vmem [shape: bf16[128,384], index: 1, kind: input, shape index: {}]
  %s2 = inlined_call_operand.vmem [shape: f32[1,384], index: 2, kind: input, shape index: {}]
  %s3 = inlined_call_operand.vmem [shape: bf16[16,384], index: 3, kind: output, shape index: {}]
  %s4 = sld [smem:[#allocation0]]
  $region131: #{transformer_forward.43} parent=0
    _
  %s6 = ssub.s32 1, %s4
  %s7 = scalar_select 0, %s6, %s4
  $region1: #{transformer_forward.43} parent=0
    #allocation3 [shape = 'u8[65536]{0}', space=vmem, size = 0x10000, scoped, tag = 'input window, operand 1']
    #allocation4 [shape = 'u8[8192]{0}', space=vmem, size = 0x2000, scoped, tag = 'output window, operand 0']
    loop: start=0, step=1, limit=5
    $region2: #{transformer_forward.43} parent=1 // loop_pre_header
      _
    $region3: #{transformer_forward.43} parent=1 // loop_header
      %s9 = sphi 0, %s13
      %p10 = scmp.ge.s32.totalorder %s9, 5
      %s16 = sphi 0, %s35
      %s17 = sphi 0, %s31
      %s18 = sphi 0, %s27
      %s19 = sphi 0, %s16
      %s20 = sphi 0, %s17
      %s21 = sphi 0, %s18
      %s22 = sphi 0, %s19
      %s23 = sphi 0, %s20
      %s24 = sphi 0, %s21
      %s40 = sphi 0, %s42
      %s43 = sphi 0, %s40
      %s44 = sphi 0, %s43
      %s60 = sphi 0, %s44
      %s68 = sphi 0, %s70
      %s71 = sphi 0, %s68
      %s72 = sphi 0, %s71
      %s88 = sphi 0, %s72
      %s94 = sphi 0, %s96
      %s97 = sphi 0, %s94
      %s98 = sphi 0, %s97
      %s114 = sphi 0, %s98
      %s122 = sphi 0, %s124
      %s125 = sphi 0, %s122
      %s126 = sphi 0, %s125
      %s142 = sphi 0, %s126
    $region4: #{transformer_forward.43} parent=1 // loop_header_branch
      %12 = sbr.rel (%p10) target = $region8
    $region5: #{transformer_forward.43} parent=1 // loop_body
      %s14 = ssub.s32 %s9, 1
      %s15 = ssub.s32 %s9, 2
      %s25 = sadd.s32 1, %s18
      %p26 = scmp.ge.s32.totalorder %s25, 1
      %s27 = scalar_select %p26, 0, %s25
      %s28 = sadd.s32 1, %s17
      %s29 = scalar_select %p26, %s28, %s17
      %p30 = scmp.ge.s32.totalorder %s29, 3
      %s31 = scalar_select %p30, 0, %s29
      %s32 = sadd.s32 1, %s16
      %s33 = scalar_select %p30, %s32, %s16
      %p34 = scmp.ge.s32.totalorder %s33, 1
      %s35 = scalar_select %p34, 0, %s33
      %s36 = ssub.s32 %s16, %s35
      %s37 = ssub.s32 %s18, %s27
      %s38 = sor.u32 %s36, %s37
      %p39 = scmp.eq.s32.totalorder %s38, 0
      %s41 = sadd.s32 %s40, 1
      %s42 = scalar_select %p39, %s40, %s41
      %p45 = pneg %p39
      %p46 = scmp.eq.s32.totalorder %s9, 2
      %p47 = por %p45, %p46
      %p48 = scmp.ne.s32.totalorder %s40, %s43
      %p49 = scmp.eq.s32.totalorder %s9, 0
      %p50 = por %p48, %p49
      %p51 = scmp.ne.s32.totalorder %s40, %s43
      %p52 = scmp.eq.s32.totalorder %s14, 2
      %p53 = por %p51, %p52
      %p54 = scmp.ne.s32.totalorder %s43, %s44
      %p55 = scmp.eq.s32.totalorder %s14, 0
      %p56 = por %p54, %p55
      %p57 = scmp.ne.s32.totalorder %s43, %s44
      %p58 = scmp.eq.s32.totalorder %s15, 2
      %p59 = por %p57, %p58
      %p61 = scmp.ne.s32.totalorder %s44, %s60
      %p62 = scmp.eq.s32.totalorder %s15, 0
      %p63 = por %p61, %p62
      %s64 = ssub.s32 %s18, %s27
      %s65 = ssub.s32 %s17, %s31
      %s66 = sor.u32 %s64, %s65
      %p67 = scmp.eq.s32.totalorder %s66, 0
      %s69 = sadd.s32 %s68, 1
      %s70 = scalar_select %p67, %s68, %s69
      %p73 = pneg %p67
      %p74 = scmp.eq.s32.totalorder %s9, 2
      %p75 = por %p73, %p74
      %p76 = scmp.ne.s32.totalorder %s68, %s71
      %p77 = scmp.eq.s32.totalorder %s9, 0
      %p78 = por %p76, %p77
      %p79 = scmp.ne.s32.totalorder %s68, %s71
      %p80 = scmp.eq.s32.totalorder %s14, 2
      %p81 = por %p79, %p80
      %p82 = scmp.ne.s32.totalorder %s71, %s72
      %p83 = scmp.eq.s32.totalorder %s14, 0
      %p84 = por %p82, %p83
      %p85 = scmp.ne.s32.totalorder %s71, %s72
      %p86 = scmp.eq.s32.totalorder %s15, 2
      %p87 = por %p85, %p86
      %p89 = scmp.ne.s32.totalorder %s72, %s88
      %p90 = scmp.eq.s32.totalorder %s15, 0
      %p91 = por %p89, %p90
      %s92 = ssub.s32 %s17, %s31
      %p93 = scmp.eq.s32.totalorder %s92, 0
      %s95 = sadd.s32 %s94, 1
      %s96 = scalar_select %p93, %s94, %s95
      %p99 = pneg %p93
      %p100 = scmp.eq.s32.totalorder %s9, 2
      %p101 = por %p99, %p100
      %p102 = scmp.ne.s32.totalorder %s94, %s97
      %p103 = scmp.eq.s32.totalorder %s9, 0
      %p104 = por %p102, %p103
      %p105 = scmp.ne.s32.totalorder %s94, %s97
      %p106 = scmp.eq.s32.totalorder %s14, 2
      %p107 = por %p105, %p106
      %p108 = scmp.ne.s32.totalorder %s97, %s98
      %p109 = scmp.eq.s32.totalorder %s14, 0
      %p110 = por %p108, %p109
      %p111 = scmp.ne.s32.totalorder %s97, %s98
      %p112 = scmp.eq.s32.totalorder %s15, 2
      %p113 = por %p111, %p112
      %p115 = scmp.ne.s32.totalorder %s98, %s114
      %p116 = scmp.eq.s32.totalorder %s15, 0
      %p117 = por %p115, %p116
      %s118 = ssub.s32 %s16, %s35
      %s119 = ssub.s32 %s17, %s31
      %s120 = sor.u32 %s118, %s119
      %p121 = scmp.eq.s32.totalorder %s120, 0
      %s123 = sadd.s32 %s122, 1
      %s124 = scalar_select %p121, %s122, %s123
      %p127 = pneg %p121
      %p128 = scmp.eq.s32.totalorder %s9, 2
      %p129 = por %p127, %p128
      %p130 = scmp.ne.s32.totalorder %s122, %s125
      %p131 = scmp.eq.s32.totalorder %s9, 0
      %p132 = por %p130, %p131
      %p133 = scmp.ne.s32.totalorder %s122, %s125
      %p134 = scmp.eq.s32.totalorder %s14, 2
      %p135 = por %p133, %p134
      %p136 = scmp.ne.s32.totalorder %s125, %s126
      %p137 = scmp.eq.s32.totalorder %s14, 0
      %p138 = por %p136, %p137
      %p139 = scmp.ne.s32.totalorder %s125, %s126
      %p140 = scmp.eq.s32.totalorder %s15, 2
      %p141 = por %p139, %p140
      %p143 = scmp.ne.s32.totalorder %s126, %s142
      %p144 = scmp.eq.s32.totalorder %s15, 0
      %p145 = por %p143, %p144
      %p146 = scmp.le.s32.totalorder 1, %s9
      %p147 = scmp.lt.s32.totalorder %s9, 4
      %p148 = pnand %p146, %p147
      %p149 = pneg %p148
      // Predicated region
      $region9: #{transformer_forward.43} parent=5 // pred_check
        _
      $region10: #{transformer_forward.43} parent=5 // pred_check_branch
        %151 = sbr.rel (%p148) target = $region12
      $region11: #{transformer_forward.43} parent=5 // pred_region
        %s152 = ssub.s32 %s9, 1
        // Predicated region
        $region13: #{transformer_forward.43} parent=11 // pred_check
          %p153 = pneg %p56
        $region14: #{transformer_forward.43} parent=11 // pred_check_branch
          %155 = sbr.rel (%p153) target = $region16
        $region15: #{transformer_forward.43} parent=11 // pred_region
          %s156 = smul.u32 2, %s19
          %p157 = scmp.lt.s32.totalorder %s156, 1
          %s158 = scalar_select %p157, %s156, 1
          %p159 = scmp.lt.s32.totalorder %s21, 0
          %s160 = scalar_select %p159, %s21, 0
          %s161 = sadd.s32 %s160, %s158
          %s162 = smul.addr %s161, 4
          %s163 = scalar_lea.vmem %s0, %s162
          %s164 = smul.u32 2, %s19
        $region16: #{transformer_forward.43} parent=11 // pred_fallthru
          _
      $region12: #{transformer_forward.43} parent=5 // pred_fallthru
        _
      %p165 = scmp.lt.s32.totalorder %s9, 3
      // Predicated region
      $region17: #{transformer_forward.43} parent=5 // pred_check
        %p166 = pneg %p165
      $region18: #{transformer_forward.43} parent=5 // pred_check_branch
        %168 = sbr.rel (%p166) target = $region20
      $region19: #{transformer_forward.43} parent=5 // pred_region
        // Predicated region
        $region21: #{transformer_forward.43} parent=19 // pred_check
          %p169 = pneg %p78
        $region22: #{transformer_forward.43} parent=19 // pred_check_branch
          %171 = sbr.rel (%p169) target = $region24
        $region23: #{transformer_forward.43} parent=19 // pred_region
          %s172 = sand.u32 %s68, 1
          %s173 = sand.u32 %s68, 1
          %s174 = smul.addr %s173, 64
          %s175 = scalar_lea.vmem [#allocation3], %s174
          %s176 = smul.u32 16, %s18
          %s177 = smul.addr %s176, 3
          %s178 = sadd.s32 %s17, %s177
          %s179 = smul.addr %s178, 4
          %s180 = scalar_lea.vmem %s1, %s179
          // Predicated region
          $region25: #{transformer_forward.43} parent=23 // pred_check
            _
          $region26: #{transformer_forward.43} parent=23 // pred_check_branch
            %182 = sbr.rel (0) target = $region28
          $region27: #{transformer_forward.43} parent=23 // pred_region
            // Predicated region
            $region29: #{transformer_forward.43} parent=27 // pred_check
              _
            $region30: #{transformer_forward.43} parent=27 // pred_check_branch
              %184 = sbr.rel target = $region32
            $region31: #{transformer_forward.43} parent=27 // pred_region
              // Predicated region
              $region44: #{transformer_forward.43} parent=31 // pred_check
                _
              $region45: #{transformer_forward.43} parent=31 // pred_check_branch
                %230 = sbr.rel (0) target = $region47
              $region46: #{transformer_forward.43} parent=31 // pred_region
                loop: start=0, step=1, limit=1
                $region48: #{transformer_forward.43} parent=46 // loop_pre_header
                  _
                $region49: #{transformer_forward.43} parent=46 // loop_header
                  %s232 = sphi 0, %s236
                  %p233 = scmp.ge.s32.totalorder %s232, 1
                  %s237 = sphi %s180, %s180
                  %s238 = sphi %s175, %s175
                $region50: #{transformer_forward.43} parent=46 // loop_header_branch
                  %235 = sbr.rel (%p233) target = $region54
                $region51: #{transformer_forward.43} parent=46 // loop_body
                  _
                $region52: #{transformer_forward.43} parent=46 // loop_footer
                  %s236 = sadd.s32 1, %s232
                $region53: #{transformer_forward.43} parent=46 // loop_footer_branch
                  %231 = sbr.rel target = $region49
                $region54: #{transformer_forward.43} parent=46 // loop_exit
                  _
                %s240 = ssub.s32 16, 1
                loop: start=0, step=1, limit=1
                $region55: #{transformer_forward.43} parent=46 // loop_pre_header
                  _
                $region56: #{transformer_forward.43} parent=46 // loop_header
                  %s242 = sphi 0, %s246
                  %p243 = scmp.ge.s32.totalorder %s242, 1
                  %s247 = sphi %s180, %s180
                  %s248 = sphi %s175, %s175
                $region57: #{transformer_forward.43} parent=46 // loop_header_branch
                  %245 = sbr.rel (%p243) target = $region61
                $region58: #{transformer_forward.43} parent=46 // loop_body
                  %v249 = vld [vmem:[%s247] sm:%s240]
                  %250 = vst [vmem:[%s248] sm:%s240] %v249
                  %v251 = vld [vmem:[%s247 + $0xc] sm:%s240]
                  %252 = vst [vmem:[%s248 + $0x4] sm:%s240] %v251
                  %v253 = vld [vmem:[%s247 + $0x18] sm:%s240]
                  %254 = vst [vmem:[%s248 + $0x8] sm:%s240] %v253
                  %v255 = vld [vmem:[%s247 + $0x24] sm:%s240]
                  %256 = vst [vmem:[%s248 + $0xc] sm:%s240] %v255
                  %v257 = vld [vmem:[%s247 + $0x30] sm:%s240]
                  %258 = vst [vmem:[%s248 + $0x10] sm:%s240] %v257
                  %v259 = vld [vmem:[%s247 + $0x3c] sm:%s240]
                  %260 = vst [vmem:[%s248 + $0x14] sm:%s240] %v259
                  %v261 = vld [vmem:[%s247 + $0x48] sm:%s240]
                  %262 = vst [vmem:[%s248 + $0x18] sm:%s240] %v261
                  %v263 = vld [vmem:[%s247 + $0x54] sm:%s240]
                  %264 = vst [vmem:[%s248 + $0x1c] sm:%s240] %v263
                  %v265 = vld [vmem:[%s247 + $0x60] sm:%s240]
                  %266 = vst [vmem:[%s248 + $0x20] sm:%s240] %v265
                  %v267 = vld [vmem:[%s247 + $0x6c] sm:%s240]
                  %268 = vst [vmem:[%s248 + $0x24] sm:%s240] %v267
                  %v269 = vld [vmem:[%s247 + $0x78] sm:%s240]
                  %270 = vst [vmem:[%s248 + $0x28] sm:%s240] %v269
                  %v271 = vld [vmem:[%s247 + $0x84] sm:%s240]
                  %272 = vst [vmem:[%s248 + $0x2c] sm:%s240] %v271
                  %v273 = vld [vmem:[%s247 + $0x90] sm:%s240]
                  %274 = vst [vmem:[%s248 + $0x30] sm:%s240] %v273
                  %v275 = vld [vmem:[%s247 + $0x9c] sm:%s240]
                  %276 = vst [vmem:[%s248 + $0x34] sm:%s240] %v275
                  %v277 = vld [vmem:[%s247 + $0xa8] sm:%s240]
                  %278 = vst [vmem:[%s248 + $0x38] sm:%s240] %v277
                  %v279 = vld [vmem:[%s247 + $0xb4] sm:%s240]
                  %280 = vst [vmem:[%s248 + $0x3c] sm:%s240] %v279
                $region59: #{transformer_forward.43} parent=46 // loop_footer
                  %s246 = sadd.s32 1, %s242
                $region60: #{transformer_forward.43} parent=46 // loop_footer_branch
                  %241 = sbr.rel target = $region56
                $region61: #{transformer_forward.43} parent=46 // loop_exit
                  _
              $region47: #{transformer_forward.43} parent=31 // pred_fallthru
                _
            $region32: #{transformer_forward.43} parent=27 // pred_fallthru
              _
            // Predicated region
            $region33: #{transformer_forward.43} parent=27 // pred_check
              _
            $region34: #{transformer_forward.43} parent=27 // pred_check_branch
              %186 = sbr.rel (0) target = $region36
            $region35: #{transformer_forward.43} parent=27 // pred_region
              %s188 = ssub.s32 16, 1
              loop: start=0, step=1, limit=1
              $region37: #{transformer_forward.43} parent=35 // loop_pre_header
                _
              $region38: #{transformer_forward.43} parent=35 // loop_header
                %s190 = sphi 0, %s194
                %p191 = scmp.ge.s32.totalorder %s190, 1
                %s195 = sphi %s180, %s180
                %s196 = sphi %s175, %s175
              $region39: #{transformer_forward.43} parent=35 // loop_header_branch
                %193 = sbr.rel (%p191) target = $region43
              $region40: #{transformer_forward.43} parent=35 // loop_body
                %v197 = vld [vmem:[%s195] sm:%s188]
                %198 = vst [vmem:[%s196] sm:%s188] %v197
                %v199 = vld [vmem:[%s195 + $0xc] sm:%s188]
                %200 = vst [vmem:[%s196 + $0x4] sm:%s188] %v199
                %v201 = vld [vmem:[%s195 + $0x18] sm:%s188]
                %202 = vst [vmem:[%s196 + $0x8] sm:%s188] %v201
                %v203 = vld [vmem:[%s195 + $0x24] sm:%s188]
                %204 = vst [vmem:[%s196 + $0xc] sm:%s188] %v203
                %v205 = vld [vmem:[%s195 + $0x30] sm:%s188]
                %206 = vst [vmem:[%s196 + $0x10] sm:%s188] %v205
                %v207 = vld [vmem:[%s195 + $0x3c] sm:%s188]
                %208 = vst [vmem:[%s196 + $0x14] sm:%s188] %v207
                %v209 = vld [vmem:[%s195 + $0x48] sm:%s188]
                %210 = vst [vmem:[%s196 + $0x18] sm:%s188] %v209
                %v211 = vld [vmem:[%s195 + $0x54] sm:%s188]
                %212 = vst [vmem:[%s196 + $0x1c] sm:%s188] %v211
                %v213 = vld [vmem:[%s195 + $0x60] sm:%s188]
                %214 = vst [vmem:[%s196 + $0x20] sm:%s188] %v213
                %v215 = vld [vmem:[%s195 + $0x6c] sm:%s188]
                %216 = vst [vmem:[%s196 + $0x24] sm:%s188] %v215
                %v217 = vld [vmem:[%s195 + $0x78] sm:%s188]
                %218 = vst [vmem:[%s196 + $0x28] sm:%s188] %v217
                %v219 = vld [vmem:[%s195 + $0x84] sm:%s188]
                %220 = vst [vmem:[%s196 + $0x2c] sm:%s188] %v219
                %v221 = vld [vmem:[%s195 + $0x90] sm:%s188]
                %222 = vst [vmem:[%s196 + $0x30] sm:%s188] %v221
                %v223 = vld [vmem:[%s195 + $0x9c] sm:%s188]
                %224 = vst [vmem:[%s196 + $0x34] sm:%s188] %v223
                %v225 = vld [vmem:[%s195 + $0xa8] sm:%s188]
                %226 = vst [vmem:[%s196 + $0x38] sm:%s188] %v225
                %v227 = vld [vmem:[%s195 + $0xb4] sm:%s188]
                %228 = vst [vmem:[%s196 + $0x3c] sm:%s188] %v227
              $region41: #{transformer_forward.43} parent=35 // loop_footer
                %s194 = sadd.s32 1, %s190
              $region42: #{transformer_forward.43} parent=35 // loop_footer_branch
                %189 = sbr.rel target = $region38
              $region43: #{transformer_forward.43} parent=35 // loop_exit
                _
            $region36: #{transformer_forward.43} parent=27 // pred_fallthru
              _
          $region28: #{transformer_forward.43} parent=23 // pred_fallthru
            _
          %281 = vnop
        $region24: #{transformer_forward.43} parent=19 // pred_fallthru
          _
        // Predicated region
        $region62: #{transformer_forward.43} parent=19 // pred_check
          %p282 = pneg %p104
        $region63: #{transformer_forward.43} parent=19 // pred_check_branch
          %284 = sbr.rel (%p282) target = $region65
        $region64: #{transformer_forward.43} parent=19 // pred_region
          %p285 = scmp.lt.s32.totalorder %s17, 2
          %s286 = scalar_select %p285, %s17, 2
          %s287 = scalar_lea.vmem %s2, %s286
        $region65: #{transformer_forward.43} parent=19 // pred_fallthru
          _
      $region20: #{transformer_forward.43} parent=5 // pred_fallthru
        _
      %p288 = scmp.le.s32.totalorder 1, %s9
      %p289 = scmp.lt.s32.totalorder %s9, 4
      %p290 = pnand %p288, %p289
      %p291 = pneg %p290
      // Predicated region
      $region66: #{transformer_forward.43} parent=5 // pred_check
        _
      $region67: #{transformer_forward.43} parent=5 // pred_check_branch
        %293 = sbr.rel (%p290) target = $region69
      $region68: #{transformer_forward.43} parent=5 // pred_region
        %s294 = ssub.s32 %s9, 1
        %s295 = sand.u32 %s71, 1
        %s296 = sand.u32 %s71, 1
        %s297 = smul.addr %s296, 64
        %s298 = scalar_lea.vmem [#allocation3], %s297
        // Predicated region
        $region70: #{transformer_forward.43} parent=68 // pred_check
          %p299 = pneg %p84
        $region71: #{transformer_forward.43} parent=68 // pred_check_branch
          %301 = sbr.rel (%p299) target = $region73
        $region72: #{transformer_forward.43} parent=68 // pred_region
          _
        $region73: #{transformer_forward.43} parent=68 // pred_fallthru
          _
        %s302 = smul.u32 2, %s19
        %p303 = scmp.lt.s32.totalorder %s302, 1
        %s304 = scalar_select %p303, %s302, 1
        %p305 = scmp.lt.s32.totalorder %s21, 0
        %s306 = scalar_select %p305, %s21, 0
        %s307 = sadd.s32 %s306, %s304
        %s308 = smul.addr %s307, 4
        %s309 = scalar_lea.vmem %s0, %s308
        %p310 = pneg %p56
        %p311 = pneg %p53
        %s312 = sand.u32 %s71, 1
        %s313 = sand.u32 %s71, 1
        %s314 = smul.addr %s313, 64
        %s315 = scalar_lea.vmem [#allocation3], %s314
        %p316 = pneg %p84
        %p317 = pneg %p81
        %p318 = scmp.lt.s32.totalorder %s20, 2
        %s319 = scalar_select %p318, %s20, 2
        %s320 = scalar_lea.vmem %s2, %s319
        %p321 = pneg %p110
        %p322 = pneg %p107
        %p323 = pneg %p138
        %p324 = pneg %p135
        %s325 = sand.u32 %s125, 1
        %s326 = sand.u32 %s125, 1
        %s327 = smul.addr %s326, 8
        %s328 = scalar_lea.vmem [#allocation4], %s327
        %s329 = smul.u32 2, %s19
        %p330 = scmp.lt.s32.totalorder %s329, 1
        %s331 = scalar_select %p330, %s329, 1
        %p332 = scmp.lt.s32.totalorder %s21, 0
        %s333 = scalar_select %p332, %s21, 0
        %s334 = sadd.s32 %s333, %s331
        %s335 = smul.addr %s334, 4
        %s336 = scalar_lea.vmem %s0, %s335
        %s337 = smul.u32 2, %s19
        %s338 = smul.u32 16, %s21
        %p339 = scmp.lt.s32.totalorder %s20, 2
        %s340 = scalar_select %p339, %s20, 2
        %s341 = scalar_lea.vmem %s2, %s340
        %s342 = smul.u32 2, %s19
        %p344 = scmp.eq.s32.totalorder %s21, 0
        // Predicated region
        $region74: #{transformer_forward.43} parent=68 // pred_check
          %p345 = pneg %p344
        $region75: #{transformer_forward.43} parent=68 // pred_check_branch
          %347 = sbr.rel (%p345) target = $region77
        $region76: #{transformer_forward.43} parent=68 // pred_region
          %348 = vst [vmem:[#allocation2] sm:$0xff] 0.0
          %349 = vst [vmem:[#allocation2 + $0x8] sm:$0xff] 0.0
        $region77: #{transformer_forward.43} parent=68 // pred_fallthru
          _
        %v350 = vld [vmem:[#allocation2] sm:$0xff]
        %v351 = vld [vmem:[#allocation2 + $0x8] sm:$0xff]
        %v352 = vld [vmem:[%s336] sm:$0xf]
        %v353 = vld [vmem:[%s336 + $0x4] sm:$0xf]
        %v354 = vld [vmem:[%s298] sm:$0xf]
        %v355 = vld [vmem:[%s298 + $0x4] sm:$0xf]
        %v356 = vld [vmem:[%s298 + $0x8] sm:$0xf]
        %v357 = vld [vmem:[%s298 + $0xc] sm:$0xf]
        %v358 = vld [vmem:[%s298 + $0x10] sm:$0xf]
        %v359 = vld [vmem:[%s298 + $0x14] sm:$0xf]
        %v360 = vld [vmem:[%s298 + $0x18] sm:$0xf]
        %v361 = vld [vmem:[%s298 + $0x1c] sm:$0xf]
        %v362 = vld [vmem:[%s298 + $0x20] sm:$0xf]
        %v363 = vld [vmem:[%s298 + $0x24] sm:$0xf]
        %v364 = vld [vmem:[%s298 + $0x28] sm:$0xf]
        %v365 = vld [vmem:[%s298 + $0x2c] sm:$0xf]
        %v366 = vld [vmem:[%s298 + $0x30] sm:$0xf]
        %v367 = vld [vmem:[%s298 + $0x34] sm:$0xf]
        %v368 = vld [vmem:[%s298 + $0x38] sm:$0xf]
        %v369 = vld [vmem:[%s298 + $0x3c] sm:$0xf]
        %v372 = vunpack.c.l.b16 %v352
        %v373 = vunpack.c.l.b16 %v353
        %v374 = vpack.c.b16 %v373, %v372
        %v392 = vunpack.c.l.b16 %v354
        %v393 = vunpack.c.l.b16 %v355
        %v394 = vunpack.c.l.b16 %v356
        %v395 = vunpack.c.l.b16 %v357
        %v396 = vunpack.c.l.b16 %v358
        %v397 = vunpack.c.l.b16 %v359
        %v398 = vunpack.c.l.b16 %v360
        %v399 = vunpack.c.l.b16 %v361
        %v400 = vunpack.c.l.b16 %v362
        %v401 = vunpack.c.l.b16 %v363
        %v402 = vunpack.c.l.b16 %v364
        %v403 = vunpack.c.l.b16 %v365
        %v404 = vunpack.c.l.b16 %v366
        %v405 = vunpack.c.l.b16 %v367
        %v406 = vunpack.c.l.b16 %v368
        %v407 = vunpack.c.l.b16 %v369
        %v408 = vpack.c.b16 %v393, %v392
        %v409 = vpack.c.b16 %v395, %v394
        %v410 = vpack.c.b16 %v397, %v396
        %v411 = vpack.c.b16 %v399, %v398
        %v412 = vpack.c.b16 %v401, %v400
        %v413 = vpack.c.b16 %v403, %v402
        %v414 = vpack.c.b16 %v405, %v404
        %v415 = vpack.c.b16 %v407, %v406
        %424 = vmatprep.subr.bf16.mxu0 0
        %425 = vmatpush1.bf16.msra.mxu0 %v415
        %426 = vmatprep.subr.bf16.mxu0 0
        %427 = vmatpush1.bf16.msra.mxu0 %v414
        %428 = vmatprep.subr.bf16.mxu0 0
        %429 = vmatpush1.bf16.msra.mxu0 %v413
        %430 = vmatprep.subr.bf16.mxu0 0
        %431 = vmatpush1.bf16.msra.mxu0 %v412
        %432 = vmatprep.subr.bf16.mxu0 0
        %433 = vmatpush1.bf16.msra.mxu0 %v411
        %434 = vmatprep.subr.bf16.mxu0 0
        %435 = vmatpush1.bf16.msra.mxu0 %v410
        %436 = vmatprep.subr.bf16.mxu0 0
        %437 = vmatpush1.bf16.msra.mxu0 %v409
        %438 = vmatprep.subr.bf16.mxu0 0
        %439 = vmatpush1.bf16.msra.mxu0 %v408
        %440 = vmatprep.subr.bf16.mxu0 0
        %441 = vmatpush2.bf16.msra.mxu0 0
        %442 = vmatprep.subr.bf16.mxu0 0
        %443 = vmatpush2.bf16.msra.mxu0 0
        %444 = vmatprep.subr.bf16.mxu0 0
        %445 = vmatpush2.bf16.msra.mxu0 0
        %446 = vmatprep.subr.bf16.mxu0 0
        %447 = vmatpush2.bf16.msra.mxu0 0
        %448 = vmatprep.subr.bf16.mxu0 0
        %449 = vmatpush2.bf16.msra.mxu0 0
        %450 = vmatprep.subr.bf16.mxu0 0
        %451 = vmatpush2.bf16.msra.mxu0 0
        %452 = vmatprep.subr.bf16.mxu0 0
        %453 = vmatpush2.bf16.msra.mxu0 0
        %454 = vmatprep.subr.bf16.mxu0 0
        %455 = vmatpush2.bf16.msra.mxu0 0
        %456 = vmatprep.mubr.bf16.mxu0 0
        %457 = vmatmul.mubr.bf16.gmra.mxu0 %v374
        %v458 = vpop.f32.mrf.mxu0
        %v459 = vadd.f32 0.0, %v458
        %v460 = vpop.f32.mrf.mxu0
        %v461 = vpop.f32.mrf.mxu0
        %v462 = vadd.f32 0.0, %v461
        %v463 = vpop.f32.mrf.mxu0
        %464 = vdwg.mxu0
        %v465 = vadd.f32 %v350, %v459
        %v466 = vadd.f32 %v351, %v462
        %467 = vst [vmem:[#allocation2] sm:$0xff] %v465
        %468 = vst [vmem:[#allocation2 + $0x8] sm:$0xff] %v466
        // Predicated region
        $region78: #{transformer_forward.43} parent=68 // pred_check
          %p469 = pneg %p344
        $region79: #{transformer_forward.43} parent=68 // pred_check_branch
          %471 = sbr.rel (%p469) target = $region81
        $region80: #{transformer_forward.43} parent=68 // pred_region
          %v472 = vld [vmem:[#allocation2] sm:$0xff]
          %v473 = vld [vmem:[#allocation2 + $0x8] sm:$0xff]
          %v474 = vld [vmem:[%s341] sm:$0x1]
          %v476 = vlaneseq
          %v477 = vshrl.u32 %v476, 7
          %v478 = vsub.s32 0, %v477
          %v479 = vrot.slane %v474, %v478
          %v481 = vadd.f32 %v472, %v479
          %v482 = vadd.f32 %v473, %v479
          %v483 = vpack.c.bf16 %v482, %v481
          %v485 = vunpack.c.l.b16 %v483
          %v486 = vunpack.c.h.b16 %v483
          %v487 = vpack.c.b16 %v485, %v485
          %v488 = vpack.c.b16 %v486, %v486
          %491 = vst [vmem:[%s328] sm:$0xf] %v487
          %492 = vst [vmem:[%s328 + $0x4] sm:$0xf] %v488
        $region81: #{transformer_forward.43} parent=68 // pred_fallthru
          _
        %s493 = sand.u32 %s125, 1
        %s494 = sand.u32 %s125, 1
        %s495 = smul.addr %s494, 8
        %s496 = scalar_lea.vmem [#allocation4], %s495
        // Predicated region
        $region82: #{transformer_forward.43} parent=68 // pred_check
          %p497 = pneg %p135
        $region83: #{transformer_forward.43} parent=68 // pred_check_branch
          %499 = sbr.rel (%p497) target = $region85
        $region84: #{transformer_forward.43} parent=68 // pred_region
          %s500 = smul.u32 2, %s19
          %s501 = smul.addr %s500, 3
          %s502 = sadd.s32 %s20, %s501
          %s503 = smul.addr %s502, 4
          %s504 = scalar_lea.vmem %s3, %s503
          // Predicated region
          $region86: #{transformer_forward.43} parent=84 // pred_check
            _
          $region87: #{transformer_forward.43} parent=84 // pred_check_branch
            %506 = sbr.rel (0) target = $region89
          $region88: #{transformer_forward.43} parent=84 // pred_region
            // Predicated region
            $region90: #{transformer_forward.43} parent=88 // pred_check
              _
            $region91: #{transformer_forward.43} parent=88 // pred_check_branch
              %508 = sbr.rel target = $region93
            $region92: #{transformer_forward.43} parent=88 // pred_region
              // Predicated region
              $region105: #{transformer_forward.43} parent=92 // pred_check
                _
              $region106: #{transformer_forward.43} parent=92 // pred_check_branch
                %526 = sbr.rel (0) target = $region108
              $region107: #{transformer_forward.43} parent=92 // pred_region
                loop: start=0, step=1, limit=1
                $region109: #{transformer_forward.43} parent=107 // loop_pre_header
                  _
                $region110: #{transformer_forward.43} parent=107 // loop_header
                  %s528 = sphi 0, %s532
                  %p529 = scmp.ge.s32.totalorder %s528, 1
                  %s533 = sphi %s496, %s496
                  %s534 = sphi %s504, %s504
                $region111: #{transformer_forward.43} parent=107 // loop_header_branch
                  %531 = sbr.rel (%p529) target = $region115
                $region112: #{transformer_forward.43} parent=107 // loop_body
                  _
                $region113: #{transformer_forward.43} parent=107 // loop_footer
                  %s532 = sadd.s32 1, %s528
                $region114: #{transformer_forward.43} parent=107 // loop_footer_branch
                  %527 = sbr.rel target = $region110
                $region115: #{transformer_forward.43} parent=107 // loop_exit
                  _
                %s536 = ssub.s32 16, 1
                loop: start=0, step=1, limit=1
                $region116: #{transformer_forward.43} parent=107 // loop_pre_header
                  _
                $region117: #{transformer_forward.43} parent=107 // loop_header
                  %s538 = sphi 0, %s542
                  %p539 = scmp.ge.s32.totalorder %s538, 1
                  %s543 = sphi %s496, %s496
                  %s544 = sphi %s504, %s504
                $region118: #{transformer_forward.43} parent=107 // loop_header_branch
                  %541 = sbr.rel (%p539) target = $region122
                $region119: #{transformer_forward.43} parent=107 // loop_body
                  %v545 = vld [vmem:[%s543] sm:%s536]
                  %546 = vst [vmem:[%s544] sm:%s536] %v545
                  %v547 = vld [vmem:[%s543 + $0x4] sm:%s536]
                  %548 = vst [vmem:[%s544 + $0xc] sm:%s536] %v547
                $region120: #{transformer_forward.43} parent=107 // loop_footer
                  %s542 = sadd.s32 1, %s538
                $region121: #{transformer_forward.43} parent=107 // loop_footer_branch
                  %537 = sbr.rel target = $region117
                $region122: #{transformer_forward.43} parent=107 // loop_exit
                  _
              $region108: #{transformer_forward.43} parent=92 // pred_fallthru
                _
            $region93: #{transformer_forward.43} parent=88 // pred_fallthru
              _
            // Predicated region
            $region94: #{transformer_forward.43} parent=88 // pred_check
              _
            $region95: #{transformer_forward.43} parent=88 // pred_check_branch
              %510 = sbr.rel (0) target = $region97
            $region96: #{transformer_forward.43} parent=88 // pred_region
              %s512 = ssub.s32 16, 1
              loop: start=0, step=1, limit=1
              $region98: #{transformer_forward.43} parent=96 // loop_pre_header
                _
              $region99: #{transformer_forward.43} parent=96 // loop_header
                %s514 = sphi 0, %s518
                %p515 = scmp.ge.s32.totalorder %s514, 1
                %s519 = sphi %s496, %s496
                %s520 = sphi %s504, %s504
              $region100: #{transformer_forward.43} parent=96 // loop_header_branch
                %517 = sbr.rel (%p515) target = $region104
              $region101: #{transformer_forward.43} parent=96 // loop_body
                %v521 = vld [vmem:[%s519] sm:%s512]
                %522 = vst [vmem:[%s520] sm:%s512] %v521
                %v523 = vld [vmem:[%s519 + $0x4] sm:%s512]
                %524 = vst [vmem:[%s520 + $0xc] sm:%s512] %v523
              $region102: #{transformer_forward.43} parent=96 // loop_footer
                %s518 = sadd.s32 1, %s514
              $region103: #{transformer_forward.43} parent=96 // loop_footer_branch
                %513 = sbr.rel target = $region99
              $region104: #{transformer_forward.43} parent=96 // loop_exit
                _
            $region97: #{transformer_forward.43} parent=88 // pred_fallthru
              _
          $region89: #{transformer_forward.43} parent=84 // pred_fallthru
            _
          %549 = vnop
        $region85: #{transformer_forward.43} parent=68 // pred_fallthru
          _
      $region69: #{transformer_forward.43} parent=5 // pred_fallthru
        _
      %p550 = scmp.le.s32.totalorder 2, %s9
      // Predicated region
      $region123: #{transformer_forward.43} parent=5 // pred_check
        %p551 = pneg %p550
      $region124: #{transformer_forward.43} parent=5 // pred_check_branch
        %553 = sbr.rel (%p551) target = $region126
      $region125: #{transformer_forward.43} parent=5 // pred_region
        %s554 = ssub.s32 %s9, 2
        // Predicated region
        $region127: #{transformer_forward.43} parent=125 // pred_check
          %p555 = pneg %p141
        $region128: #{transformer_forward.43} parent=125 // pred_check_branch
          %557 = sbr.rel (%p555) target = $region130
        $region129: #{transformer_forward.43} parent=125 // pred_region
          %s558 = sand.u32 %s126, 1
          %s559 = sand.u32 %s126, 1
          %s560 = smul.addr %s559, 8
          %s561 = scalar_lea.vmem [#allocation4], %s560
        $region130: #{transformer_forward.43} parent=125 // pred_fallthru
          _
      $region126: #{transformer_forward.43} parent=5 // pred_fallthru
        _
    $region6: #{transformer_forward.43} parent=1 // loop_footer
      %s13 = sadd.s32 1, %s9
    $region7: #{transformer_forward.43} parent=1 // loop_footer_branch
      %8 = sbr.rel target = $region3
    $region8: #{transformer_forward.43} parent=1 // loop_exit
      _

// kernel: transformer_forward.31
$region0: #{transformer_forward.31}
  #allocation0 [shape = 'u32[]', space=smem, size = 0x4, offset = 0x4, fixed_abs, tag = 'smem constant byte address 0x4 - core index']
  #allocation1 [shape = 'u32[144,128]{1,0:T(1,128)}', space=vmem, size = 0x12000, scoped, tag = 'internal scratch']
  %s0 = inlined_call_operand.vmem [shape: bf16[16,128], index: 0, kind: input, shape index: {}]
  %s1 = inlined_call_operand.vmem [shape: f32[16,128], index: 1, kind: input, shape index: {}]
  %s2 = inlined_call_operand.vmem [shape: f32[1,128], index: 2, kind: input, shape index: {}]
  %s3 = inlined_call_operand.vmem [shape: f32[1,128], index: 3, kind: input, shape index: {}]
  %s4 = inlined_call_operand.vmem [shape: bf16[16,128], index: 4, kind: output, shape index: {}]
  %s5 = sld [smem:[#allocation0]]
  $region26: #{transformer_forward.31} parent=0
    _
  %s7 = ssub.s32 1, %s5
  %s8 = scalar_select 0, %s7, %s5
  // Predicated region
  $region2: #{transformer_forward.31} parent=0 // pred_check
    _
  $region3: #{transformer_forward.31} parent=0 // pred_check_branch
    %10 = sbr.rel (0) target = $region5
  $region4: #{transformer_forward.31} parent=0 // pred_region
    _
  $region5: #{transformer_forward.31} parent=0 // pred_fallthru
    _
  // Predicated region
  $region6: #{transformer_forward.31} parent=0 // pred_check
    _
  $region7: #{transformer_forward.31} parent=0 // pred_check_branch
    %12 = sbr.rel (0) target = $region9
  $region8: #{transformer_forward.31} parent=0 // pred_region
    _
  $region9: #{transformer_forward.31} parent=0 // pred_fallthru
    _
  // Predicated region
  $region10: #{transformer_forward.31} parent=0 // pred_check
    _
  $region11: #{transformer_forward.31} parent=0 // pred_check_branch
    %14 = sbr.rel (0) target = $region13
  $region12: #{transformer_forward.31} parent=0 // pred_region
    _
  $region13: #{transformer_forward.31} parent=0 // pred_fallthru
    _
  // Predicated region
  $region14: #{transformer_forward.31} parent=0 // pred_check
    _
  $region15: #{transformer_forward.31} parent=0 // pred_check_branch
    %16 = sbr.rel (0) target = $region17
  $region16: #{transformer_forward.31} parent=0 // pred_region
    _
  $region17: #{transformer_forward.31} parent=0 // pred_fallthru
    _
  %v17 = vld [vmem:[%s0] sm:$0xf]
  %v18 = vld [vmem:[%s0 + $0x4] sm:$0xf]
  %v19 = vunpack.c.l.bf16 %v17
  %v20 = vunpack.c.l.bf16 %v18
  %v21 = vld [vmem:[%s1] sm:$0xff]
  %v22 = vld [vmem:[%s1 + $0x8] sm:$0xff]
  %v23 = vadd.f32 %v19, %v21
  %v24 = vadd.f32 %v20, %v22
  %v25 = vld [vmem:[%s2] sm:$0x1]
  %v26 = vld [vmem:[%s3] sm:$0x1]
  %27 = vadd.xlane.f32.xlu0 %v23
  %v28 = vpop.xlane.xlu0 %27
  %29 = vadd.xlane.f32.xlu0 %v24
  %v30 = vpop.xlane.xlu0 %29
  %v31 = vmul.f32 %v28, 0.03125
  %v32 = vmul.f32 %v30, 0.03125
  %v33 = vlaneseq
  %v34 = vand.u32 %v33, 127
  %vm35 = vcmp.lt.s32.totalorder %v34, 32
  %v36 = vsub.f32 %v23, %v31
  %v37 = vsub.f32 %v24, %v32
  %v38 = vsel %vm35, %v36, 0.0
  %v39 = vsel %vm35, %v37, 0.0
  %v40 = vmul.f32 %v38, %v38
  %v41 = vmul.f32 %v39, %v39
  %42 = vadd.xlane.f32.xlu0 %v40
  %v43 = vpop.xlane.xlu0 %42
  %44 = vadd.xlane.f32.xlu0 %v41
  %v45 = vpop.xlane.xlu0 %44
  %v46 = vmul.f32 %v43, 0.03125
  %v47 = vmul.f32 %v45, 0.03125
  %v48 = vadd.f32 %v46, 1e-06
  %v49 = vadd.f32 %v47, 1e-06
  %v50 = vrsqrt.pop %v48
  %v51 = vrsqrt.pop %v49
  %v52 = vmul.f32 %v36, %v50
  %v53 = vmul.f32 %v37, %v51
  %v55 = vlaneseq
  %v56 = vshrl.u32 %v55, 7
  %v57 = vsub.s32 0, %v56
  %v58 = vrot.slane %v25, %v57
  %v60 = vmul.f32 %v52, %v58
  %v61 = vmul.f32 %v53, %v58
  %v63 = vlaneseq
  %v64 = vshrl.u32 %v63, 7
  %v65 = vsub.s32 0, %v64
  %v66 = vrot.slane %v26, %v65
  %v68 = vadd.f32 %v60, %v66
  %v69 = vadd.f32 %v61, %v66
  %v70 = vpack.c.bf16 %v69, %v68
  %v72 = vunpack.c.l.b16 %v70
  %v73 = vunpack.c.h.b16 %v70
  %v74 = vpack.c.b16 %v72, %v72
  %v75 = vpack.c.b16 %v73, %v73
  %78 = vst [vmem:[%s4] sm:$0xf] %v74
  %79 = vst [vmem:[%s4 + $0x4] sm:$0xf] %v75
  // Predicated region
  $region18: #{transformer_forward.31} parent=0 // pred_check
    _
  $region19: #{transformer_forward.31} parent=0 // pred_check_branch
    %81 = sbr.rel (0) target = $region21
  $region20: #{transformer_forward.31} parent=0 // pred_region
    _
  $region21: #{transformer_forward.31} parent=0 // pred_fallthru
    _
  // Predicated region
  $region22: #{transformer_forward.31} parent=0 // pred_check
    _
  $region23: #{transformer_forward.31} parent=0 // pred_check_branch
    %83 = sbr.rel (0) target = $region25
  $region24: #{transformer_forward.31} parent=0 // pred_region
    _
  $region25: #{transformer_forward.31} parent=0 // pred_fallthru
    _

// kernel: transformer_forward.46
$region0: #{transformer_forward.46}
  #allocation0 [shape = 'u32[]', space=smem, size = 0x4, offset = 0x4, fixed_abs, tag = 'smem constant byte address 0x4 - core index']
  #allocation1 [shape = 'u32[144,128]{1,0:T(1,128)}', space=vmem, size = 0x12000, scoped, tag = 'internal scratch']
  #allocation2 [shape = 'f32[16,128]{1,0:T(8,128)}', space=vmem, size = 0x2000, scoped, tag = 'scratch operand']
  %s0 = inlined_call_operand.vmem [shape: bf16[16,128], index: 0, kind: input, shape index: {}]
  %s1 = inlined_call_operand.vmem [shape: bf16[128,128], index: 1, kind: input, shape index: {}]
  %s2 = inlined_call_operand.vmem [shape: f32[1,128], index: 2, kind: input, shape index: {}]
  %s3 = inlined_call_operand.vmem [shape: bf16[16,128], index: 3, kind: output, shape index: {}]
  %s4 = sld [smem:[#allocation0]]
  $region30: #{transformer_forward.46} parent=0
    _
  %s6 = ssub.s32 1, %s4
  %s7 = scalar_select 0, %s6, %s4
  // Predicated region
  $region2: #{transformer_forward.46} parent=0 // pred_check
    _
  $region3: #{transformer_forward.46} parent=0 // pred_check_branch
    %9 = sbr.rel (0) target = $region5
  $region4: #{transformer_forward.46} parent=0 // pred_region
    _
  $region5: #{transformer_forward.46} parent=0 // pred_fallthru
    _
  // Predicated region
  $region6: #{transformer_forward.46} parent=0 // pred_check
    _
  $region7: #{transformer_forward.46} parent=0 // pred_check_branch
    %11 = sbr.rel (0) target = $region9
  $region8: #{transformer_forward.46} parent=0 // pred_region
    _
  $region9: #{transformer_forward.46} parent=0 // pred_fallthru
    _
  // Predicated region
  $region10: #{transformer_forward.46} parent=0 // pred_check
    _
  $region11: #{transformer_forward.46} parent=0 // pred_check_branch
    %13 = sbr.rel (0) target = $region13
  $region12: #{transformer_forward.46} parent=0 // pred_region
    _
  $region13: #{transformer_forward.46} parent=0 // pred_fallthru
    _
  %p15 = scmp.eq.s32.totalorder 0, 0
  // Predicated region
  $region14: #{transformer_forward.46} parent=0 // pred_check
    %p16 = pneg %p15
  $region15: #{transformer_forward.46} parent=0 // pred_check_branch
    %18 = sbr.rel (%p16) target = $region17
  $region16: #{transformer_forward.46} parent=0 // pred_region
    %19 = vst [vmem:[#allocation2] sm:$0xff] 0.0
    %20 = vst [vmem:[#allocation2 + $0x8] sm:$0xff] 0.0
  $region17: #{transformer_forward.46} parent=0 // pred_fallthru
    _
  %v21 = vld [vmem:[#allocation2] sm:$0xff]
  %v22 = vld [vmem:[#allocation2 + $0x8] sm:$0xff]
  %v23 = vld [vmem:[%s0] sm:$0xf]
  %v24 = vld [vmem:[%s0 + $0x4] sm:$0xf]
  %v25 = vld [vmem:[%s1] sm:$0xf]
  %v26 = vld [vmem:[%s1 + $0x4] sm:$0xf]
  %v27 = vld [vmem:[%s1 + $0x8] sm:$0xf]
  %v28 = vld [vmem:[%s1 + $0xc] sm:$0xf]
  %v29 = vld [vmem:[%s1 + $0x10] sm:$0xf]
  %v30 = vld [vmem:[%s1 + $0x14] sm:$0xf]
  %v31 = vld [vmem:[%s1 + $0x18] sm:$0xf]
  %v32 = vld [vmem:[%s1 + $0x1c] sm:$0xf]
  %v33 = vld [vmem:[%s1 + $0x20] sm:$0xf]
  %v34 = vld [vmem:[%s1 + $0x24] sm:$0xf]
  %v35 = vld [vmem:[%s1 + $0x28] sm:$0xf]
  %v36 = vld [vmem:[%s1 + $0x2c] sm:$0xf]
  %v37 = vld [vmem:[%s1 + $0x30] sm:$0xf]
  %v38 = vld [vmem:[%s1 + $0x34] sm:$0xf]
  %v39 = vld [vmem:[%s1 + $0x38] sm:$0xf]
  %v40 = vld [vmem:[%s1 + $0x3c] sm:$0xf]
  %v43 = vunpack.c.l.b16 %v23
  %v44 = vunpack.c.l.b16 %v24
  %v45 = vpack.c.b16 %v44, %v43
  %v63 = vunpack.c.l.b16 %v25
  %v64 = vunpack.c.l.b16 %v26
  %v65 = vunpack.c.l.b16 %v27
  %v66 = vunpack.c.l.b16 %v28
  %v67 = vunpack.c.l.b16 %v29
  %v68 = vunpack.c.l.b16 %v30
  %v69 = vunpack.c.l.b16 %v31
  %v70 = vunpack.c.l.b16 %v32
  %v71 = vunpack.c.l.b16 %v33
  %v72 = vunpack.c.l.b16 %v34
  %v73 = vunpack.c.l.b16 %v35
  %v74 = vunpack.c.l.b16 %v36
  %v75 = vunpack.c.l.b16 %v37
  %v76 = vunpack.c.l.b16 %v38
  %v77 = vunpack.c.l.b16 %v39
  %v78 = vunpack.c.l.b16 %v40
  %v79 = vpack.c.b16 %v64, %v63
  %v80 = vpack.c.b16 %v66, %v65
  %v81 = vpack.c.b16 %v68, %v67
  %v82 = vpack.c.b16 %v70, %v69
  %v83 = vpack.c.b16 %v72, %v71
  %v84 = vpack.c.b16 %v74, %v73
  %v85 = vpack.c.b16 %v76, %v75
  %v86 = vpack.c.b16 %v78, %v77
  %95 = vmatprep.subr.bf16.mxu0 0
  %96 = vmatpush1.bf16.msra.mxu0 %v86
  %97 = vmatprep.subr.bf16.mxu0 0
  %98 = vmatpush1.bf16.msra.mxu0 %v85
  %99 = vmatprep.subr.bf16.mxu0 0
  %100 = vmatpush1.bf16.msra.mxu0 %v84
  %101 = vmatprep.subr.bf16.mxu0 0
  %102 = vmatpush1.bf16.msra.mxu0 %v83
  %103 = vmatprep.subr.bf16.mxu0 0
  %104 = vmatpush1.bf16.msra.mxu0 %v82
  %105 = vmatprep.subr.bf16.mxu0 0
  %106 = vmatpush1.bf16.msra.mxu0 %v81
  %107 = vmatprep.subr.bf16.mxu0 0
  %108 = vmatpush1.bf16.msra.mxu0 %v80
  %109 = vmatprep.subr.bf16.mxu0 0
  %110 = vmatpush1.bf16.msra.mxu0 %v79
  %111 = vmatprep.subr.bf16.mxu0 0
  %112 = vmatpush2.bf16.msra.mxu0 0
  %113 = vmatprep.subr.bf16.mxu0 0
  %114 = vmatpush2.bf16.msra.mxu0 0
  %115 = vmatprep.subr.bf16.mxu0 0
  %116 = vmatpush2.bf16.msra.mxu0 0
  %117 = vmatprep.subr.bf16.mxu0 0
  %118 = vmatpush2.bf16.msra.mxu0 0
  %119 = vmatprep.subr.bf16.mxu0 0
  %120 = vmatpush2.bf16.msra.mxu0 0
  %121 = vmatprep.subr.bf16.mxu0 0
  %122 = vmatpush2.bf16.msra.mxu0 0
  %123 = vmatprep.subr.bf16.mxu0 0
  %124 = vmatpush2.bf16.msra.mxu0 0
  %125 = vmatprep.subr.bf16.mxu0 0
  %126 = vmatpush2.bf16.msra.mxu0 0
  %127 = vmatprep.mubr.bf16.mxu0 0
  %128 = vmatmul.mubr.bf16.gmra.mxu0 %v45
  %v129 = vpop.f32.mrf.mxu0
  %v130 = vadd.f32 0.0, %v129
  %v131 = vpop.f32.mrf.mxu0
  %v132 = vpop.f32.mrf.mxu0
  %v133 = vadd.f32 0.0, %v132
  %v134 = vpop.f32.mrf.mxu0
  %135 = vdwg.mxu0
  %v136 = vadd.f32 %v21, %v130
  %v137 = vadd.f32 %v22, %v133
  %138 = vst [vmem:[#allocation2] sm:$0xff] %v136
  %139 = vst [vmem:[#allocation2 + $0x8] sm:$0xff] %v137
  // Predicated region
  $region18: #{transformer_forward.46} parent=0 // pred_check
    %p140 = pneg %p15
  $region19: #{transformer_forward.46} parent=0 // pred_check_branch
    %142 = sbr.rel (%p140) target = $region21
  $region20: #{transformer_forward.46} parent=0 // pred_region
    %v143 = vld [vmem:[#allocation2] sm:$0xff]
    %v144 = vld [vmem:[#allocation2 + $0x8] sm:$0xff]
    %v145 = vld [vmem:[%s2] sm:$0x1]
    %v147 = vlaneseq
    %v148 = vshrl.u32 %v147, 7
    %v149 = vsub.s32 0, %v148
    %v150 = vrot.slane %v145, %v149
    %v152 = vadd.f32 %v143, %v150
    %v153 = vadd.f32 %v144, %v150
    %v154 = vpack.c.bf16 %v153, %v152
    %v156 = vunpack.c.l.b16 %v154
    %v157 = vunpack.c.h.b16 %v154
    %v158 = vpack.c.b16 %v156, %v156
    %v159 = vpack.c.b16 %v157, %v157
    %162 = vst [vmem:[%s3] sm:$0xf] %v158
    %163 = vst [vmem:[%s3 + $0x4] sm:$0xf] %v159
  $region21: #{transformer_forward.46} parent=0 // pred_fallthru
    _
  // Predicated region
  $region22: #{transformer_forward.46} parent=0 // pred_check
    _
  $region23: #{transformer_forward.46} parent=0 // pred_check_branch
    %165 = sbr.rel (0) target = $region25
  $region24: #{transformer_forward.46} parent=0 // pred_region
    _
  $region25: #{transformer_forward.46} parent=0 // pred_fallthru
    _
  // Predicated region
  $region26: #{transformer_forward.46} parent=0 // pred_check
    _
  $region27: #{transformer_forward.46} parent=0 // pred_check_branch
    %167 = sbr.rel (0) target = $region29
  $region28: #{transformer_forward.46} parent=0 // pred_region
    _
  $region29: #{transformer_forward.46} parent=0 // pred_fallthru
    _

// kernel: transformer_forward.44
$region0: #{transformer_forward.44}
  #allocation0 [shape = 'u32[]', space=smem, size = 0x4, offset = 0x4, fixed_abs, tag = 'smem constant byte address 0x4 - core index']
  #allocation1 [shape = 'u32[144,128]{1,0:T(1,128)}', space=vmem, size = 0x12000, scoped, tag = 'internal scratch']
  #allocation2 [shape = 'f32[4,8,128]{2,1,0:T(8,128)}', space=vmem, size = 0x4000, scoped, tag = 'scratch operand']
  #allocation3 [shape = 'f32[4,8,128]{2,1,0:T(8,128)}', space=vmem, size = 0x4000, scoped, tag = 'scratch operand']
  #allocation4 [shape = 'f32[8,128]{1,0:T(8,128)}', space=vmem, size = 0x1000, scoped, tag = 'scratch operand']
  %s0 = inlined_call_operand.vmem [shape: bf16[2,128,384], index: 0, kind: input, shape index: {}, may-alias: {0,1,2}]
  %s1 = inlined_call_operand.vmem [shape: bf16[2,128,384], index: 1, kind: input, shape index: {}, may-alias: {0,1,2}]
  %s2 = inlined_call_operand.vmem [shape: bf16[2,128,384], index: 2, kind: input, shape index: {}, may-alias: {0,1,2}]
  %s3 = inlined_call_operand.vmem [shape: f32[2,1,128], index: 3, kind: input, shape index: {}]
  %s4 = inlined_call_operand.vmem [shape: bf16[2,8,128], index: 4, kind: output, shape index: {}]
  %s5 = sld [smem:[#allocation0]]
  $region143: #{transformer_forward.44} parent=0
    _
  %s7 = ssub.s32 1, %s5
  %s8 = scalar_select 0, %s7, %s5
  $region1: #{transformer_forward.44} parent=0
    #allocation5 [shape = 'u8[65536]{0}', space=vmem, size = 0x10000, scoped, tag = 'input window, operand 1']
    #allocation6 [shape = 'u8[65536]{0}', space=vmem, size = 0x10000, scoped, tag = 'input window, operand 2']
    loop: start=0, step=1, limit=4
    $region2: #{transformer_forward.44} parent=1 // loop_pre_header
      _
    $region3: #{transformer_forward.44} parent=1 // loop_header
      %s10 = sphi 0, %s14
      %p11 = scmp.ge.s32.totalorder %s10, 4
      %s17 = sphi 0, %s36
      %s18 = sphi 0, %s32
      %s19 = sphi 0, %s28
      %s20 = sphi 0, %s17
      %s21 = sphi 0, %s18
      %s22 = sphi 0, %s19
      %s23 = sphi 0, %s20
      %s24 = sphi 0, %s21
      %s25 = sphi 0, %s22
      %s41 = sphi 0, %s43
      %s44 = sphi 0, %s41
      %s45 = sphi 0, %s44
      %s61 = sphi 0, %s45
      %s69 = sphi 0, %s71
      %s72 = sphi 0, %s69
      %s73 = sphi 0, %s72
      %s89 = sphi 0, %s73
      %s97 = sphi 0, %s99
      %s100 = sphi 0, %s97
      %s101 = sphi 0, %s100
      %s117 = sphi 0, %s101
      %s125 = sphi 0, %s127
      %s128 = sphi 0, %s125
      %s129 = sphi 0, %s128
      %s145 = sphi 0, %s129
      %s153 = sphi 0, %s155
      %s156 = sphi 0, %s153
      %s157 = sphi 0, %s156
      %s173 = sphi 0, %s157
    $region4: #{transformer_forward.44} parent=1 // loop_header_branch
      %13 = sbr.rel (%p11) target = $region8
    $region5: #{transformer_forward.44} parent=1 // loop_body
      %s15 = ssub.s32 %s10, 1
      %s16 = ssub.s32 %s10, 2
      %s26 = sadd.s32 1, %s19
      %p27 = scmp.ge.s32.totalorder %s26, 1
      %s28 = scalar_select %p27, 0, %s26
      %s29 = sadd.s32 1, %s18
      %s30 = scalar_select %p27, %s29, %s18
      %p31 = scmp.ge.s32.totalorder %s30, 1
      %s32 = scalar_select %p31, 0, %s30
      %s33 = sadd.s32 1, %s17
      %s34 = scalar_select %p31, %s33, %s17
      %p35 = scmp.ge.s32.totalorder %s34, 2
      %s36 = scalar_select %p35, 0, %s34
      %s37 = ssub.s32 %s17, %s36
      %s38 = ssub.s32 %s18, %s32
      %s39 = sor.u32 %s37, %s38
      %p40 = scmp.eq.s32.totalorder %s39, 0
      %s42 = sadd.s32 %s41, 1
      %s43 = scalar_select %p40, %s41, %s42
      %p46 = pneg %p40
      %p47 = scmp.eq.s32.totalorder %s10, 1
      %p48 = por %p46, %p47
      %p49 = scmp.ne.s32.totalorder %s41, %s44
      %p50 = scmp.eq.s32.totalorder %s10, 0
      %p51 = por %p49, %p50
      %p52 = scmp.ne.s32.totalorder %s41, %s44
      %p53 = scmp.eq.s32.totalorder %s15, 1
      %p54 = por %p52, %p53
      %p55 = scmp.ne.s32.totalorder %s44, %s45
      %p56 = scmp.eq.s32.totalorder %s15, 0
      %p57 = por %p55, %p56
      %p58 = scmp.ne.s32.totalorder %s44, %s45
      %p59 = scmp.eq.s32.totalorder %s16, 1
      %p60 = por %p58, %p59
      %p62 = scmp.ne.s32.totalorder %s45, %s61
      %p63 = scmp.eq.s32.totalorder %s16, 0
      %p64 = por %p62, %p63
      %s65 = ssub.s32 %s17, %s36
      %s66 = ssub.s32 %s19, %s28
      %s67 = sor.u32 %s65, %s66
      %p68 = scmp.eq.s32.totalorder %s67, 0
      %s70 = sadd.s32 %s69, 1
      %s71 = scalar_select %p68, %s69, %s70
      %p74 = pneg %p68
      %p75 = scmp.eq.s32.totalorder %s10, 1
      %p76 = por %p74, %p75
      %p77 = scmp.ne.s32.totalorder %s69, %s72
      %p78 = scmp.eq.s32.totalorder %s10, 0
      %p79 = por %p77, %p78
      %p80 = scmp.ne.s32.totalorder %s69, %s72
      %p81 = scmp.eq.s32.totalorder %s15, 1
      %p82 = por %p80, %p81
      %p83 = scmp.ne.s32.totalorder %s72, %s73
      %p84 = scmp.eq.s32.totalorder %s15, 0
      %p85 = por %p83, %p84
      %p86 = scmp.ne.s32.totalorder %s72, %s73
      %p87 = scmp.eq.s32.totalorder %s16, 1
      %p88 = por %p86, %p87
      %p90 = scmp.ne.s32.totalorder %s73, %s89
      %p91 = scmp.eq.s32.totalorder %s16, 0
      %p92 = por %p90, %p91
      %s93 = ssub.s32 %s17, %s36
      %s94 = ssub.s32 %s19, %s28
      %s95 = sor.u32 %s93, %s94
      %p96 = scmp.eq.s32.totalorder %s95, 0
      %s98 = sadd.s32 %s97, 1
      %s99 = scalar_select %p96, %s97, %s98
      %p102 = pneg %p96
      %p103 = scmp.eq.s32.totalorder %s10, 1
      %p104 = por %p102, %p103
      %p105 = scmp.ne.s32.totalorder %s97, %s100
      %p106 = scmp.eq.s32.totalorder %s10, 0
      %p107 = por %p105, %p106
      %p108 = scmp.ne.s32.totalorder %s97, %s100
      %p109 = scmp.eq.s32.totalorder %s15, 1
      %p110 = por %p108, %p109
      %p111 = scmp.ne.s32.totalorder %s100, %s101
      %p112 = scmp.eq.s32.totalorder %s15, 0
      %p113 = por %p111, %p112
      %p114 = scmp.ne.s32.totalorder %s100, %s101
      %p115 = scmp.eq.s32.totalorder %s16, 1
      %p116 = por %p114, %p115
      %p118 = scmp.ne.s32.totalorder %s101, %s117
      %p119 = scmp.eq.s32.totalorder %s16, 0
      %p120 = por %p118, %p119
      %s121 = ssub.s32 %s17, %s36
      %s122 = ssub.s32 %s19, %s28
      %s123 = sor.u32 %s121, %s122
      %p124 = scmp.eq.s32.totalorder %s123, 0
      %s126 = sadd.s32 %s125, 1
      %s127 = scalar_select %p124, %s125, %s126
      %p130 = pneg %p124
      %p131 = scmp.eq.s32.totalorder %s10, 1
      %p132 = por %p130, %p131
      %p133 = scmp.ne.s32.totalorder %s125, %s128
      %p134 = scmp.eq.s32.totalorder %s10, 0
      %p135 = por %p133, %p134
      %p136 = scmp.ne.s32.totalorder %s125, %s128
      %p137 = scmp.eq.s32.totalorder %s15, 1
      %p138 = por %p136, %p137
      %p139 = scmp.ne.s32.totalorder %s128, %s129
      %p140 = scmp.eq.s32.totalorder %s15, 0
      %p141 = por %p139, %p140
      %p142 = scmp.ne.s32.totalorder %s128, %s129
      %p143 = scmp.eq.s32.totalorder %s16, 1
      %p144 = por %p142, %p143
      %p146 = scmp.ne.s32.totalorder %s129, %s145
      %p147 = scmp.eq.s32.totalorder %s16, 0
      %p148 = por %p146, %p147
      %s149 = ssub.s32 %s17, %s36
      %s150 = ssub.s32 %s18, %s32
      %s151 = sor.u32 %s149, %s150
      %p152 = scmp.eq.s32.totalorder %s151, 0
      %s154 = sadd.s32 %s153, 1
      %s155 = scalar_select %p152, %s153, %s154
      %p158 = pneg %p152
      %p159 = scmp.eq.s32.totalorder %s10, 1
      %p160 = por %p158, %p159
      %p161 = scmp.ne.s32.totalorder %s153, %s156
      %p162 = scmp.eq.s32.totalorder %s10, 0
      %p163 = por %p161, %p162
      %p164 = scmp.ne.s32.totalorder %s153, %s156
      %p165 = scmp.eq.s32.totalorder %s15, 1
      %p166 = por %p164, %p165
      %p167 = scmp.ne.s32.totalorder %s156, %s157
      %p168 = scmp.eq.s32.totalorder %s15, 0
      %p169 = por %p167, %p168
      %p170 = scmp.ne.s32.totalorder %s156, %s157
      %p171 = scmp.eq.s32.totalorder %s16, 1
      %p172 = por %p170, %p171
      %p174 = scmp.ne.s32.totalorder %s157, %s173
      %p175 = scmp.eq.s32.totalorder %s16, 0
      %p176 = por %p174, %p175
      %p177 = scmp.le.s32.totalorder 1, %s10
      %p178 = scmp.lt.s32.totalorder %s10, 3
      %p179 = pnand %p177, %p178
      %p180 = pneg %p179
      // Predicated region
      $region9: #{transformer_forward.44} parent=5 // pred_check
        _
      $region10: #{transformer_forward.44} parent=5 // pred_check_branch
        %182 = sbr.rel (%p179) target = $region12
      $region11: #{transformer_forward.44} parent=5 // pred_region
        %s183 = ssub.s32 %s10, 1
      $region12: #{transformer_forward.44} parent=5 // pred_fallthru
        _
      %p184 = scmp.lt.s32.totalorder %s10, 2
      // Predicated region
      $region13: #{transformer_forward.44} parent=5 // pred_check
        %p185 = pneg %p184
      $region14: #{transformer_forward.44} parent=5 // pred_check_branch
        %187 = sbr.rel (%p185) target = $region16
      $region15: #{transformer_forward.44} parent=5 // pred_region
        // Predicated region
        $region17: #{transformer_forward.44} parent=15 // pred_check
          %p188 = pneg %p51
        $region18: #{transformer_forward.44} parent=15 // pred_check_branch
          %190 = sbr.rel (%p188) target = $region20
        $region19: #{transformer_forward.44} parent=15 // pred_region
          %p191 = scmp.lt.s32.totalorder %s17, 1
          %s192 = scalar_select %p191, %s17, 1
          %p193 = scmp.lt.s32.totalorder %s18, 15
          %s194 = scalar_select %p193, %s18, 15
          %s195 = smul.addr %s194, 3
          %s196 = smul.addr %s192, 48
          %s197 = sadd.s32 %s195, %s196
          %s198 = smul.addr %s197, 4
          %s199 = scalar_lea.vmem %s0, %s198
        $region20: #{transformer_forward.44} parent=15 // pred_fallthru
          _
        // Predicated region
        $region21: #{transformer_forward.44} parent=15 // pred_check
          %p200 = pneg %p79
        $region22: #{transformer_forward.44} parent=15 // pred_check_branch
          %202 = sbr.rel (%p200) target = $region24
        $region23: #{transformer_forward.44} parent=15 // pred_region
          %s203 = sand.u32 %s69, 1
          %s204 = sand.u32 %s69, 1
          %s205 = smul.addr %s204, 64
          %s206 = scalar_lea.vmem [#allocation5], %s205
          %s207 = smul.u32 16, %s19
          %s208 = smul.addr %s207, 3
          %s209 = sadd.s32 1, %s208
          %s210 = smul.addr %s17, 48
          %s211 = sadd.s32 %s209, %s210
          %s212 = smul.addr %s211, 4
          %s213 = scalar_lea.vmem %s1, %s212
          // Predicated region
          $region25: #{transformer_forward.44} parent=23 // pred_check
            _
          $region26: #{transformer_forward.44} parent=23 // pred_check_branch
            %215 = sbr.rel (0) target = $region28
          $region27: #{transformer_forward.44} parent=23 // pred_region
            // Predicated region
            $region29: #{transformer_forward.44} parent=27 // pred_check
              _
            $region30: #{transformer_forward.44} parent=27 // pred_check_branch
              %217 = sbr.rel target = $region32
            $region31: #{transformer_forward.44} parent=27 // pred_region
              // Predicated region
              $region44: #{transformer_forward.44} parent=31 // pred_check
                _
              $region45: #{transformer_forward.44} parent=31 // pred_check_branch
                %263 = sbr.rel (0) target = $region47
              $region46: #{transformer_forward.44} parent=31 // pred_region
                loop: start=0, step=1, limit=1
                $region48: #{transformer_forward.44} parent=46 // loop_pre_header
                  _
                $region49: #{transformer_forward.44} parent=46 // loop_header
                  %s265 = sphi 0, %s269
                  %p266 = scmp.ge.s32.totalorder %s265, 1
                  %s270 = sphi %s213, %s213
                  %s271 = sphi %s206, %s206
                $region50: #{transformer_forward.44} parent=46 // loop_header_branch
                  %268 = sbr.rel (%p266) target = $region54
                $region51: #{transformer_forward.44} parent=46 // loop_body
                  _
                $region52: #{transformer_forward.44} parent=46 // loop_footer
                  %s269 = sadd.s32 1, %s265
                $region53: #{transformer_forward.44} parent=46 // loop_footer_branch
                  %264 = sbr.rel target = $region49
                $region54: #{transformer_forward.44} parent=46 // loop_exit
                  _
                %s273 = ssub.s32 16, 1
                loop: start=0, step=1, limit=1
                $region55: #{transformer_forward.44} parent=46 // loop_pre_header
                  _
                $region56: #{transformer_forward.44} parent=46 // loop_header
                  %s275 = sphi 0, %s279
                  %p276 = scmp.ge.s32.totalorder %s275, 1
                  %s280 = sphi %s213, %s213
                  %s281 = sphi %s206, %s206
                $region57: #{transformer_forward.44} parent=46 // loop_header_branch
                  %278 = sbr.rel (%p276) target = $region61
                $region58: #{transformer_forward.44} parent=46 // loop_body
                  %v282 = vld [vmem:[%s280] sm:%s273]
                  %283 = vst [vmem:[%s281] sm:%s273] %v282
                  %v284 = vld [vmem:[%s280 + $0xc] sm:%s273]
                  %285 = vst [vmem:[%s281 + $0x4] sm:%s273] %v284
                  %v286 = vld [vmem:[%s280 + $0x18] sm:%s273]
                  %287 = vst [vmem:[%s281 + $0x8] sm:%s273] %v286
                  %v288 = vld [vmem:[%s280 + $0x24] sm:%s273]
                  %289 = vst [vmem:[%s281 + $0xc] sm:%s273] %v288
                  %v290 = vld [vmem:[%s280 + $0x30] sm:%s273]
                  %291 = vst [vmem:[%s281 + $0x10] sm:%s273] %v290
                  %v292 = vld [vmem:[%s280 + $0x3c] sm:%s273]
                  %293 = vst [vmem:[%s281 + $0x14] sm:%s273] %v292
                  %v294 = vld [vmem:[%s280 + $0x48] sm:%s273]
                  %295 = vst [vmem:[%s281 + $0x18] sm:%s273] %v294
                  %v296 = vld [vmem:[%s280 + $0x54] sm:%s273]
                  %297 = vst [vmem:[%s281 + $0x1c] sm:%s273] %v296
                  %v298 = vld [vmem:[%s280 + $0x60] sm:%s273]
                  %299 = vst [vmem:[%s281 + $0x20] sm:%s273] %v298
                  %v300 = vld [vmem:[%s280 + $0x6c] sm:%s273]
                  %301 = vst [vmem:[%s281 + $0x24] sm:%s273] %v300
                  %v302 = vld [vmem:[%s280 + $0x78] sm:%s273]
                  %303 = vst [vmem:[%s281 + $0x28] sm:%s273] %v302
                  %v304 = vld [vmem:[%s280 + $0x84] sm:%s273]
                  %305 = vst [vmem:[%s281 + $0x2c] sm:%s273] %v304
                  %v306 = vld [vmem:[%s280 + $0x90] sm:%s273]
                  %307 = vst [vmem:[%s281 + $0x30] sm:%s273] %v306
                  %v308 = vld [vmem:[%s280 + $0x9c] sm:%s273]
                  %309 = vst [vmem:[%s281 + $0x34] sm:%s273] %v308
                  %v310 = vld [vmem:[%s280 + $0xa8] sm:%s273]
                  %311 = vst [vmem:[%s281 + $0x38] sm:%s273] %v310
                  %v312 = vld [vmem:[%s280 + $0xb4] sm:%s273]
                  %313 = vst [vmem:[%s281 + $0x3c] sm:%s273] %v312
                $region59: #{transformer_forward.44} parent=46 // loop_footer
                  %s279 = sadd.s32 1, %s275
                $region60: #{transformer_forward.44} parent=46 // loop_footer_branch
                  %274 = sbr.rel target = $region56
                $region61: #{transformer_forward.44} parent=46 // loop_exit
                  _
              $region47: #{transformer_forward.44} parent=31 // pred_fallthru
                _
            $region32: #{transformer_forward.44} parent=27 // pred_fallthru
              _
            // Predicated region
            $region33: #{transformer_forward.44} parent=27 // pred_check
              _
            $region34: #{transformer_forward.44} parent=27 // pred_check_branch
              %219 = sbr.rel (0) target = $region36
            $region35: #{transformer_forward.44} parent=27 // pred_region
              %s221 = ssub.s32 16, 1
              loop: start=0, step=1, limit=1
              $region37: #{transformer_forward.44} parent=35 // loop_pre_header
                _
              $region38: #{transformer_forward.44} parent=35 // loop_header
                %s223 = sphi 0, %s227
                %p224 = scmp.ge.s32.totalorder %s223, 1
                %s228 = sphi %s213, %s213
                %s229 = sphi %s206, %s206
              $region39: #{transformer_forward.44} parent=35 // loop_header_branch
                %226 = sbr.rel (%p224) target = $region43
              $region40: #{transformer_forward.44} parent=35 // loop_body
                %v230 = vld [vmem:[%s228] sm:%s221]
                %231 = vst [vmem:[%s229] sm:%s221] %v230
                %v232 = vld [vmem:[%s228 + $0xc] sm:%s221]
                %233 = vst [vmem:[%s229 + $0x4] sm:%s221] %v232
                %v234 = vld [vmem:[%s228 + $0x18] sm:%s221]
                %235 = vst [vmem:[%s229 + $0x8] sm:%s221] %v234
                %v236 = vld [vmem:[%s228 + $0x24] sm:%s221]
                %237 = vst [vmem:[%s229 + $0xc] sm:%s221] %v236
                %v238 = vld [vmem:[%s228 + $0x30] sm:%s221]
                %239 = vst [vmem:[%s229 + $0x10] sm:%s221] %v238
                %v240 = vld [vmem:[%s228 + $0x3c] sm:%s221]
                %241 = vst [vmem:[%s229 + $0x14] sm:%s221] %v240
                %v242 = vld [vmem:[%s228 + $0x48] sm:%s221]
                %243 = vst [vmem:[%s229 + $0x18] sm:%s221] %v242
                %v244 = vld [vmem:[%s228 + $0x54] sm:%s221]
                %245 = vst [vmem:[%s229 + $0x1c] sm:%s221] %v244
                %v246 = vld [vmem:[%s228 + $0x60] sm:%s221]
                %247 = vst [vmem:[%s229 + $0x20] sm:%s221] %v246
                %v248 = vld [vmem:[%s228 + $0x6c] sm:%s221]
                %249 = vst [vmem:[%s229 + $0x24] sm:%s221] %v248
                %v250 = vld [vmem:[%s228 + $0x78] sm:%s221]
                %251 = vst [vmem:[%s229 + $0x28] sm:%s221] %v250
                %v252 = vld [vmem:[%s228 + $0x84] sm:%s221]
                %253 = vst [vmem:[%s229 + $0x2c] sm:%s221] %v252
                %v254 = vld [vmem:[%s228 + $0x90] sm:%s221]
                %255 = vst [vmem:[%s229 + $0x30] sm:%s221] %v254
                %v256 = vld [vmem:[%s228 + $0x9c] sm:%s221]
                %257 = vst [vmem:[%s229 + $0x34] sm:%s221] %v256
                %v258 = vld [vmem:[%s228 + $0xa8] sm:%s221]
                %259 = vst [vmem:[%s229 + $0x38] sm:%s221] %v258
                %v260 = vld [vmem:[%s228 + $0xb4] sm:%s221]
                %261 = vst [vmem:[%s229 + $0x3c] sm:%s221] %v260
              $region41: #{transformer_forward.44} parent=35 // loop_footer
                %s227 = sadd.s32 1, %s223
              $region42: #{transformer_forward.44} parent=35 // loop_footer_branch
                %222 = sbr.rel target = $region38
              $region43: #{transformer_forward.44} parent=35 // loop_exit
                _
            $region36: #{transformer_forward.44} parent=27 // pred_fallthru
              _
          $region28: #{transformer_forward.44} parent=23 // pred_fallthru
            _
          %314 = vnop
        $region24: #{transformer_forward.44} parent=15 // pred_fallthru
          _
        // Predicated region
        $region62: #{transformer_forward.44} parent=15 // pred_check
          %p315 = pneg %p107
        $region63: #{transformer_forward.44} parent=15 // pred_check_branch
          %317 = sbr.rel (%p315) target = $region65
        $region64: #{transformer_forward.44} parent=15 // pred_region
          %s318 = sand.u32 %s97, 1
          %s319 = sand.u32 %s97, 1
          %s320 = smul.addr %s319, 64
          %s321 = scalar_lea.vmem [#allocation6], %s320
          %s322 = smul.u32 16, %s19
          %s323 = smul.addr %s322, 3
          %s324 = sadd.s32 2, %s323
          %s325 = smul.addr %s17, 48
          %s326 = sadd.s32 %s324, %s325
          %s327 = smul.addr %s326, 4
          %s328 = scalar_lea.vmem %s2, %s327
          // Predicated region
          $region66: #{transformer_forward.44} parent=64 // pred_check
            _
          $region67: #{transformer_forward.44} parent=64 // pred_check_branch
            %330 = sbr.rel (0) target = $region69
          $region68: #{transformer_forward.44} parent=64 // pred_region
            // Predicated region
            $region70: #{transformer_forward.44} parent=68 // pred_check
              _
            $region71: #{transformer_forward.44} parent=68 // pred_check_branch
              %332 = sbr.rel target = $region73
            $region72: #{transformer_forward.44} parent=68 // pred_region
              // Predicated region
              $region85: #{transformer_forward.44} parent=72 // pred_check
                _
              $region86: #{transformer_forward.44} parent=72 // pred_check_branch
                %378 = sbr.rel (0) target = $region88
              $region87: #{transformer_forward.44} parent=72 // pred_region
                loop: start=0, step=1, limit=1
                $region89: #{transformer_forward.44} parent=87 // loop_pre_header
                  _
                $region90: #{transformer_forward.44} parent=87 // loop_header
                  %s380 = sphi 0, %s384
                  %p381 = scmp.ge.s32.totalorder %s380, 1
                  %s385 = sphi %s328, %s328
                  %s386 = sphi %s321, %s321
                $region91: #{transformer_forward.44} parent=87 // loop_header_branch
                  %383 = sbr.rel (%p381) target = $region95
                $region92: #{transformer_forward.44} parent=87 // loop_body
                  _
                $region93: #{transformer_forward.44} parent=87 // loop_footer
                  %s384 = sadd.s32 1, %s380
                $region94: #{transformer_forward.44} parent=87 // loop_footer_branch
                  %379 = sbr.rel target = $region90
                $region95: #{transformer_forward.44} parent=87 // loop_exit
                  _
                %s388 = ssub.s32 16, 1
                loop: start=0, step=1, limit=1
                $region96: #{transformer_forward.44} parent=87 // loop_pre_header
                  _
                $region97: #{transformer_forward.44} parent=87 // loop_header
                  %s390 = sphi 0, %s394
                  %p391 = scmp.ge.s32.totalorder %s390, 1
                  %s395 = sphi %s328, %s328
                  %s396 = sphi %s321, %s321
                $region98: #{transformer_forward.44} parent=87 // loop_header_branch
                  %393 = sbr.rel (%p391) target = $region102
                $region99: #{transformer_forward.44} parent=87 // loop_body
                  %v397 = vld [vmem:[%s395] sm:%s388]
                  %398 = vst [vmem:[%s396] sm:%s388] %v397
                  %v399 = vld [vmem:[%s395 + $0xc] sm:%s388]
                  %400 = vst [vmem:[%s396 + $0x4] sm:%s388] %v399
                  %v401 = vld [vmem:[%s395 + $0x18] sm:%s388]
                  %402 = vst [vmem:[%s396 + $0x8] sm:%s388] %v401
                  %v403 = vld [vmem:[%s395 + $0x24] sm:%s388]
                  %404 = vst [vmem:[%s396 + $0xc] sm:%s388] %v403
                  %v405 = vld [vmem:[%s395 + $0x30] sm:%s388]
                  %406 = vst [vmem:[%s396 + $0x10] sm:%s388] %v405
                  %v407 = vld [vmem:[%s395 + $0x3c] sm:%s388]
                  %408 = vst [vmem:[%s396 + $0x14] sm:%s388] %v407
                  %v409 = vld [vmem:[%s395 + $0x48] sm:%s388]
                  %410 = vst [vmem:[%s396 + $0x18] sm:%s388] %v409
                  %v411 = vld [vmem:[%s395 + $0x54] sm:%s388]
                  %412 = vst [vmem:[%s396 + $0x1c] sm:%s388] %v411
                  %v413 = vld [vmem:[%s395 + $0x60] sm:%s388]
                  %414 = vst [vmem:[%s396 + $0x20] sm:%s388] %v413
                  %v415 = vld [vmem:[%s395 + $0x6c] sm:%s388]
                  %416 = vst [vmem:[%s396 + $0x24] sm:%s388] %v415
                  %v417 = vld [vmem:[%s395 + $0x78] sm:%s388]
                  %418 = vst [vmem:[%s396 + $0x28] sm:%s388] %v417
                  %v419 = vld [vmem:[%s395 + $0x84] sm:%s388]
                  %420 = vst [vmem:[%s396 + $0x2c] sm:%s388] %v419
                  %v421 = vld [vmem:[%s395 + $0x90] sm:%s388]
                  %422 = vst [vmem:[%s396 + $0x30] sm:%s388] %v421
                  %v423 = vld [vmem:[%s395 + $0x9c] sm:%s388]
                  %424 = vst [vmem:[%s396 + $0x34] sm:%s388] %v423
                  %v425 = vld [vmem:[%s395 + $0xa8] sm:%s388]
                  %426 = vst [vmem:[%s396 + $0x38] sm:%s388] %v425
                  %v427 = vld [vmem:[%s395 + $0xb4] sm:%s388]
                  %428 = vst [vmem:[%s396 + $0x3c] sm:%s388] %v427
                $region100: #{transformer_forward.44} parent=87 // loop_footer
                  %s394 = sadd.s32 1, %s390
                $region101: #{transformer_forward.44} parent=87 // loop_footer_branch
                  %389 = sbr.rel target = $region97
                $region102: #{transformer_forward.44} parent=87 // loop_exit
                  _
              $region88: #{transformer_forward.44} parent=72 // pred_fallthru
                _
            $region73: #{transformer_forward.44} parent=68 // pred_fallthru
              _
            // Predicated region
            $region74: #{transformer_forward.44} parent=68 // pred_check
              _
            $region75: #{transformer_forward.44} parent=68 // pred_check_branch
              %334 = sbr.rel (0) target = $region77
            $region76: #{transformer_forward.44} parent=68 // pred_region
              %s336 = ssub.s32 16, 1
              loop: start=0, step=1, limit=1
              $region78: #{transformer_forward.44} parent=76 // loop_pre_header
                _
              $region79: #{transformer_forward.44} parent=76 // loop_header
                %s338 = sphi 0, %s342
                %p339 = scmp.ge.s32.totalorder %s338, 1
                %s343 = sphi %s328, %s328
                %s344 = sphi %s321, %s321
              $region80: #{transformer_forward.44} parent=76 // loop_header_branch
                %341 = sbr.rel (%p339) target = $region84
              $region81: #{transformer_forward.44} parent=76 // loop_body
                %v345 = vld [vmem:[%s343] sm:%s336]
                %346 = vst [vmem:[%s344] sm:%s336] %v345
                %v347 = vld [vmem:[%s343 + $0xc] sm:%s336]
                %348 = vst [vmem:[%s344 + $0x4] sm:%s336] %v347
                %v349 = vld [vmem:[%s343 + $0x18] sm:%s336]
                %350 = vst [vmem:[%s344 + $0x8] sm:%s336] %v349
                %v351 = vld [vmem:[%s343 + $0x24] sm:%s336]
                %352 = vst [vmem:[%s344 + $0xc] sm:%s336] %v351
                %v353 = vld [vmem:[%s343 + $0x30] sm:%s336]
                %354 = vst [vmem:[%s344 + $0x10] sm:%s336] %v353
                %v355 = vld [vmem:[%s343 + $0x3c] sm:%s336]
                %356 = vst [vmem:[%s344 + $0x14] sm:%s336] %v355
                %v357 = vld [vmem:[%s343 + $0x48] sm:%s336]
                %358 = vst [vmem:[%s344 + $0x18] sm:%s336] %v357
                %v359 = vld [vmem:[%s343 + $0x54] sm:%s336]
                %360 = vst [vmem:[%s344 + $0x1c] sm:%s336] %v359
                %v361 = vld [vmem:[%s343 + $0x60] sm:%s336]
                %362 = vst [vmem:[%s344 + $0x20] sm:%s336] %v361
                %v363 = vld [vmem:[%s343 + $0x6c] sm:%s336]
                %364 = vst [vmem:[%s344 + $0x24] sm:%s336] %v363
                %v365 = vld [vmem:[%s343 + $0x78] sm:%s336]
                %366 = vst [vmem:[%s344 + $0x28] sm:%s336] %v365
                %v367 = vld [vmem:[%s343 + $0x84] sm:%s336]
                %368 = vst [vmem:[%s344 + $0x2c] sm:%s336] %v367
                %v369 = vld [vmem:[%s343 + $0x90] sm:%s336]
                %370 = vst [vmem:[%s344 + $0x30] sm:%s336] %v369
                %v371 = vld [vmem:[%s343 + $0x9c] sm:%s336]
                %372 = vst [vmem:[%s344 + $0x34] sm:%s336] %v371
                %v373 = vld [vmem:[%s343 + $0xa8] sm:%s336]
                %374 = vst [vmem:[%s344 + $0x38] sm:%s336] %v373
                %v375 = vld [vmem:[%s343 + $0xb4] sm:%s336]
                %376 = vst [vmem:[%s344 + $0x3c] sm:%s336] %v375
              $region82: #{transformer_forward.44} parent=76 // loop_footer
                %s342 = sadd.s32 1, %s338
              $region83: #{transformer_forward.44} parent=76 // loop_footer_branch
                %337 = sbr.rel target = $region79
              $region84: #{transformer_forward.44} parent=76 // loop_exit
                _
            $region77: #{transformer_forward.44} parent=68 // pred_fallthru
              _
          $region69: #{transformer_forward.44} parent=64 // pred_fallthru
            _
          %429 = vnop
        $region65: #{transformer_forward.44} parent=15 // pred_fallthru
          _
        // Predicated region
        $region103: #{transformer_forward.44} parent=15 // pred_check
          %p430 = pneg %p135
        $region104: #{transformer_forward.44} parent=15 // pred_check_branch
          %432 = sbr.rel (%p430) target = $region106
        $region105: #{transformer_forward.44} parent=15 // pred_region
          %p433 = scmp.lt.s32.totalorder %s17, 1
          %s434 = scalar_select %p433, %s17, 1
          %p435 = scmp.lt.s32.totalorder %s19, 0
          %s436 = scalar_select %p435, %s19, 0
          %s437 = sadd.s32 %s436, %s434
          %s438 = scalar_lea.vmem %s3, %s437
        $region106: #{transformer_forward.44} parent=15 // pred_fallthru
          _
      $region16: #{transformer_forward.44} parent=5 // pred_fallthru
        _
      %p439 = scmp.le.s32.totalorder 1, %s10
      %p440 = scmp.lt.s32.totalorder %s10, 3
      %p441 = pnand %p439, %p440
      %p442 = pneg %p441
      // Predicated region
      $region107: #{transformer_forward.44} parent=5 // pred_check
        _
      $region108: #{transformer_forward.44} parent=5 // pred_check_branch
        %444 = sbr.rel (%p441) target = $region110
      $region109: #{transformer_forward.44} parent=5 // pred_region
        %s445 = ssub.s32 %s10, 1
        %s446 = sand.u32 %s72, 1
        %s447 = sand.u32 %s72, 1
        %s448 = smul.addr %s447, 64
        %s449 = scalar_lea.vmem [#allocation5], %s448
        // Predicated region
        $region111: #{transformer_forward.44} parent=109 // pred_check
          %p450 = pneg %p85
        $region112: #{transformer_forward.44} parent=109 // pred_check_branch
          %452 = sbr.rel (%p450) target = $region114
        $region113: #{transformer_forward.44} parent=109 // pred_region
          _
        $region114: #{transformer_forward.44} parent=109 // pred_fallthru
          _
        %s453 = sand.u32 %s100, 1
        %s454 = sand.u32 %s100, 1
        %s455 = smul.addr %s454, 64
        %s456 = scalar_lea.vmem [#allocation6], %s455
        // Predicated region
        $region115: #{transformer_forward.44} parent=109 // pred_check
          %p457 = pneg %p113
        $region116: #{transformer_forward.44} parent=109 // pred_check_branch
          %459 = sbr.rel (%p457) target = $region118
        $region117: #{transformer_forward.44} parent=109 // pred_region
          _
        $region118: #{transformer_forward.44} parent=109 // pred_fallthru
          _
        %p460 = scmp.lt.s32.totalorder %s20, 1
        %s461 = scalar_select %p460, %s20, 1
        %p462 = scmp.lt.s32.totalorder %s21, 15
        %s463 = scalar_select %p462, %s21, 15
        %s464 = smul.addr %s463, 3
        %s465 = smul.addr %s461, 48
        %s466 = sadd.s32 %s464, %s465
        %s467 = smul.addr %s466, 4
        %s468 = scalar_lea.vmem %s0, %s467
        %p469 = pneg %p57
        %p470 = pneg %p54
        %s471 = sand.u32 %s72, 1
        %s472 = sand.u32 %s72, 1
        %s473 = smul.addr %s472, 64
        %s474 = scalar_lea.vmem [#allocation5], %s473
        %p475 = pneg %p85
        %p476 = pneg %p82
        %s477 = sand.u32 %s100, 1
        %s478 = sand.u32 %s100, 1
        %s479 = smul.addr %s478, 64
        %s480 = scalar_lea.vmem [#allocation6], %s479
        %p481 = pneg %p113
        %p482 = pneg %p110
        %p483 = scmp.lt.s32.totalorder %s20, 1
        %s484 = scalar_select %p483, %s20, 1
        %p485 = scmp.lt.s32.totalorder %s22, 0
        %s486 = scalar_select %p485, %s22, 0
        %s487 = sadd.s32 %s486, %s484
        %s488 = scalar_lea.vmem %s3, %s487
        %p489 = pneg %p141
        %p490 = pneg %p138
        %p491 = pneg %p169
        %p492 = pneg %p166
        %p493 = scmp.lt.s32.totalorder %s20, 1
        %s494 = scalar_select %p493, %s20, 1
        %p495 = scmp.lt.s32.totalorder %s21, 0
        %s496 = scalar_select %p495, %s21, 0
        %s497 = sadd.s32 %s496, %s494
        %s498 = smul.addr %s497, 4
        %s499 = scalar_lea.vmem %s4, %s498
        %p500 = scmp.lt.s32.totalorder %s20, 1
        %s501 = scalar_select %p500, %s20, 1
        %p502 = scmp.lt.s32.totalorder %s21, 15
        %s503 = scalar_select %p502, %s21, 15
        %s504 = smul.addr %s503, 3
        %s505 = smul.addr %s501, 48
        %s506 = sadd.s32 %s504, %s505
        %s507 = smul.addr %s506, 4
        %s508 = scalar_lea.vmem %s0, %s507
        %s509 = smul.u32 16, %s22
        %s510 = smul.u32 16, %s22
        %p511 = scmp.lt.s32.totalorder %s20, 1
        %s512 = scalar_select %p511, %s20, 1
        %p513 = scmp.lt.s32.totalorder %s22, 0
        %s514 = scalar_select %p513, %s22, 0
        %s515 = sadd.s32 %s514, %s512
        %s516 = scalar_lea.vmem %s3, %s515
        %p517 = scmp.lt.s32.totalorder %s20, 1
        %s518 = scalar_select %p517, %s20, 1
        %p519 = scmp.lt.s32.totalorder %s21, 0
        %s520 = scalar_select %p519, %s21, 0
        %s521 = sadd.s32 %s520, %s518
        %s522 = smul.addr %s521, 4
        %s523 = scalar_lea.vmem %s4, %s522
        %p525 = scmp.eq.s32.totalorder %s22, 0
        // Predicated region
        $region119: #{transformer_forward.44} parent=109 // pred_check
          %p526 = pneg %p525
        $region120: #{transformer_forward.44} parent=109 // pred_check_branch
          %528 = sbr.rel (%p526) target = $region122
        $region121: #{transformer_forward.44} parent=109 // pred_region
          %529 = vst [vmem:[#allocation2] sm:$0xff] -1e+30
          %530 = vst [vmem:[#allocation2 + $0x8] sm:$0xff] -1e+30
          %531 = vst [vmem:[#allocation2 + $0x10] sm:$0xff] -1e+30
          %532 = vst [vmem:[#allocation2 + $0x18] sm:$0xff] -1e+30
          %533 = vst [vmem:[#allocation3] sm:$0xff] 0.0
          %534 = vst [vmem:[#allocation3 + $0x8] sm:$0xff] 0.0
          %535 = vst [vmem:[#allocation3 + $0x10] sm:$0xff] 0.0
          %536 = vst [vmem:[#allocation3 + $0x18] sm:$0xff] 0.0
          %537 = vst [vmem:[#allocation4] sm:$0xff] 0.0
        $region122: #{transformer_forward.44} parent=109 // pred_fallthru
          _
        %s538 = smul.u32 %s22, 128
        %s539 = smul.u32 %s21, 8
        %s540 = sadd.s32 %s539, 7
        %p541 = scmp.le.s32.totalorder %s538, %s540
        // Predicated region
        $region123: #{transformer_forward.44} parent=109 // pred_check
          %p542 = pneg %p541
        $region124: #{transformer_forward.44} parent=109 // pred_check_branch
          %544 = sbr.rel (%p542) target = $region126
        $region125: #{transformer_forward.44} parent=109 // pred_region
          %v545 = vld [vmem:[%s516] sm:$0x1]
          %v546 = vlaneseq
          %v547 = vshrl.u32 %v546, 7
          %v548 = vstv %s539
          %v549 = vadd.s32 %v548, %v547
          %v550 = vlaneseq
          %v551 = vand.u32 %v550, 127
          %v552 = vstv %s538
          %v553 = vadd.s32 %v552, %v551
          %vm554 = vcmp.ge.s32.totalorder %v549, %v553
          %v555 = vsel %vm554, 0.0, -1e+09
          %v556 = vld [vmem:[%s508] sm:$0xf]
          %v557 = vld [vmem:[%s449] sm:$0xf]
          %v558 = vld [vmem:[%s449 + $0x4] sm:$0xf]
          %v559 = vld [vmem:[%s449 + $0x8] sm:$0xf]
          %v560 = vld [vmem:[%s449 + $0xc] sm:$0xf]
          %v561 = vld [vmem:[%s449 + $0x10] sm:$0xf]
          %v562 = vld [vmem:[%s449 + $0x14] sm:$0xf]
          %v563 = vld [vmem:[%s449 + $0x18] sm:$0xf]
          %v564 = vld [vmem:[%s449 + $0x1c] sm:$0xf]
          %v565 = vld [vmem:[%s449 + $0x20] sm:$0xf]
          %v566 = vld [vmem:[%s449 + $0x24] sm:$0xf]
          %v567 = vld [vmem:[%s449 + $0x28] sm:$0xf]
          %v568 = vld [vmem:[%s449 + $0x2c] sm:$0xf]
          %v569 = vld [vmem:[%s449 + $0x30] sm:$0xf]
          %v570 = vld [vmem:[%s449 + $0x34] sm:$0xf]
          %v571 = vld [vmem:[%s449 + $0x38] sm:$0xf]
          %v572 = vld [vmem:[%s449 + $0x3c] sm:$0xf]
          %v573 = vld [vmem:[%s456] sm:$0xf]
          %v574 = vld [vmem:[%s456 + $0x4] sm:$0xf]
          %v575 = vld [vmem:[%s456 + $0x8] sm:$0xf]
          %v576 = vld [vmem:[%s456 + $0xc] sm:$0xf]
          %v577 = vld [vmem:[%s456 + $0x10] sm:$0xf]
          %v578 = vld [vmem:[%s456 + $0x14] sm:$0xf]
          %v579 = vld [vmem:[%s456 + $0x18] sm:$0xf]
          %v580 = vld [vmem:[%s456 + $0x1c] sm:$0xf]
          %v581 = vld [vmem:[%s456 + $0x20] sm:$0xf]
          %v582 = vld [vmem:[%s456 + $0x24] sm:$0xf]
          %v583 = vld [vmem:[%s456 + $0x28] sm:$0xf]
          %v584 = vld [vmem:[%s456 + $0x2c] sm:$0xf]
          %v585 = vld [vmem:[%s456 + $0x30] sm:$0xf]
          %v586 = vld [vmem:[%s456 + $0x34] sm:$0xf]
          %v587 = vld [vmem:[%s456 + $0x38] sm:$0xf]
          %v588 = vld [vmem:[%s456 + $0x3c] sm:$0xf]
          %v590 = vlaneseq
          %v591 = vshrl.u32 %v590, 7
          %v592 = vsub.s32 0, %v591
          %v593 = vrot.slane %v545, %v592
          %v611 = vunpack.c.l.b16 %v557
          %v612 = vunpack.c.l.b16 %v558
          %v613 = vunpack.c.l.b16 %v559
          %v614 = vunpack.c.l.b16 %v560
          %v615 = vunpack.c.l.b16 %v561
          %v616 = vunpack.c.l.b16 %v562
          %v617 = vunpack.c.l.b16 %v563
          %v618 = vunpack.c.l.b16 %v564
          %v619 = vunpack.c.l.b16 %v565
          %v620 = vunpack.c.l.b16 %v566
          %v621 = vunpack.c.l.b16 %v567
          %v622 = vunpack.c.l.b16 %v568
          %v623 = vunpack.c.l.b16 %v569
          %v624 = vunpack.c.l.b16 %v570
          %v625 = vunpack.c.l.b16 %v571
          %v626 = vunpack.c.l.b16 %v572
          %v627 = vpack.c.b16 %v612, %v611
          %v628 = vpack.c.b16 %v614, %v613
          %v629 = vpack.c.b16 %v616, %v615
          %v630 = vpack.c.b16 %v618, %v617
          %v631 = vpack.c.b16 %v620, %v619
          %v632 = vpack.c.b16 %v622, %v621
          %v633 = vpack.c.b16 %v624, %v623
          %v634 = vpack.c.b16 %v626, %v625
          %vm635 = vcmask 64512
          %v637 = vsel %vm635, %v556, 0
          %v640 = vsel %vm635, %v627, 0
          %v643 = vsel %vm635, %v628, 0
          %v646 = vsel %vm635, %v629, 0
          %v649 = vsel %vm635, %v630, 0
          %v652 = vsel %vm635, %v631, 0
          %v655 = vsel %vm635, %v632, 0
          %v658 = vsel %vm635, %v633, 0
          %v661 = vsel %vm635, %v634, 0
          %663 = vmatprep.subr.bf16.mxu0 0
          %664 = vmatpush1.bf16.xpose.msra.mxu0 %v661
          %665 = vmatprep.subr.bf16.mxu0 0
          %666 = vmatpush1.bf16.xpose.msra.mxu0 %v658
          %667 = vmatprep.subr.bf16.mxu0 0
          %668 = vmatpush1.bf16.xpose.msra.mxu0 %v655
          %669 = vmatprep.subr.bf16.mxu0 0
          %670 = vmatpush1.bf16.xpose.msra.mxu0 %v652
          %671 = vmatprep.subr.bf16.mxu0 0
          %672 = vmatpush1.bf16.xpose.msra.mxu0 %v649
          %673 = vmatprep.subr.bf16.mxu0 0
          %674 = vmatpush1.bf16.xpose.msra.mxu0 %v646
          %675 = vmatprep.subr.bf16.mxu0 0
          %676 = vmatpush1.bf16.xpose.msra.mxu0 %v643
          %677 = vmatprep.subr.bf16.mxu0 0
          %678 = vmatpush1.bf16.xpose.msra.mxu0 %v640
          %679 = vmatprep.subr.bf16.mxu0 0
          %680 = vmatpush2.bf16.xpose.msra.mxu0 0
          %681 = vmatprep.subr.bf16.mxu0 0
          %682 = vmatpush2.bf16.xpose.msra.mxu0 0
          %683 = vmatprep.subr.bf16.mxu0 0
          %684 = vmatpush2.bf16.xpose.msra.mxu0 0
          %685 = vmatprep.subr.bf16.mxu0 0
          %686 = vmatpush2.bf16.xpose.msra.mxu0 0
          %687 = vmatprep.subr.bf16.mxu0 0
          %688 = vmatpush2.bf16.xpose.msra.mxu0 0
          %689 = vmatprep.subr.bf16.mxu0 0
          %690 = vmatpush2.bf16.xpose.msra.mxu0 0
          %691 = vmatprep.subr.bf16.mxu0 0
          %692 = vmatpush2.bf16.xpose.msra.mxu0 0
          %693 = vmatprep.subr.bf16.mxu0 0
          %694 = vmatpush2.bf16.xpose.msra.mxu0 0
          %695 = vmatprep.mubr.bf16.mxu0 0
          %696 = vmatmul.mubr.bf16.gmra.mxu0 %v637
          %v697 = vpop.f32.mrf.mxu0
          %v698 = vadd.f32 %v593, %v697
          %v699 = vpop.f32.mrf.mxu0
          %v700 = vpop.f32.mrf.mxu0
          %v701 = vpop.f32.mrf.mxu0
          %702 = vdwg.mxu0
          %v703 = vadd.f32 %v698, %v555
          %v704 = vld [vmem:[#allocation2] sm:$0xff]
          %705 = vmax.xlane.f32.xlu0 %v703
          %v706 = vpop.xlane.xlu0 %705
          %v707 = vmax.f32 %v704, %v706
          %v708 = vsub.f32 %v704, %v707
          %v709 = vmul.f32 %v708, 1.442695
          %v710 = vpow.pop %v709
          %712 = vset.pattern.permute.xlu0 0
          %713 = vperm.xlu0 %712, %v707
          %v714 = vpop.permute.xlu0 %713
          %v716 = vsub.f32 %v703, %v714
          %v717 = vmul.f32 %v716, 1.442695
          %v718 = vpow.pop %v717
          %v719 = vld [vmem:[#allocation3] sm:$0xff]
          %v720 = vmul.f32 %v710, %v719
          %721 = vadd.xlane.f32.xlu0 %v718
          %v722 = vpop.xlane.xlu0 %721
          %v723 = vadd.f32 %v720, %v722
          %724 = vst [vmem:[#allocation3] sm:$0xff] %v723
          %725 = vst [vmem:[#allocation2] sm:$0xff] %v707
          %v726 = vpack.c.bf16 %v718, %v718
          %v743 = vunpack.c.l.b16 %v573
          %v744 = vunpack.c.l.b16 %v574
          %v745 = vunpack.c.l.b16 %v575
          %v746 = vunpack.c.l.b16 %v576
          %v747 = vunpack.c.l.b16 %v577
          %v748 = vunpack.c.l.b16 %v578
          %v749 = vunpack.c.l.b16 %v579
          %v750 = vunpack.c.l.b16 %v580
          %v751 = vunpack.c.l.b16 %v581
          %v752 = vunpack.c.l.b16 %v582
          %v753 = vunpack.c.l.b16 %v583
          %v754 = vunpack.c.l.b16 %v584
          %v755 = vunpack.c.l.b16 %v585
          %v756 = vunpack.c.l.b16 %v586
          %v757 = vunpack.c.l.b16 %v587
          %v758 = vunpack.c.l.b16 %v588
          %v759 = vpack.c.b16 %v744, %v743
          %v760 = vpack.c.b16 %v746, %v745
          %v761 = vpack.c.b16 %v748, %v747
          %v762 = vpack.c.b16 %v750, %v749
          %v763 = vpack.c.b16 %v752, %v751
          %v764 = vpack.c.b16 %v754, %v753
          %v765 = vpack.c.b16 %v756, %v755
          %v766 = vpack.c.b16 %v758, %v757
          %775 = vmatprep.subr.bf16.mxu0 0
          %776 = vmatpush1.bf16.msra.mxu0 %v766
          %777 = vmatprep.subr.bf16.mxu0 0
          %778 = vmatpush1.bf16.msra.mxu0 %v765
          %779 = vmatprep.subr.bf16.mxu0 0
          %780 = vmatpush1.bf16.msra.mxu0 %v764
          %781 = vmatprep.subr.bf16.mxu0 0
          %782 = vmatpush1.bf16.msra.mxu0 %v763
          %783 = vmatprep.subr.bf16.mxu0 0
          %784 = vmatpush1.bf16.msra.mxu0 %v762
          %785 = vmatprep.subr.bf16.mxu0 0
          %786 = vmatpush1.bf16.msra.mxu0 %v761
          %787 = vmatprep.subr.bf16.mxu0 0
          %788 = vmatpush1.bf16.msra.mxu0 %v760
          %789 = vmatprep.subr.bf16.mxu0 0
          %790 = vmatpush1.bf16.msra.mxu0 %v759
          %791 = vmatprep.subr.bf16.mxu0 0
          %792 = vmatpush2.bf16.msra.mxu0 0
          %793 = vmatprep.subr.bf16.mxu0 0
          %794 = vmatpush2.bf16.msra.mxu0 0
          %795 = vmatprep.subr.bf16.mxu0 0
          %796 = vmatpush2.bf16.msra.mxu0 0
          %797 = vmatprep.subr.bf16.mxu0 0
          %798 = vmatpush2.bf16.msra.mxu0 0
          %799 = vmatprep.subr.bf16.mxu0 0
          %800 = vmatpush2.bf16.msra.mxu0 0
          %801 = vmatprep.subr.bf16.mxu0 0
          %802 = vmatpush2.bf16.msra.mxu0 0
          %803 = vmatprep.subr.bf16.mxu0 0
          %804 = vmatpush2.bf16.msra.mxu0 0
          %805 = vmatprep.subr.bf16.mxu0 0
          %806 = vmatpush2.bf16.msra.mxu0 0
          %807 = vmatprep.mubr.bf16.mxu0 0
          %808 = vmatmul.mubr.bf16.gmra.mxu0 %v726
          %v809 = vpop.f32.mrf.mxu0
          %v810 = vadd.f32 0.0, %v809
          %v811 = vpop.f32.mrf.mxu0
          %v812 = vpop.f32.mrf.mxu0
          %v813 = vpop.f32.mrf.mxu0
          %814 = vdwg.mxu0
          %v815 = vld [vmem:[#allocation4] sm:$0xff]
          %817 = vset.pattern.permute.xlu0 0
          %818 = vperm.xlu0 %817, %v710
          %v819 = vpop.permute.xlu0 %818
          %v821 = vmul.f32 %v819, %v815
          %v822 = vadd.f32 %v821, %v810
          %823 = vst.msk [vmem:[#allocation4] sm:$0xff] %vm635, %v822
          %v824 = vld [vmem:[%s508] sm:$0xf]
          %v825 = vld [vmem:[%s449] sm:$0xf]
          %v826 = vld [vmem:[%s449 + $0x4] sm:$0xf]
          %v827 = vld [vmem:[%s449 + $0x8] sm:$0xf]
          %v828 = vld [vmem:[%s449 + $0xc] sm:$0xf]
          %v829 = vld [vmem:[%s449 + $0x10] sm:$0xf]
          %v830 = vld [vmem:[%s449 + $0x14] sm:$0xf]
          %v831 = vld [vmem:[%s449 + $0x18] sm:$0xf]
          %v832 = vld [vmem:[%s449 + $0x1c] sm:$0xf]
          %v833 = vld [vmem:[%s449 + $0x20] sm:$0xf]
          %v834 = vld [vmem:[%s449 + $0x24] sm:$0xf]
          %v835 = vld [vmem:[%s449 + $0x28] sm:$0xf]
          %v836 = vld [vmem:[%s449 + $0x2c] sm:$0xf]
          %v837 = vld [vmem:[%s449 + $0x30] sm:$0xf]
          %v838 = vld [vmem:[%s449 + $0x34] sm:$0xf]
          %v839 = vld [vmem:[%s449 + $0x38] sm:$0xf]
          %v840 = vld [vmem:[%s449 + $0x3c] sm:$0xf]
          %v841 = vld [vmem:[%s456] sm:$0xf]
          %v842 = vld [vmem:[%s456 + $0x4] sm:$0xf]
          %v843 = vld [vmem:[%s456 + $0x8] sm:$0xf]
          %v844 = vld [vmem:[%s456 + $0xc] sm:$0xf]
          %v845 = vld [vmem:[%s456 + $0x10] sm:$0xf]
          %v846 = vld [vmem:[%s456 + $0x14] sm:$0xf]
          %v847 = vld [vmem:[%s456 + $0x18] sm:$0xf]
          %v848 = vld [vmem:[%s456 + $0x1c] sm:$0xf]
          %v849 = vld [vmem:[%s456 + $0x20] sm:$0xf]
          %v850 = vld [vmem:[%s456 + $0x24] sm:$0xf]
          %v851 = vld [vmem:[%s456 + $0x28] sm:$0xf]
          %v852 = vld [vmem:[%s456 + $0x2c] sm:$0xf]
          %v853 = vld [vmem:[%s456 + $0x30] sm:$0xf]
          %v854 = vld [vmem:[%s456 + $0x34] sm:$0xf]
          %v855 = vld [vmem:[%s456 + $0x38] sm:$0xf]
          %v856 = vld [vmem:[%s456 + $0x3c] sm:$0xf]
          %v858 = vunpack.c.l.b16 %v824
          %v859 = vpack.c.b16 %v858, %v858
          %860 = vrot.lane.b32.xlu0 %v859, 120
          %v861 = vpop.permute.xlu0 %860
          %v878 = vunpack.c.l.b16 %v825
          %v879 = vunpack.c.l.b16 %v826
          %v880 = vunpack.c.l.b16 %v827
          %v881 = vunpack.c.l.b16 %v828
          %v882 = vunpack.c.l.b16 %v829
          %v883 = vunpack.c.l.b16 %v830
          %v884 = vunpack.c.l.b16 %v831
          %v885 = vunpack.c.l.b16 %v832
          %v886 = vunpack.c.l.b16 %v833
          %v887 = vunpack.c.l.b16 %v834
          %v888 = vunpack.c.l.b16 %v835
          %v889 = vunpack.c.l.b16 %v836
          %v890 = vunpack.c.l.b16 %v837
          %v891 = vunpack.c.l.b16 %v838
          %v892 = vunpack.c.l.b16 %v839
          %v893 = vunpack.c.l.b16 %v840
          %v894 = vpack.c.b16 %v879, %v878
          %v895 = vpack.c.b16 %v881, %v880
          %v896 = vpack.c.b16 %v883, %v882
          %v897 = vpack.c.b16 %v885, %v884
          %v898 = vpack.c.b16 %v887, %v886
          %v899 = vpack.c.b16 %v889, %v888
          %v900 = vpack.c.b16 %v891, %v890
          %v901 = vpack.c.b16 %v893, %v892
          %902 = vrot.lane.b32.xlu0 %v894, 120
          %v903 = vpop.permute.xlu0 %902
          %904 = vrot.lane.b32.xlu0 %v895, 120
          %v905 = vpop.permute.xlu0 %904
          %906 = vrot.lane.b32.xlu0 %v896, 120
          %v907 = vpop.permute.xlu0 %906
          %908 = vrot.lane.b32.xlu0 %v897, 120
          %v909 = vpop.permute.xlu0 %908
          %910 = vrot.lane.b32.xlu0 %v898, 120
          %v911 = vpop.permute.xlu0 %910
          %912 = vrot.lane.b32.xlu0 %v899, 120
          %v913 = vpop.permute.xlu0 %912
          %914 = vrot.lane.b32.xlu0 %v900, 120
          %v915 = vpop.permute.xlu0 %914
          %916 = vrot.lane.b32.xlu0 %v901, 120
          %v917 = vpop.permute.xlu0 %916
          %v919 = vsel %vm635, %v861, 0
          %v922 = vsel %vm635, %v903, 0
          %v925 = vsel %vm635, %v905, 0
          %v928 = vsel %vm635, %v907, 0
          %v931 = vsel %vm635, %v909, 0
          %v934 = vsel %vm635, %v911, 0
          %v937 = vsel %vm635, %v913, 0
          %v940 = vsel %vm635, %v915, 0
          %v943 = vsel %vm635, %v917, 0
          %945 = vmatprep.subr.bf16.mxu0 0
          %946 = vmatpush1.bf16.xpose.msra.mxu0 %v943
          %947 = vmatprep.subr.bf16.mxu0 0
          %948 = vmatpush1.bf16.xpose.msra.mxu0 %v940
          %949 = vmatprep.subr.bf16.mxu0 0
          %950 = vmatpush1.bf16.xpose.msra.mxu0 %v937
          %951 = vmatprep.subr.bf16.mxu0 0
          %952 = vmatpush1.bf16.xpose.msra.mxu0 %v934
          %953 = vmatprep.subr.bf16.mxu0 0
          %954 = vmatpush1.bf16.xpose.msra.mxu0 %v931
          %955 = vmatprep.subr.bf16.mxu0 0
          %956 = vmatpush1.bf16.xpose.msra.mxu0 %v928
          %957 = vmatprep.subr.bf16.mxu0 0
          %958 = vmatpush1.bf16.xpose.msra.mxu0 %v925
          %959 = vmatprep.subr.bf16.mxu0 0
          %960 = vmatpush1.bf16.xpose.msra.mxu0 %v922
          %961 = vmatprep.subr.bf16.mxu0 0
          %962 = vmatpush2.bf16.xpose.msra.mxu0 0
          %963 = vmatprep.subr.bf16.mxu0 0
          %964 = vmatpush2.bf16.xpose.msra.mxu0 0
          %965 = vmatprep.subr.bf16.mxu0 0
          %966 = vmatpush2.bf16.xpose.msra.mxu0 0
          %967 = vmatprep.subr.bf16.mxu0 0
          %968 = vmatpush2.bf16.xpose.msra.mxu0 0
          %969 = vmatprep.subr.bf16.mxu0 0
          %970 = vmatpush2.bf16.xpose.msra.mxu0 0
          %971 = vmatprep.subr.bf16.mxu0 0
          %972 = vmatpush2.bf16.xpose.msra.mxu0 0
          %973 = vmatprep.subr.bf16.mxu0 0
          %974 = vmatpush2.bf16.xpose.msra.mxu0 0
          %975 = vmatprep.subr.bf16.mxu0 0
          %976 = vmatpush2.bf16.xpose.msra.mxu0 0
          %977 = vmatprep.mubr.bf16.mxu0 0
          %978 = vmatmul.mubr.bf16.gmra.mxu0 %v919
          %v979 = vpop.f32.mrf.mxu0
          %v980 = vadd.f32 %v593, %v979
          %v981 = vpop.f32.mrf.mxu0
          %v982 = vpop.f32.mrf.mxu0
          %v983 = vpop.f32.mrf.mxu0
          %984 = vdwg.mxu0
          %v985 = vadd.f32 %v980, %v555
          %s986 = scalar_lea.vmem [#allocation2], 8
          %v987 = vld [vmem:[%s986] sm:$0xff]
          %988 = vmax.xlane.f32.xlu0 %v985
          %v989 = vpop.xlane.xlu0 %988
          %v990 = vmax.f32 %v987, %v989
          %v991 = vsub.f32 %v987, %v990
          %v992 = vmul.f32 %v991, 1.442695
          %v993 = vpow.pop %v992
          %995 = vset.pattern.permute.xlu0 0
          %996 = vperm.xlu0 %995, %v990
          %v997 = vpop.permute.xlu0 %996
          %v999 = vsub.f32 %v985, %v997
          %v1000 = vmul.f32 %v999, 1.442695
          %v1001 = vpow.pop %v1000
          %s1002 = scalar_lea.vmem [#allocation3], 8
          %v1003 = vld [vmem:[%s1002] sm:$0xff]
          %v1004 = vmul.f32 %v993, %v1003
          %1005 = vadd.xlane.f32.xlu0 %v1001
          %v1006 = vpop.xlane.xlu0 %1005
          %v1007 = vadd.f32 %v1004, %v1006
          %1008 = vst [vmem:[%s1002] sm:$0xff] %v1007
          %1009 = vst [vmem:[%s986] sm:$0xff] %v990
          %v1010 = vpack.c.bf16 %v1001, %v1001
          %v1027 = vunpack.c.l.b16 %v841
          %v1028 = vunpack.c.l.b16 %v842
          %v1029 = vunpack.c.l.b16 %v843
          %v1030 = vunpack.c.l.b16 %v844
          %v1031 = vunpack.c.l.b16 %v845
          %v1032 = vunpack.c.l.b16 %v846
          %v1033 = vunpack.c.l.b16 %v847
          %v1034 = vunpack.c.l.b16 %v848
          %v1035 = vunpack.c.l.b16 %v849
          %v1036 = vunpack.c.l.b16 %v850
          %v1037 = vunpack.c.l.b16 %v851
          %v1038 = vunpack.c.l.b16 %v852
          %v1039 = vunpack.c.l.b16 %v853
          %v1040 = vunpack.c.l.b16 %v854
          %v1041 = vunpack.c.l.b16 %v855
          %v1042 = vunpack.c.l.b16 %v856
          %v1043 = vpack.c.b16 %v1028, %v1027
          %v1044 = vpack.c.b16 %v1030, %v1029
          %v1045 = vpack.c.b16 %v1032, %v1031
          %v1046 = vpack.c.b16 %v1034, %v1033
          %v1047 = vpack.c.b16 %v1036, %v1035
          %v1048 = vpack.c.b16 %v1038, %v1037
          %v1049 = vpack.c.b16 %v1040, %v1039
          %v1050 = vpack.c.b16 %v1042, %v1041
          %1051 = vrot.lane.b32.xlu0 %v1043, 120
          %v1052 = vpop.permute.xlu0 %1051
          %1053 = vrot.lane.b32.xlu0 %v1044, 120
          %v1054 = vpop.permute.xlu0 %1053
          %1055 = vrot.lane.b32.xlu0 %v1045, 120
          %v1056 = vpop.permute.xlu0 %1055
          %1057 = vrot.lane.b32.xlu0 %v1046, 120
          %v1058 = vpop.permute.xlu0 %1057
          %1059 = vrot.lane.b32.xlu0 %v1047, 120
          %v1060 = vpop.permute.xlu0 %1059
          %1061 = vrot.lane.b32.xlu0 %v1048, 120
          %v1062 = vpop.permute.xlu0 %1061
          %1063 = vrot.lane.b32.xlu0 %v1049, 120
          %v1064 = vpop.permute.xlu0 %1063
          %1065 = vrot.lane.b32.xlu0 %v1050, 120
          %v1066 = vpop.permute.xlu0 %1065
          %1075 = vmatprep.subr.bf16.mxu0 0
          %1076 = vmatpush1.bf16.msra.mxu0 %v1066
          %1077 = vmatprep.subr.bf16.mxu0 0
          %1078 = vmatpush1.bf16.msra.mxu0 %v1064
          %1079 = vmatprep.subr.bf16.mxu0 0
          %1080 = vmatpush1.bf16.msra.mxu0 %v1062
          %1081 = vmatprep.subr.bf16.mxu0 0
          %1082 = vmatpush1.bf16.msra.mxu0 %v1060
          %1083 = vmatprep.subr.bf16.mxu0 0
          %1084 = vmatpush1.bf16.msra.mxu0 %v1058
          %1085 = vmatprep.subr.bf16.mxu0 0
          %1086 = vmatpush1.bf16.msra.mxu0 %v1056
          %1087 = vmatprep.subr.bf16.mxu0 0
          %1088 = vmatpush1.bf16.msra.mxu0 %v1054
          %1089 = vmatprep.subr.bf16.mxu0 0
          %1090 = vmatpush1.bf16.msra.mxu0 %v1052
          %1091 = vmatprep.subr.bf16.mxu0 0
          %1092 = vmatpush2.bf16.msra.mxu0 0
          %1093 = vmatprep.subr.bf16.mxu0 0
          %1094 = vmatpush2.bf16.msra.mxu0 0
          %1095 = vmatprep.subr.bf16.mxu0 0
          %1096 = vmatpush2.bf16.msra.mxu0 0
          %1097 = vmatprep.subr.bf16.mxu0 0
          %1098 = vmatpush2.bf16.msra.mxu0 0
          %1099 = vmatprep.subr.bf16.mxu0 0
          %1100 = vmatpush2.bf16.msra.mxu0 0
          %1101 = vmatprep.subr.bf16.mxu0 0
          %1102 = vmatpush2.bf16.msra.mxu0 0
          %1103 = vmatprep.subr.bf16.mxu0 0
          %1104 = vmatpush2.bf16.msra.mxu0 0
          %1105 = vmatprep.subr.bf16.mxu0 0
          %1106 = vmatpush2.bf16.msra.mxu0 0
          %1107 = vmatprep.mubr.bf16.mxu0 0
          %1108 = vmatmul.mubr.bf16.gmra.mxu0 %v1010
          %v1109 = vpop.f32.mrf.mxu0
          %v1110 = vadd.f32 0.0, %v1109
          %v1111 = vpop.f32.mrf.mxu0
          %v1112 = vpop.f32.mrf.mxu0
          %v1113 = vpop.f32.mrf.mxu0
          %1114 = vdwg.mxu0
          %v1115 = vld [vmem:[#allocation4] sm:$0xff]
          %1117 = vset.pattern.permute.xlu0 0
          %1118 = vperm.xlu0 %1117, %v993
          %v1119 = vpop.permute.xlu0 %1118
          %v1121 = vmul.f32 %v1119, %v1115
          %1123 = vrot.lane.b32.xlu0 %v1110, 8
          %v1124 = vpop.permute.xlu0 %1123
          %v1126 = vadd.f32 %v1121, %v1124
          %vm1127 = vcmask 130112
          %1128 = vst.msk [vmem:[#allocation4] sm:$0xff] %vm1127, %v1126
          %v1129 = vld [vmem:[%s508] sm:$0xf]
          %v1130 = vld [vmem:[%s449] sm:$0xf]
          %v1131 = vld [vmem:[%s449 + $0x4] sm:$0xf]
          %v1132 = vld [vmem:[%s449 + $0x8] sm:$0xf]
          %v1133 = vld [vmem:[%s449 + $0xc] sm:$0xf]
          %v1134 = vld [vmem:[%s449 + $0x10] sm:$0xf]
          %v1135 = vld [vmem:[%s449 + $0x14] sm:$0xf]
          %v1136 = vld [vmem:[%s449 + $0x18] sm:$0xf]
          %v1137 = vld [vmem:[%s449 + $0x1c] sm:$0xf]
          %v1138 = vld [vmem:[%s449 + $0x20] sm:$0xf]
          %v1139 = vld [vmem:[%s449 + $0x24] sm:$0xf]
          %v1140 = vld [vmem:[%s449 + $0x28] sm:$0xf]
          %v1141 = vld [vmem:[%s449 + $0x2c] sm:$0xf]
          %v1142 = vld [vmem:[%s449 + $0x30] sm:$0xf]
          %v1143 = vld [vmem:[%s449 + $0x34] sm:$0xf]
          %v1144 = vld [vmem:[%s449 + $0x38] sm:$0xf]
          %v1145 = vld [vmem:[%s449 + $0x3c] sm:$0xf]
          %v1146 = vld [vmem:[%s456] sm:$0xf]
          %v1147 = vld [vmem:[%s456 + $0x4] sm:$0xf]
          %v1148 = vld [vmem:[%s456 + $0x8] sm:$0xf]
          %v1149 = vld [vmem:[%s456 + $0xc] sm:$0xf]
          %v1150 = vld [vmem:[%s456 + $0x10] sm:$0xf]
          %v1151 = vld [vmem:[%s456 + $0x14] sm:$0xf]
          %v1152 = vld [vmem:[%s456 + $0x18] sm:$0xf]
          %v1153 = vld [vmem:[%s456 + $0x1c] sm:$0xf]
          %v1154 = vld [vmem:[%s456 + $0x20] sm:$0xf]
          %v1155 = vld [vmem:[%s456 + $0x24] sm:$0xf]
          %v1156 = vld [vmem:[%s456 + $0x28] sm:$0xf]
          %v1157 = vld [vmem:[%s456 + $0x2c] sm:$0xf]
          %v1158 = vld [vmem:[%s456 + $0x30] sm:$0xf]
          %v1159 = vld [vmem:[%s456 + $0x34] sm:$0xf]
          %v1160 = vld [vmem:[%s456 + $0x38] sm:$0xf]
          %v1161 = vld [vmem:[%s456 + $0x3c] sm:$0xf]
          %v1163 = vunpack.c.l.b16 %v1129
          %v1164 = vpack.c.b16 %v1163, %v1163
          %1165 = vrot.lane.b32.xlu0 %v1164, 112
          %v1166 = vpop.permute.xlu0 %1165
          %v1183 = vunpack.c.l.b16 %v1130
          %v1184 = vunpack.c.l.b16 %v1131
          %v1185 = vunpack.c.l.b16 %v1132
          %v1186 = vunpack.c.l.b16 %v1133
          %v1187 = vunpack.c.l.b16 %v1134
          %v1188 = vunpack.c.l.b16 %v1135
          %v1189 = vunpack.c.l.b16 %v1136
          %v1190 = vunpack.c.l.b16 %v1137
          %v1191 = vunpack.c.l.b16 %v1138
          %v1192 = vunpack.c.l.b16 %v1139
          %v1193 = vunpack.c.l.b16 %v1140
          %v1194 = vunpack.c.l.b16 %v1141
          %v1195 = vunpack.c.l.b16 %v1142
          %v1196 = vunpack.c.l.b16 %v1143
          %v1197 = vunpack.c.l.b16 %v1144
          %v1198 = vunpack.c.l.b16 %v1145
          %v1199 = vpack.c.b16 %v1184, %v1183
          %v1200 = vpack.c.b16 %v1186, %v1185
          %v1201 = vpack.c.b16 %v1188, %v1187
          %v1202 = vpack.c.b16 %v1190, %v1189
          %v1203 = vpack.c.b16 %v1192, %v1191
          %v1204 = vpack.c.b16 %v1194, %v1193
          %v1205 = vpack.c.b16 %v1196, %v1195
          %v1206 = vpack.c.b16 %v1198, %v1197
          %1207 = vrot.lane.b32.xlu0 %v1199, 112
          %v1208 = vpop.permute.xlu0 %1207
          %1209 = vrot.lane.b32.xlu0 %v1200, 112
          %v1210 = vpop.permute.xlu0 %1209
          %1211 = vrot.lane.b32.xlu0 %v1201, 112
          %v1212 = vpop.permute.xlu0 %1211
          %1213 = vrot.lane.b32.xlu0 %v1202, 112
          %v1214 = vpop.permute.xlu0 %1213
          %1215 = vrot.lane.b32.xlu0 %v1203, 112
          %v1216 = vpop.permute.xlu0 %1215
          %1217 = vrot.lane.b32.xlu0 %v1204, 112
          %v1218 = vpop.permute.xlu0 %1217
          %1219 = vrot.lane.b32.xlu0 %v1205, 112
          %v1220 = vpop.permute.xlu0 %1219
          %1221 = vrot.lane.b32.xlu0 %v1206, 112
          %v1222 = vpop.permute.xlu0 %1221
          %v1224 = vsel %vm635, %v1166, 0
          %v1227 = vsel %vm635, %v1208, 0
          %v1230 = vsel %vm635, %v1210, 0
          %v1233 = vsel %vm635, %v1212, 0
          %v1236 = vsel %vm635, %v1214, 0
          %v1239 = vsel %vm635, %v1216, 0
          %v1242 = vsel %vm635, %v1218, 0
          %v1245 = vsel %vm635, %v1220, 0
          %v1248 = vsel %vm635, %v1222, 0
          %1250 = vmatprep.subr.bf16.mxu0 0
          %1251 = vmatpush1.bf16.xpose.msra.mxu0 %v1248
          %1252 = vmatprep.subr.bf16.mxu0 0
          %1253 = vmatpush1.bf16.xpose.msra.mxu0 %v1245
          %1254 = vmatprep.subr.bf16.mxu0 0
          %1255 = vmatpush1.bf16.xpose.msra.mxu0 %v1242
          %1256 = vmatprep.subr.bf16.mxu0 0
          %1257 = vmatpush1.bf16.xpose.msra.mxu0 %v1239
          %1258 = vmatprep.subr.bf16.mxu0 0
          %1259 = vmatpush1.bf16.xpose.msra.mxu0 %v1236
          %1260 = vmatprep.subr.bf16.mxu0 0
          %1261 = vmatpush1.bf16.xpose.msra.mxu0 %v1233
          %1262 = vmatprep.subr.bf16.mxu0 0
          %1263 = vmatpush1.bf16.xpose.msra.mxu0 %v1230
          %1264 = vmatprep.subr.bf16.mxu0 0
          %1265 = vmatpush1.bf16.xpose.msra.mxu0 %v1227
          %1266 = vmatprep.subr.bf16.mxu0 0
          %1267 = vmatpush2.bf16.xpose.msra.mxu0 0
          %1268 = vmatprep.subr.bf16.mxu0 0
          %1269 = vmatpush2.bf16.xpose.msra.mxu0 0
          %1270 = vmatprep.subr.bf16.mxu0 0
          %1271 = vmatpush2.bf16.xpose.msra.mxu0 0
          %1272 = vmatprep.subr.bf16.mxu0 0
          %1273 = vmatpush2.bf16.xpose.msra.mxu0 0
          %1274 = vmatprep.subr.bf16.mxu0 0
          %1275 = vmatpush2.bf16.xpose.msra.mxu0 0
          %1276 = vmatprep.subr.bf16.mxu0 0
          %1277 = vmatpush2.bf16.xpose.msra.mxu0 0
          %1278 = vmatprep.subr.bf16.mxu0 0
          %1279 = vmatpush2.bf16.xpose.msra.mxu0 0
          %1280 = vmatprep.subr.bf16.mxu0 0
          %1281 = vmatpush2.bf16.xpose.msra.mxu0 0
          %1282 = vmatprep.mubr.bf16.mxu0 0
          %1283 = vmatmul.mubr.bf16.gmra.mxu0 %v1224
          %v1284 = vpop.f32.mrf.mxu0
          %v1285 = vadd.f32 %v593, %v1284
          %v1286 = vpop.f32.mrf.mxu0
          %v1287 = vpop.f32.mrf.mxu0
          %v1288 = vpop.f32.mrf.mxu0
          %1289 = vdwg.mxu0
          %v1290 = vadd.f32 %v1285, %v555
          %s1291 = scalar_lea.vmem [#allocation2], 16
          %v1292 = vld [vmem:[%s1291] sm:$0xff]
          %1293 = vmax.xlane.f32.xlu0 %v1290
          %v1294 = vpop.xlane.xlu0 %1293
          %v1295 = vmax.f32 %v1292, %v1294
          %v1296 = vsub.f32 %v1292, %v1295
          %v1297 = vmul.f32 %v1296, 1.442695
          %v1298 = vpow.pop %v1297
          %1300 = vset.pattern.permute.xlu0 0
          %1301 = vperm.xlu0 %1300, %v1295
          %v1302 = vpop.permute.xlu0 %1301
          %v1304 = vsub.f32 %v1290, %v1302
          %v1305 = vmul.f32 %v1304, 1.442695
          %v1306 = vpow.pop %v1305
          %s1307 = scalar_lea.vmem [#allocation3], 16
          %v1308 = vld [vmem:[%s1307] sm:$0xff]
          %v1309 = vmul.f32 %v1298, %v1308
          %1310 = vadd.xlane.f32.xlu0 %v1306
          %v1311 = vpop.xlane.xlu0 %1310
          %v1312 = vadd.f32 %v1309, %v1311
          %1313 = vst [vmem:[%s1307] sm:$0xff] %v1312
          %1314 = vst [vmem:[%s1291] sm:$0xff] %v1295
          %v1315 = vpack.c.bf16 %v1306, %v1306
          %v1332 = vunpack.c.l.b16 %v1146
          %v1333 = vunpack.c.l.b16 %v1147
          %v1334 = vunpack.c.l.b16 %v1148
          %v1335 = vunpack.c.l.b16 %v1149
          %v1336 = vunpack.c.l.b16 %v1150
          %v1337 = vunpack.c.l.b16 %v1151
          %v1338 = vunpack.c.l.b16 %v1152
          %v1339 = vunpack.c.l.b16 %v1153
          %v1340 = vunpack.c.l.b16 %v1154
          %v1341 = vunpack.c.l.b16 %v1155
          %v1342 = vunpack.c.l.b16 %v1156
          %v1343 = vunpack.c.l.b16 %v1157
          %v1344 = vunpack.c.l.b16 %v1158
          %v1345 = vunpack.c.l.b16 %v1159
          %v1346 = vunpack.c.l.b16 %v1160
          %v1347 = vunpack.c.l.b16 %v1161
          %v1348 = vpack.c.b16 %v1333, %v1332
          %v1349 = vpack.c.b16 %v1335, %v1334
          %v1350 = vpack.c.b16 %v1337, %v1336
          %v1351 = vpack.c.b16 %v1339, %v1338
          %v1352 = vpack.c.b16 %v1341, %v1340
          %v1353 = vpack.c.b16 %v1343, %v1342
          %v1354 = vpack.c.b16 %v1345, %v1344
          %v1355 = vpack.c.b16 %v1347, %v1346
          %1356 = vrot.lane.b32.xlu0 %v1348, 112
          %v1357 = vpop.permute.xlu0 %1356
          %1358 = vrot.lane.b32.xlu0 %v1349, 112
          %v1359 = vpop.permute.xlu0 %1358
          %1360 = vrot.lane.b32.xlu0 %v1350, 112
          %v1361 = vpop.permute.xlu0 %1360
          %1362 = vrot.lane.b32.xlu0 %v1351, 112
          %v1363 = vpop.permute.xlu0 %1362
          %1364 = vrot.lane.b32.xlu0 %v1352, 112
          %v1365 = vpop.permute.xlu0 %1364
          %1366 = vrot.lane.b32.xlu0 %v1353, 112
          %v1367 = vpop.permute.xlu0 %1366
          %1368 = vrot.lane.b32.xlu0 %v1354, 112
          %v1369 = vpop.permute.xlu0 %1368
          %1370 = vrot.lane.b32.xlu0 %v1355, 112
          %v1371 = vpop.permute.xlu0 %1370
          %1380 = vmatprep.subr.bf16.mxu0 0
          %1381 = vmatpush1.bf16.msra.mxu0 %v1371
          %1382 = vmatprep.subr.bf16.mxu0 0
          %1383 = vmatpush1.bf16.msra.mxu0 %v1369
          %1384 = vmatprep.subr.bf16.mxu0 0
          %1385 = vmatpush1.bf16.msra.mxu0 %v1367
          %1386 = vmatprep.subr.bf16.mxu0 0
          %1387 = vmatpush1.bf16.msra.mxu0 %v1365
          %1388 = vmatprep.subr.bf16.mxu0 0
          %1389 = vmatpush1.bf16.msra.mxu0 %v1363
          %1390 = vmatprep.subr.bf16.mxu0 0
          %1391 = vmatpush1.bf16.msra.mxu0 %v1361
          %1392 = vmatprep.subr.bf16.mxu0 0
          %1393 = vmatpush1.bf16.msra.mxu0 %v1359
          %1394 = vmatprep.subr.bf16.mxu0 0
          %1395 = vmatpush1.bf16.msra.mxu0 %v1357
          %1396 = vmatprep.subr.bf16.mxu0 0
          %1397 = vmatpush2.bf16.msra.mxu0 0
          %1398 = vmatprep.subr.bf16.mxu0 0
          %1399 = vmatpush2.bf16.msra.mxu0 0
          %1400 = vmatprep.subr.bf16.mxu0 0
          %1401 = vmatpush2.bf16.msra.mxu0 0
          %1402 = vmatprep.subr.bf16.mxu0 0
          %1403 = vmatpush2.bf16.msra.mxu0 0
          %1404 = vmatprep.subr.bf16.mxu0 0
          %1405 = vmatpush2.bf16.msra.mxu0 0
          %1406 = vmatprep.subr.bf16.mxu0 0
          %1407 = vmatpush2.bf16.msra.mxu0 0
          %1408 = vmatprep.subr.bf16.mxu0 0
          %1409 = vmatpush2.bf16.msra.mxu0 0
          %1410 = vmatprep.subr.bf16.mxu0 0
          %1411 = vmatpush2.bf16.msra.mxu0 0
          %1412 = vmatprep.mubr.bf16.mxu0 0
          %1413 = vmatmul.mubr.bf16.gmra.mxu0 %v1315
          %v1414 = vpop.f32.mrf.mxu0
          %v1415 = vadd.f32 0.0, %v1414
          %v1416 = vpop.f32.mrf.mxu0
          %v1417 = vpop.f32.mrf.mxu0
          %v1418 = vpop.f32.mrf.mxu0
          %1419 = vdwg.mxu0
          %v1420 = vld [vmem:[#allocation4] sm:$0xff]
          %1422 = vset.pattern.permute.xlu0 0
          %1423 = vperm.xlu0 %1422, %v1298
          %v1424 = vpop.permute.xlu0 %1423
          %v1426 = vmul.f32 %v1424, %v1420
          %1428 = vrot.lane.b32.xlu0 %v1415, 16
          %v1429 = vpop.permute.xlu0 %1428
          %v1431 = vadd.f32 %v1426, %v1429
          %vm1432 = vcmask 195712
          %1433 = vst.msk [vmem:[#allocation4] sm:$0xff] %vm1432, %v1431
          %v1434 = vld [vmem:[%s508] sm:$0xf]
          %v1435 = vld [vmem:[%s449] sm:$0xf]
          %v1436 = vld [vmem:[%s449 + $0x4] sm:$0xf]
          %v1437 = vld [vmem:[%s449 + $0x8] sm:$0xf]
          %v1438 = vld [vmem:[%s449 + $0xc] sm:$0xf]
          %v1439 = vld [vmem:[%s449 + $0x10] sm:$0xf]
          %v1440 = vld [vmem:[%s449 + $0x14] sm:$0xf]
          %v1441 = vld [vmem:[%s449 + $0x18] sm:$0xf]
          %v1442 = vld [vmem:[%s449 + $0x1c] sm:$0xf]
          %v1443 = vld [vmem:[%s449 + $0x20] sm:$0xf]
          %v1444 = vld [vmem:[%s449 + $0x24] sm:$0xf]
          %v1445 = vld [vmem:[%s449 + $0x28] sm:$0xf]
          %v1446 = vld [vmem:[%s449 + $0x2c] sm:$0xf]
          %v1447 = vld [vmem:[%s449 + $0x30] sm:$0xf]
          %v1448 = vld [vmem:[%s449 + $0x34] sm:$0xf]
          %v1449 = vld [vmem:[%s449 + $0x38] sm:$0xf]
          %v1450 = vld [vmem:[%s449 + $0x3c] sm:$0xf]
          %v1451 = vld [vmem:[%s456] sm:$0xf]
          %v1452 = vld [vmem:[%s456 + $0x4] sm:$0xf]
          %v1453 = vld [vmem:[%s456 + $0x8] sm:$0xf]
          %v1454 = vld [vmem:[%s456 + $0xc] sm:$0xf]
          %v1455 = vld [vmem:[%s456 + $0x10] sm:$0xf]
          %v1456 = vld [vmem:[%s456 + $0x14] sm:$0xf]
          %v1457 = vld [vmem:[%s456 + $0x18] sm:$0xf]
          %v1458 = vld [vmem:[%s456 + $0x1c] sm:$0xf]
          %v1459 = vld [vmem:[%s456 + $0x20] sm:$0xf]
          %v1460 = vld [vmem:[%s456 + $0x24] sm:$0xf]
          %v1461 = vld [vmem:[%s456 + $0x28] sm:$0xf]
          %v1462 = vld [vmem:[%s456 + $0x2c] sm:$0xf]
          %v1463 = vld [vmem:[%s456 + $0x30] sm:$0xf]
          %v1464 = vld [vmem:[%s456 + $0x34] sm:$0xf]
          %v1465 = vld [vmem:[%s456 + $0x38] sm:$0xf]
          %v1466 = vld [vmem:[%s456 + $0x3c] sm:$0xf]
          %v1468 = vunpack.c.l.b16 %v1434
          %v1469 = vpack.c.b16 %v1468, %v1468
          %1470 = vrot.lane.b32.xlu0 %v1469, 104
          %v1471 = vpop.permute.xlu0 %1470
          %v1488 = vunpack.c.l.b16 %v1435
          %v1489 = vunpack.c.l.b16 %v1436
          %v1490 = vunpack.c.l.b16 %v1437
          %v1491 = vunpack.c.l.b16 %v1438
          %v1492 = vunpack.c.l.b16 %v1439
          %v1493 = vunpack.c.l.b16 %v1440
          %v1494 = vunpack.c.l.b16 %v1441
          %v1495 = vunpack.c.l.b16 %v1442
          %v1496 = vunpack.c.l.b16 %v1443
          %v1497 = vunpack.c.l.b16 %v1444
          %v1498 = vunpack.c.l.b16 %v1445
          %v1499 = vunpack.c.l.b16 %v1446
          %v1500 = vunpack.c.l.b16 %v1447
          %v1501 = vunpack.c.l.b16 %v1448
          %v1502 = vunpack.c.l.b16 %v1449
          %v1503 = vunpack.c.l.b16 %v1450
          %v1504 = vpack.c.b16 %v1489, %v1488
          %v1505 = vpack.c.b16 %v1491, %v1490
          %v1506 = vpack.c.b16 %v1493, %v1492
          %v1507 = vpack.c.b16 %v1495, %v1494
          %v1508 = vpack.c.b16 %v1497, %v1496
          %v1509 = vpack.c.b16 %v1499, %v1498
          %v1510 = vpack.c.b16 %v1501, %v1500
          %v1511 = vpack.c.b16 %v1503, %v1502
          %1512 = vrot.lane.b32.xlu0 %v1504, 104
          %v1513 = vpop.permute.xlu0 %1512
          %1514 = vrot.lane.b32.xlu0 %v1505, 104
          %v1515 = vpop.permute.xlu0 %1514
          %1516 = vrot.lane.b32.xlu0 %v1506, 104
          %v1517 = vpop.permute.xlu0 %1516
          %1518 = vrot.lane.b32.xlu0 %v1507, 104
          %v1519 = vpop.permute.xlu0 %1518
          %1520 = vrot.lane.b32.xlu0 %v1508, 104
          %v1521 = vpop.permute.xlu0 %1520
          %1522 = vrot.lane.b32.xlu0 %v1509, 104
          %v1523 = vpop.permute.xlu0 %1522
          %1524 = vrot.lane.b32.xlu0 %v1510, 104
          %v1525 = vpop.permute.xlu0 %1524
          %1526 = vrot.lane.b32.xlu0 %v1511, 104
          %v1527 = vpop.permute.xlu0 %1526
          %v1529 = vsel %vm635, %v1471, 0
          %v1532 = vsel %vm635, %v1513, 0
          %v1535 = vsel %vm635, %v1515, 0
          %v1538 = vsel %vm635, %v1517, 0
          %v1541 = vsel %vm635, %v1519, 0
          %v1544 = vsel %vm635, %v1521, 0
          %v1547 = vsel %vm635, %v1523, 0
          %v1550 = vsel %vm635, %v1525, 0
          %v1553 = vsel %vm635, %v1527, 0
          %1555 = vmatprep.subr.bf16.mxu0 0
          %1556 = vmatpush1.bf16.xpose.msra.mxu0 %v1553
          %1557 = vmatprep.subr.bf16.mxu0 0
          %1558 = vmatpush1.bf16.xpose.msra.mxu0 %v1550
          %1559 = vmatprep.subr.bf16.mxu0 0
          %1560 = vmatpush1.bf16.xpose.msra.mxu0 %v1547
          %1561 = vmatprep.subr.bf16.mxu0 0
          %1562 = vmatpush1.bf16.xpose.msra.mxu0 %v1544
          %1563 = vmatprep.subr.bf16.mxu0 0
          %1564 = vmatpush1.bf16.xpose.msra.mxu0 %v1541
          %1565 = vmatprep.subr.bf16.mxu0 0
          %1566 = vmatpush1.bf16.xpose.msra.mxu0 %v1538
          %1567 = vmatprep.subr.bf16.mxu0 0
          %1568 = vmatpush1.bf16.xpose.msra.mxu0 %v1535
          %1569 = vmatprep.subr.bf16.mxu0 0
          %1570 = vmatpush1.bf16.xpose.msra.mxu0 %v1532
          %1571 = vmatprep.subr.bf16.mxu0 0
          %1572 = vmatpush2.bf16.xpose.msra.mxu0 0
          %1573 = vmatprep.subr.bf16.mxu0 0
          %1574 = vmatpush2.bf16.xpose.msra.mxu0 0
          %1575 = vmatprep.subr.bf16.mxu0 0
          %1576 = vmatpush2.bf16.xpose.msra.mxu0 0
          %1577 = vmatprep.subr.bf16.mxu0 0
          %1578 = vmatpush2.bf16.xpose.msra.mxu0 0
          %1579 = vmatprep.subr.bf16.mxu0 0
          %1580 = vmatpush2.bf16.xpose.msra.mxu0 0
          %1581 = vmatprep.subr.bf16.mxu0 0
          %1582 = vmatpush2.bf16.xpose.msra.mxu0 0
          %1583 = vmatprep.subr.bf16.mxu0 0
          %1584 = vmatpush2.bf16.xpose.msra.mxu0 0
          %1585 = vmatprep.subr.bf16.mxu0 0
          %1586 = vmatpush2.bf16.xpose.msra.mxu0 0
          %1587 = vmatprep.mubr.bf16.mxu0 0
          %1588 = vmatmul.mubr.bf16.gmra.mxu0 %v1529
          %v1589 = vpop.f32.mrf.mxu0
          %v1590 = vadd.f32 %v593, %v1589
          %v1591 = vpop.f32.mrf.mxu0
          %v1592 = vpop.f32.mrf.mxu0
          %v1593 = vpop.f32.mrf.mxu0
          %1594 = vdwg.mxu0
          %v1595 = vadd.f32 %v1590, %v555
          %s1596 = scalar_lea.vmem [#allocation2], 24
          %v1597 = vld [vmem:[%s1596] sm:$0xff]
          %1598 = vmax.xlane.f32.xlu0 %v1595
          %v1599 = vpop.xlane.xlu0 %1598
          %v1600 = vmax.f32 %v1597, %v1599
          %v1601 = vsub.f32 %v1597, %v1600
          %v1602 = vmul.f32 %v1601, 1.442695
          %v1603 = vpow.pop %v1602
          %1605 = vset.pattern.permute.xlu0 0
          %1606 = vperm.xlu0 %1605, %v1600
          %v1607 = vpop.permute.xlu0 %1606
          %v1609 = vsub.f32 %v1595, %v1607
          %v1610 = vmul.f32 %v1609, 1.442695
          %v1611 = vpow.pop %v1610
          %s1612 = scalar_lea.vmem [#allocation3], 24
          %v1613 = vld [vmem:[%s1612] sm:$0xff]
          %v1614 = vmul.f32 %v1603, %v1613
          %1615 = vadd.xlane.f32.xlu0 %v1611
          %v1616 = vpop.xlane.xlu0 %1615
          %v1617 = vadd.f32 %v1614, %v1616
          %1618 = vst [vmem:[%s1612] sm:$0xff] %v1617
          %1619 = vst [vmem:[%s1596] sm:$0xff] %v1600
          %v1620 = vpack.c.bf16 %v1611, %v1611
          %v1637 = vunpack.c.l.b16 %v1451
          %v1638 = vunpack.c.l.b16 %v1452
          %v1639 = vunpack.c.l.b16 %v1453
          %v1640 = vunpack.c.l.b16 %v1454
          %v1641 = vunpack.c.l.b16 %v1455
          %v1642 = vunpack.c.l.b16 %v1456
          %v1643 = vunpack.c.l.b16 %v1457
          %v1644 = vunpack.c.l.b16 %v1458
          %v1645 = vunpack.c.l.b16 %v1459
          %v1646 = vunpack.c.l.b16 %v1460
          %v1647 = vunpack.c.l.b16 %v1461
          %v1648 = vunpack.c.l.b16 %v1462
          %v1649 = vunpack.c.l.b16 %v1463
          %v1650 = vunpack.c.l.b16 %v1464
          %v1651 = vunpack.c.l.b16 %v1465
          %v1652 = vunpack.c.l.b16 %v1466
          %v1653 = vpack.c.b16 %v1638, %v1637
          %v1654 = vpack.c.b16 %v1640, %v1639
          %v1655 = vpack.c.b16 %v1642, %v1641
          %v1656 = vpack.c.b16 %v1644, %v1643
          %v1657 = vpack.c.b16 %v1646, %v1645
          %v1658 = vpack.c.b16 %v1648, %v1647
          %v1659 = vpack.c.b16 %v1650, %v1649
          %v1660 = vpack.c.b16 %v1652, %v1651
          %1661 = vrot.lane.b32.xlu0 %v1653, 104
          %v1662 = vpop.permute.xlu0 %1661
          %1663 = vrot.lane.b32.xlu0 %v1654, 104
          %v1664 = vpop.permute.xlu0 %1663
          %1665 = vrot.lane.b32.xlu0 %v1655, 104
          %v1666 = vpop.permute.xlu0 %1665
          %1667 = vrot.lane.b32.xlu0 %v1656, 104
          %v1668 = vpop.permute.xlu0 %1667
          %1669 = vrot.lane.b32.xlu0 %v1657, 104
          %v1670 = vpop.permute.xlu0 %1669
          %1671 = vrot.lane.b32.xlu0 %v1658, 104
          %v1672 = vpop.permute.xlu0 %1671
          %1673 = vrot.lane.b32.xlu0 %v1659, 104
          %v1674 = vpop.permute.xlu0 %1673
          %1675 = vrot.lane.b32.xlu0 %v1660, 104
          %v1676 = vpop.permute.xlu0 %1675
          %1685 = vmatprep.subr.bf16.mxu0 0
          %1686 = vmatpush1.bf16.msra.mxu0 %v1676
          %1687 = vmatprep.subr.bf16.mxu0 0
          %1688 = vmatpush1.bf16.msra.mxu0 %v1674
          %1689 = vmatprep.subr.bf16.mxu0 0
          %1690 = vmatpush1.bf16.msra.mxu0 %v1672
          %1691 = vmatprep.subr.bf16.mxu0 0
          %1692 = vmatpush1.bf16.msra.mxu0 %v1670
          %1693 = vmatprep.subr.bf16.mxu0 0
          %1694 = vmatpush1.bf16.msra.mxu0 %v1668
          %1695 = vmatprep.subr.bf16.mxu0 0
          %1696 = vmatpush1.bf16.msra.mxu0 %v1666
          %1697 = vmatprep.subr.bf16.mxu0 0
          %1698 = vmatpush1.bf16.msra.mxu0 %v1664
          %1699 = vmatprep.subr.bf16.mxu0 0
          %1700 = vmatpush1.bf16.msra.mxu0 %v1662
          %1701 = vmatprep.subr.bf16.mxu0 0
          %1702 = vmatpush2.bf16.msra.mxu0 0
          %1703 = vmatprep.subr.bf16.mxu0 0
          %1704 = vmatpush2.bf16.msra.mxu0 0
          %1705 = vmatprep.subr.bf16.mxu0 0
          %1706 = vmatpush2.bf16.msra.mxu0 0
          %1707 = vmatprep.subr.bf16.mxu0 0
          %1708 = vmatpush2.bf16.msra.mxu0 0
          %1709 = vmatprep.subr.bf16.mxu0 0
          %1710 = vmatpush2.bf16.msra.mxu0 0
          %1711 = vmatprep.subr.bf16.mxu0 0
          %1712 = vmatpush2.bf16.msra.mxu0 0
          %1713 = vmatprep.subr.bf16.mxu0 0
          %1714 = vmatpush2.bf16.msra.mxu0 0
          %1715 = vmatprep.subr.bf16.mxu0 0
          %1716 = vmatpush2.bf16.msra.mxu0 0
          %1717 = vmatprep.mubr.bf16.mxu0 0
          %1718 = vmatmul.mubr.bf16.gmra.mxu0 %v1620
          %v1719 = vpop.f32.mrf.mxu0
          %v1720 = vadd.f32 0.0, %v1719
          %v1721 = vpop.f32.mrf.mxu0
          %v1722 = vpop.f32.mrf.mxu0
          %v1723 = vpop.f32.mrf.mxu0
          %1724 = vdwg.mxu0
          %v1725 = vld [vmem:[#allocation4] sm:$0xff]
          %1727 = vset.pattern.permute.xlu0 0
          %1728 = vperm.xlu0 %1727, %v1603
          %v1729 = vpop.permute.xlu0 %1728
          %v1731 = vmul.f32 %v1729, %v1725
          %1733 = vrot.lane.b32.xlu0 %v1720, 24
          %v1734 = vpop.permute.xlu0 %1733
          %v1736 = vadd.f32 %v1731, %v1734
          %vm1737 = vcmask 261312
          %1738 = vst.msk [vmem:[#allocation4] sm:$0xff] %vm1737, %v1736
        $region126: #{transformer_forward.44} parent=109 // pred_fallthru
          _
        // Predicated region
        $region127: #{transformer_forward.44} parent=109 // pred_check
          %p1739 = pneg %p525
        $region128: #{transformer_forward.44} parent=109 // pred_check_branch
          %1741 = sbr.rel (%p1739) target = $region130
        $region129: #{transformer_forward.44} parent=109 // pred_region
          %vm1742 = vcmask 1043712
          %1743 = vst.msk [vmem:[%s523] sm:$0xf] %vm1742, 0
          %v1744 = vld [vmem:[#allocation3] sm:$0xff]
          %v1745 = vrcp.pop %v1744
          %v1746 = vld [vmem:[#allocation4] sm:$0xff]
          %1748 = vset.pattern.permute.xlu0 0
          %1749 = vperm.xlu0 %1748, %v1745
          %v1750 = vpop.permute.xlu0 %1749
          %v1752 = vmul.f32 %v1746, %v1750
          %v1753 = vpack.c.bf16 %v1752, %v1752
          %vm1754 = vcmask 60416
          %1755 = vst.msk [vmem:[%s523] sm:$0xf] %vm1754, %v1753
          %s1756 = scalar_lea.vmem [#allocation3], 8
          %v1757 = vld [vmem:[%s1756] sm:$0xff]
          %v1758 = vrcp.pop %v1757
          %v1759 = vld [vmem:[#allocation4] sm:$0xff]
          %1761 = vset.pattern.permute.xlu0 0
          %1762 = vperm.xlu0 %1761, %v1758
          %v1763 = vpop.permute.xlu0 %1762
          %v1765 = vmul.f32 %v1759, %v1763
          %v1766 = vpack.c.bf16 %v1765, %v1765
          %vm1767 = vcmask 126016
          %1768 = vst.msk [vmem:[%s523] sm:$0xf] %vm1767, %v1766
          %s1769 = scalar_lea.vmem [#allocation3], 16
          %v1770 = vld [vmem:[%s1769] sm:$0xff]
          %v1771 = vrcp.pop %v1770
          %v1772 = vld [vmem:[#allocation4] sm:$0xff]
          %1774 = vset.pattern.permute.xlu0 0
          %1775 = vperm.xlu0 %1774, %v1771
          %v1776 = vpop.permute.xlu0 %1775
          %v1778 = vmul.f32 %v1772, %v1776
          %v1779 = vpack.c.bf16 %v1778, %v1778
          %vm1780 = vcmask 191616
          %1781 = vst.msk [vmem:[%s523] sm:$0xf] %vm1780, %v1779
          %s1782 = scalar_lea.vmem [#allocation3], 24
          %v1783 = vld [vmem:[%s1782] sm:$0xff]
          %v1784 = vrcp.pop %v1783
          %v1785 = vld [vmem:[#allocation4] sm:$0xff]
          %1787 = vset.pattern.permute.xlu0 0
          %1788 = vperm.xlu0 %1787, %v1784
          %v1789 = vpop.permute.xlu0 %1788
          %v1791 = vmul.f32 %v1785, %v1789
          %v1792 = vpack.c.bf16 %v1791, %v1791
          %vm1793 = vcmask 257216
          %1794 = vst.msk [vmem:[%s523] sm:$0xf] %vm1793, %v1792
        $region130: #{transformer_forward.44} parent=109 // pred_fallthru
          _
        %p1795 = scmp.lt.s32.totalorder %s20, 1
        %s1796 = scalar_select %p1795, %s20, 1
        %p1797 = scmp.lt.s32.totalorder %s21, 0
        %s1798 = scalar_select %p1797, %s21, 0
        %s1799 = sadd.s32 %s1798, %s1796
        %s1800 = smul.addr %s1799, 4
        %s1801 = scalar_lea.vmem %s4, %s1800
        // Predicated region
        $region131: #{transformer_forward.44} parent=109 // pred_check
          %p1802 = pneg %p166
        $region132: #{transformer_forward.44} parent=109 // pred_check_branch
          %1804 = sbr.rel (%p1802) target = $region134
        $region133: #{transformer_forward.44} parent=109 // pred_region
          _
        $region134: #{transformer_forward.44} parent=109 // pred_fallthru
          _
      $region110: #{transformer_forward.44} parent=5 // pred_fallthru
        _
      %p1805 = scmp.le.s32.totalorder 2, %s10
      // Predicated region
      $region135: #{transformer_forward.44} parent=5 // pred_check
        %p1806 = pneg %p1805
      $region136: #{transformer_forward.44} parent=5 // pred_check_branch
        %1808 = sbr.rel (%p1806) target = $region138
      $region137: #{transformer_forward.44} parent=5 // pred_region
        %s1809 = ssub.s32 %s10, 2
        // Predicated region
        $region139: #{transformer_forward.44} parent=137 // pred_check
          %p1810 = pneg %p172
        $region140: #{transformer_forward.44} parent=137 // pred_check_branch
          %1812 = sbr.rel (%p1810) target = $region142
        $region141: #{transformer_forward.44} parent=137 // pred_region
          %p1813 = scmp.lt.s32.totalorder %s23, 1
          %s1814 = scalar_select %p1813, %s23, 1
          %p1815 = scmp.lt.s32.totalorder %s24, 0
          %s1816 = scalar_select %p1815, %s24, 0
          %s1817 = sadd.s32 %s1816, %s1814
          %s1818 = smul.addr %s1817, 4
          %s1819 = scalar_lea.vmem %s4, %s1818
        $region142: #{transformer_forward.44} parent=137 // pred_fallthru
          _
      $region138: #{transformer_forward.44} parent=5 // pred_fallthru
        _
    $region6: #{transformer_forward.44} parent=1 // loop_footer
      %s14 = sadd.s32 1, %s10
    $region7: #{transformer_forward.44} parent=1 // loop_footer_branch
      %9 = sbr.rel target = $region3
    $region8: #{transformer_forward.44} parent=1 // loop_exit
      _

// kernel: transformer_forward.35
$region0: #{transformer_forward.35}
  #allocation0 [shape = 'u32[]', space=smem, size = 0x4, offset = 0x4, fixed_abs, tag = 'smem constant byte address 0x4 - core index']
  #allocation1 [shape = 'u32[144,128]{1,0:T(1,128)}', space=vmem, size = 0x12000, scoped, tag = 'internal scratch']
  #allocation2 [shape = 'f32[16,128]{1,0:T(8,128)}', space=vmem, size = 0x2000, scoped, tag = 'scratch operand']
  %s0 = inlined_call_operand.vmem [shape: bf16[16,128], index: 0, kind: input, shape index: {}]
  %s1 = inlined_call_operand.vmem [shape: bf16[128,128], index: 1, kind: input, shape index: {}]
  %s2 = inlined_call_operand.vmem [shape: f32[1,128], index: 2, kind: input, shape index: {}]
  %s3 = inlined_call_operand.vmem [shape: bf16[16,128], index: 3, kind: output, shape index: {}]
  %s4 = sld [smem:[#allocation0]]
  $region30: #{transformer_forward.35} parent=0
    _
  %s6 = ssub.s32 1, %s4
  %s7 = scalar_select 0, %s6, %s4
  // Predicated region
  $region2: #{transformer_forward.35} parent=0 // pred_check
    _
  $region3: #{transformer_forward.35} parent=0 // pred_check_branch
    %9 = sbr.rel (0) target = $region5
  $region4: #{transformer_forward.35} parent=0 // pred_region
    _
  $region5: #{transformer_forward.35} parent=0 // pred_fallthru
    _
  // Predicated region
  $region6: #{transformer_forward.35} parent=0 // pred_check
    _
  $region7: #{transformer_forward.35} parent=0 // pred_check_branch
    %11 = sbr.rel (0) target = $region9
  $region8: #{transformer_forward.35} parent=0 // pred_region
    _
  $region9: #{transformer_forward.35} parent=0 // pred_fallthru
    _
  // Predicated region
  $region10: #{transformer_forward.35} parent=0 // pred_check
    _
  $region11: #{transformer_forward.35} parent=0 // pred_check_branch
    %13 = sbr.rel (0) target = $region13
  $region12: #{transformer_forward.35} parent=0 // pred_region
    _
  $region13: #{transformer_forward.35} parent=0 // pred_fallthru
    _
  %p15 = scmp.eq.s32.totalorder 0, 0
  // Predicated region
  $region14: #{transformer_forward.35} parent=0 // pred_check
    %p16 = pneg %p15
  $region15: #{transformer_forward.35} parent=0 // pred_check_branch
    %18 = sbr.rel (%p16) target = $region17
  $region16: #{transformer_forward.35} parent=0 // pred_region
    %19 = vst [vmem:[#allocation2] sm:$0xff] 0.0
    %20 = vst [vmem:[#allocation2 + $0x8] sm:$0xff] 0.0
  $region17: #{transformer_forward.35} parent=0 // pred_fallthru
    _
  %v21 = vld [vmem:[#allocation2] sm:$0xff]
  %v22 = vld [vmem:[#allocation2 + $0x8] sm:$0xff]
  %v23 = vld [vmem:[%s0] sm:$0xf]
  %v24 = vld [vmem:[%s0 + $0x4] sm:$0xf]
  %v25 = vld [vmem:[%s1] sm:$0xf]
  %v26 = vld [vmem:[%s1 + $0x4] sm:$0xf]
  %v27 = vld [vmem:[%s1 + $0x8] sm:$0xf]
  %v28 = vld [vmem:[%s1 + $0xc] sm:$0xf]
  %v29 = vld [vmem:[%s1 + $0x10] sm:$0xf]
  %v30 = vld [vmem:[%s1 + $0x14] sm:$0xf]
  %v31 = vld [vmem:[%s1 + $0x18] sm:$0xf]
  %v32 = vld [vmem:[%s1 + $0x1c] sm:$0xf]
  %v33 = vld [vmem:[%s1 + $0x20] sm:$0xf]
  %v34 = vld [vmem:[%s1 + $0x24] sm:$0xf]
  %v35 = vld [vmem:[%s1 + $0x28] sm:$0xf]
  %v36 = vld [vmem:[%s1 + $0x2c] sm:$0xf]
  %v37 = vld [vmem:[%s1 + $0x30] sm:$0xf]
  %v38 = vld [vmem:[%s1 + $0x34] sm:$0xf]
  %v39 = vld [vmem:[%s1 + $0x38] sm:$0xf]
  %v40 = vld [vmem:[%s1 + $0x3c] sm:$0xf]
  %v43 = vunpack.c.l.b16 %v23
  %v44 = vunpack.c.l.b16 %v24
  %v45 = vpack.c.b16 %v44, %v43
  %v63 = vunpack.c.l.b16 %v25
  %v64 = vunpack.c.l.b16 %v26
  %v65 = vunpack.c.l.b16 %v27
  %v66 = vunpack.c.l.b16 %v28
  %v67 = vunpack.c.l.b16 %v29
  %v68 = vunpack.c.l.b16 %v30
  %v69 = vunpack.c.l.b16 %v31
  %v70 = vunpack.c.l.b16 %v32
  %v71 = vunpack.c.l.b16 %v33
  %v72 = vunpack.c.l.b16 %v34
  %v73 = vunpack.c.l.b16 %v35
  %v74 = vunpack.c.l.b16 %v36
  %v75 = vunpack.c.l.b16 %v37
  %v76 = vunpack.c.l.b16 %v38
  %v77 = vunpack.c.l.b16 %v39
  %v78 = vunpack.c.l.b16 %v40
  %v79 = vpack.c.b16 %v64, %v63
  %v80 = vpack.c.b16 %v66, %v65
  %v81 = vpack.c.b16 %v68, %v67
  %v82 = vpack.c.b16 %v70, %v69
  %v83 = vpack.c.b16 %v72, %v71
  %v84 = vpack.c.b16 %v74, %v73
  %v85 = vpack.c.b16 %v76, %v75
  %v86 = vpack.c.b16 %v78, %v77
  %95 = vmatprep.subr.bf16.mxu0 0
  %96 = vmatpush1.bf16.msra.mxu0 %v86
  %97 = vmatprep.subr.bf16.mxu0 0
  %98 = vmatpush1.bf16.msra.mxu0 %v85
  %99 = vmatprep.subr.bf16.mxu0 0
  %100 = vmatpush1.bf16.msra.mxu0 %v84
  %101 = vmatprep.subr.bf16.mxu0 0
  %102 = vmatpush1.bf16.msra.mxu0 %v83
  %103 = vmatprep.subr.bf16.mxu0 0
  %104 = vmatpush1.bf16.msra.mxu0 %v82
  %105 = vmatprep.subr.bf16.mxu0 0
  %106 = vmatpush1.bf16.msra.mxu0 %v81
  %107 = vmatprep.subr.bf16.mxu0 0
  %108 = vmatpush1.bf16.msra.mxu0 %v80
  %109 = vmatprep.subr.bf16.mxu0 0
  %110 = vmatpush1.bf16.msra.mxu0 %v79
  %111 = vmatprep.subr.bf16.mxu0 0
  %112 = vmatpush2.bf16.msra.mxu0 0
  %113 = vmatprep.subr.bf16.mxu0 0
  %114 = vmatpush2.bf16.msra.mxu0 0
  %115 = vmatprep.subr.bf16.mxu0 0
  %116 = vmatpush2.bf16.msra.mxu0 0
  %117 = vmatprep.subr.bf16.mxu0 0
  %118 = vmatpush2.bf16.msra.mxu0 0
  %119 = vmatprep.subr.bf16.mxu0 0
  %120 = vmatpush2.bf16.msra.mxu0 0
  %121 = vmatprep.subr.bf16.mxu0 0
  %122 = vmatpush2.bf16.msra.mxu0 0
  %123 = vmatprep.subr.bf16.mxu0 0
  %124 = vmatpush2.bf16.msra.mxu0 0
  %125 = vmatprep.subr.bf16.mxu0 0
  %126 = vmatpush2.bf16.msra.mxu0 0
  %127 = vmatprep.mubr.bf16.mxu0 0
  %128 = vmatmul.mubr.bf16.gmra.mxu0 %v45
  %v129 = vpop.f32.mrf.mxu0
  %v130 = vadd.f32 0.0, %v129
  %v131 = vpop.f32.mrf.mxu0
  %v132 = vpop.f32.mrf.mxu0
  %v133 = vadd.f32 0.0, %v132
  %v134 = vpop.f32.mrf.mxu0
  %135 = vdwg.mxu0
  %v136 = vadd.f32 %v21, %v130
  %v137 = vadd.f32 %v22, %v133
  %138 = vst [vmem:[#allocation2] sm:$0xff] %v136
  %139 = vst [vmem:[#allocation2 + $0x8] sm:$0xff] %v137
  // Predicated region
  $region18: #{transformer_forward.35} parent=0 // pred_check
    %p140 = pneg %p15
  $region19: #{transformer_forward.35} parent=0 // pred_check_branch
    %142 = sbr.rel (%p140) target = $region21
  $region20: #{transformer_forward.35} parent=0 // pred_region
    %v143 = vld [vmem:[#allocation2] sm:$0xff]
    %v144 = vld [vmem:[#allocation2 + $0x8] sm:$0xff]
    %v145 = vld [vmem:[%s2] sm:$0x1]
    %v147 = vlaneseq
    %v148 = vshrl.u32 %v147, 7
    %v149 = vsub.s32 0, %v148
    %v150 = vrot.slane %v145, %v149
    %v152 = vadd.f32 %v143, %v150
    %v153 = vadd.f32 %v144, %v150
    %v154 = vmax.f32 %v152, 0.0
    %v155 = vmax.f32 %v153, 0.0
    %v156 = vpack.c.bf16 %v155, %v154
    %v158 = vunpack.c.l.b16 %v156
    %v159 = vunpack.c.h.b16 %v156
    %v160 = vpack.c.b16 %v158, %v158
    %v161 = vpack.c.b16 %v159, %v159
    %164 = vst [vmem:[%s3] sm:$0xf] %v160
    %165 = vst [vmem:[%s3 + $0x4] sm:$0xf] %v161
  $region21: #{transformer_forward.35} parent=0 // pred_fallthru
    _
  // Predicated region
  $region22: #{transformer_forward.35} parent=0 // pred_check
    _
  $region23: #{transformer_forward.35} parent=0 // pred_check_branch
    %167 = sbr.rel (0) target = $region25
  $region24: #{transformer_forward.35} parent=0 // pred_region
    _
  $region25: #{transformer_forward.35} parent=0 // pred_fallthru
    _
  // Predicated region
  $region26: #{transformer_forward.35} parent=0 // pred_check
    _
  $region27: #{transformer_forward.35} parent=0 // pred_check_branch
    %169 = sbr.rel (0) target = $region29
  $region28: #{transformer_forward.35} parent=0 // pred_region
    _
  $region29: #{transformer_forward.35} parent=0 // pred_fallthru
    _

// kernel: transformer_forward.47
$region0: #{transformer_forward.47}
  #allocation0 [shape = 'u32[]', space=smem, size = 0x4, offset = 0x4, fixed_abs, tag = 'smem constant byte address 0x4 - core index']
  #allocation1 [shape = 'u32[144,128]{1,0:T(1,128)}', space=vmem, size = 0x12000, scoped, tag = 'internal scratch']
  #allocation2 [shape = 'f32[16,256]{1,0:T(8,128)}', space=vmem, size = 0x4000, scoped, tag = 'scratch operand']
  %s0 = inlined_call_operand.vmem [shape: bf16[16,128], index: 0, kind: input, shape index: {}]
  %s1 = inlined_call_operand.vmem [shape: bf16[128,256], index: 1, kind: input, shape index: {}]
  %s2 = inlined_call_operand.vmem [shape: f32[1,256], index: 2, kind: input, shape index: {}]
  %s3 = inlined_call_operand.vmem [shape: bf16[16,256], index: 3, kind: output, shape index: {}]
  %s4 = sld [smem:[#allocation0]]
  $region30: #{transformer_forward.47} parent=0
    _
  %s6 = ssub.s32 1, %s4
  %s7 = scalar_select 0, %s6, %s4
  // Predicated region
  $region2: #{transformer_forward.47} parent=0 // pred_check
    _
  $region3: #{transformer_forward.47} parent=0 // pred_check_branch
    %9 = sbr.rel (0) target = $region5
  $region4: #{transformer_forward.47} parent=0 // pred_region
    _
  $region5: #{transformer_forward.47} parent=0 // pred_fallthru
    _
  // Predicated region
  $region6: #{transformer_forward.47} parent=0 // pred_check
    _
  $region7: #{transformer_forward.47} parent=0 // pred_check_branch
    %11 = sbr.rel (0) target = $region9
  $region8: #{transformer_forward.47} parent=0 // pred_region
    _
  $region9: #{transformer_forward.47} parent=0 // pred_fallthru
    _
  // Predicated region
  $region10: #{transformer_forward.47} parent=0 // pred_check
    _
  $region11: #{transformer_forward.47} parent=0 // pred_check_branch
    %13 = sbr.rel (0) target = $region13
  $region12: #{transformer_forward.47} parent=0 // pred_region
    _
  $region13: #{transformer_forward.47} parent=0 // pred_fallthru
    _
  %p15 = scmp.eq.s32.totalorder 0, 0
  // Predicated region
  $region14: #{transformer_forward.47} parent=0 // pred_check
    %p16 = pneg %p15
  $region15: #{transformer_forward.47} parent=0 // pred_check_branch
    %18 = sbr.rel (%p16) target = $region17
  $region16: #{transformer_forward.47} parent=0 // pred_region
    %19 = vst [vmem:[#allocation2] sm:$0xff] 0.0
    %20 = vst [vmem:[#allocation2 + $0x8] sm:$0xff] 0.0
    %21 = vst [vmem:[#allocation2 + $0x10] sm:$0xff] 0.0
    %22 = vst [vmem:[#allocation2 + $0x18] sm:$0xff] 0.0
  $region17: #{transformer_forward.47} parent=0 // pred_fallthru
    _
  %v23 = vld [vmem:[#allocation2] sm:$0xff]
  %v24 = vld [vmem:[#allocation2 + $0x8] sm:$0xff]
  %v25 = vld [vmem:[#allocation2 + $0x10] sm:$0xff]
  %v26 = vld [vmem:[#allocation2 + $0x18] sm:$0xff]
  %v27 = vld [vmem:[%s0] sm:$0xf]
  %v28 = vld [vmem:[%s0 + $0x4] sm:$0xf]
  %v29 = vld [vmem:[%s1] sm:$0xff]
  %v30 = vld [vmem:[%s1 + $0x8] sm:$0xff]
  %v31 = vld [vmem:[%s1 + $0x10] sm:$0xff]
  %v32 = vld [vmem:[%s1 + $0x18] sm:$0xff]
  %v33 = vld [vmem:[%s1 + $0x20] sm:$0xff]
  %v34 = vld [vmem:[%s1 + $0x28] sm:$0xff]
  %v35 = vld [vmem:[%s1 + $0x30] sm:$0xff]
  %v36 = vld [vmem:[%s1 + $0x38] sm:$0xff]
  %v37 = vld [vmem:[%s1 + $0x40] sm:$0xff]
  %v38 = vld [vmem:[%s1 + $0x48] sm:$0xff]
  %v39 = vld [vmem:[%s1 + $0x50] sm:$0xff]
  %v40 = vld [vmem:[%s1 + $0x58] sm:$0xff]
  %v41 = vld [vmem:[%s1 + $0x60] sm:$0xff]
  %v42 = vld [vmem:[%s1 + $0x68] sm:$0xff]
  %v43 = vld [vmem:[%s1 + $0x70] sm:$0xff]
  %v44 = vld [vmem:[%s1 + $0x78] sm:$0xff]
  %v47 = vunpack.c.l.b16 %v27
  %v48 = vunpack.c.l.b16 %v28
  %v49 = vpack.c.b16 %v48, %v47
  %v67 = vunpack.c.l.b16 %v29
  %v68 = vunpack.c.h.b16 %v29
  %v69 = vunpack.c.l.b16 %v30
  %v70 = vunpack.c.h.b16 %v30
  %v71 = vunpack.c.l.b16 %v31
  %v72 = vunpack.c.h.b16 %v31
  %v73 = vunpack.c.l.b16 %v32
  %v74 = vunpack.c.h.b16 %v32
  %v75 = vunpack.c.l.b16 %v33
  %v76 = vunpack.c.h.b16 %v33
  %v77 = vunpack.c.l.b16 %v34
  %v78 = vunpack.c.h.b16 %v34
  %v79 = vunpack.c.l.b16 %v35
  %v80 = vunpack.c.h.b16 %v35
  %v81 = vunpack.c.l.b16 %v36
  %v82 = vunpack.c.h.b16 %v36
  %v83 = vunpack.c.l.b16 %v37
  %v84 = vunpack.c.h.b16 %v37
  %v85 = vunpack.c.l.b16 %v38
  %v86 = vunpack.c.h.b16 %v38
  %v87 = vunpack.c.l.b16 %v39
  %v88 = vunpack.c.h.b16 %v39
  %v89 = vunpack.c.l.b16 %v40
  %v90 = vunpack.c.h.b16 %v40
  %v91 = vunpack.c.l.b16 %v41
  %v92 = vunpack.c.h.b16 %v41
  %v93 = vunpack.c.l.b16 %v42
  %v94 = vunpack.c.h.b16 %v42
  %v95 = vunpack.c.l.b16 %v43
  %v96 = vunpack.c.h.b16 %v43
  %v97 = vunpack.c.l.b16 %v44
  %v98 = vunpack.c.h.b16 %v44
  %v99 = vpack.c.b16 %v69, %v67
  %v100 = vpack.c.b16 %v70, %v68
  %v101 = vpack.c.b16 %v73, %v71
  %v102 = vpack.c.b16 %v74, %v72
  %v103 = vpack.c.b16 %v77, %v75
  %v104 = vpack.c.b16 %v78, %v76
  %v105 = vpack.c.b16 %v81, %v79
  %v106 = vpack.c.b16 %v82, %v80
  %v107 = vpack.c.b16 %v85, %v83
  %v108 = vpack.c.b16 %v86, %v84
  %v109 = vpack.c.b16 %v89, %v87
  %v110 = vpack.c.b16 %v90, %v88
  %v111 = vpack.c.b16 %v93, %v91
  %v112 = vpack.c.b16 %v94, %v92
  %v113 = vpack.c.b16 %v97, %v95
  %v114 = vpack.c.b16 %v98, %v96
  %131 = vmatprep.subr.bf16.mxu0 %v114
  %132 = vmatpush1.bf16.msra.mxu0 %v113
  %133 = vmatprep.subr.bf16.mxu0 %v112
  %134 = vmatpush1.bf16.msra.mxu0 %v111
  %135 = vmatprep.subr.bf16.mxu0 %v110
  %136 = vmatpush1.bf16.msra.mxu0 %v109
  %137 = vmatprep.subr.bf16.mxu0 %v108
  %138 = vmatpush1.bf16.msra.mxu0 %v107
  %139 = vmatprep.subr.bf16.mxu0 %v106
  %140 = vmatpush1.bf16.msra.mxu0 %v105
  %141 = vmatprep.subr.bf16.mxu0 %v104
  %142 = vmatpush1.bf16.msra.mxu0 %v103
  %143 = vmatprep.subr.bf16.mxu0 %v102
  %144 = vmatpush1.bf16.msra.mxu0 %v101
  %145 = vmatprep.subr.bf16.mxu0 %v100
  %146 = vmatpush1.bf16.msra.mxu0 %v99
  %147 = vmatprep.subr.bf16.mxu0 0
  %148 = vmatpush2.bf16.msra.mxu0 0
  %149 = vmatprep.subr.bf16.mxu0 0
  %150 = vmatpush2.bf16.msra.mxu0 0
  %151 = vmatprep.subr.bf16.mxu0 0
  %152 = vmatpush2.bf16.msra.mxu0 0
  %153 = vmatprep.subr.bf16.mxu0 0
  %154 = vmatpush2.bf16.msra.mxu0 0
  %155 = vmatprep.subr.bf16.mxu0 0
  %156 = vmatpush2.bf16.msra.mxu0 0
  %157 = vmatprep.subr.bf16.mxu0 0
  %158 = vmatpush2.bf16.msra.mxu0 0
  %159 = vmatprep.subr.bf16.mxu0 0
  %160 = vmatpush2.bf16.msra.mxu0 0
  %161 = vmatprep.subr.bf16.mxu0 0
  %162 = vmatpush2.bf16.msra.mxu0 0
  %163 = vmatprep.mubr.bf16.mxu0 0
  %164 = vmatmul.mubr.bf16.gmra.mxu0 %v49
  %v165 = vpop.f32.mrf.mxu0
  %v166 = vadd.f32 0.0, %v165
  %v167 = vpop.f32.mrf.mxu0
  %v168 = vadd.f32 0.0, %v167
  %v169 = vpop.f32.mrf.mxu0
  %v170 = vadd.f32 0.0, %v169
  %v171 = vpop.f32.mrf.mxu0
  %v172 = vadd.f32 0.0, %v171
  %173 = vdwg.mxu0
  %v174 = vadd.f32 %v23, %v166
  %v175 = vadd.f32 %v24, %v168
  %v176 = vadd.f32 %v25, %v170
  %v177 = vadd.f32 %v26, %v172
  %178 = vst [vmem:[#allocation2] sm:$0xff] %v174
  %179 = vst [vmem:[#allocation2 + $0x8] sm:$0xff] %v175
  %180 = vst [vmem:[#allocation2 + $0x10] sm:$0xff] %v176
  %181 = vst [vmem:[#allocation2 + $0x18] sm:$0xff] %v177
  // Predicated region
  $region18: #{transformer_forward.47} parent=0 // pred_check
    %p182 = pneg %p15
  $region19: #{transformer_forward.47} parent=0 // pred_check_branch
    %184 = sbr.rel (%p182) target = $region21
  $region20: #{transformer_forward.47} parent=0 // pred_region
    %v185 = vld [vmem:[#allocation2] sm:$0xff]
    %v186 = vld [vmem:[#allocation2 + $0x8] sm:$0xff]
    %v187 = vld [vmem:[#allocation2 + $0x10] sm:$0xff]
    %v188 = vld [vmem:[#allocation2 + $0x18] sm:$0xff]
    %v189 = vld [vmem:[%s2] sm:$0x3]
    %v191 = vlaneseq
    %v192 = vshrl.u32 %v191, 7
    %v193 = vsub.s32 0, %v192
    %v194 = vrot.slane %v189, %v193
    %v195 = vlaneseq
    %v196 = vshrl.u32 %v195, 7
    %v197 = vsub.s32 1, %v196
    %v198 = vrot.slane %v189, %v197
    %v201 = vadd.f32 %v185, %v194
    %v202 = vadd.f32 %v186, %v198
    %v203 = vadd.f32 %v187, %v194
    %v204 = vadd.f32 %v188, %v198
    %v205 = vpack.c.bf16 %v203, %v201
    %v206 = vpack.c.bf16 %v204, %v202
    %v209 = vunpack.c.l.b16 %v205
    %v210 = vunpack.c.l.b16 %v206
    %v211 = vunpack.c.h.b16 %v205
    %v212 = vunpack.c.h.b16 %v206
    %v213 = vpack.c.b16 %v210, %v209
    %v214 = vpack.c.b16 %v212, %v211
    %217 = vst [vmem:[%s3] sm:$0xff] %v213
    %218 = vst [vmem:[%s3 + $0x8] sm:$0xff] %v214
  $region21: #{transformer_forward.47} parent=0 // pred_fallthru
    _
  // Predicated region
  $region22: #{transformer_forward.47} parent=0 // pred_check
    _
  $region23: #{transformer_forward.47} parent=0 // pred_check_branch
    %220 = sbr.rel (0) target = $region25
  $region24: #{transformer_forward.47} parent=0 // pred_region
    _
  $region25: #{transformer_forward.47} parent=0 // pred_fallthru
    _
  // Predicated region
  $region26: #{transformer_forward.47} parent=0 // pred_check
    _
  $region27: #{transformer_forward.47} parent=0 // pred_check_branch
    %222 = sbr.rel (0) target = $region29
  $region28: #{transformer_forward.47} parent=0 // pred_region
    _
  $region29: #{transformer_forward.47} parent=0 // pred_fallthru
    _

// kernel: transformer_forward.33
$region0: #{transformer_forward.33}
  #allocation0 [shape = 'u32[]', space=smem, size = 0x4, offset = 0x4, fixed_abs, tag = 'smem constant byte address 0x4 - core index']
  #allocation1 [shape = 'u32[144,128]{1,0:T(1,128)}', space=vmem, size = 0x12000, scoped, tag = 'internal scratch']
  #allocation2 [shape = 'f32[4,8,128]{2,1,0:T(8,128)}', space=vmem, size = 0x4000, scoped, tag = 'scratch operand']
  #allocation3 [shape = 'f32[4,8,128]{2,1,0:T(8,128)}', space=vmem, size = 0x4000, scoped, tag = 'scratch operand']
  #allocation4 [shape = 'f32[8,128]{1,0:T(8,128)}', space=vmem, size = 0x1000, scoped, tag = 'scratch operand']
  %s0 = inlined_call_operand.vmem [shape: bf16[2,128,384], index: 0, kind: input, shape index: {}, may-alias: {0,1,2}]
  %s1 = inlined_call_operand.vmem [shape: bf16[2,128,384], index: 1, kind: input, shape index: {}, may-alias: {0,1,2}]
  %s2 = inlined_call_operand.vmem [shape: bf16[2,128,384], index: 2, kind: input, shape index: {}, may-alias: {0,1,2}]
  %s3 = inlined_call_operand.vmem [shape: f32[2,1,128], index: 3, kind: input, shape index: {}]
  %s4 = inlined_call_operand.vmem [shape: bf16[2,8,128], index: 4, kind: output, shape index: {}]
  %s5 = sld [smem:[#allocation0]]
  $region139: #{transformer_forward.33} parent=0
    _
  %s7 = ssub.s32 1, %s5
  %s8 = scalar_select 0, %s7, %s5
  $region1: #{transformer_forward.33} parent=0
    #allocation5 [shape = 'u8[65536]{0}', space=vmem, size = 0x10000, scoped, tag = 'input window, operand 1']
    #allocation6 [shape = 'u8[65536]{0}', space=vmem, size = 0x10000, scoped, tag = 'input window, operand 2']
    loop: start=0, step=1, limit=4
    $region2: #{transformer_forward.33} parent=1 // loop_pre_header
      _
    $region3: #{transformer_forward.33} parent=1 // loop_header
      %s10 = sphi 0, %s14
      %p11 = scmp.ge.s32.totalorder %s10, 4
      %s17 = sphi 0, %s36
      %s18 = sphi 0, %s32
      %s19 = sphi 0, %s28
      %s20 = sphi 0, %s17
      %s21 = sphi 0, %s18
      %s22 = sphi 0, %s19
      %s23 = sphi 0, %s20
      %s24 = sphi 0, %s21
      %s25 = sphi 0, %s22
      %s41 = sphi 0, %s43
      %s44 = sphi 0, %s41
      %s45 = sphi 0, %s44
      %s61 = sphi 0, %s45
      %s69 = sphi 0, %s71
      %s72 = sphi 0, %s69
      %s73 = sphi 0, %s72
      %s89 = sphi 0, %s73
      %s97 = sphi 0, %s99
      %s100 = sphi 0, %s97
      %s101 = sphi 0, %s100
      %s117 = sphi 0, %s101
      %s125 = sphi 0, %s127
      %s128 = sphi 0, %s125
      %s129 = sphi 0, %s128
      %s145 = sphi 0, %s129
      %s153 = sphi 0, %s155
      %s156 = sphi 0, %s153
      %s157 = sphi 0, %s156
      %s173 = sphi 0, %s157
    $region4: #{transformer_forward.33} parent=1 // loop_header_branch
      %13 = sbr.rel (%p11) target = $region8
    $region5: #{transformer_forward.33} parent=1 // loop_body
      %s15 = ssub.s32 %s10, 1
      %s16 = ssub.s32 %s10, 2
      %s26 = sadd.s32 1, %s19
      %p27 = scmp.ge.s32.totalorder %s26, 1
      %s28 = scalar_select %p27, 0, %s26
      %s29 = sadd.s32 1, %s18
      %s30 = scalar_select %p27, %s29, %s18
      %p31 = scmp.ge.s32.totalorder %s30, 1
      %s32 = scalar_select %p31, 0, %s30
      %s33 = sadd.s32 1, %s17
      %s34 = scalar_select %p31, %s33, %s17
      %p35 = scmp.ge.s32.totalorder %s34, 2
      %s36 = scalar_select %p35, 0, %s34
      %s37 = ssub.s32 %s17, %s36
      %s38 = ssub.s32 %s18, %s32
      %s39 = sor.u32 %s37, %s38
      %p40 = scmp.eq.s32.totalorder %s39, 0
      %s42 = sadd.s32 %s41, 1
      %s43 = scalar_select %p40, %s41, %s42
      %p46 = pneg %p40
      %p47 = scmp.eq.s32.totalorder %s10, 1
      %p48 = por %p46, %p47
      %p49 = scmp.ne.s32.totalorder %s41, %s44
      %p50 = scmp.eq.s32.totalorder %s10, 0
      %p51 = por %p49, %p50
      %p52 = scmp.ne.s32.totalorder %s41, %s44
      %p53 = scmp.eq.s32.totalorder %s15, 1
      %p54 = por %p52, %p53
      %p55 = scmp.ne.s32.totalorder %s44, %s45
      %p56 = scmp.eq.s32.totalorder %s15, 0
      %p57 = por %p55, %p56
      %p58 = scmp.ne.s32.totalorder %s44, %s45
      %p59 = scmp.eq.s32.totalorder %s16, 1
      %p60 = por %p58, %p59
      %p62 = scmp.ne.s32.totalorder %s45, %s61
      %p63 = scmp.eq.s32.totalorder %s16, 0
      %p64 = por %p62, %p63
      %s65 = ssub.s32 %s17, %s36
      %s66 = ssub.s32 %s19, %s28
      %s67 = sor.u32 %s65, %s66
      %p68 = scmp.eq.s32.totalorder %s67, 0
      %s70 = sadd.s32 %s69, 1
      %s71 = scalar_select %p68, %s69, %s70
      %p74 = pneg %p68
      %p75 = scmp.eq.s32.totalorder %s10, 1
      %p76 = por %p74, %p75
      %p77 = scmp.ne.s32.totalorder %s69, %s72
      %p78 = scmp.eq.s32.totalorder %s10, 0
      %p79 = por %p77, %p78
      %p80 = scmp.ne.s32.totalorder %s69, %s72
      %p81 = scmp.eq.s32.totalorder %s15, 1
      %p82 = por %p80, %p81
      %p83 = scmp.ne.s32.totalorder %s72, %s73
      %p84 = scmp.eq.s32.totalorder %s15, 0
      %p85 = por %p83, %p84
      %p86 = scmp.ne.s32.totalorder %s72, %s73
      %p87 = scmp.eq.s32.totalorder %s16, 1
      %p88 = por %p86, %p87
      %p90 = scmp.ne.s32.totalorder %s73, %s89
      %p91 = scmp.eq.s32.totalorder %s16, 0
      %p92 = por %p90, %p91
      %s93 = ssub.s32 %s17, %s36
      %s94 = ssub.s32 %s19, %s28
      %s95 = sor.u32 %s93, %s94
      %p96 = scmp.eq.s32.totalorder %s95, 0
      %s98 = sadd.s32 %s97, 1
      %s99 = scalar_select %p96, %s97, %s98
      %p102 = pneg %p96
      %p103 = scmp.eq.s32.totalorder %s10, 1
      %p104 = por %p102, %p103
      %p105 = scmp.ne.s32.totalorder %s97, %s100
      %p106 = scmp.eq.s32.totalorder %s10, 0
      %p107 = por %p105, %p106
      %p108 = scmp.ne.s32.totalorder %s97, %s100
      %p109 = scmp.eq.s32.totalorder %s15, 1
      %p110 = por %p108, %p109
      %p111 = scmp.ne.s32.totalorder %s100, %s101
      %p112 = scmp.eq.s32.totalorder %s15, 0
      %p113 = por %p111, %p112
      %p114 = scmp.ne.s32.totalorder %s100, %s101
      %p115 = scmp.eq.s32.totalorder %s16, 1
      %p116 = por %p114, %p115
      %p118 = scmp.ne.s32.totalorder %s101, %s117
      %p119 = scmp.eq.s32.totalorder %s16, 0
      %p120 = por %p118, %p119
      %s121 = ssub.s32 %s17, %s36
      %s122 = ssub.s32 %s19, %s28
      %s123 = sor.u32 %s121, %s122
      %p124 = scmp.eq.s32.totalorder %s123, 0
      %s126 = sadd.s32 %s125, 1
      %s127 = scalar_select %p124, %s125, %s126
      %p130 = pneg %p124
      %p131 = scmp.eq.s32.totalorder %s10, 1
      %p132 = por %p130, %p131
      %p133 = scmp.ne.s32.totalorder %s125, %s128
      %p134 = scmp.eq.s32.totalorder %s10, 0
      %p135 = por %p133, %p134
      %p136 = scmp.ne.s32.totalorder %s125, %s128
      %p137 = scmp.eq.s32.totalorder %s15, 1
      %p138 = por %p136, %p137
      %p139 = scmp.ne.s32.totalorder %s128, %s129
      %p140 = scmp.eq.s32.totalorder %s15, 0
      %p141 = por %p139, %p140
      %p142 = scmp.ne.s32.totalorder %s128, %s129
      %p143 = scmp.eq.s32.totalorder %s16, 1
      %p144 = por %p142, %p143
      %p146 = scmp.ne.s32.totalorder %s129, %s145
      %p147 = scmp.eq.s32.totalorder %s16, 0
      %p148 = por %p146, %p147
      %s149 = ssub.s32 %s17, %s36
      %s150 = ssub.s32 %s18, %s32
      %s151 = sor.u32 %s149, %s150
      %p152 = scmp.eq.s32.totalorder %s151, 0
      %s154 = sadd.s32 %s153, 1
      %s155 = scalar_select %p152, %s153, %s154
      %p158 = pneg %p152
      %p159 = scmp.eq.s32.totalorder %s10, 1
      %p160 = por %p158, %p159
      %p161 = scmp.ne.s32.totalorder %s153, %s156
      %p162 = scmp.eq.s32.totalorder %s10, 0
      %p163 = por %p161, %p162
      %p164 = scmp.ne.s32.totalorder %s153, %s156
      %p165 = scmp.eq.s32.totalorder %s15, 1
      %p166 = por %p164, %p165
      %p167 = scmp.ne.s32.totalorder %s156, %s157
      %p168 = scmp.eq.s32.totalorder %s15, 0
      %p169 = por %p167, %p168
      %p170 = scmp.ne.s32.totalorder %s156, %s157
      %p171 = scmp.eq.s32.totalorder %s16, 1
      %p172 = por %p170, %p171
      %p174 = scmp.ne.s32.totalorder %s157, %s173
      %p175 = scmp.eq.s32.totalorder %s16, 0
      %p176 = por %p174, %p175
      %p177 = scmp.le.s32.totalorder 1, %s10
      %p178 = scmp.lt.s32.totalorder %s10, 3
      %p179 = pnand %p177, %p178
      %p180 = pneg %p179
      // Predicated region
      $region9: #{transformer_forward.33} parent=5 // pred_check
        _
      $region10: #{transformer_forward.33} parent=5 // pred_check_branch
        %182 = sbr.rel (%p179) target = $region12
      $region11: #{transformer_forward.33} parent=5 // pred_region
        %s183 = ssub.s32 %s10, 1
      $region12: #{transformer_forward.33} parent=5 // pred_fallthru
        _
      %p184 = scmp.lt.s32.totalorder %s10, 2
      // Predicated region
      $region13: #{transformer_forward.33} parent=5 // pred_check
        %p185 = pneg %p184
      $region14: #{transformer_forward.33} parent=5 // pred_check_branch
        %187 = sbr.rel (%p185) target = $region16
      $region15: #{transformer_forward.33} parent=5 // pred_region
        // Predicated region
        $region17: #{transformer_forward.33} parent=15 // pred_check
          %p188 = pneg %p51
        $region18: #{transformer_forward.33} parent=15 // pred_check_branch
          %190 = sbr.rel (%p188) target = $region20
        $region19: #{transformer_forward.33} parent=15 // pred_region
          %p191 = scmp.lt.s32.totalorder %s17, 1
          %s192 = scalar_select %p191, %s17, 1
          %p193 = scmp.lt.s32.totalorder %s18, 15
          %s194 = scalar_select %p193, %s18, 15
          %s195 = smul.addr %s194, 3
          %s196 = smul.addr %s192, 48
          %s197 = sadd.s32 %s195, %s196
          %s198 = smul.addr %s197, 4
          %s199 = scalar_lea.vmem %s0, %s198
        $region20: #{transformer_forward.33} parent=15 // pred_fallthru
          _
        // Predicated region
        $region21: #{transformer_forward.33} parent=15 // pred_check
          %p200 = pneg %p79
        $region22: #{transformer_forward.33} parent=15 // pred_check_branch
          %202 = sbr.rel (%p200) target = $region24
        $region23: #{transformer_forward.33} parent=15 // pred_region
          %s203 = sand.u32 %s69, 1
          %s204 = sand.u32 %s69, 1
          %s205 = smul.addr %s204, 64
          %s206 = scalar_lea.vmem [#allocation5], %s205
          %s207 = smul.u32 16, %s19
          %s208 = smul.addr %s207, 3
          %s209 = sadd.s32 1, %s208
          %s210 = smul.addr %s17, 48
          %s211 = sadd.s32 %s209, %s210
          %s212 = smul.addr %s211, 4
          %s213 = scalar_lea.vmem %s1, %s212
          // Predicated region
          $region25: #{transformer_forward.33} parent=23 // pred_check
            _
          $region26: #{transformer_forward.33} parent=23 // pred_check_branch
            %215 = sbr.rel (0) target = $region28
          $region27: #{transformer_forward.33} parent=23 // pred_region
            // Predicated region
            $region29: #{transformer_forward.33} parent=27 // pred_check
              _
            $region30: #{transformer_forward.33} parent=27 // pred_check_branch
              %217 = sbr.rel target = $region32
            $region31: #{transformer_forward.33} parent=27 // pred_region
              // Predicated region
              $region44: #{transformer_forward.33} parent=31 // pred_check
                _
              $region45: #{transformer_forward.33} parent=31 // pred_check_branch
                %263 = sbr.rel (0) target = $region47
              $region46: #{transformer_forward.33} parent=31 // pred_region
                loop: start=0, step=1, limit=1
                $region48: #{transformer_forward.33} parent=46 // loop_pre_header
                  _
                $region49: #{transformer_forward.33} parent=46 // loop_header
                  %s265 = sphi 0, %s269
                  %p266 = scmp.ge.s32.totalorder %s265, 1
                  %s270 = sphi %s213, %s213
                  %s271 = sphi %s206, %s206
                $region50: #{transformer_forward.33} parent=46 // loop_header_branch
                  %268 = sbr.rel (%p266) target = $region54
                $region51: #{transformer_forward.33} parent=46 // loop_body
                  _
                $region52: #{transformer_forward.33} parent=46 // loop_footer
                  %s269 = sadd.s32 1, %s265
                $region53: #{transformer_forward.33} parent=46 // loop_footer_branch
                  %264 = sbr.rel target = $region49
                $region54: #{transformer_forward.33} parent=46 // loop_exit
                  _
                %s273 = ssub.s32 16, 1
                loop: start=0, step=1, limit=1
                $region55: #{transformer_forward.33} parent=46 // loop_pre_header
                  _
                $region56: #{transformer_forward.33} parent=46 // loop_header
                  %s275 = sphi 0, %s279
                  %p276 = scmp.ge.s32.totalorder %s275, 1
                  %s280 = sphi %s213, %s213
                  %s281 = sphi %s206, %s206
                $region57: #{transformer_forward.33} parent=46 // loop_header_branch
                  %278 = sbr.rel (%p276) target = $region61
                $region58: #{transformer_forward.33} parent=46 // loop_body
                  %v282 = vld [vmem:[%s280] sm:%s273]
                  %283 = vst [vmem:[%s281] sm:%s273] %v282
                  %v284 = vld [vmem:[%s280 + $0xc] sm:%s273]
                  %285 = vst [vmem:[%s281 + $0x4] sm:%s273] %v284
                  %v286 = vld [vmem:[%s280 + $0x18] sm:%s273]
                  %287 = vst [vmem:[%s281 + $0x8] sm:%s273] %v286
                  %v288 = vld [vmem:[%s280 + $0x24] sm:%s273]
                  %289 = vst [vmem:[%s281 + $0xc] sm:%s273] %v288
                  %v290 = vld [vmem:[%s280 + $0x30] sm:%s273]
                  %291 = vst [vmem:[%s281 + $0x10] sm:%s273] %v290
                  %v292 = vld [vmem:[%s280 + $0x3c] sm:%s273]
                  %293 = vst [vmem:[%s281 + $0x14] sm:%s273] %v292
                  %v294 = vld [vmem:[%s280 + $0x48] sm:%s273]
                  %295 = vst [vmem:[%s281 + $0x18] sm:%s273] %v294
                  %v296 = vld [vmem:[%s280 + $0x54] sm:%s273]
                  %297 = vst [vmem:[%s281 + $0x1c] sm:%s273] %v296
                  %v298 = vld [vmem:[%s280 + $0x60] sm:%s273]
                  %299 = vst [vmem:[%s281 + $0x20] sm:%s273] %v298
                  %v300 = vld [vmem:[%s280 + $0x6c] sm:%s273]
                  %301 = vst [vmem:[%s281 + $0x24] sm:%s273] %v300
                  %v302 = vld [vmem:[%s280 + $0x78] sm:%s273]
                  %303 = vst [vmem:[%s281 + $0x28] sm:%s273] %v302
                  %v304 = vld [vmem:[%s280 + $0x84] sm:%s273]
                  %305 = vst [vmem:[%s281 + $0x2c] sm:%s273] %v304
                  %v306 = vld [vmem:[%s280 + $0x90] sm:%s273]
                  %307 = vst [vmem:[%s281 + $0x30] sm:%s273] %v306
                  %v308 = vld [vmem:[%s280 + $0x9c] sm:%s273]
                  %309 = vst [vmem:[%s281 + $0x34] sm:%s273] %v308
                  %v310 = vld [vmem:[%s280 + $0xa8] sm:%s273]
                  %311 = vst [vmem:[%s281 + $0x38] sm:%s273] %v310
                  %v312 = vld [vmem:[%s280 + $0xb4] sm:%s273]
                  %313 = vst [vmem:[%s281 + $0x3c] sm:%s273] %v312
                $region59: #{transformer_forward.33} parent=46 // loop_footer
                  %s279 = sadd.s32 1, %s275
                $region60: #{transformer_forward.33} parent=46 // loop_footer_branch
                  %274 = sbr.rel target = $region56
                $region61: #{transformer_forward.33} parent=46 // loop_exit
                  _
              $region47: #{transformer_forward.33} parent=31 // pred_fallthru
                _
            $region32: #{transformer_forward.33} parent=27 // pred_fallthru
              _
            // Predicated region
            $region33: #{transformer_forward.33} parent=27 // pred_check
              _
            $region34: #{transformer_forward.33} parent=27 // pred_check_branch
              %219 = sbr.rel (0) target = $region36
            $region35: #{transformer_forward.33} parent=27 // pred_region
              %s221 = ssub.s32 16, 1
              loop: start=0, step=1, limit=1
              $region37: #{transformer_forward.33} parent=35 // loop_pre_header
                _
              $region38: #{transformer_forward.33} parent=35 // loop_header
                %s223 = sphi 0, %s227
                %p224 = scmp.ge.s32.totalorder %s223, 1
                %s228 = sphi %s213, %s213
                %s229 = sphi %s206, %s206
              $region39: #{transformer_forward.33} parent=35 // loop_header_branch
                %226 = sbr.rel (%p224) target = $region43
              $region40: #{transformer_forward.33} parent=35 // loop_body
                %v230 = vld [vmem:[%s228] sm:%s221]
                %231 = vst [vmem:[%s229] sm:%s221] %v230
                %v232 = vld [vmem:[%s228 + $0xc] sm:%s221]
                %233 = vst [vmem:[%s229 + $0x4] sm:%s221] %v232
                %v234 = vld [vmem:[%s228 + $0x18] sm:%s221]
                %235 = vst [vmem:[%s229 + $0x8] sm:%s221] %v234
                %v236 = vld [vmem:[%s228 + $0x24] sm:%s221]
                %237 = vst [vmem:[%s229 + $0xc] sm:%s221] %v236
                %v238 = vld [vmem:[%s228 + $0x30] sm:%s221]
                %239 = vst [vmem:[%s229 + $0x10] sm:%s221] %v238
                %v240 = vld [vmem:[%s228 + $0x3c] sm:%s221]
                %241 = vst [vmem:[%s229 + $0x14] sm:%s221] %v240
                %v242 = vld [vmem:[%s228 + $0x48] sm:%s221]
                %243 = vst [vmem:[%s229 + $0x18] sm:%s221] %v242
                %v244 = vld [vmem:[%s228 + $0x54] sm:%s221]
                %245 = vst [vmem:[%s229 + $0x1c] sm:%s221] %v244
                %v246 = vld [vmem:[%s228 + $0x60] sm:%s221]
                %247 = vst [vmem:[%s229 + $0x20] sm:%s221] %v246
                %v248 = vld [vmem:[%s228 + $0x6c] sm:%s221]
                %249 = vst [vmem:[%s229 + $0x24] sm:%s221] %v248
                %v250 = vld [vmem:[%s228 + $0x78] sm:%s221]
                %251 = vst [vmem:[%s229 + $0x28] sm:%s221] %v250
                %v252 = vld [vmem:[%s228 + $0x84] sm:%s221]
                %253 = vst [vmem:[%s229 + $0x2c] sm:%s221] %v252
                %v254 = vld [vmem:[%s228 + $0x90] sm:%s221]
                %255 = vst [vmem:[%s229 + $0x30] sm:%s221] %v254
                %v256 = vld [vmem:[%s228 + $0x9c] sm:%s221]
                %257 = vst [vmem:[%s229 + $0x34] sm:%s221] %v256
                %v258 = vld [vmem:[%s228 + $0xa8] sm:%s221]
                %259 = vst [vmem:[%s229 + $0x38] sm:%s221] %v258
                %v260 = vld [vmem:[%s228 + $0xb4] sm:%s221]
                %261 = vst [vmem:[%s229 + $0x3c] sm:%s221] %v260
              $region41: #{transformer_forward.33} parent=35 // loop_footer
                %s227 = sadd.s32 1, %s223
              $region42: #{transformer_forward.33} parent=35 // loop_footer_branch
                %222 = sbr.rel target = $region38
              $region43: #{transformer_forward.33} parent=35 // loop_exit
                _
            $region36: #{transformer_forward.33} parent=27 // pred_fallthru
              _
          $region28: #{transformer_forward.33} parent=23 // pred_fallthru
            _
          %314 = vnop
        $region24: #{transformer_forward.33} parent=15 // pred_fallthru
          _
        // Predicated region
        $region62: #{transformer_forward.33} parent=15 // pred_check
          %p315 = pneg %p107
        $region63: #{transformer_forward.33} parent=15 // pred_check_branch
          %317 = sbr.rel (%p315) target = $region65
        $region64: #{transformer_forward.33} parent=15 // pred_region
          %s318 = sand.u32 %s97, 1
          %s319 = sand.u32 %s97, 1
          %s320 = smul.addr %s319, 64
          %s321 = scalar_lea.vmem [#allocation6], %s320
          %s322 = smul.u32 16, %s19
          %s323 = smul.addr %s322, 3
          %s324 = sadd.s32 2, %s323
          %s325 = smul.addr %s17, 48
          %s326 = sadd.s32 %s324, %s325
          %s327 = smul.addr %s326, 4
          %s328 = scalar_lea.vmem %s2, %s327
          // Predicated region
          $region66: #{transformer_forward.33} parent=64 // pred_check
            _
          $region67: #{transformer_forward.33} parent=64 // pred_check_branch
            %330 = sbr.rel (0) target = $region69
          $region68: #{transformer_forward.33} parent=64 // pred_region
            // Predicated region
            $region70: #{transformer_forward.33} parent=68 // pred_check
              _
            $region71: #{transformer_forward.33} parent=68 // pred_check_branch
              %332 = sbr.rel target = $region73
            $region72: #{transformer_forward.33} parent=68 // pred_region
              // Predicated region
              $region85: #{transformer_forward.33} parent=72 // pred_check
                _
              $region86: #{transformer_forward.33} parent=72 // pred_check_branch
                %378 = sbr.rel (0) target = $region88
              $region87: #{transformer_forward.33} parent=72 // pred_region
                loop: start=0, step=1, limit=1
                $region89: #{transformer_forward.33} parent=87 // loop_pre_header
                  _
                $region90: #{transformer_forward.33} parent=87 // loop_header
                  %s380 = sphi 0, %s384
                  %p381 = scmp.ge.s32.totalorder %s380, 1
                  %s385 = sphi %s328, %s328
                  %s386 = sphi %s321, %s321
                $region91: #{transformer_forward.33} parent=87 // loop_header_branch
                  %383 = sbr.rel (%p381) target = $region95
                $region92: #{transformer_forward.33} parent=87 // loop_body
                  _
                $region93: #{transformer_forward.33} parent=87 // loop_footer
                  %s384 = sadd.s32 1, %s380
                $region94: #{transformer_forward.33} parent=87 // loop_footer_branch
                  %379 = sbr.rel target = $region90
                $region95: #{transformer_forward.33} parent=87 // loop_exit
                  _
                %s388 = ssub.s32 16, 1
                loop: start=0, step=1, limit=1
                $region96: #{transformer_forward.33} parent=87 // loop_pre_header
                  _
                $region97: #{transformer_forward.33} parent=87 // loop_header
                  %s390 = sphi 0, %s394
                  %p391 = scmp.ge.s32.totalorder %s390, 1
                  %s395 = sphi %s328, %s328
                  %s396 = sphi %s321, %s321
                $region98: #{transformer_forward.33} parent=87 // loop_header_branch
                  %393 = sbr.rel (%p391) target = $region102
                $region99: #{transformer_forward.33} parent=87 // loop_body
                  %v397 = vld [vmem:[%s395] sm:%s388]
                  %398 = vst [vmem:[%s396] sm:%s388] %v397
                  %v399 = vld [vmem:[%s395 + $0xc] sm:%s388]
                  %400 = vst [vmem:[%s396 + $0x4] sm:%s388] %v399
                  %v401 = vld [vmem:[%s395 + $0x18] sm:%s388]
                  %402 = vst [vmem:[%s396 + $0x8] sm:%s388] %v401
                  %v403 = vld [vmem:[%s395 + $0x24] sm:%s388]
                  %404 = vst [vmem:[%s396 + $0xc] sm:%s388] %v403
                  %v405 = vld [vmem:[%s395 + $0x30] sm:%s388]
                  %406 = vst [vmem:[%s396 + $0x10] sm:%s388] %v405
                  %v407 = vld [vmem:[%s395 + $0x3c] sm:%s388]
                  %408 = vst [vmem:[%s396 + $0x14] sm:%s388] %v407
                  %v409 = vld [vmem:[%s395 + $0x48] sm:%s388]
                  %410 = vst [vmem:[%s396 + $0x18] sm:%s388] %v409
                  %v411 = vld [vmem:[%s395 + $0x54] sm:%s388]
                  %412 = vst [vmem:[%s396 + $0x1c] sm:%s388] %v411
                  %v413 = vld [vmem:[%s395 + $0x60] sm:%s388]
                  %414 = vst [vmem:[%s396 + $0x20] sm:%s388] %v413
                  %v415 = vld [vmem:[%s395 + $0x6c] sm:%s388]
                  %416 = vst [vmem:[%s396 + $0x24] sm:%s388] %v415
                  %v417 = vld [vmem:[%s395 + $0x78] sm:%s388]
                  %418 = vst [vmem:[%s396 + $0x28] sm:%s388] %v417
                  %v419 = vld [vmem:[%s395 + $0x84] sm:%s388]
                  %420 = vst [vmem:[%s396 + $0x2c] sm:%s388] %v419
                  %v421 = vld [vmem:[%s395 + $0x90] sm:%s388]
                  %422 = vst [vmem:[%s396 + $0x30] sm:%s388] %v421
                  %v423 = vld [vmem:[%s395 + $0x9c] sm:%s388]
                  %424 = vst [vmem:[%s396 + $0x34] sm:%s388] %v423
                  %v425 = vld [vmem:[%s395 + $0xa8] sm:%s388]
                  %426 = vst [vmem:[%s396 + $0x38] sm:%s388] %v425
                  %v427 = vld [vmem:[%s395 + $0xb4] sm:%s388]
                  %428 = vst [vmem:[%s396 + $0x3c] sm:%s388] %v427
                $region100: #{transformer_forward.33} parent=87 // loop_footer
                  %s394 = sadd.s32 1, %s390
                $region101: #{transformer_forward.33} parent=87 // loop_footer_branch
                  %389 = sbr.rel target = $region97
                $region102: #{transformer_forward.33} parent=87 // loop_exit
                  _
              $region88: #{transformer_forward.33} parent=72 // pred_fallthru
                _
            $region73: #{transformer_forward.33} parent=68 // pred_fallthru
              _
            // Predicated region
            $region74: #{transformer_forward.33} parent=68 // pred_check
              _
            $region75: #{transformer_forward.33} parent=68 // pred_check_branch
              %334 = sbr.rel (0) target = $region77
            $region76: #{transformer_forward.33} parent=68 // pred_region
              %s336 = ssub.s32 16, 1
              loop: start=0, step=1, limit=1
              $region78: #{transformer_forward.33} parent=76 // loop_pre_header
                _
              $region79: #{transformer_forward.33} parent=76 // loop_header
                %s338 = sphi 0, %s342
                %p339 = scmp.ge.s32.totalorder %s338, 1
                %s343 = sphi %s328, %s328
                %s344 = sphi %s321, %s321
              $region80: #{transformer_forward.33} parent=76 // loop_header_branch
                %341 = sbr.rel (%p339) target = $region84
              $region81: #{transformer_forward.33} parent=76 // loop_body
                %v345 = vld [vmem:[%s343] sm:%s336]
                %346 = vst [vmem:[%s344] sm:%s336] %v345
                %v347 = vld [vmem:[%s343 + $0xc] sm:%s336]
                %348 = vst [vmem:[%s344 + $0x4] sm:%s336] %v347
                %v349 = vld [vmem:[%s343 + $0x18] sm:%s336]
                %350 = vst [vmem:[%s344 + $0x8] sm:%s336] %v349
                %v351 = vld [vmem:[%s343 + $0x24] sm:%s336]
                %352 = vst [vmem:[%s344 + $0xc] sm:%s336] %v351
                %v353 = vld [vmem:[%s343 + $0x30] sm:%s336]
                %354 = vst [vmem:[%s344 + $0x10] sm:%s336] %v353
                %v355 = vld [vmem:[%s343 + $0x3c] sm:%s336]
                %356 = vst [vmem:[%s344 + $0x14] sm:%s336] %v355
                %v357 = vld [vmem:[%s343 + $0x48] sm:%s336]
                %358 = vst [vmem:[%s344 + $0x18] sm:%s336] %v357
                %v359 = vld [vmem:[%s343 + $0x54] sm:%s336]
                %360 = vst [vmem:[%s344 + $0x1c] sm:%s336] %v359
                %v361 = vld [vmem:[%s343 + $0x60] sm:%s336]
                %362 = vst [vmem:[%s344 + $0x20] sm:%s336] %v361
                %v363 = vld [vmem:[%s343 + $0x6c] sm:%s336]
                %364 = vst [vmem:[%s344 + $0x24] sm:%s336] %v363
                %v365 = vld [vmem:[%s343 + $0x78] sm:%s336]
                %366 = vst [vmem:[%s344 + $0x28] sm:%s336] %v365
                %v367 = vld [vmem:[%s343 + $0x84] sm:%s336]
                %368 = vst [vmem:[%s344 + $0x2c] sm:%s336] %v367
                %v369 = vld [vmem:[%s343 + $0x90] sm:%s336]
                %370 = vst [vmem:[%s344 + $0x30] sm:%s336] %v369
                %v371 = vld [vmem:[%s343 + $0x9c] sm:%s336]
                %372 = vst [vmem:[%s344 + $0x34] sm:%s336] %v371
                %v373 = vld [vmem:[%s343 + $0xa8] sm:%s336]
                %374 = vst [vmem:[%s344 + $0x38] sm:%s336] %v373
                %v375 = vld [vmem:[%s343 + $0xb4] sm:%s336]
                %376 = vst [vmem:[%s344 + $0x3c] sm:%s336] %v375
              $region82: #{transformer_forward.33} parent=76 // loop_footer
                %s342 = sadd.s32 1, %s338
              $region83: #{transformer_forward.33} parent=76 // loop_footer_branch
                %337 = sbr.rel target = $region79
              $region84: #{transformer_forward.33} parent=76 // loop_exit
                _
            $region77: #{transformer_forward.33} parent=68 // pred_fallthru
              _
          $region69: #{transformer_forward.33} parent=64 // pred_fallthru
            _
          %429 = vnop
        $region65: #{transformer_forward.33} parent=15 // pred_fallthru
          _
        // Predicated region
        $region103: #{transformer_forward.33} parent=15 // pred_check
          %p430 = pneg %p135
        $region104: #{transformer_forward.33} parent=15 // pred_check_branch
          %432 = sbr.rel (%p430) target = $region106
        $region105: #{transformer_forward.33} parent=15 // pred_region
          %p433 = scmp.lt.s32.totalorder %s17, 1
          %s434 = scalar_select %p433, %s17, 1
          %p435 = scmp.lt.s32.totalorder %s19, 0
          %s436 = scalar_select %p435, %s19, 0
          %s437 = sadd.s32 %s436, %s434
          %s438 = scalar_lea.vmem %s3, %s437
        $region106: #{transformer_forward.33} parent=15 // pred_fallthru
          _
      $region16: #{transformer_forward.33} parent=5 // pred_fallthru
        _
      %p439 = scmp.le.s32.totalorder 1, %s10
      %p440 = scmp.lt.s32.totalorder %s10, 3
      %p441 = pnand %p439, %p440
      %p442 = pneg %p441
      // Predicated region
      $region107: #{transformer_forward.33} parent=5 // pred_check
        _
      $region108: #{transformer_forward.33} parent=5 // pred_check_branch
        %444 = sbr.rel (%p441) target = $region110
      $region109: #{transformer_forward.33} parent=5 // pred_region
        %s445 = ssub.s32 %s10, 1
        %s446 = sand.u32 %s72, 1
        %s447 = sand.u32 %s72, 1
        %s448 = smul.addr %s447, 64
        %s449 = scalar_lea.vmem [#allocation5], %s448
        // Predicated region
        $region111: #{transformer_forward.33} parent=109 // pred_check
          %p450 = pneg %p85
        $region112: #{transformer_forward.33} parent=109 // pred_check_branch
          %452 = sbr.rel (%p450) target = $region114
        $region113: #{transformer_forward.33} parent=109 // pred_region
          _
        $region114: #{transformer_forward.33} parent=109 // pred_fallthru
          _
        %s453 = sand.u32 %s100, 1
        %s454 = sand.u32 %s100, 1
        %s455 = smul.addr %s454, 64
        %s456 = scalar_lea.vmem [#allocation6], %s455
        // Predicated region
        $region115: #{transformer_forward.33} parent=109 // pred_check
          %p457 = pneg %p113
        $region116: #{transformer_forward.33} parent=109 // pred_check_branch
          %459 = sbr.rel (%p457) target = $region118
        $region117: #{transformer_forward.33} parent=109 // pred_region
          _
        $region118: #{transformer_forward.33} parent=109 // pred_fallthru
          _
        %p460 = scmp.lt.s32.totalorder %s20, 1
        %s461 = scalar_select %p460, %s20, 1
        %p462 = scmp.lt.s32.totalorder %s21, 15
        %s463 = scalar_select %p462, %s21, 15
        %s464 = smul.addr %s463, 3
        %s465 = smul.addr %s461, 48
        %s466 = sadd.s32 %s464, %s465
        %s467 = smul.addr %s466, 4
        %s468 = scalar_lea.vmem %s0, %s467
        %p469 = pneg %p57
        %p470 = pneg %p54
        %s471 = sand.u32 %s72, 1
        %s472 = sand.u32 %s72, 1
        %s473 = smul.addr %s472, 64
        %s474 = scalar_lea.vmem [#allocation5], %s473
        %p475 = pneg %p85
        %p476 = pneg %p82
        %s477 = sand.u32 %s100, 1
        %s478 = sand.u32 %s100, 1
        %s479 = smul.addr %s478, 64
        %s480 = scalar_lea.vmem [#allocation6], %s479
        %p481 = pneg %p113
        %p482 = pneg %p110
        %p483 = scmp.lt.s32.totalorder %s20, 1
        %s484 = scalar_select %p483, %s20, 1
        %p485 = scmp.lt.s32.totalorder %s22, 0
        %s486 = scalar_select %p485, %s22, 0
        %s487 = sadd.s32 %s486, %s484
        %s488 = scalar_lea.vmem %s3, %s487
        %p489 = pneg %p141
        %p490 = pneg %p138
        %p491 = pneg %p169
        %p492 = pneg %p166
        %p493 = scmp.lt.s32.totalorder %s20, 1
        %s494 = scalar_select %p493, %s20, 1
        %p495 = scmp.lt.s32.totalorder %s21, 0
        %s496 = scalar_select %p495, %s21, 0
        %s497 = sadd.s32 %s496, %s494
        %s498 = smul.addr %s497, 4
        %s499 = scalar_lea.vmem %s4, %s498
        %p500 = scmp.lt.s32.totalorder %s20, 1
        %s501 = scalar_select %p500, %s20, 1
        %p502 = scmp.lt.s32.totalorder %s21, 15
        %s503 = scalar_select %p502, %s21, 15
        %s504 = smul.addr %s503, 3
        %s505 = smul.addr %s501, 48
        %s506 = sadd.s32 %s504, %s505
        %s507 = smul.addr %s506, 4
        %s508 = scalar_lea.vmem %s0, %s507
        %s509 = smul.u32 16, %s22
        %s510 = smul.u32 16, %s22
        %p511 = scmp.lt.s32.totalorder %s20, 1
        %s512 = scalar_select %p511, %s20, 1
        %p513 = scmp.lt.s32.totalorder %s22, 0
        %s514 = scalar_select %p513, %s22, 0
        %s515 = sadd.s32 %s514, %s512
        %s516 = scalar_lea.vmem %s3, %s515
        %p517 = scmp.lt.s32.totalorder %s20, 1
        %s518 = scalar_select %p517, %s20, 1
        %p519 = scmp.lt.s32.totalorder %s21, 0
        %s520 = scalar_select %p519, %s21, 0
        %s521 = sadd.s32 %s520, %s518
        %s522 = smul.addr %s521, 4
        %s523 = scalar_lea.vmem %s4, %s522
        %p525 = scmp.eq.s32.totalorder %s22, 0
        // Predicated region
        $region119: #{transformer_forward.33} parent=109 // pred_check
          %p526 = pneg %p525
        $region120: #{transformer_forward.33} parent=109 // pred_check_branch
          %528 = sbr.rel (%p526) target = $region122
        $region121: #{transformer_forward.33} parent=109 // pred_region
          %529 = vst [vmem:[#allocation2] sm:$0xff] -1e+30
          %530 = vst [vmem:[#allocation2 + $0x8] sm:$0xff] -1e+30
          %531 = vst [vmem:[#allocation2 + $0x10] sm:$0xff] -1e+30
          %532 = vst [vmem:[#allocation2 + $0x18] sm:$0xff] -1e+30
          %533 = vst [vmem:[#allocation3] sm:$0xff] 0.0
          %534 = vst [vmem:[#allocation3 + $0x8] sm:$0xff] 0.0
          %535 = vst [vmem:[#allocation3 + $0x10] sm:$0xff] 0.0
          %536 = vst [vmem:[#allocation3 + $0x18] sm:$0xff] 0.0
          %537 = vst [vmem:[#allocation4] sm:$0xff] 0.0
        $region122: #{transformer_forward.33} parent=109 // pred_fallthru
          _
        %v538 = vld [vmem:[%s516] sm:$0x1]
        %v539 = vld [vmem:[%s508] sm:$0xf]
        %v540 = vld [vmem:[%s449] sm:$0xf]
        %v541 = vld [vmem:[%s449 + $0x4] sm:$0xf]
        %v542 = vld [vmem:[%s449 + $0x8] sm:$0xf]
        %v543 = vld [vmem:[%s449 + $0xc] sm:$0xf]
        %v544 = vld [vmem:[%s449 + $0x10] sm:$0xf]
        %v545 = vld [vmem:[%s449 + $0x14] sm:$0xf]
        %v546 = vld [vmem:[%s449 + $0x18] sm:$0xf]
        %v547 = vld [vmem:[%s449 + $0x1c] sm:$0xf]
        %v548 = vld [vmem:[%s449 + $0x20] sm:$0xf]
        %v549 = vld [vmem:[%s449 + $0x24] sm:$0xf]
        %v550 = vld [vmem:[%s449 + $0x28] sm:$0xf]
        %v551 = vld [vmem:[%s449 + $0x2c] sm:$0xf]
        %v552 = vld [vmem:[%s449 + $0x30] sm:$0xf]
        %v553 = vld [vmem:[%s449 + $0x34] sm:$0xf]
        %v554 = vld [vmem:[%s449 + $0x38] sm:$0xf]
        %v555 = vld [vmem:[%s449 + $0x3c] sm:$0xf]
        %v556 = vld [vmem:[%s456] sm:$0xf]
        %v557 = vld [vmem:[%s456 + $0x4] sm:$0xf]
        %v558 = vld [vmem:[%s456 + $0x8] sm:$0xf]
        %v559 = vld [vmem:[%s456 + $0xc] sm:$0xf]
        %v560 = vld [vmem:[%s456 + $0x10] sm:$0xf]
        %v561 = vld [vmem:[%s456 + $0x14] sm:$0xf]
        %v562 = vld [vmem:[%s456 + $0x18] sm:$0xf]
        %v563 = vld [vmem:[%s456 + $0x1c] sm:$0xf]
        %v564 = vld [vmem:[%s456 + $0x20] sm:$0xf]
        %v565 = vld [vmem:[%s456 + $0x24] sm:$0xf]
        %v566 = vld [vmem:[%s456 + $0x28] sm:$0xf]
        %v567 = vld [vmem:[%s456 + $0x2c] sm:$0xf]
        %v568 = vld [vmem:[%s456 + $0x30] sm:$0xf]
        %v569 = vld [vmem:[%s456 + $0x34] sm:$0xf]
        %v570 = vld [vmem:[%s456 + $0x38] sm:$0xf]
        %v571 = vld [vmem:[%s456 + $0x3c] sm:$0xf]
        %v573 = vlaneseq
        %v574 = vshrl.u32 %v573, 7
        %v575 = vsub.s32 0, %v574
        %v576 = vrot.slane %v538, %v575
        %v594 = vunpack.c.l.b16 %v540
        %v595 = vunpack.c.l.b16 %v541
        %v596 = vunpack.c.l.b16 %v542
        %v597 = vunpack.c.l.b16 %v543
        %v598 = vunpack.c.l.b16 %v544
        %v599 = vunpack.c.l.b16 %v545
        %v600 = vunpack.c.l.b16 %v546
        %v601 = vunpack.c.l.b16 %v547
        %v602 = vunpack.c.l.b16 %v548
        %v603 = vunpack.c.l.b16 %v549
        %v604 = vunpack.c.l.b16 %v550
        %v605 = vunpack.c.l.b16 %v551
        %v606 = vunpack.c.l.b16 %v552
        %v607 = vunpack.c.l.b16 %v553
        %v608 = vunpack.c.l.b16 %v554
        %v609 = vunpack.c.l.b16 %v555
        %v610 = vpack.c.b16 %v595, %v594
        %v611 = vpack.c.b16 %v597, %v596
        %v612 = vpack.c.b16 %v599, %v598
        %v613 = vpack.c.b16 %v601, %v600
        %v614 = vpack.c.b16 %v603, %v602
        %v615 = vpack.c.b16 %v605, %v604
        %v616 = vpack.c.b16 %v607, %v606
        %v617 = vpack.c.b16 %v609, %v608
        %vm618 = vcmask 64512
        %v620 = vsel %vm618, %v539, 0
        %v623 = vsel %vm618, %v610, 0
        %v626 = vsel %vm618, %v611, 0
        %v629 = vsel %vm618, %v612, 0
        %v632 = vsel %vm618, %v613, 0
        %v635 = vsel %vm618, %v614, 0
        %v638 = vsel %vm618, %v615, 0
        %v641 = vsel %vm618, %v616, 0
        %v644 = vsel %vm618, %v617, 0
        %646 = vmatprep.subr.bf16.mxu0 0
        %647 = vmatpush1.bf16.xpose.msra.mxu0 %v644
        %648 = vmatprep.subr.bf16.mxu0 0
        %649 = vmatpush1.bf16.xpose.msra.mxu0 %v641
        %650 = vmatprep.subr.bf16.mxu0 0
        %651 = vmatpush1.bf16.xpose.msra.mxu0 %v638
        %652 = vmatprep.subr.bf16.mxu0 0
        %653 = vmatpush1.bf16.xpose.msra.mxu0 %v635
        %654 = vmatprep.subr.bf16.mxu0 0
        %655 = vmatpush1.bf16.xpose.msra.mxu0 %v632
        %656 = vmatprep.subr.bf16.mxu0 0
        %657 = vmatpush1.bf16.xpose.msra.mxu0 %v629
        %658 = vmatprep.subr.bf16.mxu0 0
        %659 = vmatpush1.bf16.xpose.msra.mxu0 %v626
        %660 = vmatprep.subr.bf16.mxu0 0
        %661 = vmatpush1.bf16.xpose.msra.mxu0 %v623
        %662 = vmatprep.subr.bf16.mxu0 0
        %663 = vmatpush2.bf16.xpose.msra.mxu0 0
        %664 = vmatprep.subr.bf16.mxu0 0
        %665 = vmatpush2.bf16.xpose.msra.mxu0 0
        %666 = vmatprep.subr.bf16.mxu0 0
        %667 = vmatpush2.bf16.xpose.msra.mxu0 0
        %668 = vmatprep.subr.bf16.mxu0 0
        %669 = vmatpush2.bf16.xpose.msra.mxu0 0
        %670 = vmatprep.subr.bf16.mxu0 0
        %671 = vmatpush2.bf16.xpose.msra.mxu0 0
        %672 = vmatprep.subr.bf16.mxu0 0
        %673 = vmatpush2.bf16.xpose.msra.mxu0 0
        %674 = vmatprep.subr.bf16.mxu0 0
        %675 = vmatpush2.bf16.xpose.msra.mxu0 0
        %676 = vmatprep.subr.bf16.mxu0 0
        %677 = vmatpush2.bf16.xpose.msra.mxu0 0
        %678 = vmatprep.mubr.bf16.mxu0 0
        %679 = vmatmul.mubr.bf16.gmra.mxu0 %v620
        %v680 = vpop.f32.mrf.mxu0
        %v681 = vadd.f32 %v576, %v680
        %v682 = vpop.f32.mrf.mxu0
        %v683 = vpop.f32.mrf.mxu0
        %v684 = vpop.f32.mrf.mxu0
        %685 = vdwg.mxu0
        %v686 = vld [vmem:[#allocation2] sm:$0xff]
        %687 = vmax.xlane.f32.xlu0 %v681
        %v688 = vpop.xlane.xlu0 %687
        %v689 = vmax.f32 %v686, %v688
        %v690 = vsub.f32 %v686, %v689
        %v691 = vmul.f32 %v690, 1.442695
        %v692 = vpow.pop %v691
        %694 = vset.pattern.permute.xlu0 0
        %695 = vperm.xlu0 %694, %v689
        %v696 = vpop.permute.xlu0 %695
        %v698 = vsub.f32 %v681, %v696
        %v699 = vmul.f32 %v698, 1.442695
        %v700 = vpow.pop %v699
        %v701 = vld [vmem:[#allocation3] sm:$0xff]
        %v702 = vmul.f32 %v692, %v701
        %703 = vadd.xlane.f32.xlu0 %v700
        %v704 = vpop.xlane.xlu0 %703
        %v705 = vadd.f32 %v702, %v704
        %706 = vst [vmem:[#allocation3] sm:$0xff] %v705
        %707 = vst [vmem:[#allocation2] sm:$0xff] %v689
        %v708 = vpack.c.bf16 %v700, %v700
        %v725 = vunpack.c.l.b16 %v556
        %v726 = vunpack.c.l.b16 %v557
        %v727 = vunpack.c.l.b16 %v558
        %v728 = vunpack.c.l.b16 %v559
        %v729 = vunpack.c.l.b16 %v560
        %v730 = vunpack.c.l.b16 %v561
        %v731 = vunpack.c.l.b16 %v562
        %v732 = vunpack.c.l.b16 %v563
        %v733 = vunpack.c.l.b16 %v564
        %v734 = vunpack.c.l.b16 %v565
        %v735 = vunpack.c.l.b16 %v566
        %v736 = vunpack.c.l.b16 %v567
        %v737 = vunpack.c.l.b16 %v568
        %v738 = vunpack.c.l.b16 %v569
        %v739 = vunpack.c.l.b16 %v570
        %v740 = vunpack.c.l.b16 %v571
        %v741 = vpack.c.b16 %v726, %v725
        %v742 = vpack.c.b16 %v728, %v727
        %v743 = vpack.c.b16 %v730, %v729
        %v744 = vpack.c.b16 %v732, %v731
        %v745 = vpack.c.b16 %v734, %v733
        %v746 = vpack.c.b16 %v736, %v735
        %v747 = vpack.c.b16 %v738, %v737
        %v748 = vpack.c.b16 %v740, %v739
        %757 = vmatprep.subr.bf16.mxu0 0
        %758 = vmatpush1.bf16.msra.mxu0 %v748
        %759 = vmatprep.subr.bf16.mxu0 0
        %760 = vmatpush1.bf16.msra.mxu0 %v747
        %761 = vmatprep.subr.bf16.mxu0 0
        %762 = vmatpush1.bf16.msra.mxu0 %v746
        %763 = vmatprep.subr.bf16.mxu0 0
        %764 = vmatpush1.bf16.msra.mxu0 %v745
        %765 = vmatprep.subr.bf16.mxu0 0
        %766 = vmatpush1.bf16.msra.mxu0 %v744
        %767 = vmatprep.subr.bf16.mxu0 0
        %768 = vmatpush1.bf16.msra.mxu0 %v743
        %769 = vmatprep.subr.bf16.mxu0 0
        %770 = vmatpush1.bf16.msra.mxu0 %v742
        %771 = vmatprep.subr.bf16.mxu0 0
        %772 = vmatpush1.bf16.msra.mxu0 %v741
        %773 = vmatprep.subr.bf16.mxu0 0
        %774 = vmatpush2.bf16.msra.mxu0 0
        %775 = vmatprep.subr.bf16.mxu0 0
        %776 = vmatpush2.bf16.msra.mxu0 0
        %777 = vmatprep.subr.bf16.mxu0 0
        %778 = vmatpush2.bf16.msra.mxu0 0
        %779 = vmatprep.subr.bf16.mxu0 0
        %780 = vmatpush2.bf16.msra.mxu0 0
        %781 = vmatprep.subr.bf16.mxu0 0
        %782 = vmatpush2.bf16.msra.mxu0 0
        %783 = vmatprep.subr.bf16.mxu0 0
        %784 = vmatpush2.bf16.msra.mxu0 0
        %785 = vmatprep.subr.bf16.mxu0 0
        %786 = vmatpush2.bf16.msra.mxu0 0
        %787 = vmatprep.subr.bf16.mxu0 0
        %788 = vmatpush2.bf16.msra.mxu0 0
        %789 = vmatprep.mubr.bf16.mxu0 0
        %790 = vmatmul.mubr.bf16.gmra.mxu0 %v708
        %v791 = vpop.f32.mrf.mxu0
        %v792 = vadd.f32 0.0, %v791
        %v793 = vpop.f32.mrf.mxu0
        %v794 = vpop.f32.mrf.mxu0
        %v795 = vpop.f32.mrf.mxu0
        %796 = vdwg.mxu0
        %v797 = vld [vmem:[#allocation4] sm:$0xff]
        %799 = vset.pattern.permute.xlu0 0
        %800 = vperm.xlu0 %799, %v692
        %v801 = vpop.permute.xlu0 %800
        %v803 = vmul.f32 %v801, %v797
        %v804 = vadd.f32 %v803, %v792
        %805 = vst.msk [vmem:[#allocation4] sm:$0xff] %vm618, %v804
        %v806 = vld [vmem:[%s508] sm:$0xf]
        %v807 = vld [vmem:[%s449] sm:$0xf]
        %v808 = vld [vmem:[%s449 + $0x4] sm:$0xf]
        %v809 = vld [vmem:[%s449 + $0x8] sm:$0xf]
        %v810 = vld [vmem:[%s449 + $0xc] sm:$0xf]
        %v811 = vld [vmem:[%s449 + $0x10] sm:$0xf]
        %v812 = vld [vmem:[%s449 + $0x14] sm:$0xf]
        %v813 = vld [vmem:[%s449 + $0x18] sm:$0xf]
        %v814 = vld [vmem:[%s449 + $0x1c] sm:$0xf]
        %v815 = vld [vmem:[%s449 + $0x20] sm:$0xf]
        %v816 = vld [vmem:[%s449 + $0x24] sm:$0xf]
        %v817 = vld [vmem:[%s449 + $0x28] sm:$0xf]
        %v818 = vld [vmem:[%s449 + $0x2c] sm:$0xf]
        %v819 = vld [vmem:[%s449 + $0x30] sm:$0xf]
        %v820 = vld [vmem:[%s449 + $0x34] sm:$0xf]
        %v821 = vld [vmem:[%s449 + $0x38] sm:$0xf]
        %v822 = vld [vmem:[%s449 + $0x3c] sm:$0xf]
        %v823 = vld [vmem:[%s456] sm:$0xf]
        %v824 = vld [vmem:[%s456 + $0x4] sm:$0xf]
        %v825 = vld [vmem:[%s456 + $0x8] sm:$0xf]
        %v826 = vld [vmem:[%s456 + $0xc] sm:$0xf]
        %v827 = vld [vmem:[%s456 + $0x10] sm:$0xf]
        %v828 = vld [vmem:[%s456 + $0x14] sm:$0xf]
        %v829 = vld [vmem:[%s456 + $0x18] sm:$0xf]
        %v830 = vld [vmem:[%s456 + $0x1c] sm:$0xf]
        %v831 = vld [vmem:[%s456 + $0x20] sm:$0xf]
        %v832 = vld [vmem:[%s456 + $0x24] sm:$0xf]
        %v833 = vld [vmem:[%s456 + $0x28] sm:$0xf]
        %v834 = vld [vmem:[%s456 + $0x2c] sm:$0xf]
        %v835 = vld [vmem:[%s456 + $0x30] sm:$0xf]
        %v836 = vld [vmem:[%s456 + $0x34] sm:$0xf]
        %v837 = vld [vmem:[%s456 + $0x38] sm:$0xf]
        %v838 = vld [vmem:[%s456 + $0x3c] sm:$0xf]
        %v840 = vunpack.c.l.b16 %v806
        %v841 = vpack.c.b16 %v840, %v840
        %842 = vrot.lane.b32.xlu0 %v841, 120
        %v843 = vpop.permute.xlu0 %842
        %v860 = vunpack.c.l.b16 %v807
        %v861 = vunpack.c.l.b16 %v808
        %v862 = vunpack.c.l.b16 %v809
        %v863 = vunpack.c.l.b16 %v810
        %v864 = vunpack.c.l.b16 %v811
        %v865 = vunpack.c.l.b16 %v812
        %v866 = vunpack.c.l.b16 %v813
        %v867 = vunpack.c.l.b16 %v814
        %v868 = vunpack.c.l.b16 %v815
        %v869 = vunpack.c.l.b16 %v816
        %v870 = vunpack.c.l.b16 %v817
        %v871 = vunpack.c.l.b16 %v818
        %v872 = vunpack.c.l.b16 %v819
        %v873 = vunpack.c.l.b16 %v820
        %v874 = vunpack.c.l.b16 %v821
        %v875 = vunpack.c.l.b16 %v822
        %v876 = vpack.c.b16 %v861, %v860
        %v877 = vpack.c.b16 %v863, %v862
        %v878 = vpack.c.b16 %v865, %v864
        %v879 = vpack.c.b16 %v867, %v866
        %v880 = vpack.c.b16 %v869, %v868
        %v881 = vpack.c.b16 %v871, %v870
        %v882 = vpack.c.b16 %v873, %v872
        %v883 = vpack.c.b16 %v875, %v874
        %884 = vrot.lane.b32.xlu0 %v876, 120
        %v885 = vpop.permute.xlu0 %884
        %886 = vrot.lane.b32.xlu0 %v877, 120
        %v887 = vpop.permute.xlu0 %886
        %888 = vrot.lane.b32.xlu0 %v878, 120
        %v889 = vpop.permute.xlu0 %888
        %890 = vrot.lane.b32.xlu0 %v879, 120
        %v891 = vpop.permute.xlu0 %890
        %892 = vrot.lane.b32.xlu0 %v880, 120
        %v893 = vpop.permute.xlu0 %892
        %894 = vrot.lane.b32.xlu0 %v881, 120
        %v895 = vpop.permute.xlu0 %894
        %896 = vrot.lane.b32.xlu0 %v882, 120
        %v897 = vpop.permute.xlu0 %896
        %898 = vrot.lane.b32.xlu0 %v883, 120
        %v899 = vpop.permute.xlu0 %898
        %v901 = vsel %vm618, %v843, 0
        %v904 = vsel %vm618, %v885, 0
        %v907 = vsel %vm618, %v887, 0
        %v910 = vsel %vm618, %v889, 0
        %v913 = vsel %vm618, %v891, 0
        %v916 = vsel %vm618, %v893, 0
        %v919 = vsel %vm618, %v895, 0
        %v922 = vsel %vm618, %v897, 0
        %v925 = vsel %vm618, %v899, 0
        %927 = vmatprep.subr.bf16.mxu0 0
        %928 = vmatpush1.bf16.xpose.msra.mxu0 %v925
        %929 = vmatprep.subr.bf16.mxu0 0
        %930 = vmatpush1.bf16.xpose.msra.mxu0 %v922
        %931 = vmatprep.subr.bf16.mxu0 0
        %932 = vmatpush1.bf16.xpose.msra.mxu0 %v919
        %933 = vmatprep.subr.bf16.mxu0 0
        %934 = vmatpush1.bf16.xpose.msra.mxu0 %v916
        %935 = vmatprep.subr.bf16.mxu0 0
        %936 = vmatpush1.bf16.xpose.msra.mxu0 %v913
        %937 = vmatprep.subr.bf16.mxu0 0
        %938 = vmatpush1.bf16.xpose.msra.mxu0 %v910
        %939 = vmatprep.subr.bf16.mxu0 0
        %940 = vmatpush1.bf16.xpose.msra.mxu0 %v907
        %941 = vmatprep.subr.bf16.mxu0 0
        %942 = vmatpush1.bf16.xpose.msra.mxu0 %v904
        %943 = vmatprep.subr.bf16.mxu0 0
        %944 = vmatpush2.bf16.xpose.msra.mxu0 0
        %945 = vmatprep.subr.bf16.mxu0 0
        %946 = vmatpush2.bf16.xpose.msra.mxu0 0
        %947 = vmatprep.subr.bf16.mxu0 0
        %948 = vmatpush2.bf16.xpose.msra.mxu0 0
        %949 = vmatprep.subr.bf16.mxu0 0
        %950 = vmatpush2.bf16.xpose.msra.mxu0 0
        %951 = vmatprep.subr.bf16.mxu0 0
        %952 = vmatpush2.bf16.xpose.msra.mxu0 0
        %953 = vmatprep.subr.bf16.mxu0 0
        %954 = vmatpush2.bf16.xpose.msra.mxu0 0
        %955 = vmatprep.subr.bf16.mxu0 0
        %956 = vmatpush2.bf16.xpose.msra.mxu0 0
        %957 = vmatprep.subr.bf16.mxu0 0
        %958 = vmatpush2.bf16.xpose.msra.mxu0 0
        %959 = vmatprep.mubr.bf16.mxu0 0
        %960 = vmatmul.mubr.bf16.gmra.mxu0 %v901
        %v961 = vpop.f32.mrf.mxu0
        %v962 = vadd.f32 %v576, %v961
        %v963 = vpop.f32.mrf.mxu0
        %v964 = vpop.f32.mrf.mxu0
        %v965 = vpop.f32.mrf.mxu0
        %966 = vdwg.mxu0
        %s967 = scalar_lea.vmem [#allocation2], 8
        %v968 = vld [vmem:[%s967] sm:$0xff]
        %969 = vmax.xlane.f32.xlu0 %v962
        %v970 = vpop.xlane.xlu0 %969
        %v971 = vmax.f32 %v968, %v970
        %v972 = vsub.f32 %v968, %v971
        %v973 = vmul.f32 %v972, 1.442695
        %v974 = vpow.pop %v973
        %976 = vset.pattern.permute.xlu0 0
        %977 = vperm.xlu0 %976, %v971
        %v978 = vpop.permute.xlu0 %977
        %v980 = vsub.f32 %v962, %v978
        %v981 = vmul.f32 %v980, 1.442695
        %v982 = vpow.pop %v981
        %s983 = scalar_lea.vmem [#allocation3], 8
        %v984 = vld [vmem:[%s983] sm:$0xff]
        %v985 = vmul.f32 %v974, %v984
        %986 = vadd.xlane.f32.xlu0 %v982
        %v987 = vpop.xlane.xlu0 %986
        %v988 = vadd.f32 %v985, %v987
        %989 = vst [vmem:[%s983] sm:$0xff] %v988
        %990 = vst [vmem:[%s967] sm:$0xff] %v971
        %v991 = vpack.c.bf16 %v982, %v982
        %v1008 = vunpack.c.l.b16 %v823
        %v1009 = vunpack.c.l.b16 %v824
        %v1010 = vunpack.c.l.b16 %v825
        %v1011 = vunpack.c.l.b16 %v826
        %v1012 = vunpack.c.l.b16 %v827
        %v1013 = vunpack.c.l.b16 %v828
        %v1014 = vunpack.c.l.b16 %v829
        %v1015 = vunpack.c.l.b16 %v830
        %v1016 = vunpack.c.l.b16 %v831
        %v1017 = vunpack.c.l.b16 %v832
        %v1018 = vunpack.c.l.b16 %v833
        %v1019 = vunpack.c.l.b16 %v834
        %v1020 = vunpack.c.l.b16 %v835
        %v1021 = vunpack.c.l.b16 %v836
        %v1022 = vunpack.c.l.b16 %v837
        %v1023 = vunpack.c.l.b16 %v838
        %v1024 = vpack.c.b16 %v1009, %v1008
        %v1025 = vpack.c.b16 %v1011, %v1010
        %v1026 = vpack.c.b16 %v1013, %v1012
        %v1027 = vpack.c.b16 %v1015, %v1014
        %v1028 = vpack.c.b16 %v1017, %v1016
        %v1029 = vpack.c.b16 %v1019, %v1018
        %v1030 = vpack.c.b16 %v1021, %v1020
        %v1031 = vpack.c.b16 %v1023, %v1022
        %1032 = vrot.lane.b32.xlu0 %v1024, 120
        %v1033 = vpop.permute.xlu0 %1032
        %1034 = vrot.lane.b32.xlu0 %v1025, 120
        %v1035 = vpop.permute.xlu0 %1034
        %1036 = vrot.lane.b32.xlu0 %v1026, 120
        %v1037 = vpop.permute.xlu0 %1036
        %1038 = vrot.lane.b32.xlu0 %v1027, 120
        %v1039 = vpop.permute.xlu0 %1038
        %1040 = vrot.lane.b32.xlu0 %v1028, 120
        %v1041 = vpop.permute.xlu0 %1040
        %1042 = vrot.lane.b32.xlu0 %v1029, 120
        %v1043 = vpop.permute.xlu0 %1042
        %1044 = vrot.lane.b32.xlu0 %v1030, 120
        %v1045 = vpop.permute.xlu0 %1044
        %1046 = vrot.lane.b32.xlu0 %v1031, 120
        %v1047 = vpop.permute.xlu0 %1046
        %1056 = vmatprep.subr.bf16.mxu0 0
        %1057 = vmatpush1.bf16.msra.mxu0 %v1047
        %1058 = vmatprep.subr.bf16.mxu0 0
        %1059 = vmatpush1.bf16.msra.mxu0 %v1045
        %1060 = vmatprep.subr.bf16.mxu0 0
        %1061 = vmatpush1.bf16.msra.mxu0 %v1043
        %1062 = vmatprep.subr.bf16.mxu0 0
        %1063 = vmatpush1.bf16.msra.mxu0 %v1041
        %1064 = vmatprep.subr.bf16.mxu0 0
        %1065 = vmatpush1.bf16.msra.mxu0 %v1039
        %1066 = vmatprep.subr.bf16.mxu0 0
        %1067 = vmatpush1.bf16.msra.mxu0 %v1037
        %1068 = vmatprep.subr.bf16.mxu0 0
        %1069 = vmatpush1.bf16.msra.mxu0 %v1035
        %1070 = vmatprep.subr.bf16.mxu0 0
        %1071 = vmatpush1.bf16.msra.mxu0 %v1033
        %1072 = vmatprep.subr.bf16.mxu0 0
        %1073 = vmatpush2.bf16.msra.mxu0 0
        %1074 = vmatprep.subr.bf16.mxu0 0
        %1075 = vmatpush2.bf16.msra.mxu0 0
        %1076 = vmatprep.subr.bf16.mxu0 0
        %1077 = vmatpush2.bf16.msra.mxu0 0
        %1078 = vmatprep.subr.bf16.mxu0 0
        %1079 = vmatpush2.bf16.msra.mxu0 0
        %1080 = vmatprep.subr.bf16.mxu0 0
        %1081 = vmatpush2.bf16.msra.mxu0 0
        %1082 = vmatprep.subr.bf16.mxu0 0
        %1083 = vmatpush2.bf16.msra.mxu0 0
        %1084 = vmatprep.subr.bf16.mxu0 0
        %1085 = vmatpush2.bf16.msra.mxu0 0
        %1086 = vmatprep.subr.bf16.mxu0 0
        %1087 = vmatpush2.bf16.msra.mxu0 0
        %1088 = vmatprep.mubr.bf16.mxu0 0
        %1089 = vmatmul.mubr.bf16.gmra.mxu0 %v991
        %v1090 = vpop.f32.mrf.mxu0
        %v1091 = vadd.f32 0.0, %v1090
        %v1092 = vpop.f32.mrf.mxu0
        %v1093 = vpop.f32.mrf.mxu0
        %v1094 = vpop.f32.mrf.mxu0
        %1095 = vdwg.mxu0
        %v1096 = vld [vmem:[#allocation4] sm:$0xff]
        %1098 = vset.pattern.permute.xlu0 0
        %1099 = vperm.xlu0 %1098, %v974
        %v1100 = vpop.permute.xlu0 %1099
        %v1102 = vmul.f32 %v1100, %v1096
        %1104 = vrot.lane.b32.xlu0 %v1091, 8
        %v1105 = vpop.permute.xlu0 %1104
        %v1107 = vadd.f32 %v1102, %v1105
        %vm1108 = vcmask 130112
        %1109 = vst.msk [vmem:[#allocation4] sm:$0xff] %vm1108, %v1107
        %v1110 = vld [vmem:[%s508] sm:$0xf]
        %v1111 = vld [vmem:[%s449] sm:$0xf]
        %v1112 = vld [vmem:[%s449 + $0x4] sm:$0xf]
        %v1113 = vld [vmem:[%s449 + $0x8] sm:$0xf]
        %v1114 = vld [vmem:[%s449 + $0xc] sm:$0xf]
        %v1115 = vld [vmem:[%s449 + $0x10] sm:$0xf]
        %v1116 = vld [vmem:[%s449 + $0x14] sm:$0xf]
        %v1117 = vld [vmem:[%s449 + $0x18] sm:$0xf]
        %v1118 = vld [vmem:[%s449 + $0x1c] sm:$0xf]
        %v1119 = vld [vmem:[%s449 + $0x20] sm:$0xf]
        %v1120 = vld [vmem:[%s449 + $0x24] sm:$0xf]
        %v1121 = vld [vmem:[%s449 + $0x28] sm:$0xf]
        %v1122 = vld [vmem:[%s449 + $0x2c] sm:$0xf]
        %v1123 = vld [vmem:[%s449 + $0x30] sm:$0xf]
        %v1124 = vld [vmem:[%s449 + $0x34] sm:$0xf]
        %v1125 = vld [vmem:[%s449 + $0x38] sm:$0xf]
        %v1126 = vld [vmem:[%s449 + $0x3c] sm:$0xf]
        %v1127 = vld [vmem:[%s456] sm:$0xf]
        %v1128 = vld [vmem:[%s456 + $0x4] sm:$0xf]
        %v1129 = vld [vmem:[%s456 + $0x8] sm:$0xf]
        %v1130 = vld [vmem:[%s456 + $0xc] sm:$0xf]
        %v1131 = vld [vmem:[%s456 + $0x10] sm:$0xf]
        %v1132 = vld [vmem:[%s456 + $0x14] sm:$0xf]
        %v1133 = vld [vmem:[%s456 + $0x18] sm:$0xf]
        %v1134 = vld [vmem:[%s456 + $0x1c] sm:$0xf]
        %v1135 = vld [vmem:[%s456 + $0x20] sm:$0xf]
        %v1136 = vld [vmem:[%s456 + $0x24] sm:$0xf]
        %v1137 = vld [vmem:[%s456 + $0x28] sm:$0xf]
        %v1138 = vld [vmem:[%s456 + $0x2c] sm:$0xf]
        %v1139 = vld [vmem:[%s456 + $0x30] sm:$0xf]
        %v1140 = vld [vmem:[%s456 + $0x34] sm:$0xf]
        %v1141 = vld [vmem:[%s456 + $0x38] sm:$0xf]
        %v1142 = vld [vmem:[%s456 + $0x3c] sm:$0xf]
        %v1144 = vunpack.c.l.b16 %v1110
        %v1145 = vpack.c.b16 %v1144, %v1144
        %1146 = vrot.lane.b32.xlu0 %v1145, 112
        %v1147 = vpop.permute.xlu0 %1146
        %v1164 = vunpack.c.l.b16 %v1111
        %v1165 = vunpack.c.l.b16 %v1112
        %v1166 = vunpack.c.l.b16 %v1113
        %v1167 = vunpack.c.l.b16 %v1114
        %v1168 = vunpack.c.l.b16 %v1115
        %v1169 = vunpack.c.l.b16 %v1116
        %v1170 = vunpack.c.l.b16 %v1117
        %v1171 = vunpack.c.l.b16 %v1118
        %v1172 = vunpack.c.l.b16 %v1119
        %v1173 = vunpack.c.l.b16 %v1120
        %v1174 = vunpack.c.l.b16 %v1121
        %v1175 = vunpack.c.l.b16 %v1122
        %v1176 = vunpack.c.l.b16 %v1123
        %v1177 = vunpack.c.l.b16 %v1124
        %v1178 = vunpack.c.l.b16 %v1125
        %v1179 = vunpack.c.l.b16 %v1126
        %v1180 = vpack.c.b16 %v1165, %v1164
        %v1181 = vpack.c.b16 %v1167, %v1166
        %v1182 = vpack.c.b16 %v1169, %v1168
        %v1183 = vpack.c.b16 %v1171, %v1170
        %v1184 = vpack.c.b16 %v1173, %v1172
        %v1185 = vpack.c.b16 %v1175, %v1174
        %v1186 = vpack.c.b16 %v1177, %v1176
        %v1187 = vpack.c.b16 %v1179, %v1178
        %1188 = vrot.lane.b32.xlu0 %v1180, 112
        %v1189 = vpop.permute.xlu0 %1188
        %1190 = vrot.lane.b32.xlu0 %v1181, 112
        %v1191 = vpop.permute.xlu0 %1190
        %1192 = vrot.lane.b32.xlu0 %v1182, 112
        %v1193 = vpop.permute.xlu0 %1192
        %1194 = vrot.lane.b32.xlu0 %v1183, 112
        %v1195 = vpop.permute.xlu0 %1194
        %1196 = vrot.lane.b32.xlu0 %v1184, 112
        %v1197 = vpop.permute.xlu0 %1196
        %1198 = vrot.lane.b32.xlu0 %v1185, 112
        %v1199 = vpop.permute.xlu0 %1198
        %1200 = vrot.lane.b32.xlu0 %v1186, 112
        %v1201 = vpop.permute.xlu0 %1200
        %1202 = vrot.lane.b32.xlu0 %v1187, 112
        %v1203 = vpop.permute.xlu0 %1202
        %v1205 = vsel %vm618, %v1147, 0
        %v1208 = vsel %vm618, %v1189, 0
        %v1211 = vsel %vm618, %v1191, 0
        %v1214 = vsel %vm618, %v1193, 0
        %v1217 = vsel %vm618, %v1195, 0
        %v1220 = vsel %vm618, %v1197, 0
        %v1223 = vsel %vm618, %v1199, 0
        %v1226 = vsel %vm618, %v1201, 0
        %v1229 = vsel %vm618, %v1203, 0
        %1231 = vmatprep.subr.bf16.mxu0 0
        %1232 = vmatpush1.bf16.xpose.msra.mxu0 %v1229
        %1233 = vmatprep.subr.bf16.mxu0 0
        %1234 = vmatpush1.bf16.xpose.msra.mxu0 %v1226
        %1235 = vmatprep.subr.bf16.mxu0 0
        %1236 = vmatpush1.bf16.xpose.msra.mxu0 %v1223
        %1237 = vmatprep.subr.bf16.mxu0 0
        %1238 = vmatpush1.bf16.xpose.msra.mxu0 %v1220
        %1239 = vmatprep.subr.bf16.mxu0 0
        %1240 = vmatpush1.bf16.xpose.msra.mxu0 %v1217
        %1241 = vmatprep.subr.bf16.mxu0 0
        %1242 = vmatpush1.bf16.xpose.msra.mxu0 %v1214
        %1243 = vmatprep.subr.bf16.mxu0 0
        %1244 = vmatpush1.bf16.xpose.msra.mxu0 %v1211
        %1245 = vmatprep.subr.bf16.mxu0 0
        %1246 = vmatpush1.bf16.xpose.msra.mxu0 %v1208
        %1247 = vmatprep.subr.bf16.mxu0 0
        %1248 = vmatpush2.bf16.xpose.msra.mxu0 0
        %1249 = vmatprep.subr.bf16.mxu0 0
        %1250 = vmatpush2.bf16.xpose.msra.mxu0 0
        %1251 = vmatprep.subr.bf16.mxu0 0
        %1252 = vmatpush2.bf16.xpose.msra.mxu0 0
        %1253 = vmatprep.subr.bf16.mxu0 0
        %1254 = vmatpush2.bf16.xpose.msra.mxu0 0
        %1255 = vmatprep.subr.bf16.mxu0 0
        %1256 = vmatpush2.bf16.xpose.msra.mxu0 0
        %1257 = vmatprep.subr.bf16.mxu0 0
        %1258 = vmatpush2.bf16.xpose.msra.mxu0 0
        %1259 = vmatprep.subr.bf16.mxu0 0
        %1260 = vmatpush2.bf16.xpose.msra.mxu0 0
        %1261 = vmatprep.subr.bf16.mxu0 0
        %1262 = vmatpush2.bf16.xpose.msra.mxu0 0
        %1263 = vmatprep.mubr.bf16.mxu0 0
        %1264 = vmatmul.mubr.bf16.gmra.mxu0 %v1205
        %v1265 = vpop.f32.mrf.mxu0
        %v1266 = vadd.f32 %v576, %v1265
        %v1267 = vpop.f32.mrf.mxu0
        %v1268 = vpop.f32.mrf.mxu0
        %v1269 = vpop.f32.mrf.mxu0
        %1270 = vdwg.mxu0
        %s1271 = scalar_lea.vmem [#allocation2], 16
        %v1272 = vld [vmem:[%s1271] sm:$0xff]
        %1273 = vmax.xlane.f32.xlu0 %v1266
        %v1274 = vpop.xlane.xlu0 %1273
        %v1275 = vmax.f32 %v1272, %v1274
        %v1276 = vsub.f32 %v1272, %v1275
        %v1277 = vmul.f32 %v1276, 1.442695
        %v1278 = vpow.pop %v1277
        %1280 = vset.pattern.permute.xlu0 0
        %1281 = vperm.xlu0 %1280, %v1275
        %v1282 = vpop.permute.xlu0 %1281
        %v1284 = vsub.f32 %v1266, %v1282
        %v1285 = vmul.f32 %v1284, 1.442695
        %v1286 = vpow.pop %v1285
        %s1287 = scalar_lea.vmem [#allocation3], 16
        %v1288 = vld [vmem:[%s1287] sm:$0xff]
        %v1289 = vmul.f32 %v1278, %v1288
        %1290 = vadd.xlane.f32.xlu0 %v1286
        %v1291 = vpop.xlane.xlu0 %1290
        %v1292 = vadd.f32 %v1289, %v1291
        %1293 = vst [vmem:[%s1287] sm:$0xff] %v1292
        %1294 = vst [vmem:[%s1271] sm:$0xff] %v1275
        %v1295 = vpack.c.bf16 %v1286, %v1286
        %v1312 = vunpack.c.l.b16 %v1127
        %v1313 = vunpack.c.l.b16 %v1128
        %v1314 = vunpack.c.l.b16 %v1129
        %v1315 = vunpack.c.l.b16 %v1130
        %v1316 = vunpack.c.l.b16 %v1131
        %v1317 = vunpack.c.l.b16 %v1132
        %v1318 = vunpack.c.l.b16 %v1133
        %v1319 = vunpack.c.l.b16 %v1134
        %v1320 = vunpack.c.l.b16 %v1135
        %v1321 = vunpack.c.l.b16 %v1136
        %v1322 = vunpack.c.l.b16 %v1137
        %v1323 = vunpack.c.l.b16 %v1138
        %v1324 = vunpack.c.l.b16 %v1139
        %v1325 = vunpack.c.l.b16 %v1140
        %v1326 = vunpack.c.l.b16 %v1141
        %v1327 = vunpack.c.l.b16 %v1142
        %v1328 = vpack.c.b16 %v1313, %v1312
        %v1329 = vpack.c.b16 %v1315, %v1314
        %v1330 = vpack.c.b16 %v1317, %v1316
        %v1331 = vpack.c.b16 %v1319, %v1318
        %v1332 = vpack.c.b16 %v1321, %v1320
        %v1333 = vpack.c.b16 %v1323, %v1322
        %v1334 = vpack.c.b16 %v1325, %v1324
        %v1335 = vpack.c.b16 %v1327, %v1326
        %1336 = vrot.lane.b32.xlu0 %v1328, 112
        %v1337 = vpop.permute.xlu0 %1336
        %1338 = vrot.lane.b32.xlu0 %v1329, 112
        %v1339 = vpop.permute.xlu0 %1338
        %1340 = vrot.lane.b32.xlu0 %v1330, 112
        %v1341 = vpop.permute.xlu0 %1340
        %1342 = vrot.lane.b32.xlu0 %v1331, 112
        %v1343 = vpop.permute.xlu0 %1342
        %1344 = vrot.lane.b32.xlu0 %v1332, 112
        %v1345 = vpop.permute.xlu0 %1344
        %1346 = vrot.lane.b32.xlu0 %v1333, 112
        %v1347 = vpop.permute.xlu0 %1346
        %1348 = vrot.lane.b32.xlu0 %v1334, 112
        %v1349 = vpop.permute.xlu0 %1348
        %1350 = vrot.lane.b32.xlu0 %v1335, 112
        %v1351 = vpop.permute.xlu0 %1350
        %1360 = vmatprep.subr.bf16.mxu0 0
        %1361 = vmatpush1.bf16.msra.mxu0 %v1351
        %1362 = vmatprep.subr.bf16.mxu0 0
        %1363 = vmatpush1.bf16.msra.mxu0 %v1349
        %1364 = vmatprep.subr.bf16.mxu0 0
        %1365 = vmatpush1.bf16.msra.mxu0 %v1347
        %1366 = vmatprep.subr.bf16.mxu0 0
        %1367 = vmatpush1.bf16.msra.mxu0 %v1345
        %1368 = vmatprep.subr.bf16.mxu0 0
        %1369 = vmatpush1.bf16.msra.mxu0 %v1343
        %1370 = vmatprep.subr.bf16.mxu0 0
        %1371 = vmatpush1.bf16.msra.mxu0 %v1341
        %1372 = vmatprep.subr.bf16.mxu0 0
        %1373 = vmatpush1.bf16.msra.mxu0 %v1339
        %1374 = vmatprep.subr.bf16.mxu0 0
        %1375 = vmatpush1.bf16.msra.mxu0 %v1337
        %1376 = vmatprep.subr.bf16.mxu0 0
        %1377 = vmatpush2.bf16.msra.mxu0 0
        %1378 = vmatprep.subr.bf16.mxu0 0
        %1379 = vmatpush2.bf16.msra.mxu0 0
        %1380 = vmatprep.subr.bf16.mxu0 0
        %1381 = vmatpush2.bf16.msra.mxu0 0
        %1382 = vmatprep.subr.bf16.mxu0 0
        %1383 = vmatpush2.bf16.msra.mxu0 0
        %1384 = vmatprep.subr.bf16.mxu0 0
        %1385 = vmatpush2.bf16.msra.mxu0 0
        %1386 = vmatprep.subr.bf16.mxu0 0
        %1387 = vmatpush2.bf16.msra.mxu0 0
        %1388 = vmatprep.subr.bf16.mxu0 0
        %1389 = vmatpush2.bf16.msra.mxu0 0
        %1390 = vmatprep.subr.bf16.mxu0 0
        %1391 = vmatpush2.bf16.msra.mxu0 0
        %1392 = vmatprep.mubr.bf16.mxu0 0
        %1393 = vmatmul.mubr.bf16.gmra.mxu0 %v1295
        %v1394 = vpop.f32.mrf.mxu0
        %v1395 = vadd.f32 0.0, %v1394
        %v1396 = vpop.f32.mrf.mxu0
        %v1397 = vpop.f32.mrf.mxu0
        %v1398 = vpop.f32.mrf.mxu0
        %1399 = vdwg.mxu0
        %v1400 = vld [vmem:[#allocation4] sm:$0xff]
        %1402 = vset.pattern.permute.xlu0 0
        %1403 = vperm.xlu0 %1402, %v1278
        %v1404 = vpop.permute.xlu0 %1403
        %v1406 = vmul.f32 %v1404, %v1400
        %1408 = vrot.lane.b32.xlu0 %v1395, 16
        %v1409 = vpop.permute.xlu0 %1408
        %v1411 = vadd.f32 %v1406, %v1409
        %vm1412 = vcmask 195712
        %1413 = vst.msk [vmem:[#allocation4] sm:$0xff] %vm1412, %v1411
        %v1414 = vld [vmem:[%s508] sm:$0xf]
        %v1415 = vld [vmem:[%s449] sm:$0xf]
        %v1416 = vld [vmem:[%s449 + $0x4] sm:$0xf]
        %v1417 = vld [vmem:[%s449 + $0x8] sm:$0xf]
        %v1418 = vld [vmem:[%s449 + $0xc] sm:$0xf]
        %v1419 = vld [vmem:[%s449 + $0x10] sm:$0xf]
        %v1420 = vld [vmem:[%s449 + $0x14] sm:$0xf]
        %v1421 = vld [vmem:[%s449 + $0x18] sm:$0xf]
        %v1422 = vld [vmem:[%s449 + $0x1c] sm:$0xf]
        %v1423 = vld [vmem:[%s449 + $0x20] sm:$0xf]
        %v1424 = vld [vmem:[%s449 + $0x24] sm:$0xf]
        %v1425 = vld [vmem:[%s449 + $0x28] sm:$0xf]
        %v1426 = vld [vmem:[%s449 + $0x2c] sm:$0xf]
        %v1427 = vld [vmem:[%s449 + $0x30] sm:$0xf]
        %v1428 = vld [vmem:[%s449 + $0x34] sm:$0xf]
        %v1429 = vld [vmem:[%s449 + $0x38] sm:$0xf]
        %v1430 = vld [vmem:[%s449 + $0x3c] sm:$0xf]
        %v1431 = vld [vmem:[%s456] sm:$0xf]
        %v1432 = vld [vmem:[%s456 + $0x4] sm:$0xf]
        %v1433 = vld [vmem:[%s456 + $0x8] sm:$0xf]
        %v1434 = vld [vmem:[%s456 + $0xc] sm:$0xf]
        %v1435 = vld [vmem:[%s456 + $0x10] sm:$0xf]
        %v1436 = vld [vmem:[%s456 + $0x14] sm:$0xf]
        %v1437 = vld [vmem:[%s456 + $0x18] sm:$0xf]
        %v1438 = vld [vmem:[%s456 + $0x1c] sm:$0xf]
        %v1439 = vld [vmem:[%s456 + $0x20] sm:$0xf]
        %v1440 = vld [vmem:[%s456 + $0x24] sm:$0xf]
        %v1441 = vld [vmem:[%s456 + $0x28] sm:$0xf]
        %v1442 = vld [vmem:[%s456 + $0x2c] sm:$0xf]
        %v1443 = vld [vmem:[%s456 + $0x30] sm:$0xf]
        %v1444 = vld [vmem:[%s456 + $0x34] sm:$0xf]
        %v1445 = vld [vmem:[%s456 + $0x38] sm:$0xf]
        %v1446 = vld [vmem:[%s456 + $0x3c] sm:$0xf]
        %v1448 = vunpack.c.l.b16 %v1414
        %v1449 = vpack.c.b16 %v1448, %v1448
        %1450 = vrot.lane.b32.xlu0 %v1449, 104
        %v1451 = vpop.permute.xlu0 %1450
        %v1468 = vunpack.c.l.b16 %v1415
        %v1469 = vunpack.c.l.b16 %v1416
        %v1470 = vunpack.c.l.b16 %v1417
        %v1471 = vunpack.c.l.b16 %v1418
        %v1472 = vunpack.c.l.b16 %v1419
        %v1473 = vunpack.c.l.b16 %v1420
        %v1474 = vunpack.c.l.b16 %v1421
        %v1475 = vunpack.c.l.b16 %v1422
        %v1476 = vunpack.c.l.b16 %v1423
        %v1477 = vunpack.c.l.b16 %v1424
        %v1478 = vunpack.c.l.b16 %v1425
        %v1479 = vunpack.c.l.b16 %v1426
        %v1480 = vunpack.c.l.b16 %v1427
        %v1481 = vunpack.c.l.b16 %v1428
        %v1482 = vunpack.c.l.b16 %v1429
        %v1483 = vunpack.c.l.b16 %v1430
        %v1484 = vpack.c.b16 %v1469, %v1468
        %v1485 = vpack.c.b16 %v1471, %v1470
        %v1486 = vpack.c.b16 %v1473, %v1472
        %v1487 = vpack.c.b16 %v1475, %v1474
        %v1488 = vpack.c.b16 %v1477, %v1476
        %v1489 = vpack.c.b16 %v1479, %v1478
        %v1490 = vpack.c.b16 %v1481, %v1480
        %v1491 = vpack.c.b16 %v1483, %v1482
        %1492 = vrot.lane.b32.xlu0 %v1484, 104
        %v1493 = vpop.permute.xlu0 %1492
        %1494 = vrot.lane.b32.xlu0 %v1485, 104
        %v1495 = vpop.permute.xlu0 %1494
        %1496 = vrot.lane.b32.xlu0 %v1486, 104
        %v1497 = vpop.permute.xlu0 %1496
        %1498 = vrot.lane.b32.xlu0 %v1487, 104
        %v1499 = vpop.permute.xlu0 %1498
        %1500 = vrot.lane.b32.xlu0 %v1488, 104
        %v1501 = vpop.permute.xlu0 %1500
        %1502 = vrot.lane.b32.xlu0 %v1489, 104
        %v1503 = vpop.permute.xlu0 %1502
        %1504 = vrot.lane.b32.xlu0 %v1490, 104
        %v1505 = vpop.permute.xlu0 %1504
        %1506 = vrot.lane.b32.xlu0 %v1491, 104
        %v1507 = vpop.permute.xlu0 %1506
        %v1509 = vsel %vm618, %v1451, 0
        %v1512 = vsel %vm618, %v1493, 0
        %v1515 = vsel %vm618, %v1495, 0
        %v1518 = vsel %vm618, %v1497, 0
        %v1521 = vsel %vm618, %v1499, 0
        %v1524 = vsel %vm618, %v1501, 0
        %v1527 = vsel %vm618, %v1503, 0
        %v1530 = vsel %vm618, %v1505, 0
        %v1533 = vsel %vm618, %v1507, 0
        %1535 = vmatprep.subr.bf16.mxu0 0
        %1536 = vmatpush1.bf16.xpose.msra.mxu0 %v1533
        %1537 = vmatprep.subr.bf16.mxu0 0
        %1538 = vmatpush1.bf16.xpose.msra.mxu0 %v1530
        %1539 = vmatprep.subr.bf16.mxu0 0
        %1540 = vmatpush1.bf16.xpose.msra.mxu0 %v1527
        %1541 = vmatprep.subr.bf16.mxu0 0
        %1542 = vmatpush1.bf16.xpose.msra.mxu0 %v1524
        %1543 = vmatprep.subr.bf16.mxu0 0
        %1544 = vmatpush1.bf16.xpose.msra.mxu0 %v1521
        %1545 = vmatprep.subr.bf16.mxu0 0
        %1546 = vmatpush1.bf16.xpose.msra.mxu0 %v1518
        %1547 = vmatprep.subr.bf16.mxu0 0
        %1548 = vmatpush1.bf16.xpose.msra.mxu0 %v1515
        %1549 = vmatprep.subr.bf16.mxu0 0
        %1550 = vmatpush1.bf16.xpose.msra.mxu0 %v1512
        %1551 = vmatprep.subr.bf16.mxu0 0
        %1552 = vmatpush2.bf16.xpose.msra.mxu0 0
        %1553 = vmatprep.subr.bf16.mxu0 0
        %1554 = vmatpush2.bf16.xpose.msra.mxu0 0
        %1555 = vmatprep.subr.bf16.mxu0 0
        %1556 = vmatpush2.bf16.xpose.msra.mxu0 0
        %1557 = vmatprep.subr.bf16.mxu0 0
        %1558 = vmatpush2.bf16.xpose.msra.mxu0 0
        %1559 = vmatprep.subr.bf16.mxu0 0
        %1560 = vmatpush2.bf16.xpose.msra.mxu0 0
        %1561 = vmatprep.subr.bf16.mxu0 0
        %1562 = vmatpush2.bf16.xpose.msra.mxu0 0
        %1563 = vmatprep.subr.bf16.mxu0 0
        %1564 = vmatpush2.bf16.xpose.msra.mxu0 0
        %1565 = vmatprep.subr.bf16.mxu0 0
        %1566 = vmatpush2.bf16.xpose.msra.mxu0 0
        %1567 = vmatprep.mubr.bf16.mxu0 0
        %1568 = vmatmul.mubr.bf16.gmra.mxu0 %v1509
        %v1569 = vpop.f32.mrf.mxu0
        %v1570 = vadd.f32 %v576, %v1569
        %v1571 = vpop.f32.mrf.mxu0
        %v1572 = vpop.f32.mrf.mxu0
        %v1573 = vpop.f32.mrf.mxu0
        %1574 = vdwg.mxu0
        %s1575 = scalar_lea.vmem [#allocation2], 24
        %v1576 = vld [vmem:[%s1575] sm:$0xff]
        %1577 = vmax.xlane.f32.xlu0 %v1570
        %v1578 = vpop.xlane.xlu0 %1577
        %v1579 = vmax.f32 %v1576, %v1578
        %v1580 = vsub.f32 %v1576, %v1579
        %v1581 = vmul.f32 %v1580, 1.442695
        %v1582 = vpow.pop %v1581
        %1584 = vset.pattern.permute.xlu0 0
        %1585 = vperm.xlu0 %1584, %v1579
        %v1586 = vpop.permute.xlu0 %1585
        %v1588 = vsub.f32 %v1570, %v1586
        %v1589 = vmul.f32 %v1588, 1.442695
        %v1590 = vpow.pop %v1589
        %s1591 = scalar_lea.vmem [#allocation3], 24
        %v1592 = vld [vmem:[%s1591] sm:$0xff]
        %v1593 = vmul.f32 %v1582, %v1592
        %1594 = vadd.xlane.f32.xlu0 %v1590
        %v1595 = vpop.xlane.xlu0 %1594
        %v1596 = vadd.f32 %v1593, %v1595
        %1597 = vst [vmem:[%s1591] sm:$0xff] %v1596
        %1598 = vst [vmem:[%s1575] sm:$0xff] %v1579
        %v1599 = vpack.c.bf16 %v1590, %v1590
        %v1616 = vunpack.c.l.b16 %v1431
        %v1617 = vunpack.c.l.b16 %v1432
        %v1618 = vunpack.c.l.b16 %v1433
        %v1619 = vunpack.c.l.b16 %v1434
        %v1620 = vunpack.c.l.b16 %v1435
        %v1621 = vunpack.c.l.b16 %v1436
        %v1622 = vunpack.c.l.b16 %v1437
        %v1623 = vunpack.c.l.b16 %v1438
        %v1624 = vunpack.c.l.b16 %v1439
        %v1625 = vunpack.c.l.b16 %v1440
        %v1626 = vunpack.c.l.b16 %v1441
        %v1627 = vunpack.c.l.b16 %v1442
        %v1628 = vunpack.c.l.b16 %v1443
        %v1629 = vunpack.c.l.b16 %v1444
        %v1630 = vunpack.c.l.b16 %v1445
        %v1631 = vunpack.c.l.b16 %v1446
        %v1632 = vpack.c.b16 %v1617, %v1616
        %v1633 = vpack.c.b16 %v1619, %v1618
        %v1634 = vpack.c.b16 %v1621, %v1620
        %v1635 = vpack.c.b16 %v1623, %v1622
        %v1636 = vpack.c.b16 %v1625, %v1624
        %v1637 = vpack.c.b16 %v1627, %v1626
        %v1638 = vpack.c.b16 %v1629, %v1628
        %v1639 = vpack.c.b16 %v1631, %v1630
        %1640 = vrot.lane.b32.xlu0 %v1632, 104
        %v1641 = vpop.permute.xlu0 %1640
        %1642 = vrot.lane.b32.xlu0 %v1633, 104
        %v1643 = vpop.permute.xlu0 %1642
        %1644 = vrot.lane.b32.xlu0 %v1634, 104
        %v1645 = vpop.permute.xlu0 %1644
        %1646 = vrot.lane.b32.xlu0 %v1635, 104
        %v1647 = vpop.permute.xlu0 %1646
        %1648 = vrot.lane.b32.xlu0 %v1636, 104
        %v1649 = vpop.permute.xlu0 %1648
        %1650 = vrot.lane.b32.xlu0 %v1637, 104
        %v1651 = vpop.permute.xlu0 %1650
        %1652 = vrot.lane.b32.xlu0 %v1638, 104
        %v1653 = vpop.permute.xlu0 %1652
        %1654 = vrot.lane.b32.xlu0 %v1639, 104
        %v1655 = vpop.permute.xlu0 %1654
        %1664 = vmatprep.subr.bf16.mxu0 0
        %1665 = vmatpush1.bf16.msra.mxu0 %v1655
        %1666 = vmatprep.subr.bf16.mxu0 0
        %1667 = vmatpush1.bf16.msra.mxu0 %v1653
        %1668 = vmatprep.subr.bf16.mxu0 0
        %1669 = vmatpush1.bf16.msra.mxu0 %v1651
        %1670 = vmatprep.subr.bf16.mxu0 0
        %1671 = vmatpush1.bf16.msra.mxu0 %v1649
        %1672 = vmatprep.subr.bf16.mxu0 0
        %1673 = vmatpush1.bf16.msra.mxu0 %v1647
        %1674 = vmatprep.subr.bf16.mxu0 0
        %1675 = vmatpush1.bf16.msra.mxu0 %v1645
        %1676 = vmatprep.subr.bf16.mxu0 0
        %1677 = vmatpush1.bf16.msra.mxu0 %v1643
        %1678 = vmatprep.subr.bf16.mxu0 0
        %1679 = vmatpush1.bf16.msra.mxu0 %v1641
        %1680 = vmatprep.subr.bf16.mxu0 0
        %1681 = vmatpush2.bf16.msra.mxu0 0
        %1682 = vmatprep.subr.bf16.mxu0 0
        %1683 = vmatpush2.bf16.msra.mxu0 0
        %1684 = vmatprep.subr.bf16.mxu0 0
        %1685 = vmatpush2.bf16.msra.mxu0 0
        %1686 = vmatprep.subr.bf16.mxu0 0
        %1687 = vmatpush2.bf16.msra.mxu0 0
        %1688 = vmatprep.subr.bf16.mxu0 0
        %1689 = vmatpush2.bf16.msra.mxu0 0
        %1690 = vmatprep.subr.bf16.mxu0 0
        %1691 = vmatpush2.bf16.msra.mxu0 0
        %1692 = vmatprep.subr.bf16.mxu0 0
        %1693 = vmatpush2.bf16.msra.mxu0 0
        %1694 = vmatprep.subr.bf16.mxu0 0
        %1695 = vmatpush2.bf16.msra.mxu0 0
        %1696 = vmatprep.mubr.bf16.mxu0 0
        %1697 = vmatmul.mubr.bf16.gmra.mxu0 %v1599
        %v1698 = vpop.f32.mrf.mxu0
        %v1699 = vadd.f32 0.0, %v1698
        %v1700 = vpop.f32.mrf.mxu0
        %v1701 = vpop.f32.mrf.mxu0
        %v1702 = vpop.f32.mrf.mxu0
        %1703 = vdwg.mxu0
        %v1704 = vld [vmem:[#allocation4] sm:$0xff]
        %1706 = vset.pattern.permute.xlu0 0
        %1707 = vperm.xlu0 %1706, %v1582
        %v1708 = vpop.permute.xlu0 %1707
        %v1710 = vmul.f32 %v1708, %v1704
        %1712 = vrot.lane.b32.xlu0 %v1699, 24
        %v1713 = vpop.permute.xlu0 %1712
        %v1715 = vadd.f32 %v1710, %v1713
        %vm1716 = vcmask 261312
        %1717 = vst.msk [vmem:[#allocation4] sm:$0xff] %vm1716, %v1715
        // Predicated region
        $region123: #{transformer_forward.33} parent=109 // pred_check
          %p1718 = pneg %p525
        $region124: #{transformer_forward.33} parent=109 // pred_check_branch
          %1720 = sbr.rel (%p1718) target = $region126
        $region125: #{transformer_forward.33} parent=109 // pred_region
          %vm1721 = vcmask 1043712
          %1722 = vst.msk [vmem:[%s523] sm:$0xf] %vm1721, 0
          %v1723 = vld [vmem:[#allocation3] sm:$0xff]
          %v1724 = vrcp.pop %v1723
          %v1725 = vld [vmem:[#allocation4] sm:$0xff]
          %1727 = vset.pattern.permute.xlu0 0
          %1728 = vperm.xlu0 %1727, %v1724
          %v1729 = vpop.permute.xlu0 %1728
          %v1731 = vmul.f32 %v1725, %v1729
          %v1732 = vpack.c.bf16 %v1731, %v1731
          %vm1733 = vcmask 60416
          %1734 = vst.msk [vmem:[%s523] sm:$0xf] %vm1733, %v1732
          %v1735 = vld [vmem:[%s983] sm:$0xff]
          %v1736 = vrcp.pop %v1735
          %v1737 = vld [vmem:[#allocation4] sm:$0xff]
          %1739 = vset.pattern.permute.xlu0 0
          %1740 = vperm.xlu0 %1739, %v1736
          %v1741 = vpop.permute.xlu0 %1740
          %v1743 = vmul.f32 %v1737, %v1741
          %v1744 = vpack.c.bf16 %v1743, %v1743
          %vm1745 = vcmask 126016
          %1746 = vst.msk [vmem:[%s523] sm:$0xf] %vm1745, %v1744
          %v1747 = vld [vmem:[%s1287] sm:$0xff]
          %v1748 = vrcp.pop %v1747
          %v1749 = vld [vmem:[#allocation4] sm:$0xff]
          %1751 = vset.pattern.permute.xlu0 0
          %1752 = vperm.xlu0 %1751, %v1748
          %v1753 = vpop.permute.xlu0 %1752
          %v1755 = vmul.f32 %v1749, %v1753
          %v1756 = vpack.c.bf16 %v1755, %v1755
          %vm1757 = vcmask 191616
          %1758 = vst.msk [vmem:[%s523] sm:$0xf] %vm1757, %v1756
          %v1759 = vld [vmem:[%s1591] sm:$0xff]
          %v1760 = vrcp.pop %v1759
          %v1761 = vld [vmem:[#allocation4] sm:$0xff]
          %1763 = vset.pattern.permute.xlu0 0
          %1764 = vperm.xlu0 %1763, %v1760
          %v1765 = vpop.permute.xlu0 %1764
          %v1767 = vmul.f32 %v1761, %v1765
          %v1768 = vpack.c.bf16 %v1767, %v1767
          %vm1769 = vcmask 257216
          %1770 = vst.msk [vmem:[%s523] sm:$0xf] %vm1769, %v1768
        $region126: #{transformer_forward.33} parent=109 // pred_fallthru
          _
        %p1771 = scmp.lt.s32.totalorder %s20, 1
        %s1772 = scalar_select %p1771, %s20, 1
        %p1773 = scmp.lt.s32.totalorder %s21, 0
        %s1774 = scalar_select %p1773, %s21, 0
        %s1775 = sadd.s32 %s1774, %s1772
        %s1776 = smul.addr %s1775, 4
        %s1777 = scalar_lea.vmem %s4, %s1776
        // Predicated region
        $region127: #{transformer_forward.33} parent=109 // pred_check
          %p1778 = pneg %p166
        $region128: #{transformer_forward.33} parent=109 // pred_check_branch
          %1780 = sbr.rel (%p1778) target = $region130
        $region129: #{transformer_forward.33} parent=109 // pred_region
          _
        $region130: #{transformer_forward.33} parent=109 // pred_fallthru
          _
      $region110: #{transformer_forward.33} parent=5 // pred_fallthru
        _
      %p1781 = scmp.le.s32.totalorder 2, %s10
      // Predicated region
      $region131: #{transformer_forward.33} parent=5 // pred_check
        %p1782 = pneg %p1781
      $region132: #{transformer_forward.33} parent=5 // pred_check_branch
        %1784 = sbr.rel (%p1782) target = $region134
      $region133: #{transformer_forward.33} parent=5 // pred_region
        %s1785 = ssub.s32 %s10, 2
        // Predicated region
        $region135: #{transformer_forward.33} parent=133 // pred_check
          %p1786 = pneg %p172
        $region136: #{transformer_forward.33} parent=133 // pred_check_branch
          %1788 = sbr.rel (%p1786) target = $region138
        $region137: #{transformer_forward.33} parent=133 // pred_region
          %p1789 = scmp.lt.s32.totalorder %s23, 1
          %s1790 = scalar_select %p1789, %s23, 1
          %p1791 = scmp.lt.s32.totalorder %s24, 0
          %s1792 = scalar_select %p1791, %s24, 0
          %s1793 = sadd.s32 %s1792, %s1790
          %s1794 = smul.addr %s1793, 4
          %s1795 = scalar_lea.vmem %s4, %s1794
        $region138: #{transformer_forward.33} parent=133 // pred_fallthru
          _
      $region134: #{transformer_forward.33} parent=5 // pred_fallthru
        _
    $region6: #{transformer_forward.33} parent=1 // loop_footer
      %s14 = sadd.s32 1, %s10
    $region7: #{transformer_forward.33} parent=1 // loop_footer_branch
      %9 = sbr.rel target = $region3
    $region8: #{transformer_forward.33} parent=1 // loop_exit
      _

// kernel: transformer_forward.61
$region0: #{transformer_forward.61}
  #allocation0 [shape = 'u32[]', space=smem, size = 0x4, offset = 0x4, fixed_abs, tag = 'smem constant byte address 0x4 - core index']
  #allocation1 [shape = 'u32[144,128]{1,0:T(1,128)}', space=vmem, size = 0x12000, scoped, tag = 'internal scratch']
  #allocation2 [shape = 'f32[16,128]{1,0:T(8,128)}', space=vmem, size = 0x2000, scoped, tag = 'scratch operand']
  %s0 = inlined_call_operand.vmem [shape: bf16[16,128], index: 0, kind: input, shape index: {}]
  %s1 = inlined_call_operand.vmem [shape: bf16[128,128], index: 1, kind: input, shape index: {}]
  %s2 = inlined_call_operand.vmem [shape: f32[1,128], index: 2, kind: input, shape index: {}]
  %s3 = inlined_call_operand.hbm [shape: f32[16,128], index: 3, kind: output, shape index: {}]
  %s4 = sld [smem:[#allocation0]]
  $region30: #{transformer_forward.61} parent=0
    _
  %s6 = ssub.s32 1, %s4
  %s7 = scalar_select 0, %s6, %s4
  $region1: #{transformer_forward.61} parent=0
    #allocation3 [shape = 'u8[8192]{0}', space=vmem, size = 0x2000, scoped, tag = 'output window, operand 0, single buffered']
    #allocation4 [shape = 's32[1]{0}', space=sflag, size = 0x4, scoped, tag = 'scoped memory for transformer_forward.61']
    %8 = vsyncpa [#allocation4], 0
    // Predicated region
    $region2: #{transformer_forward.61} parent=1 // pred_check
      _
    $region3: #{transformer_forward.61} parent=1 // pred_check_branch
      %10 = sbr.rel (0) target = $region5
    $region4: #{transformer_forward.61} parent=1 // pred_region
      _
    $region5: #{transformer_forward.61} parent=1 // pred_fallthru
      _
    // Predicated region
    $region6: #{transformer_forward.61} parent=1 // pred_check
      _
    $region7: #{transformer_forward.61} parent=1 // pred_check_branch
      %12 = sbr.rel (0) target = $region9
    $region8: #{transformer_forward.61} parent=1 // pred_region
      _
    $region9: #{transformer_forward.61} parent=1 // pred_fallthru
      _
    // Predicated region
    $region10: #{transformer_forward.61} parent=1 // pred_check
      _
    $region11: #{transformer_forward.61} parent=1 // pred_check_branch
      %14 = sbr.rel (0) target = $region13
    $region12: #{transformer_forward.61} parent=1 // pred_region
      _
    $region13: #{transformer_forward.61} parent=1 // pred_fallthru
      _
    %p16 = scmp.eq.s32.totalorder 0, 0
    // Predicated region
    $region14: #{transformer_forward.61} parent=1 // pred_check
      %p17 = pneg %p16
    $region15: #{transformer_forward.61} parent=1 // pred_check_branch
      %19 = sbr.rel (%p17) target = $region17
    $region16: #{transformer_forward.61} parent=1 // pred_region
      %20 = vst [vmem:[#allocation2] sm:$0xff] 0.0
      %21 = vst [vmem:[#allocation2 + $0x8] sm:$0xff] 0.0
    $region17: #{transformer_forward.61} parent=1 // pred_fallthru
      _
    %v22 = vld [vmem:[#allocation2] sm:$0xff]
    %v23 = vld [vmem:[#allocation2 + $0x8] sm:$0xff]
    %v24 = vld [vmem:[%s0] sm:$0xf]
    %v25 = vld [vmem:[%s0 + $0x4] sm:$0xf]
    %v26 = vld [vmem:[%s1] sm:$0xf]
    %v27 = vld [vmem:[%s1 + $0x4] sm:$0xf]
    %v28 = vld [vmem:[%s1 + $0x8] sm:$0xf]
    %v29 = vld [vmem:[%s1 + $0xc] sm:$0xf]
    %v30 = vld [vmem:[%s1 + $0x10] sm:$0xf]
    %v31 = vld [vmem:[%s1 + $0x14] sm:$0xf]
    %v32 = vld [vmem:[%s1 + $0x18] sm:$0xf]
    %v33 = vld [vmem:[%s1 + $0x1c] sm:$0xf]
    %v34 = vld [vmem:[%s1 + $0x20] sm:$0xf]
    %v35 = vld [vmem:[%s1 + $0x24] sm:$0xf]
    %v36 = vld [vmem:[%s1 + $0x28] sm:$0xf]
    %v37 = vld [vmem:[%s1 + $0x2c] sm:$0xf]
    %v38 = vld [vmem:[%s1 + $0x30] sm:$0xf]
    %v39 = vld [vmem:[%s1 + $0x34] sm:$0xf]
    %v40 = vld [vmem:[%s1 + $0x38] sm:$0xf]
    %v41 = vld [vmem:[%s1 + $0x3c] sm:$0xf]
    %v44 = vunpack.c.l.b16 %v24
    %v45 = vunpack.c.l.b16 %v25
    %v46 = vpack.c.b16 %v45, %v44
    %v64 = vunpack.c.l.b16 %v26
    %v65 = vunpack.c.l.b16 %v27
    %v66 = vunpack.c.l.b16 %v28
    %v67 = vunpack.c.l.b16 %v29
    %v68 = vunpack.c.l.b16 %v30
    %v69 = vunpack.c.l.b16 %v31
    %v70 = vunpack.c.l.b16 %v32
    %v71 = vunpack.c.l.b16 %v33
    %v72 = vunpack.c.l.b16 %v34
    %v73 = vunpack.c.l.b16 %v35
    %v74 = vunpack.c.l.b16 %v36
    %v75 = vunpack.c.l.b16 %v37
    %v76 = vunpack.c.l.b16 %v38
    %v77 = vunpack.c.l.b16 %v39
    %v78 = vunpack.c.l.b16 %v40
    %v79 = vunpack.c.l.b16 %v41
    %v80 = vpack.c.b16 %v65, %v64
    %v81 = vpack.c.b16 %v67, %v66
    %v82 = vpack.c.b16 %v69, %v68
    %v83 = vpack.c.b16 %v71, %v70
    %v84 = vpack.c.b16 %v73, %v72
    %v85 = vpack.c.b16 %v75, %v74
    %v86 = vpack.c.b16 %v77, %v76
    %v87 = vpack.c.b16 %v79, %v78
    %96 = vmatprep.subr.bf16.mxu0 0
    %97 = vmatpush1.bf16.xpose.msra.mxu0 %v87
    %98 = vmatprep.subr.bf16.mxu0 0
    %99 = vmatpush1.bf16.xpose.msra.mxu0 %v86
    %100 = vmatprep.subr.bf16.mxu0 0
    %101 = vmatpush1.bf16.xpose.msra.mxu0 %v85
    %102 = vmatprep.subr.bf16.mxu0 0
    %103 = vmatpush1.bf16.xpose.msra.mxu0 %v84
    %104 = vmatprep.subr.bf16.mxu0 0
    %105 = vmatpush1.bf16.xpose.msra.mxu0 %v83
    %106 = vmatprep.subr.bf16.mxu0 0
    %107 = vmatpush1.bf16.xpose.msra.mxu0 %v82
    %108 = vmatprep.subr.bf16.mxu0 0
    %109 = vmatpush1.bf16.xpose.msra.mxu0 %v81
    %110 = vmatprep.subr.bf16.mxu0 0
    %111 = vmatpush1.bf16.xpose.msra.mxu0 %v80
    %112 = vmatprep.subr.bf16.mxu0 0
    %113 = vmatpush2.bf16.xpose.msra.mxu0 0
    %114 = vmatprep.subr.bf16.mxu0 0
    %115 = vmatpush2.bf16.xpose.msra.mxu0 0
    %116 = vmatprep.subr.bf16.mxu0 0
    %117 = vmatpush2.bf16.xpose.msra.mxu0 0
    %118 = vmatprep.subr.bf16.mxu0 0
    %119 = vmatpush2.bf16.xpose.msra.mxu0 0
    %120 = vmatprep.subr.bf16.mxu0 0
    %121 = vmatpush2.bf16.xpose.msra.mxu0 0
    %122 = vmatprep.subr.bf16.mxu0 0
    %123 = vmatpush2.bf16.xpose.msra.mxu0 0
    %124 = vmatprep.subr.bf16.mxu0 0
    %125 = vmatpush2.bf16.xpose.msra.mxu0 0
    %126 = vmatprep.subr.bf16.mxu0 0
    %127 = vmatpush2.bf16.xpose.msra.mxu0 0
    %128 = vmatprep.mubr.bf16.mxu0 0
    %129 = vmatmul.mubr.bf16.gmra.mxu0 %v46
    %v130 = vpop.f32.mrf.mxu0
    %v131 = vadd.f32 0.0, %v130
    %v132 = vpop.f32.mrf.mxu0
    %v133 = vpop.f32.mrf.mxu0
    %v134 = vadd.f32 0.0, %v133
    %v135 = vpop.f32.mrf.mxu0
    %136 = vdwg.mxu0
    %v137 = vadd.f32 %v22, %v131
    %v138 = vadd.f32 %v23, %v134
    %139 = vst [vmem:[#allocation2] sm:$0xff] %v137
    %140 = vst [vmem:[#allocation2 + $0x8] sm:$0xff] %v138
    // Predicated region
    $region18: #{transformer_forward.61} parent=1 // pred_check
      %p141 = pneg %p16
    $region19: #{transformer_forward.61} parent=1 // pred_check_branch
      %143 = sbr.rel (%p141) target = $region21
    $region20: #{transformer_forward.61} parent=1 // pred_region
      %v144 = vld [vmem:[#allocation2] sm:$0xff]
      %v145 = vld [vmem:[#allocation2 + $0x8] sm:$0xff]
      %v146 = vld [vmem:[%s2] sm:$0x1]
      %v148 = vlaneseq
      %v149 = vshrl.u32 %v148, 7
      %v150 = vsub.s32 0, %v149
      %v151 = vrot.slane %v146, %v150
      %v153 = vadd.f32 %v144, %v151
      %v154 = vadd.f32 %v145, %v151
      %v155 = vmul.f32 %v153, 0.17677669
      %v156 = vmul.f32 %v154, 0.17677669
      %157 = vst [vmem:[#allocation3] sm:$0xff] %v155
      %158 = vst [vmem:[#allocation3 + $0x8] sm:$0xff] %v156
    $region21: #{transformer_forward.61} parent=1 // pred_fallthru
      _
    // Predicated region
    $region22: #{transformer_forward.61} parent=1 // pred_check
      _
    $region23: #{transformer_forward.61} parent=1 // pred_check_branch
      %160 = sbr.rel (0) target = $region25
    $region24: #{transformer_forward.61} parent=1 // pred_region
      %s162 = ssub.s32 256, 256
      %163 = vsyncadd [#allocation4], %s162
      %s164 = sshll.u32 [#allocation3], 4
      %s165 = int_to_ptr.vmem [resolvable:$true] %s164
      %170 = dma.vmem_to_hbm [thread:$0]  %s165, 256, %s3, [#allocation4], 128, 128, 8
    $region25: #{transformer_forward.61} parent=1 // pred_fallthru
      _
    // Predicated region
    $region26: #{transformer_forward.61} parent=1 // pred_check
      _
    $region27: #{transformer_forward.61} parent=1 // pred_check_branch
      %172 = sbr.rel (0) target = $region29
    $region28: #{transformer_forward.61} parent=1 // pred_region
      %173 = dma.done [#allocation4], 256
    $region29: #{transformer_forward.61} parent=1 // pred_fallthru
      _
    %174 = vsyncpa [#allocation4], 1

// kernel: transformer_forward.48
$region0: #{transformer_forward.48}
  #allocation0 [shape = 'u32[]', space=smem, size = 0x4, offset = 0x4, fixed_abs, tag = 'smem constant byte address 0x4 - core index']
  #allocation1 [shape = 'u32[144,128]{1,0:T(1,128)}', space=vmem, size = 0x12000, scoped, tag = 'internal scratch']
  #allocation2 [shape = 'f32[4,8,128]{2,1,0:T(8,128)}', space=vmem, size = 0x4000, scoped, tag = 'scratch operand']
  #allocation3 [shape = 'f32[4,8,128]{2,1,0:T(8,128)}', space=vmem, size = 0x4000, scoped, tag = 'scratch operand']
  #allocation4 [shape = 'f32[8,128]{1,0:T(8,128)}', space=vmem, size = 0x1000, scoped, tag = 'scratch operand']
  %s0 = inlined_call_operand.vmem [shape: bf16[2,8,128], index: 0, kind: input, shape index: {}]
  %s1 = inlined_call_operand.vmem [shape: bf16[2,128,256], index: 1, kind: input, shape index: {}, may-alias: {1,2}]
  %s2 = inlined_call_operand.vmem [shape: bf16[2,128,256], index: 2, kind: input, shape index: {}, may-alias: {1,2}]
  %s3 = inlined_call_operand.vmem [shape: f32[2,1,128], index: 3, kind: input, shape index: {}]
  %s4 = inlined_call_operand.vmem [shape: bf16[2,8,128], index: 4, kind: output, shape index: {}]
  %s5 = sld [smem:[#allocation0]]
  $region139: #{transformer_forward.48} parent=0
    _
  %s7 = ssub.s32 1, %s5
  %s8 = scalar_select 0, %s7, %s5
  $region1: #{transformer_forward.48} parent=0
    #allocation5 [shape = 'u8[65536]{0}', space=vmem, size = 0x10000, scoped, tag = 'input window, operand 1']
    #allocation6 [shape = 'u8[65536]{0}', space=vmem, size = 0x10000, scoped, tag = 'input window, operand 2']
    loop: start=0, step=1, limit=4
    $region2: #{transformer_forward.48} parent=1 // loop_pre_header
      _
    $region3: #{transformer_forward.48} parent=1 // loop_header
      %s10 = sphi 0, %s14
      %p11 = scmp.ge.s32.totalorder %s10, 4
      %s17 = sphi 0, %s36
      %s18 = sphi 0, %s32
      %s19 = sphi 0, %s28
      %s20 = sphi 0, %s17
      %s21 = sphi 0, %s18
      %s22 = sphi 0, %s19
      %s23 = sphi 0, %s20
      %s24 = sphi 0, %s21
      %s25 = sphi 0, %s22
      %s41 = sphi 0, %s43
      %s44 = sphi 0, %s41
      %s45 = sphi 0, %s44
      %s61 = sphi 0, %s45
      %s69 = sphi 0, %s71
      %s72 = sphi 0, %s69
      %s73 = sphi 0, %s72
      %s89 = sphi 0, %s73
      %s97 = sphi 0, %s99
      %s100 = sphi 0, %s97
      %s101 = sphi 0, %s100
      %s117 = sphi 0, %s101
      %s125 = sphi 0, %s127
      %s128 = sphi 0, %s125
      %s129 = sphi 0, %s128
      %s145 = sphi 0, %s129
      %s153 = sphi 0, %s155
      %s156 = sphi 0, %s153
      %s157 = sphi 0, %s156
      %s173 = sphi 0, %s157
    $region4: #{transformer_forward.48} parent=1 // loop_header_branch
      %13 = sbr.rel (%p11) target = $region8
    $region5: #{transformer_forward.48} parent=1 // loop_body
      %s15 = ssub.s32 %s10, 1
      %s16 = ssub.s32 %s10, 2
      %s26 = sadd.s32 1, %s19
      %p27 = scmp.ge.s32.totalorder %s26, 1
      %s28 = scalar_select %p27, 0, %s26
      %s29 = sadd.s32 1, %s18
      %s30 = scalar_select %p27, %s29, %s18
      %p31 = scmp.ge.s32.totalorder %s30, 1
      %s32 = scalar_select %p31, 0, %s30
      %s33 = sadd.s32 1, %s17
      %s34 = scalar_select %p31, %s33, %s17
      %p35 = scmp.ge.s32.totalorder %s34, 2
      %s36 = scalar_select %p35, 0, %s34
      %s37 = ssub.s32 %s17, %s36
      %s38 = ssub.s32 %s18, %s32
      %s39 = sor.u32 %s37, %s38
      %p40 = scmp.eq.s32.totalorder %s39, 0
      %s42 = sadd.s32 %s41, 1
      %s43 = scalar_select %p40, %s41, %s42
      %p46 = pneg %p40
      %p47 = scmp.eq.s32.totalorder %s10, 1
      %p48 = por %p46, %p47
      %p49 = scmp.ne.s32.totalorder %s41, %s44
      %p50 = scmp.eq.s32.totalorder %s10, 0
      %p51 = por %p49, %p50
      %p52 = scmp.ne.s32.totalorder %s41, %s44
      %p53 = scmp.eq.s32.totalorder %s15, 1
      %p54 = por %p52, %p53
      %p55 = scmp.ne.s32.totalorder %s44, %s45
      %p56 = scmp.eq.s32.totalorder %s15, 0
      %p57 = por %p55, %p56
      %p58 = scmp.ne.s32.totalorder %s44, %s45
      %p59 = scmp.eq.s32.totalorder %s16, 1
      %p60 = por %p58, %p59
      %p62 = scmp.ne.s32.totalorder %s45, %s61
      %p63 = scmp.eq.s32.totalorder %s16, 0
      %p64 = por %p62, %p63
      %s65 = ssub.s32 %s17, %s36
      %s66 = ssub.s32 %s19, %s28
      %s67 = sor.u32 %s65, %s66
      %p68 = scmp.eq.s32.totalorder %s67, 0
      %s70 = sadd.s32 %s69, 1
      %s71 = scalar_select %p68, %s69, %s70
      %p74 = pneg %p68
      %p75 = scmp.eq.s32.totalorder %s10, 1
      %p76 = por %p74, %p75
      %p77 = scmp.ne.s32.totalorder %s69, %s72
      %p78 = scmp.eq.s32.totalorder %s10, 0
      %p79 = por %p77, %p78
      %p80 = scmp.ne.s32.totalorder %s69, %s72
      %p81 = scmp.eq.s32.totalorder %s15, 1
      %p82 = por %p80, %p81
      %p83 = scmp.ne.s32.totalorder %s72, %s73
      %p84 = scmp.eq.s32.totalorder %s15, 0
      %p85 = por %p83, %p84
      %p86 = scmp.ne.s32.totalorder %s72, %s73
      %p87 = scmp.eq.s32.totalorder %s16, 1
      %p88 = por %p86, %p87
      %p90 = scmp.ne.s32.totalorder %s73, %s89
      %p91 = scmp.eq.s32.totalorder %s16, 0
      %p92 = por %p90, %p91
      %s93 = ssub.s32 %s17, %s36
      %s94 = ssub.s32 %s19, %s28
      %s95 = sor.u32 %s93, %s94
      %p96 = scmp.eq.s32.totalorder %s95, 0
      %s98 = sadd.s32 %s97, 1
      %s99 = scalar_select %p96, %s97, %s98
      %p102 = pneg %p96
      %p103 = scmp.eq.s32.totalorder %s10, 1
      %p104 = por %p102, %p103
      %p105 = scmp.ne.s32.totalorder %s97, %s100
      %p106 = scmp.eq.s32.totalorder %s10, 0
      %p107 = por %p105, %p106
      %p108 = scmp.ne.s32.totalorder %s97, %s100
      %p109 = scmp.eq.s32.totalorder %s15, 1
      %p110 = por %p108, %p109
      %p111 = scmp.ne.s32.totalorder %s100, %s101
      %p112 = scmp.eq.s32.totalorder %s15, 0
      %p113 = por %p111, %p112
      %p114 = scmp.ne.s32.totalorder %s100, %s101
      %p115 = scmp.eq.s32.totalorder %s16, 1
      %p116 = por %p114, %p115
      %p118 = scmp.ne.s32.totalorder %s101, %s117
      %p119 = scmp.eq.s32.totalorder %s16, 0
      %p120 = por %p118, %p119
      %s121 = ssub.s32 %s17, %s36
      %s122 = ssub.s32 %s19, %s28
      %s123 = sor.u32 %s121, %s122
      %p124 = scmp.eq.s32.totalorder %s123, 0
      %s126 = sadd.s32 %s125, 1
      %s127 = scalar_select %p124, %s125, %s126
      %p130 = pneg %p124
      %p131 = scmp.eq.s32.totalorder %s10, 1
      %p132 = por %p130, %p131
      %p133 = scmp.ne.s32.totalorder %s125, %s128
      %p134 = scmp.eq.s32.totalorder %s10, 0
      %p135 = por %p133, %p134
      %p136 = scmp.ne.s32.totalorder %s125, %s128
      %p137 = scmp.eq.s32.totalorder %s15, 1
      %p138 = por %p136, %p137
      %p139 = scmp.ne.s32.totalorder %s128, %s129
      %p140 = scmp.eq.s32.totalorder %s15, 0
      %p141 = por %p139, %p140
      %p142 = scmp.ne.s32.totalorder %s128, %s129
      %p143 = scmp.eq.s32.totalorder %s16, 1
      %p144 = por %p142, %p143
      %p146 = scmp.ne.s32.totalorder %s129, %s145
      %p147 = scmp.eq.s32.totalorder %s16, 0
      %p148 = por %p146, %p147
      %s149 = ssub.s32 %s17, %s36
      %s150 = ssub.s32 %s18, %s32
      %s151 = sor.u32 %s149, %s150
      %p152 = scmp.eq.s32.totalorder %s151, 0
      %s154 = sadd.s32 %s153, 1
      %s155 = scalar_select %p152, %s153, %s154
      %p158 = pneg %p152
      %p159 = scmp.eq.s32.totalorder %s10, 1
      %p160 = por %p158, %p159
      %p161 = scmp.ne.s32.totalorder %s153, %s156
      %p162 = scmp.eq.s32.totalorder %s10, 0
      %p163 = por %p161, %p162
      %p164 = scmp.ne.s32.totalorder %s153, %s156
      %p165 = scmp.eq.s32.totalorder %s15, 1
      %p166 = por %p164, %p165
      %p167 = scmp.ne.s32.totalorder %s156, %s157
      %p168 = scmp.eq.s32.totalorder %s15, 0
      %p169 = por %p167, %p168
      %p170 = scmp.ne.s32.totalorder %s156, %s157
      %p171 = scmp.eq.s32.totalorder %s16, 1
      %p172 = por %p170, %p171
      %p174 = scmp.ne.s32.totalorder %s157, %s173
      %p175 = scmp.eq.s32.totalorder %s16, 0
      %p176 = por %p174, %p175
      %p177 = scmp.le.s32.totalorder 1, %s10
      %p178 = scmp.lt.s32.totalorder %s10, 3
      %p179 = pnand %p177, %p178
      %p180 = pneg %p179
      // Predicated region
      $region9: #{transformer_forward.48} parent=5 // pred_check
        _
      $region10: #{transformer_forward.48} parent=5 // pred_check_branch
        %182 = sbr.rel (%p179) target = $region12
      $region11: #{transformer_forward.48} parent=5 // pred_region
        %s183 = ssub.s32 %s10, 1
      $region12: #{transformer_forward.48} parent=5 // pred_fallthru
        _
      %p184 = scmp.lt.s32.totalorder %s10, 2
      // Predicated region
      $region13: #{transformer_forward.48} parent=5 // pred_check
        %p185 = pneg %p184
      $region14: #{transformer_forward.48} parent=5 // pred_check_branch
        %187 = sbr.rel (%p185) target = $region16
      $region15: #{transformer_forward.48} parent=5 // pred_region
        // Predicated region
        $region17: #{transformer_forward.48} parent=15 // pred_check
          %p188 = pneg %p51
        $region18: #{transformer_forward.48} parent=15 // pred_check_branch
          %190 = sbr.rel (%p188) target = $region20
        $region19: #{transformer_forward.48} parent=15 // pred_region
          %p191 = scmp.lt.s32.totalorder %s17, 1
          %s192 = scalar_select %p191, %s17, 1
          %p193 = scmp.lt.s32.totalorder %s18, 0
          %s194 = scalar_select %p193, %s18, 0
          %s195 = sadd.s32 %s194, %s192
          %s196 = smul.addr %s195, 4
          %s197 = scalar_lea.vmem %s0, %s196
        $region20: #{transformer_forward.48} parent=15 // pred_fallthru
          _
        // Predicated region
        $region21: #{transformer_forward.48} parent=15 // pred_check
          %p198 = pneg %p79
        $region22: #{transformer_forward.48} parent=15 // pred_check_branch
          %200 = sbr.rel (%p198) target = $region24
        $region23: #{transformer_forward.48} parent=15 // pred_region
          %s201 = sand.u32 %s69, 1
          %s202 = sand.u32 %s69, 1
          %s203 = smul.addr %s202, 64
          %s204 = scalar_lea.vmem [#allocation5], %s203
          %s205 = smul.u32 16, %s19
          %s206 = smul.addr %s205, 2
          %s207 = smul.addr %s17, 32
          %s208 = sadd.s32 %s206, %s207
          %s209 = smul.addr %s208, 4
          %s210 = scalar_lea.vmem %s1, %s209
          // Predicated region
          $region25: #{transformer_forward.48} parent=23 // pred_check
            _
          $region26: #{transformer_forward.48} parent=23 // pred_check_branch
            %212 = sbr.rel (0) target = $region28
          $region27: #{transformer_forward.48} parent=23 // pred_region
            // Predicated region
            $region29: #{transformer_forward.48} parent=27 // pred_check
              _
            $region30: #{transformer_forward.48} parent=27 // pred_check_branch
              %214 = sbr.rel target = $region32
            $region31: #{transformer_forward.48} parent=27 // pred_region
              // Predicated region
              $region44: #{transformer_forward.48} parent=31 // pred_check
                _
              $region45: #{transformer_forward.48} parent=31 // pred_check_branch
                %260 = sbr.rel (0) target = $region47
              $region46: #{transformer_forward.48} parent=31 // pred_region
                loop: start=0, step=1, limit=1
                $region48: #{transformer_forward.48} parent=46 // loop_pre_header
                  _
                $region49: #{transformer_forward.48} parent=46 // loop_header
                  %s262 = sphi 0, %s266
                  %p263 = scmp.ge.s32.totalorder %s262, 1
                  %s267 = sphi %s210, %s210
                  %s268 = sphi %s204, %s204
                $region50: #{transformer_forward.48} parent=46 // loop_header_branch
                  %265 = sbr.rel (%p263) target = $region54
                $region51: #{transformer_forward.48} parent=46 // loop_body
                  _
                $region52: #{transformer_forward.48} parent=46 // loop_footer
                  %s266 = sadd.s32 1, %s262
                $region53: #{transformer_forward.48} parent=46 // loop_footer_branch
                  %261 = sbr.rel target = $region49
                $region54: #{transformer_forward.48} parent=46 // loop_exit
                  _
                %s270 = ssub.s32 16, 1
                loop: start=0, step=1, limit=1
                $region55: #{transformer_forward.48} parent=46 // loop_pre_header
                  _
                $region56: #{transformer_forward.48} parent=46 // loop_header
                  %s272 = sphi 0, %s276
                  %p273 = scmp.ge.s32.totalorder %s272, 1
                  %s277 = sphi %s210, %s210
                  %s278 = sphi %s204, %s204
                $region57: #{transformer_forward.48} parent=46 // loop_header_branch
                  %275 = sbr.rel (%p273) target = $region61
                $region58: #{transformer_forward.48} parent=46 // loop_body
                  %v279 = vld [vmem:[%s277] sm:%s270]
                  %280 = vst [vmem:[%s278] sm:%s270] %v279
                  %v281 = vld [vmem:[%s277 + $0x8] sm:%s270]
                  %282 = vst [vmem:[%s278 + $0x4] sm:%s270] %v281
                  %v283 = vld [vmem:[%s277 + $0x10] sm:%s270]
                  %284 = vst [vmem:[%s278 + $0x8] sm:%s270] %v283
                  %v285 = vld [vmem:[%s277 + $0x18] sm:%s270]
                  %286 = vst [vmem:[%s278 + $0xc] sm:%s270] %v285
                  %v287 = vld [vmem:[%s277 + $0x20] sm:%s270]
                  %288 = vst [vmem:[%s278 + $0x10] sm:%s270] %v287
                  %v289 = vld [vmem:[%s277 + $0x28] sm:%s270]
                  %290 = vst [vmem:[%s278 + $0x14] sm:%s270] %v289
                  %v291 = vld [vmem:[%s277 + $0x30] sm:%s270]
                  %292 = vst [vmem:[%s278 + $0x18] sm:%s270] %v291
                  %v293 = vld [vmem:[%s277 + $0x38] sm:%s270]
                  %294 = vst [vmem:[%s278 + $0x1c] sm:%s270] %v293
                  %v295 = vld [vmem:[%s277 + $0x40] sm:%s270]
                  %296 = vst [vmem:[%s278 + $0x20] sm:%s270] %v295
                  %v297 = vld [vmem:[%s277 + $0x48] sm:%s270]
                  %298 = vst [vmem:[%s278 + $0x24] sm:%s270] %v297
                  %v299 = vld [vmem:[%s277 + $0x50] sm:%s270]
                  %300 = vst [vmem:[%s278 + $0x28] sm:%s270] %v299
                  %v301 = vld [vmem:[%s277 + $0x58] sm:%s270]
                  %302 = vst [vmem:[%s278 + $0x2c] sm:%s270] %v301
                  %v303 = vld [vmem:[%s277 + $0x60] sm:%s270]
                  %304 = vst [vmem:[%s278 + $0x30] sm:%s270] %v303
                  %v305 = vld [vmem:[%s277 + $0x68] sm:%s270]
                  %306 = vst [vmem:[%s278 + $0x34] sm:%s270] %v305
                  %v307 = vld [vmem:[%s277 + $0x70] sm:%s270]
                  %308 = vst [vmem:[%s278 + $0x38] sm:%s270] %v307
                  %v309 = vld [vmem:[%s277 + $0x78] sm:%s270]
                  %310 = vst [vmem:[%s278 + $0x3c] sm:%s270] %v309
                $region59: #{transformer_forward.48} parent=46 // loop_footer
                  %s276 = sadd.s32 1, %s272
                $region60: #{transformer_forward.48} parent=46 // loop_footer_branch
                  %271 = sbr.rel target = $region56
                $region61: #{transformer_forward.48} parent=46 // loop_exit
                  _
              $region47: #{transformer_forward.48} parent=31 // pred_fallthru
                _
            $region32: #{transformer_forward.48} parent=27 // pred_fallthru
              _
            // Predicated region
            $region33: #{transformer_forward.48} parent=27 // pred_check
              _
            $region34: #{transformer_forward.48} parent=27 // pred_check_branch
              %216 = sbr.rel (0) target = $region36
            $region35: #{transformer_forward.48} parent=27 // pred_region
              %s218 = ssub.s32 16, 1
              loop: start=0, step=1, limit=1
              $region37: #{transformer_forward.48} parent=35 // loop_pre_header
                _
              $region38: #{transformer_forward.48} parent=35 // loop_header
                %s220 = sphi 0, %s224
                %p221 = scmp.ge.s32.totalorder %s220, 1
                %s225 = sphi %s210, %s210
                %s226 = sphi %s204, %s204
              $region39: #{transformer_forward.48} parent=35 // loop_header_branch
                %223 = sbr.rel (%p221) target = $region43
              $region40: #{transformer_forward.48} parent=35 // loop_body
                %v227 = vld [vmem:[%s225] sm:%s218]
                %228 = vst [vmem:[%s226] sm:%s218] %v227
                %v229 = vld [vmem:[%s225 + $0x8] sm:%s218]
                %230 = vst [vmem:[%s226 + $0x4] sm:%s218] %v229
                %v231 = vld [vmem:[%s225 + $0x10] sm:%s218]
                %232 = vst [vmem:[%s226 + $0x8] sm:%s218] %v231
                %v233 = vld [vmem:[%s225 + $0x18] sm:%s218]
                %234 = vst [vmem:[%s226 + $0xc] sm:%s218] %v233
                %v235 = vld [vmem:[%s225 + $0x20] sm:%s218]
                %236 = vst [vmem:[%s226 + $0x10] sm:%s218] %v235
                %v237 = vld [vmem:[%s225 + $0x28] sm:%s218]
                %238 = vst [vmem:[%s226 + $0x14] sm:%s218] %v237
                %v239 = vld [vmem:[%s225 + $0x30] sm:%s218]
                %240 = vst [vmem:[%s226 + $0x18] sm:%s218] %v239
                %v241 = vld [vmem:[%s225 + $0x38] sm:%s218]
                %242 = vst [vmem:[%s226 + $0x1c] sm:%s218] %v241
                %v243 = vld [vmem:[%s225 + $0x40] sm:%s218]
                %244 = vst [vmem:[%s226 + $0x20] sm:%s218] %v243
                %v245 = vld [vmem:[%s225 + $0x48] sm:%s218]
                %246 = vst [vmem:[%s226 + $0x24] sm:%s218] %v245
                %v247 = vld [vmem:[%s225 + $0x50] sm:%s218]
                %248 = vst [vmem:[%s226 + $0x28] sm:%s218] %v247
                %v249 = vld [vmem:[%s225 + $0x58] sm:%s218]
                %250 = vst [vmem:[%s226 + $0x2c] sm:%s218] %v249
                %v251 = vld [vmem:[%s225 + $0x60] sm:%s218]
                %252 = vst [vmem:[%s226 + $0x30] sm:%s218] %v251
                %v253 = vld [vmem:[%s225 + $0x68] sm:%s218]
                %254 = vst [vmem:[%s226 + $0x34] sm:%s218] %v253
                %v255 = vld [vmem:[%s225 + $0x70] sm:%s218]
                %256 = vst [vmem:[%s226 + $0x38] sm:%s218] %v255
                %v257 = vld [vmem:[%s225 + $0x78] sm:%s218]
                %258 = vst [vmem:[%s226 + $0x3c] sm:%s218] %v257
              $region41: #{transformer_forward.48} parent=35 // loop_footer
                %s224 = sadd.s32 1, %s220
              $region42: #{transformer_forward.48} parent=35 // loop_footer_branch
                %219 = sbr.rel target = $region38
              $region43: #{transformer_forward.48} parent=35 // loop_exit
                _
            $region36: #{transformer_forward.48} parent=27 // pred_fallthru
              _
          $region28: #{transformer_forward.48} parent=23 // pred_fallthru
            _
          %311 = vnop
        $region24: #{transformer_forward.48} parent=15 // pred_fallthru
          _
        // Predicated region
        $region62: #{transformer_forward.48} parent=15 // pred_check
          %p312 = pneg %p107
        $region63: #{transformer_forward.48} parent=15 // pred_check_branch
          %314 = sbr.rel (%p312) target = $region65
        $region64: #{transformer_forward.48} parent=15 // pred_region
          %s315 = sand.u32 %s97, 1
          %s316 = sand.u32 %s97, 1
          %s317 = smul.addr %s316, 64
          %s318 = scalar_lea.vmem [#allocation6], %s317
          %s319 = smul.u32 16, %s19
          %s320 = smul.addr %s319, 2
          %s321 = sadd.s32 1, %s320
          %s322 = smul.addr %s17, 32
          %s323 = sadd.s32 %s321, %s322
          %s324 = smul.addr %s323, 4
          %s325 = scalar_lea.vmem %s2, %s324
          // Predicated region
          $region66: #{transformer_forward.48} parent=64 // pred_check
            _
          $region67: #{transformer_forward.48} parent=64 // pred_check_branch
            %327 = sbr.rel (0) target = $region69
          $region68: #{transformer_forward.48} parent=64 // pred_region
            // Predicated region
            $region70: #{transformer_forward.48} parent=68 // pred_check
              _
            $region71: #{transformer_forward.48} parent=68 // pred_check_branch
              %329 = sbr.rel target = $region73
            $region72: #{transformer_forward.48} parent=68 // pred_region
              // Predicated region
              $region85: #{transformer_forward.48} parent=72 // pred_check
                _
              $region86: #{transformer_forward.48} parent=72 // pred_check_branch
                %375 = sbr.rel (0) target = $region88
              $region87: #{transformer_forward.48} parent=72 // pred_region
                loop: start=0, step=1, limit=1
                $region89: #{transformer_forward.48} parent=87 // loop_pre_header
                  _
                $region90: #{transformer_forward.48} parent=87 // loop_header
                  %s377 = sphi 0, %s381
                  %p378 = scmp.ge.s32.totalorder %s377, 1
                  %s382 = sphi %s325, %s325
                  %s383 = sphi %s318, %s318
                $region91: #{transformer_forward.48} parent=87 // loop_header_branch
                  %380 = sbr.rel (%p378) target = $region95
                $region92: #{transformer_forward.48} parent=87 // loop_body
                  _
                $region93: #{transformer_forward.48} parent=87 // loop_footer
                  %s381 = sadd.s32 1, %s377
                $region94: #{transformer_forward.48} parent=87 // loop_footer_branch
                  %376 = sbr.rel target = $region90
                $region95: #{transformer_forward.48} parent=87 // loop_exit
                  _
                %s385 = ssub.s32 16, 1
                loop: start=0, step=1, limit=1
                $region96: #{transformer_forward.48} parent=87 // loop_pre_header
                  _
                $region97: #{transformer_forward.48} parent=87 // loop_header
                  %s387 = sphi 0, %s391
                  %p388 = scmp.ge.s32.totalorder %s387, 1
                  %s392 = sphi %s325, %s325
                  %s393 = sphi %s318, %s318
                $region98: #{transformer_forward.48} parent=87 // loop_header_branch
                  %390 = sbr.rel (%p388) target = $region102
                $region99: #{transformer_forward.48} parent=87 // loop_body
                  %v394 = vld [vmem:[%s392] sm:%s385]
                  %395 = vst [vmem:[%s393] sm:%s385] %v394
                  %v396 = vld [vmem:[%s392 + $0x8] sm:%s385]
                  %397 = vst [vmem:[%s393 + $0x4] sm:%s385] %v396
                  %v398 = vld [vmem:[%s392 + $0x10] sm:%s385]
                  %399 = vst [vmem:[%s393 + $0x8] sm:%s385] %v398
                  %v400 = vld [vmem:[%s392 + $0x18] sm:%s385]
                  %401 = vst [vmem:[%s393 + $0xc] sm:%s385] %v400
                  %v402 = vld [vmem:[%s392 + $0x20] sm:%s385]
                  %403 = vst [vmem:[%s393 + $0x10] sm:%s385] %v402
                  %v404 = vld [vmem:[%s392 + $0x28] sm:%s385]
                  %405 = vst [vmem:[%s393 + $0x14] sm:%s385] %v404
                  %v406 = vld [vmem:[%s392 + $0x30] sm:%s385]
                  %407 = vst [vmem:[%s393 + $0x18] sm:%s385] %v406
                  %v408 = vld [vmem:[%s392 + $0x38] sm:%s385]
                  %409 = vst [vmem:[%s393 + $0x1c] sm:%s385] %v408
                  %v410 = vld [vmem:[%s392 + $0x40] sm:%s385]
                  %411 = vst [vmem:[%s393 + $0x20] sm:%s385] %v410
                  %v412 = vld [vmem:[%s392 + $0x48] sm:%s385]
                  %413 = vst [vmem:[%s393 + $0x24] sm:%s385] %v412
                  %v414 = vld [vmem:[%s392 + $0x50] sm:%s385]
                  %415 = vst [vmem:[%s393 + $0x28] sm:%s385] %v414
                  %v416 = vld [vmem:[%s392 + $0x58] sm:%s385]
                  %417 = vst [vmem:[%s393 + $0x2c] sm:%s385] %v416
                  %v418 = vld [vmem:[%s392 + $0x60] sm:%s385]
                  %419 = vst [vmem:[%s393 + $0x30] sm:%s385] %v418
                  %v420 = vld [vmem:[%s392 + $0x68] sm:%s385]
                  %421 = vst [vmem:[%s393 + $0x34] sm:%s385] %v420
                  %v422 = vld [vmem:[%s392 + $0x70] sm:%s385]
                  %423 = vst [vmem:[%s393 + $0x38] sm:%s385] %v422
                  %v424 = vld [vmem:[%s392 + $0x78] sm:%s385]
                  %425 = vst [vmem:[%s393 + $0x3c] sm:%s385] %v424
                $region100: #{transformer_forward.48} parent=87 // loop_footer
                  %s391 = sadd.s32 1, %s387
                $region101: #{transformer_forward.48} parent=87 // loop_footer_branch
                  %386 = sbr.rel target = $region97
                $region102: #{transformer_forward.48} parent=87 // loop_exit
                  _
              $region88: #{transformer_forward.48} parent=72 // pred_fallthru
                _
            $region73: #{transformer_forward.48} parent=68 // pred_fallthru
              _
            // Predicated region
            $region74: #{transformer_forward.48} parent=68 // pred_check
              _
            $region75: #{transformer_forward.48} parent=68 // pred_check_branch
              %331 = sbr.rel (0) target = $region77
            $region76: #{transformer_forward.48} parent=68 // pred_region
              %s333 = ssub.s32 16, 1
              loop: start=0, step=1, limit=1
              $region78: #{transformer_forward.48} parent=76 // loop_pre_header
                _
              $region79: #{transformer_forward.48} parent=76 // loop_header
                %s335 = sphi 0, %s339
                %p336 = scmp.ge.s32.totalorder %s335, 1
                %s340 = sphi %s325, %s325
                %s341 = sphi %s318, %s318
              $region80: #{transformer_forward.48} parent=76 // loop_header_branch
                %338 = sbr.rel (%p336) target = $region84
              $region81: #{transformer_forward.48} parent=76 // loop_body
                %v342 = vld [vmem:[%s340] sm:%s333]
                %343 = vst [vmem:[%s341] sm:%s333] %v342
                %v344 = vld [vmem:[%s340 + $0x8] sm:%s333]
                %345 = vst [vmem:[%s341 + $0x4] sm:%s333] %v344
                %v346 = vld [vmem:[%s340 + $0x10] sm:%s333]
                %347 = vst [vmem:[%s341 + $0x8] sm:%s333] %v346
                %v348 = vld [vmem:[%s340 + $0x18] sm:%s333]
                %349 = vst [vmem:[%s341 + $0xc] sm:%s333] %v348
                %v350 = vld [vmem:[%s340 + $0x20] sm:%s333]
                %351 = vst [vmem:[%s341 + $0x10] sm:%s333] %v350
                %v352 = vld [vmem:[%s340 + $0x28] sm:%s333]
                %353 = vst [vmem:[%s341 + $0x14] sm:%s333] %v352
                %v354 = vld [vmem:[%s340 + $0x30] sm:%s333]
                %355 = vst [vmem:[%s341 + $0x18] sm:%s333] %v354
                %v356 = vld [vmem:[%s340 + $0x38] sm:%s333]
                %357 = vst [vmem:[%s341 + $0x1c] sm:%s333] %v356
                %v358 = vld [vmem:[%s340 + $0x40] sm:%s333]
                %359 = vst [vmem:[%s341 + $0x20] sm:%s333] %v358
                %v360 = vld [vmem:[%s340 + $0x48] sm:%s333]
                %361 = vst [vmem:[%s341 + $0x24] sm:%s333] %v360
                %v362 = vld [vmem:[%s340 + $0x50] sm:%s333]
                %363 = vst [vmem:[%s341 + $0x28] sm:%s333] %v362
                %v364 = vld [vmem:[%s340 + $0x58] sm:%s333]
                %365 = vst [vmem:[%s341 + $0x2c] sm:%s333] %v364
                %v366 = vld [vmem:[%s340 + $0x60] sm:%s333]
                %367 = vst [vmem:[%s341 + $0x30] sm:%s333] %v366
                %v368 = vld [vmem:[%s340 + $0x68] sm:%s333]
                %369 = vst [vmem:[%s341 + $0x34] sm:%s333] %v368
                %v370 = vld [vmem:[%s340 + $0x70] sm:%s333]
                %371 = vst [vmem:[%s341 + $0x38] sm:%s333] %v370
                %v372 = vld [vmem:[%s340 + $0x78] sm:%s333]
                %373 = vst [vmem:[%s341 + $0x3c] sm:%s333] %v372
              $region82: #{transformer_forward.48} parent=76 // loop_footer
                %s339 = sadd.s32 1, %s335
              $region83: #{transformer_forward.48} parent=76 // loop_footer_branch
                %334 = sbr.rel target = $region79
              $region84: #{transformer_forward.48} parent=76 // loop_exit
                _
            $region77: #{transformer_forward.48} parent=68 // pred_fallthru
              _
          $region69: #{transformer_forward.48} parent=64 // pred_fallthru
            _
          %426 = vnop
        $region65: #{transformer_forward.48} parent=15 // pred_fallthru
          _
        // Predicated region
        $region103: #{transformer_forward.48} parent=15 // pred_check
          %p427 = pneg %p135
        $region104: #{transformer_forward.48} parent=15 // pred_check_branch
          %429 = sbr.rel (%p427) target = $region106
        $region105: #{transformer_forward.48} parent=15 // pred_region
          %p430 = scmp.lt.s32.totalorder %s17, 1
          %s431 = scalar_select %p430, %s17, 1
          %p432 = scmp.lt.s32.totalorder %s19, 0
          %s433 = scalar_select %p432, %s19, 0
          %s434 = sadd.s32 %s433, %s431
          %s435 = scalar_lea.vmem %s3, %s434
        $region106: #{transformer_forward.48} parent=15 // pred_fallthru
          _
      $region16: #{transformer_forward.48} parent=5 // pred_fallthru
        _
      %p436 = scmp.le.s32.totalorder 1, %s10
      %p437 = scmp.lt.s32.totalorder %s10, 3
      %p438 = pnand %p436, %p437
      %p439 = pneg %p438
      // Predicated region
      $region107: #{transformer_forward.48} parent=5 // pred_check
        _
      $region108: #{transformer_forward.48} parent=5 // pred_check_branch
        %441 = sbr.rel (%p438) target = $region110
      $region109: #{transformer_forward.48} parent=5 // pred_region
        %s442 = ssub.s32 %s10, 1
        %s443 = sand.u32 %s72, 1
        %s444 = sand.u32 %s72, 1
        %s445 = smul.addr %s444, 64
        %s446 = scalar_lea.vmem [#allocation5], %s445
        // Predicated region
        $region111: #{transformer_forward.48} parent=109 // pred_check
          %p447 = pneg %p85
        $region112: #{transformer_forward.48} parent=109 // pred_check_branch
          %449 = sbr.rel (%p447) target = $region114
        $region113: #{transformer_forward.48} parent=109 // pred_region
          _
        $region114: #{transformer_forward.48} parent=109 // pred_fallthru
          _
        %s450 = sand.u32 %s100, 1
        %s451 = sand.u32 %s100, 1
        %s452 = smul.addr %s451, 64
        %s453 = scalar_lea.vmem [#allocation6], %s452
        // Predicated region
        $region115: #{transformer_forward.48} parent=109 // pred_check
          %p454 = pneg %p113
        $region116: #{transformer_forward.48} parent=109 // pred_check_branch
          %456 = sbr.rel (%p454) target = $region118
        $region117: #{transformer_forward.48} parent=109 // pred_region
          _
        $region118: #{transformer_forward.48} parent=109 // pred_fallthru
          _
        %p457 = scmp.lt.s32.totalorder %s20, 1
        %s458 = scalar_select %p457, %s20, 1
        %p459 = scmp.lt.s32.totalorder %s21, 0
        %s460 = scalar_select %p459, %s21, 0
        %s461 = sadd.s32 %s460, %s458
        %s462 = smul.addr %s461, 4
        %s463 = scalar_lea.vmem %s0, %s462
        %p464 = pneg %p57
        %p465 = pneg %p54
        %s466 = sand.u32 %s72, 1
        %s467 = sand.u32 %s72, 1
        %s468 = smul.addr %s467, 64
        %s469 = scalar_lea.vmem [#allocation5], %s468
        %p470 = pneg %p85
        %p471 = pneg %p82
        %s472 = sand.u32 %s100, 1
        %s473 = sand.u32 %s100, 1
        %s474 = smul.addr %s473, 64
        %s475 = scalar_lea.vmem [#allocation6], %s474
        %p476 = pneg %p113
        %p477 = pneg %p110
        %p478 = scmp.lt.s32.totalorder %s20, 1
        %s479 = scalar_select %p478, %s20, 1
        %p480 = scmp.lt.s32.totalorder %s22, 0
        %s481 = scalar_select %p480, %s22, 0
        %s482 = sadd.s32 %s481, %s479
        %s483 = scalar_lea.vmem %s3, %s482
        %p484 = pneg %p141
        %p485 = pneg %p138
        %p486 = pneg %p169
        %p487 = pneg %p166
        %p488 = scmp.lt.s32.totalorder %s20, 1
        %s489 = scalar_select %p488, %s20, 1
        %p490 = scmp.lt.s32.totalorder %s21, 0
        %s491 = scalar_select %p490, %s21, 0
        %s492 = sadd.s32 %s491, %s489
        %s493 = smul.addr %s492, 4
        %s494 = scalar_lea.vmem %s4, %s493
        %p495 = scmp.lt.s32.totalorder %s20, 1
        %s496 = scalar_select %p495, %s20, 1
        %p497 = scmp.lt.s32.totalorder %s21, 0
        %s498 = scalar_select %p497, %s21, 0
        %s499 = sadd.s32 %s498, %s496
        %s500 = smul.addr %s499, 4
        %s501 = scalar_lea.vmem %s0, %s500
        %s502 = smul.u32 16, %s22
        %s503 = smul.u32 16, %s22
        %p504 = scmp.lt.s32.totalorder %s20, 1
        %s505 = scalar_select %p504, %s20, 1
        %p506 = scmp.lt.s32.totalorder %s22, 0
        %s507 = scalar_select %p506, %s22, 0
        %s508 = sadd.s32 %s507, %s505
        %s509 = scalar_lea.vmem %s3, %s508
        %p510 = scmp.lt.s32.totalorder %s20, 1
        %s511 = scalar_select %p510, %s20, 1
        %p512 = scmp.lt.s32.totalorder %s21, 0
        %s513 = scalar_select %p512, %s21, 0
        %s514 = sadd.s32 %s513, %s511
        %s515 = smul.addr %s514, 4
        %s516 = scalar_lea.vmem %s4, %s515
        %p518 = scmp.eq.s32.totalorder %s22, 0
        // Predicated region
        $region119: #{transformer_forward.48} parent=109 // pred_check
          %p519 = pneg %p518
        $region120: #{transformer_forward.48} parent=109 // pred_check_branch
          %521 = sbr.rel (%p519) target = $region122
        $region121: #{transformer_forward.48} parent=109 // pred_region
          %522 = vst [vmem:[#allocation2] sm:$0xff] -1e+30
          %523 = vst [vmem:[#allocation2 + $0x8] sm:$0xff] -1e+30
          %524 = vst [vmem:[#allocation2 + $0x10] sm:$0xff] -1e+30
          %525 = vst [vmem:[#allocation2 + $0x18] sm:$0xff] -1e+30
          %526 = vst [vmem:[#allocation3] sm:$0xff] 0.0
          %527 = vst [vmem:[#allocation3 + $0x8] sm:$0xff] 0.0
          %528 = vst [vmem:[#allocation3 + $0x10] sm:$0xff] 0.0
          %529 = vst [vmem:[#allocation3 + $0x18] sm:$0xff] 0.0
          %530 = vst [vmem:[#allocation4] sm:$0xff] 0.0
        $region122: #{transformer_forward.48} parent=109 // pred_fallthru
          _
        %v531 = vld [vmem:[%s509] sm:$0x1]
        %v532 = vld [vmem:[%s501] sm:$0xf]
        %v533 = vld [vmem:[%s446] sm:$0xf]
        %v534 = vld [vmem:[%s446 + $0x4] sm:$0xf]
        %v535 = vld [vmem:[%s446 + $0x8] sm:$0xf]
        %v536 = vld [vmem:[%s446 + $0xc] sm:$0xf]
        %v537 = vld [vmem:[%s446 + $0x10] sm:$0xf]
        %v538 = vld [vmem:[%s446 + $0x14] sm:$0xf]
        %v539 = vld [vmem:[%s446 + $0x18] sm:$0xf]
        %v540 = vld [vmem:[%s446 + $0x1c] sm:$0xf]
        %v541 = vld [vmem:[%s446 + $0x20] sm:$0xf]
        %v542 = vld [vmem:[%s446 + $0x24] sm:$0xf]
        %v543 = vld [vmem:[%s446 + $0x28] sm:$0xf]
        %v544 = vld [vmem:[%s446 + $0x2c] sm:$0xf]
        %v545 = vld [vmem:[%s446 + $0x30] sm:$0xf]
        %v546 = vld [vmem:[%s446 + $0x34] sm:$0xf]
        %v547 = vld [vmem:[%s446 + $0x38] sm:$0xf]
        %v548 = vld [vmem:[%s446 + $0x3c] sm:$0xf]
        %v549 = vld [vmem:[%s453] sm:$0xf]
        %v550 = vld [vmem:[%s453 + $0x4] sm:$0xf]
        %v551 = vld [vmem:[%s453 + $0x8] sm:$0xf]
        %v552 = vld [vmem:[%s453 + $0xc] sm:$0xf]
        %v553 = vld [vmem:[%s453 + $0x10] sm:$0xf]
        %v554 = vld [vmem:[%s453 + $0x14] sm:$0xf]
        %v555 = vld [vmem:[%s453 + $0x18] sm:$0xf]
        %v556 = vld [vmem:[%s453 + $0x1c] sm:$0xf]
        %v557 = vld [vmem:[%s453 + $0x20] sm:$0xf]
        %v558 = vld [vmem:[%s453 + $0x24] sm:$0xf]
        %v559 = vld [vmem:[%s453 + $0x28] sm:$0xf]
        %v560 = vld [vmem:[%s453 + $0x2c] sm:$0xf]
        %v561 = vld [vmem:[%s453 + $0x30] sm:$0xf]
        %v562 = vld [vmem:[%s453 + $0x34] sm:$0xf]
        %v563 = vld [vmem:[%s453 + $0x38] sm:$0xf]
        %v564 = vld [vmem:[%s453 + $0x3c] sm:$0xf]
        %v566 = vlaneseq
        %v567 = vshrl.u32 %v566, 7
        %v568 = vsub.s32 0, %v567
        %v569 = vrot.slane %v531, %v568
        %v587 = vunpack.c.l.b16 %v533
        %v588 = vunpack.c.l.b16 %v534
        %v589 = vunpack.c.l.b16 %v535
        %v590 = vunpack.c.l.b16 %v536
        %v591 = vunpack.c.l.b16 %v537
        %v592 = vunpack.c.l.b16 %v538
        %v593 = vunpack.c.l.b16 %v539
        %v594 = vunpack.c.l.b16 %v540
        %v595 = vunpack.c.l.b16 %v541
        %v596 = vunpack.c.l.b16 %v542
        %v597 = vunpack.c.l.b16 %v543
        %v598 = vunpack.c.l.b16 %v544
        %v599 = vunpack.c.l.b16 %v545
        %v600 = vunpack.c.l.b16 %v546
        %v601 = vunpack.c.l.b16 %v547
        %v602 = vunpack.c.l.b16 %v548
        %v603 = vpack.c.b16 %v588, %v587
        %v604 = vpack.c.b16 %v590, %v589
        %v605 = vpack.c.b16 %v592, %v591
        %v606 = vpack.c.b16 %v594, %v593
        %v607 = vpack.c.b16 %v596, %v595
        %v608 = vpack.c.b16 %v598, %v597
        %v609 = vpack.c.b16 %v600, %v599
        %v610 = vpack.c.b16 %v602, %v601
        %vm611 = vcmask 64512
        %v613 = vsel %vm611, %v532, 0
        %v616 = vsel %vm611, %v603, 0
        %v619 = vsel %vm611, %v604, 0
        %v622 = vsel %vm611, %v605, 0
        %v625 = vsel %vm611, %v606, 0
        %v628 = vsel %vm611, %v607, 0
        %v631 = vsel %vm611, %v608, 0
        %v634 = vsel %vm611, %v609, 0
        %v637 = vsel %vm611, %v610, 0
        %639 = vmatprep.subr.bf16.mxu0 0
        %640 = vmatpush1.bf16.xpose.msra.mxu0 %v637
        %641 = vmatprep.subr.bf16.mxu0 0
        %642 = vmatpush1.bf16.xpose.msra.mxu0 %v634
        %643 = vmatprep.subr.bf16.mxu0 0
        %644 = vmatpush1.bf16.xpose.msra.mxu0 %v631
        %645 = vmatprep.subr.bf16.mxu0 0
        %646 = vmatpush1.bf16.xpose.msra.mxu0 %v628
        %647 = vmatprep.subr.bf16.mxu0 0
        %648 = vmatpush1.bf16.xpose.msra.mxu0 %v625
        %649 = vmatprep.subr.bf16.mxu0 0
        %650 = vmatpush1.bf16.xpose.msra.mxu0 %v622
        %651 = vmatprep.subr.bf16.mxu0 0
        %652 = vmatpush1.bf16.xpose.msra.mxu0 %v619
        %653 = vmatprep.subr.bf16.mxu0 0
        %654 = vmatpush1.bf16.xpose.msra.mxu0 %v616
        %655 = vmatprep.subr.bf16.mxu0 0
        %656 = vmatpush2.bf16.xpose.msra.mxu0 0
        %657 = vmatprep.subr.bf16.mxu0 0
        %658 = vmatpush2.bf16.xpose.msra.mxu0 0
        %659 = vmatprep.subr.bf16.mxu0 0
        %660 = vmatpush2.bf16.xpose.msra.mxu0 0
        %661 = vmatprep.subr.bf16.mxu0 0
        %662 = vmatpush2.bf16.xpose.msra.mxu0 0
        %663 = vmatprep.subr.bf16.mxu0 0
        %664 = vmatpush2.bf16.xpose.msra.mxu0 0
        %665 = vmatprep.subr.bf16.mxu0 0
        %666 = vmatpush2.bf16.xpose.msra.mxu0 0
        %667 = vmatprep.subr.bf16.mxu0 0
        %668 = vmatpush2.bf16.xpose.msra.mxu0 0
        %669 = vmatprep.subr.bf16.mxu0 0
        %670 = vmatpush2.bf16.xpose.msra.mxu0 0
        %671 = vmatprep.mubr.bf16.mxu0 0
        %672 = vmatmul.mubr.bf16.gmra.mxu0 %v613
        %v673 = vpop.f32.mrf.mxu0
        %v674 = vadd.f32 %v569, %v673
        %v675 = vpop.f32.mrf.mxu0
        %v676 = vpop.f32.mrf.mxu0
        %v677 = vpop.f32.mrf.mxu0
        %678 = vdwg.mxu0
        %v679 = vld [vmem:[#allocation2] sm:$0xff]
        %680 = vmax.xlane.f32.xlu0 %v674
        %v681 = vpop.xlane.xlu0 %680
        %v682 = vmax.f32 %v679, %v681
        %v683 = vsub.f32 %v679, %v682
        %v684 = vmul.f32 %v683, 1.442695
        %v685 = vpow.pop %v684
        %687 = vset.pattern.permute.xlu0 0
        %688 = vperm.xlu0 %687, %v682
        %v689 = vpop.permute.xlu0 %688
        %v691 = vsub.f32 %v674, %v689
        %v692 = vmul.f32 %v691, 1.442695
        %v693 = vpow.pop %v692
        %v694 = vld [vmem:[#allocation3] sm:$0xff]
        %v695 = vmul.f32 %v685, %v694
        %696 = vadd.xlane.f32.xlu0 %v693
        %v697 = vpop.xlane.xlu0 %696
        %v698 = vadd.f32 %v695, %v697
        %699 = vst [vmem:[#allocation3] sm:$0xff] %v698
        %700 = vst [vmem:[#allocation2] sm:$0xff] %v682
        %v701 = vpack.c.bf16 %v693, %v693
        %v718 = vunpack.c.l.b16 %v549
        %v719 = vunpack.c.l.b16 %v550
        %v720 = vunpack.c.l.b16 %v551
        %v721 = vunpack.c.l.b16 %v552
        %v722 = vunpack.c.l.b16 %v553
        %v723 = vunpack.c.l.b16 %v554
        %v724 = vunpack.c.l.b16 %v555
        %v725 = vunpack.c.l.b16 %v556
        %v726 = vunpack.c.l.b16 %v557
        %v727 = vunpack.c.l.b16 %v558
        %v728 = vunpack.c.l.b16 %v559
        %v729 = vunpack.c.l.b16 %v560
        %v730 = vunpack.c.l.b16 %v561
        %v731 = vunpack.c.l.b16 %v562
        %v732 = vunpack.c.l.b16 %v563
        %v733 = vunpack.c.l.b16 %v564
        %v734 = vpack.c.b16 %v719, %v718
        %v735 = vpack.c.b16 %v721, %v720
        %v736 = vpack.c.b16 %v723, %v722
        %v737 = vpack.c.b16 %v725, %v724
        %v738 = vpack.c.b16 %v727, %v726
        %v739 = vpack.c.b16 %v729, %v728
        %v740 = vpack.c.b16 %v731, %v730
        %v741 = vpack.c.b16 %v733, %v732
        %750 = vmatprep.subr.bf16.mxu0 0
        %751 = vmatpush1.bf16.msra.mxu0 %v741
        %752 = vmatprep.subr.bf16.mxu0 0
        %753 = vmatpush1.bf16.msra.mxu0 %v740
        %754 = vmatprep.subr.bf16.mxu0 0
        %755 = vmatpush1.bf16.msra.mxu0 %v739
        %756 = vmatprep.subr.bf16.mxu0 0
        %757 = vmatpush1.bf16.msra.mxu0 %v738
        %758 = vmatprep.subr.bf16.mxu0 0
        %759 = vmatpush1.bf16.msra.mxu0 %v737
        %760 = vmatprep.subr.bf16.mxu0 0
        %761 = vmatpush1.bf16.msra.mxu0 %v736
        %762 = vmatprep.subr.bf16.mxu0 0
        %763 = vmatpush1.bf16.msra.mxu0 %v735
        %764 = vmatprep.subr.bf16.mxu0 0
        %765 = vmatpush1.bf16.msra.mxu0 %v734
        %766 = vmatprep.subr.bf16.mxu0 0
        %767 = vmatpush2.bf16.msra.mxu0 0
        %768 = vmatprep.subr.bf16.mxu0 0
        %769 = vmatpush2.bf16.msra.mxu0 0
        %770 = vmatprep.subr.bf16.mxu0 0
        %771 = vmatpush2.bf16.msra.mxu0 0
        %772 = vmatprep.subr.bf16.mxu0 0
        %773 = vmatpush2.bf16.msra.mxu0 0
        %774 = vmatprep.subr.bf16.mxu0 0
        %775 = vmatpush2.bf16.msra.mxu0 0
        %776 = vmatprep.subr.bf16.mxu0 0
        %777 = vmatpush2.bf16.msra.mxu0 0
        %778 = vmatprep.subr.bf16.mxu0 0
        %779 = vmatpush2.bf16.msra.mxu0 0
        %780 = vmatprep.subr.bf16.mxu0 0
        %781 = vmatpush2.bf16.msra.mxu0 0
        %782 = vmatprep.mubr.bf16.mxu0 0
        %783 = vmatmul.mubr.bf16.gmra.mxu0 %v701
        %v784 = vpop.f32.mrf.mxu0
        %v785 = vadd.f32 0.0, %v784
        %v786 = vpop.f32.mrf.mxu0
        %v787 = vpop.f32.mrf.mxu0
        %v788 = vpop.f32.mrf.mxu0
        %789 = vdwg.mxu0
        %v790 = vld [vmem:[#allocation4] sm:$0xff]
        %792 = vset.pattern.permute.xlu0 0
        %793 = vperm.xlu0 %792, %v685
        %v794 = vpop.permute.xlu0 %793
        %v796 = vmul.f32 %v794, %v790
        %v797 = vadd.f32 %v796, %v785
        %798 = vst.msk [vmem:[#allocation4] sm:$0xff] %vm611, %v797
        %v799 = vld [vmem:[%s501] sm:$0xf]
        %v800 = vld [vmem:[%s446] sm:$0xf]
        %v801 = vld [vmem:[%s446 + $0x4] sm:$0xf]
        %v802 = vld [vmem:[%s446 + $0x8] sm:$0xf]
        %v803 = vld [vmem:[%s446 + $0xc] sm:$0xf]
        %v804 = vld [vmem:[%s446 + $0x10] sm:$0xf]
        %v805 = vld [vmem:[%s446 + $0x14] sm:$0xf]
        %v806 = vld [vmem:[%s446 + $0x18] sm:$0xf]
        %v807 = vld [vmem:[%s446 + $0x1c] sm:$0xf]
        %v808 = vld [vmem:[%s446 + $0x20] sm:$0xf]
        %v809 = vld [vmem:[%s446 + $0x24] sm:$0xf]
        %v810 = vld [vmem:[%s446 + $0x28] sm:$0xf]
        %v811 = vld [vmem:[%s446 + $0x2c] sm:$0xf]
        %v812 = vld [vmem:[%s446 + $0x30] sm:$0xf]
        %v813 = vld [vmem:[%s446 + $0x34] sm:$0xf]
        %v814 = vld [vmem:[%s446 + $0x38] sm:$0xf]
        %v815 = vld [vmem:[%s446 + $0x3c] sm:$0xf]
        %v816 = vld [vmem:[%s453] sm:$0xf]
        %v817 = vld [vmem:[%s453 + $0x4] sm:$0xf]
        %v818 = vld [vmem:[%s453 + $0x8] sm:$0xf]
        %v819 = vld [vmem:[%s453 + $0xc] sm:$0xf]
        %v820 = vld [vmem:[%s453 + $0x10] sm:$0xf]
        %v821 = vld [vmem:[%s453 + $0x14] sm:$0xf]
        %v822 = vld [vmem:[%s453 + $0x18] sm:$0xf]
        %v823 = vld [vmem:[%s453 + $0x1c] sm:$0xf]
        %v824 = vld [vmem:[%s453 + $0x20] sm:$0xf]
        %v825 = vld [vmem:[%s453 + $0x24] sm:$0xf]
        %v826 = vld [vmem:[%s453 + $0x28] sm:$0xf]
        %v827 = vld [vmem:[%s453 + $0x2c] sm:$0xf]
        %v828 = vld [vmem:[%s453 + $0x30] sm:$0xf]
        %v829 = vld [vmem:[%s453 + $0x34] sm:$0xf]
        %v830 = vld [vmem:[%s453 + $0x38] sm:$0xf]
        %v831 = vld [vmem:[%s453 + $0x3c] sm:$0xf]
        %v833 = vunpack.c.l.b16 %v799
        %v834 = vpack.c.b16 %v833, %v833
        %835 = vrot.lane.b32.xlu0 %v834, 120
        %v836 = vpop.permute.xlu0 %835
        %v853 = vunpack.c.l.b16 %v800
        %v854 = vunpack.c.l.b16 %v801
        %v855 = vunpack.c.l.b16 %v802
        %v856 = vunpack.c.l.b16 %v803
        %v857 = vunpack.c.l.b16 %v804
        %v858 = vunpack.c.l.b16 %v805
        %v859 = vunpack.c.l.b16 %v806
        %v860 = vunpack.c.l.b16 %v807
        %v861 = vunpack.c.l.b16 %v808
        %v862 = vunpack.c.l.b16 %v809
        %v863 = vunpack.c.l.b16 %v810
        %v864 = vunpack.c.l.b16 %v811
        %v865 = vunpack.c.l.b16 %v812
        %v866 = vunpack.c.l.b16 %v813
        %v867 = vunpack.c.l.b16 %v814
        %v868 = vunpack.c.l.b16 %v815
        %v869 = vpack.c.b16 %v854, %v853
        %v870 = vpack.c.b16 %v856, %v855
        %v871 = vpack.c.b16 %v858, %v857
        %v872 = vpack.c.b16 %v860, %v859
        %v873 = vpack.c.b16 %v862, %v861
        %v874 = vpack.c.b16 %v864, %v863
        %v875 = vpack.c.b16 %v866, %v865
        %v876 = vpack.c.b16 %v868, %v867
        %877 = vrot.lane.b32.xlu0 %v869, 120
        %v878 = vpop.permute.xlu0 %877
        %879 = vrot.lane.b32.xlu0 %v870, 120
        %v880 = vpop.permute.xlu0 %879
        %881 = vrot.lane.b32.xlu0 %v871, 120
        %v882 = vpop.permute.xlu0 %881
        %883 = vrot.lane.b32.xlu0 %v872, 120
        %v884 = vpop.permute.xlu0 %883
        %885 = vrot.lane.b32.xlu0 %v873, 120
        %v886 = vpop.permute.xlu0 %885
        %887 = vrot.lane.b32.xlu0 %v874, 120
        %v888 = vpop.permute.xlu0 %887
        %889 = vrot.lane.b32.xlu0 %v875, 120
        %v890 = vpop.permute.xlu0 %889
        %891 = vrot.lane.b32.xlu0 %v876, 120
        %v892 = vpop.permute.xlu0 %891
        %v894 = vsel %vm611, %v836, 0
        %v897 = vsel %vm611, %v878, 0
        %v900 = vsel %vm611, %v880, 0
        %v903 = vsel %vm611, %v882, 0
        %v906 = vsel %vm611, %v884, 0
        %v909 = vsel %vm611, %v886, 0
        %v912 = vsel %vm611, %v888, 0
        %v915 = vsel %vm611, %v890, 0
        %v918 = vsel %vm611, %v892, 0
        %920 = vmatprep.subr.bf16.mxu0 0
        %921 = vmatpush1.bf16.xpose.msra.mxu0 %v918
        %922 = vmatprep.subr.bf16.mxu0 0
        %923 = vmatpush1.bf16.xpose.msra.mxu0 %v915
        %924 = vmatprep.subr.bf16.mxu0 0
        %925 = vmatpush1.bf16.xpose.msra.mxu0 %v912
        %926 = vmatprep.subr.bf16.mxu0 0
        %927 = vmatpush1.bf16.xpose.msra.mxu0 %v909
        %928 = vmatprep.subr.bf16.mxu0 0
        %929 = vmatpush1.bf16.xpose.msra.mxu0 %v906
        %930 = vmatprep.subr.bf16.mxu0 0
        %931 = vmatpush1.bf16.xpose.msra.mxu0 %v903
        %932 = vmatprep.subr.bf16.mxu0 0
        %933 = vmatpush1.bf16.xpose.msra.mxu0 %v900
        %934 = vmatprep.subr.bf16.mxu0 0
        %935 = vmatpush1.bf16.xpose.msra.mxu0 %v897
        %936 = vmatprep.subr.bf16.mxu0 0
        %937 = vmatpush2.bf16.xpose.msra.mxu0 0
        %938 = vmatprep.subr.bf16.mxu0 0
        %939 = vmatpush2.bf16.xpose.msra.mxu0 0
        %940 = vmatprep.subr.bf16.mxu0 0
        %941 = vmatpush2.bf16.xpose.msra.mxu0 0
        %942 = vmatprep.subr.bf16.mxu0 0
        %943 = vmatpush2.bf16.xpose.msra.mxu0 0
        %944 = vmatprep.subr.bf16.mxu0 0
        %945 = vmatpush2.bf16.xpose.msra.mxu0 0
        %946 = vmatprep.subr.bf16.mxu0 0
        %947 = vmatpush2.bf16.xpose.msra.mxu0 0
        %948 = vmatprep.subr.bf16.mxu0 0
        %949 = vmatpush2.bf16.xpose.msra.mxu0 0
        %950 = vmatprep.subr.bf16.mxu0 0
        %951 = vmatpush2.bf16.xpose.msra.mxu0 0
        %952 = vmatprep.mubr.bf16.mxu0 0
        %953 = vmatmul.mubr.bf16.gmra.mxu0 %v894
        %v954 = vpop.f32.mrf.mxu0
        %v955 = vadd.f32 %v569, %v954
        %v956 = vpop.f32.mrf.mxu0
        %v957 = vpop.f32.mrf.mxu0
        %v958 = vpop.f32.mrf.mxu0
        %959 = vdwg.mxu0
        %s960 = scalar_lea.vmem [#allocation2], 8
        %v961 = vld [vmem:[%s960] sm:$0xff]
        %962 = vmax.xlane.f32.xlu0 %v955
        %v963 = vpop.xlane.xlu0 %962
        %v964 = vmax.f32 %v961, %v963
        %v965 = vsub.f32 %v961, %v964
        %v966 = vmul.f32 %v965, 1.442695
        %v967 = vpow.pop %v966
        %969 = vset.pattern.permute.xlu0 0
        %970 = vperm.xlu0 %969, %v964
        %v971 = vpop.permute.xlu0 %970
        %v973 = vsub.f32 %v955, %v971
        %v974 = vmul.f32 %v973, 1.442695
        %v975 = vpow.pop %v974
        %s976 = scalar_lea.vmem [#allocation3], 8
        %v977 = vld [vmem:[%s976] sm:$0xff]
        %v978 = vmul.f32 %v967, %v977
        %979 = vadd.xlane.f32.xlu0 %v975
        %v980 = vpop.xlane.xlu0 %979
        %v981 = vadd.f32 %v978, %v980
        %982 = vst [vmem:[%s976] sm:$0xff] %v981
        %983 = vst [vmem:[%s960] sm:$0xff] %v964
        %v984 = vpack.c.bf16 %v975, %v975
        %v1001 = vunpack.c.l.b16 %v816
        %v1002 = vunpack.c.l.b16 %v817
        %v1003 = vunpack.c.l.b16 %v818
        %v1004 = vunpack.c.l.b16 %v819
        %v1005 = vunpack.c.l.b16 %v820
        %v1006 = vunpack.c.l.b16 %v821
        %v1007 = vunpack.c.l.b16 %v822
        %v1008 = vunpack.c.l.b16 %v823
        %v1009 = vunpack.c.l.b16 %v824
        %v1010 = vunpack.c.l.b16 %v825
        %v1011 = vunpack.c.l.b16 %v826
        %v1012 = vunpack.c.l.b16 %v827
        %v1013 = vunpack.c.l.b16 %v828
        %v1014 = vunpack.c.l.b16 %v829
        %v1015 = vunpack.c.l.b16 %v830
        %v1016 = vunpack.c.l.b16 %v831
        %v1017 = vpack.c.b16 %v1002, %v1001
        %v1018 = vpack.c.b16 %v1004, %v1003
        %v1019 = vpack.c.b16 %v1006, %v1005
        %v1020 = vpack.c.b16 %v1008, %v1007
        %v1021 = vpack.c.b16 %v1010, %v1009
        %v1022 = vpack.c.b16 %v1012, %v1011
        %v1023 = vpack.c.b16 %v1014, %v1013
        %v1024 = vpack.c.b16 %v1016, %v1015
        %1025 = vrot.lane.b32.xlu0 %v1017, 120
        %v1026 = vpop.permute.xlu0 %1025
        %1027 = vrot.lane.b32.xlu0 %v1018, 120
        %v1028 = vpop.permute.xlu0 %1027
        %1029 = vrot.lane.b32.xlu0 %v1019, 120
        %v1030 = vpop.permute.xlu0 %1029
        %1031 = vrot.lane.b32.xlu0 %v1020, 120
        %v1032 = vpop.permute.xlu0 %1031
        %1033 = vrot.lane.b32.xlu0 %v1021, 120
        %v1034 = vpop.permute.xlu0 %1033
        %1035 = vrot.lane.b32.xlu0 %v1022, 120
        %v1036 = vpop.permute.xlu0 %1035
        %1037 = vrot.lane.b32.xlu0 %v1023, 120
        %v1038 = vpop.permute.xlu0 %1037
        %1039 = vrot.lane.b32.xlu0 %v1024, 120
        %v1040 = vpop.permute.xlu0 %1039
        %1049 = vmatprep.subr.bf16.mxu0 0
        %1050 = vmatpush1.bf16.msra.mxu0 %v1040
        %1051 = vmatprep.subr.bf16.mxu0 0
        %1052 = vmatpush1.bf16.msra.mxu0 %v1038
        %1053 = vmatprep.subr.bf16.mxu0 0
        %1054 = vmatpush1.bf16.msra.mxu0 %v1036
        %1055 = vmatprep.subr.bf16.mxu0 0
        %1056 = vmatpush1.bf16.msra.mxu0 %v1034
        %1057 = vmatprep.subr.bf16.mxu0 0
        %1058 = vmatpush1.bf16.msra.mxu0 %v1032
        %1059 = vmatprep.subr.bf16.mxu0 0
        %1060 = vmatpush1.bf16.msra.mxu0 %v1030
        %1061 = vmatprep.subr.bf16.mxu0 0
        %1062 = vmatpush1.bf16.msra.mxu0 %v1028
        %1063 = vmatprep.subr.bf16.mxu0 0
        %1064 = vmatpush1.bf16.msra.mxu0 %v1026
        %1065 = vmatprep.subr.bf16.mxu0 0
        %1066 = vmatpush2.bf16.msra.mxu0 0
        %1067 = vmatprep.subr.bf16.mxu0 0
        %1068 = vmatpush2.bf16.msra.mxu0 0
        %1069 = vmatprep.subr.bf16.mxu0 0
        %1070 = vmatpush2.bf16.msra.mxu0 0
        %1071 = vmatprep.subr.bf16.mxu0 0
        %1072 = vmatpush2.bf16.msra.mxu0 0
        %1073 = vmatprep.subr.bf16.mxu0 0
        %1074 = vmatpush2.bf16.msra.mxu0 0
        %1075 = vmatprep.subr.bf16.mxu0 0
        %1076 = vmatpush2.bf16.msra.mxu0 0
        %1077 = vmatprep.subr.bf16.mxu0 0
        %1078 = vmatpush2.bf16.msra.mxu0 0
        %1079 = vmatprep.subr.bf16.mxu0 0
        %1080 = vmatpush2.bf16.msra.mxu0 0
        %1081 = vmatprep.mubr.bf16.mxu0 0
        %1082 = vmatmul.mubr.bf16.gmra.mxu0 %v984
        %v1083 = vpop.f32.mrf.mxu0
        %v1084 = vadd.f32 0.0, %v1083
        %v1085 = vpop.f32.mrf.mxu0
        %v1086 = vpop.f32.mrf.mxu0
        %v1087 = vpop.f32.mrf.mxu0
        %1088 = vdwg.mxu0
        %v1089 = vld [vmem:[#allocation4] sm:$0xff]
        %1091 = vset.pattern.permute.xlu0 0
        %1092 = vperm.xlu0 %1091, %v967
        %v1093 = vpop.permute.xlu0 %1092
        %v1095 = vmul.f32 %v1093, %v1089
        %1097 = vrot.lane.b32.xlu0 %v1084, 8
        %v1098 = vpop.permute.xlu0 %1097
        %v1100 = vadd.f32 %v1095, %v1098
        %vm1101 = vcmask 130112
        %1102 = vst.msk [vmem:[#allocation4] sm:$0xff] %vm1101, %v1100
        %v1103 = vld [vmem:[%s501] sm:$0xf]
        %v1104 = vld [vmem:[%s446] sm:$0xf]
        %v1105 = vld [vmem:[%s446 + $0x4] sm:$0xf]
        %v1106 = vld [vmem:[%s446 + $0x8] sm:$0xf]
        %v1107 = vld [vmem:[%s446 + $0xc] sm:$0xf]
        %v1108 = vld [vmem:[%s446 + $0x10] sm:$0xf]
        %v1109 = vld [vmem:[%s446 + $0x14] sm:$0xf]
        %v1110 = vld [vmem:[%s446 + $0x18] sm:$0xf]
        %v1111 = vld [vmem:[%s446 + $0x1c] sm:$0xf]
        %v1112 = vld [vmem:[%s446 + $0x20] sm:$0xf]
        %v1113 = vld [vmem:[%s446 + $0x24] sm:$0xf]
        %v1114 = vld [vmem:[%s446 + $0x28] sm:$0xf]
        %v1115 = vld [vmem:[%s446 + $0x2c] sm:$0xf]
        %v1116 = vld [vmem:[%s446 + $0x30] sm:$0xf]
        %v1117 = vld [vmem:[%s446 + $0x34] sm:$0xf]
        %v1118 = vld [vmem:[%s446 + $0x38] sm:$0xf]
        %v1119 = vld [vmem:[%s446 + $0x3c] sm:$0xf]
        %v1120 = vld [vmem:[%s453] sm:$0xf]
        %v1121 = vld [vmem:[%s453 + $0x4] sm:$0xf]
        %v1122 = vld [vmem:[%s453 + $0x8] sm:$0xf]
        %v1123 = vld [vmem:[%s453 + $0xc] sm:$0xf]
        %v1124 = vld [vmem:[%s453 + $0x10] sm:$0xf]
        %v1125 = vld [vmem:[%s453 + $0x14] sm:$0xf]
        %v1126 = vld [vmem:[%s453 + $0x18] sm:$0xf]
        %v1127 = vld [vmem:[%s453 + $0x1c] sm:$0xf]
        %v1128 = vld [vmem:[%s453 + $0x20] sm:$0xf]
        %v1129 = vld [vmem:[%s453 + $0x24] sm:$0xf]
        %v1130 = vld [vmem:[%s453 + $0x28] sm:$0xf]
        %v1131 = vld [vmem:[%s453 + $0x2c] sm:$0xf]
        %v1132 = vld [vmem:[%s453 + $0x30] sm:$0xf]
        %v1133 = vld [vmem:[%s453 + $0x34] sm:$0xf]
        %v1134 = vld [vmem:[%s453 + $0x38] sm:$0xf]
        %v1135 = vld [vmem:[%s453 + $0x3c] sm:$0xf]
        %v1137 = vunpack.c.l.b16 %v1103
        %v1138 = vpack.c.b16 %v1137, %v1137
        %1139 = vrot.lane.b32.xlu0 %v1138, 112
        %v1140 = vpop.permute.xlu0 %1139
        %v1157 = vunpack.c.l.b16 %v1104
        %v1158 = vunpack.c.l.b16 %v1105
        %v1159 = vunpack.c.l.b16 %v1106
        %v1160 = vunpack.c.l.b16 %v1107
        %v1161 = vunpack.c.l.b16 %v1108
        %v1162 = vunpack.c.l.b16 %v1109
        %v1163 = vunpack.c.l.b16 %v1110
        %v1164 = vunpack.c.l.b16 %v1111
        %v1165 = vunpack.c.l.b16 %v1112
        %v1166 = vunpack.c.l.b16 %v1113
        %v1167 = vunpack.c.l.b16 %v1114
        %v1168 = vunpack.c.l.b16 %v1115
        %v1169 = vunpack.c.l.b16 %v1116
        %v1170 = vunpack.c.l.b16 %v1117
        %v1171 = vunpack.c.l.b16 %v1118
        %v1172 = vunpack.c.l.b16 %v1119
        %v1173 = vpack.c.b16 %v1158, %v1157
        %v1174 = vpack.c.b16 %v1160, %v1159
        %v1175 = vpack.c.b16 %v1162, %v1161
        %v1176 = vpack.c.b16 %v1164, %v1163
        %v1177 = vpack.c.b16 %v1166, %v1165
        %v1178 = vpack.c.b16 %v1168, %v1167
        %v1179 = vpack.c.b16 %v1170, %v1169
        %v1180 = vpack.c.b16 %v1172, %v1171
        %1181 = vrot.lane.b32.xlu0 %v1173, 112
        %v1182 = vpop.permute.xlu0 %1181
        %1183 = vrot.lane.b32.xlu0 %v1174, 112
        %v1184 = vpop.permute.xlu0 %1183
        %1185 = vrot.lane.b32.xlu0 %v1175, 112
        %v1186 = vpop.permute.xlu0 %1185
        %1187 = vrot.lane.b32.xlu0 %v1176, 112
        %v1188 = vpop.permute.xlu0 %1187
        %1189 = vrot.lane.b32.xlu0 %v1177, 112
        %v1190 = vpop.permute.xlu0 %1189
        %1191 = vrot.lane.b32.xlu0 %v1178, 112
        %v1192 = vpop.permute.xlu0 %1191
        %1193 = vrot.lane.b32.xlu0 %v1179, 112
        %v1194 = vpop.permute.xlu0 %1193
        %1195 = vrot.lane.b32.xlu0 %v1180, 112
        %v1196 = vpop.permute.xlu0 %1195
        %v1198 = vsel %vm611, %v1140, 0
        %v1201 = vsel %vm611, %v1182, 0
        %v1204 = vsel %vm611, %v1184, 0
        %v1207 = vsel %vm611, %v1186, 0
        %v1210 = vsel %vm611, %v1188, 0
        %v1213 = vsel %vm611, %v1190, 0
        %v1216 = vsel %vm611, %v1192, 0
        %v1219 = vsel %vm611, %v1194, 0
        %v1222 = vsel %vm611, %v1196, 0
        %1224 = vmatprep.subr.bf16.mxu0 0
        %1225 = vmatpush1.bf16.xpose.msra.mxu0 %v1222
        %1226 = vmatprep.subr.bf16.mxu0 0
        %1227 = vmatpush1.bf16.xpose.msra.mxu0 %v1219
        %1228 = vmatprep.subr.bf16.mxu0 0
        %1229 = vmatpush1.bf16.xpose.msra.mxu0 %v1216
        %1230 = vmatprep.subr.bf16.mxu0 0
        %1231 = vmatpush1.bf16.xpose.msra.mxu0 %v1213
        %1232 = vmatprep.subr.bf16.mxu0 0
        %1233 = vmatpush1.bf16.xpose.msra.mxu0 %v1210
        %1234 = vmatprep.subr.bf16.mxu0 0
        %1235 = vmatpush1.bf16.xpose.msra.mxu0 %v1207
        %1236 = vmatprep.subr.bf16.mxu0 0
        %1237 = vmatpush1.bf16.xpose.msra.mxu0 %v1204
        %1238 = vmatprep.subr.bf16.mxu0 0
        %1239 = vmatpush1.bf16.xpose.msra.mxu0 %v1201
        %1240 = vmatprep.subr.bf16.mxu0 0
        %1241 = vmatpush2.bf16.xpose.msra.mxu0 0
        %1242 = vmatprep.subr.bf16.mxu0 0
        %1243 = vmatpush2.bf16.xpose.msra.mxu0 0
        %1244 = vmatprep.subr.bf16.mxu0 0
        %1245 = vmatpush2.bf16.xpose.msra.mxu0 0
        %1246 = vmatprep.subr.bf16.mxu0 0
        %1247 = vmatpush2.bf16.xpose.msra.mxu0 0
        %1248 = vmatprep.subr.bf16.mxu0 0
        %1249 = vmatpush2.bf16.xpose.msra.mxu0 0
        %1250 = vmatprep.subr.bf16.mxu0 0
        %1251 = vmatpush2.bf16.xpose.msra.mxu0 0
        %1252 = vmatprep.subr.bf16.mxu0 0
        %1253 = vmatpush2.bf16.xpose.msra.mxu0 0
        %1254 = vmatprep.subr.bf16.mxu0 0
        %1255 = vmatpush2.bf16.xpose.msra.mxu0 0
        %1256 = vmatprep.mubr.bf16.mxu0 0
        %1257 = vmatmul.mubr.bf16.gmra.mxu0 %v1198
        %v1258 = vpop.f32.mrf.mxu0
        %v1259 = vadd.f32 %v569, %v1258
        %v1260 = vpop.f32.mrf.mxu0
        %v1261 = vpop.f32.mrf.mxu0
        %v1262 = vpop.f32.mrf.mxu0
        %1263 = vdwg.mxu0
        %s1264 = scalar_lea.vmem [#allocation2], 16
        %v1265 = vld [vmem:[%s1264] sm:$0xff]
        %1266 = vmax.xlane.f32.xlu0 %v1259
        %v1267 = vpop.xlane.xlu0 %1266
        %v1268 = vmax.f32 %v1265, %v1267
        %v1269 = vsub.f32 %v1265, %v1268
        %v1270 = vmul.f32 %v1269, 1.442695
        %v1271 = vpow.pop %v1270
        %1273 = vset.pattern.permute.xlu0 0
        %1274 = vperm.xlu0 %1273, %v1268
        %v1275 = vpop.permute.xlu0 %1274
        %v1277 = vsub.f32 %v1259, %v1275
        %v1278 = vmul.f32 %v1277, 1.442695
        %v1279 = vpow.pop %v1278
        %s1280 = scalar_lea.vmem [#allocation3], 16
        %v1281 = vld [vmem:[%s1280] sm:$0xff]
        %v1282 = vmul.f32 %v1271, %v1281
        %1283 = vadd.xlane.f32.xlu0 %v1279
        %v1284 = vpop.xlane.xlu0 %1283
        %v1285 = vadd.f32 %v1282, %v1284
        %1286 = vst [vmem:[%s1280] sm:$0xff] %v1285
        %1287 = vst [vmem:[%s1264] sm:$0xff] %v1268
        %v1288 = vpack.c.bf16 %v1279, %v1279
        %v1305 = vunpack.c.l.b16 %v1120
        %v1306 = vunpack.c.l.b16 %v1121
        %v1307 = vunpack.c.l.b16 %v1122
        %v1308 = vunpack.c.l.b16 %v1123
        %v1309 = vunpack.c.l.b16 %v1124
        %v1310 = vunpack.c.l.b16 %v1125
        %v1311 = vunpack.c.l.b16 %v1126
        %v1312 = vunpack.c.l.b16 %v1127
        %v1313 = vunpack.c.l.b16 %v1128
        %v1314 = vunpack.c.l.b16 %v1129
        %v1315 = vunpack.c.l.b16 %v1130
        %v1316 = vunpack.c.l.b16 %v1131
        %v1317 = vunpack.c.l.b16 %v1132
        %v1318 = vunpack.c.l.b16 %v1133
        %v1319 = vunpack.c.l.b16 %v1134
        %v1320 = vunpack.c.l.b16 %v1135
        %v1321 = vpack.c.b16 %v1306, %v1305
        %v1322 = vpack.c.b16 %v1308, %v1307
        %v1323 = vpack.c.b16 %v1310, %v1309
        %v1324 = vpack.c.b16 %v1312, %v1311
        %v1325 = vpack.c.b16 %v1314, %v1313
        %v1326 = vpack.c.b16 %v1316, %v1315
        %v1327 = vpack.c.b16 %v1318, %v1317
        %v1328 = vpack.c.b16 %v1320, %v1319
        %1329 = vrot.lane.b32.xlu0 %v1321, 112
        %v1330 = vpop.permute.xlu0 %1329
        %1331 = vrot.lane.b32.xlu0 %v1322, 112
        %v1332 = vpop.permute.xlu0 %1331
        %1333 = vrot.lane.b32.xlu0 %v1323, 112
        %v1334 = vpop.permute.xlu0 %1333
        %1335 = vrot.lane.b32.xlu0 %v1324, 112
        %v1336 = vpop.permute.xlu0 %1335
        %1337 = vrot.lane.b32.xlu0 %v1325, 112
        %v1338 = vpop.permute.xlu0 %1337
        %1339 = vrot.lane.b32.xlu0 %v1326, 112
        %v1340 = vpop.permute.xlu0 %1339
        %1341 = vrot.lane.b32.xlu0 %v1327, 112
        %v1342 = vpop.permute.xlu0 %1341
        %1343 = vrot.lane.b32.xlu0 %v1328, 112
        %v1344 = vpop.permute.xlu0 %1343
        %1353 = vmatprep.subr.bf16.mxu0 0
        %1354 = vmatpush1.bf16.msra.mxu0 %v1344
        %1355 = vmatprep.subr.bf16.mxu0 0
        %1356 = vmatpush1.bf16.msra.mxu0 %v1342
        %1357 = vmatprep.subr.bf16.mxu0 0
        %1358 = vmatpush1.bf16.msra.mxu0 %v1340
        %1359 = vmatprep.subr.bf16.mxu0 0
        %1360 = vmatpush1.bf16.msra.mxu0 %v1338
        %1361 = vmatprep.subr.bf16.mxu0 0
        %1362 = vmatpush1.bf16.msra.mxu0 %v1336
        %1363 = vmatprep.subr.bf16.mxu0 0
        %1364 = vmatpush1.bf16.msra.mxu0 %v1334
        %1365 = vmatprep.subr.bf16.mxu0 0
        %1366 = vmatpush1.bf16.msra.mxu0 %v1332
        %1367 = vmatprep.subr.bf16.mxu0 0
        %1368 = vmatpush1.bf16.msra.mxu0 %v1330
        %1369 = vmatprep.subr.bf16.mxu0 0
        %1370 = vmatpush2.bf16.msra.mxu0 0
        %1371 = vmatprep.subr.bf16.mxu0 0
        %1372 = vmatpush2.bf16.msra.mxu0 0
        %1373 = vmatprep.subr.bf16.mxu0 0
        %1374 = vmatpush2.bf16.msra.mxu0 0
        %1375 = vmatprep.subr.bf16.mxu0 0
        %1376 = vmatpush2.bf16.msra.mxu0 0
        %1377 = vmatprep.subr.bf16.mxu0 0
        %1378 = vmatpush2.bf16.msra.mxu0 0
        %1379 = vmatprep.subr.bf16.mxu0 0
        %1380 = vmatpush2.bf16.msra.mxu0 0
        %1381 = vmatprep.subr.bf16.mxu0 0
        %1382 = vmatpush2.bf16.msra.mxu0 0
        %1383 = vmatprep.subr.bf16.mxu0 0
        %1384 = vmatpush2.bf16.msra.mxu0 0
        %1385 = vmatprep.mubr.bf16.mxu0 0
        %1386 = vmatmul.mubr.bf16.gmra.mxu0 %v1288
        %v1387 = vpop.f32.mrf.mxu0
        %v1388 = vadd.f32 0.0, %v1387
        %v1389 = vpop.f32.mrf.mxu0
        %v1390 = vpop.f32.mrf.mxu0
        %v1391 = vpop.f32.mrf.mxu0
        %1392 = vdwg.mxu0
        %v1393 = vld [vmem:[#allocation4] sm:$0xff]
        %1395 = vset.pattern.permute.xlu0 0
        %1396 = vperm.xlu0 %1395, %v1271
        %v1397 = vpop.permute.xlu0 %1396
        %v1399 = vmul.f32 %v1397, %v1393
        %1401 = vrot.lane.b32.xlu0 %v1388, 16
        %v1402 = vpop.permute.xlu0 %1401
        %v1404 = vadd.f32 %v1399, %v1402
        %vm1405 = vcmask 195712
        %1406 = vst.msk [vmem:[#allocation4] sm:$0xff] %vm1405, %v1404
        %v1407 = vld [vmem:[%s501] sm:$0xf]
        %v1408 = vld [vmem:[%s446] sm:$0xf]
        %v1409 = vld [vmem:[%s446 + $0x4] sm:$0xf]
        %v1410 = vld [vmem:[%s446 + $0x8] sm:$0xf]
        %v1411 = vld [vmem:[%s446 + $0xc] sm:$0xf]
        %v1412 = vld [vmem:[%s446 + $0x10] sm:$0xf]
        %v1413 = vld [vmem:[%s446 + $0x14] sm:$0xf]
        %v1414 = vld [vmem:[%s446 + $0x18] sm:$0xf]
        %v1415 = vld [vmem:[%s446 + $0x1c] sm:$0xf]
        %v1416 = vld [vmem:[%s446 + $0x20] sm:$0xf]
        %v1417 = vld [vmem:[%s446 + $0x24] sm:$0xf]
        %v1418 = vld [vmem:[%s446 + $0x28] sm:$0xf]
        %v1419 = vld [vmem:[%s446 + $0x2c] sm:$0xf]
        %v1420 = vld [vmem:[%s446 + $0x30] sm:$0xf]
        %v1421 = vld [vmem:[%s446 + $0x34] sm:$0xf]
        %v1422 = vld [vmem:[%s446 + $0x38] sm:$0xf]
        %v1423 = vld [vmem:[%s446 + $0x3c] sm:$0xf]
        %v1424 = vld [vmem:[%s453] sm:$0xf]
        %v1425 = vld [vmem:[%s453 + $0x4] sm:$0xf]
        %v1426 = vld [vmem:[%s453 + $0x8] sm:$0xf]
        %v1427 = vld [vmem:[%s453 + $0xc] sm:$0xf]
        %v1428 = vld [vmem:[%s453 + $0x10] sm:$0xf]
        %v1429 = vld [vmem:[%s453 + $0x14] sm:$0xf]
        %v1430 = vld [vmem:[%s453 + $0x18] sm:$0xf]
        %v1431 = vld [vmem:[%s453 + $0x1c] sm:$0xf]
        %v1432 = vld [vmem:[%s453 + $0x20] sm:$0xf]
        %v1433 = vld [vmem:[%s453 + $0x24] sm:$0xf]
        %v1434 = vld [vmem:[%s453 + $0x28] sm:$0xf]
        %v1435 = vld [vmem:[%s453 + $0x2c] sm:$0xf]
        %v1436 = vld [vmem:[%s453 + $0x30] sm:$0xf]
        %v1437 = vld [vmem:[%s453 + $0x34] sm:$0xf]
        %v1438 = vld [vmem:[%s453 + $0x38] sm:$0xf]
        %v1439 = vld [vmem:[%s453 + $0x3c] sm:$0xf]
        %v1441 = vunpack.c.l.b16 %v1407
        %v1442 = vpack.c.b16 %v1441, %v1441
        %1443 = vrot.lane.b32.xlu0 %v1442, 104
        %v1444 = vpop.permute.xlu0 %1443
        %v1461 = vunpack.c.l.b16 %v1408
        %v1462 = vunpack.c.l.b16 %v1409
        %v1463 = vunpack.c.l.b16 %v1410
        %v1464 = vunpack.c.l.b16 %v1411
        %v1465 = vunpack.c.l.b16 %v1412
        %v1466 = vunpack.c.l.b16 %v1413
        %v1467 = vunpack.c.l.b16 %v1414
        %v1468 = vunpack.c.l.b16 %v1415
        %v1469 = vunpack.c.l.b16 %v1416
        %v1470 = vunpack.c.l.b16 %v1417
        %v1471 = vunpack.c.l.b16 %v1418
        %v1472 = vunpack.c.l.b16 %v1419
        %v1473 = vunpack.c.l.b16 %v1420
        %v1474 = vunpack.c.l.b16 %v1421
        %v1475 = vunpack.c.l.b16 %v1422
        %v1476 = vunpack.c.l.b16 %v1423
        %v1477 = vpack.c.b16 %v1462, %v1461
        %v1478 = vpack.c.b16 %v1464, %v1463
        %v1479 = vpack.c.b16 %v1466, %v1465
        %v1480 = vpack.c.b16 %v1468, %v1467
        %v1481 = vpack.c.b16 %v1470, %v1469
        %v1482 = vpack.c.b16 %v1472, %v1471
        %v1483 = vpack.c.b16 %v1474, %v1473
        %v1484 = vpack.c.b16 %v1476, %v1475
        %1485 = vrot.lane.b32.xlu0 %v1477, 104
        %v1486 = vpop.permute.xlu0 %1485
        %1487 = vrot.lane.b32.xlu0 %v1478, 104
        %v1488 = vpop.permute.xlu0 %1487
        %1489 = vrot.lane.b32.xlu0 %v1479, 104
        %v1490 = vpop.permute.xlu0 %1489
        %1491 = vrot.lane.b32.xlu0 %v1480, 104
        %v1492 = vpop.permute.xlu0 %1491
        %1493 = vrot.lane.b32.xlu0 %v1481, 104
        %v1494 = vpop.permute.xlu0 %1493
        %1495 = vrot.lane.b32.xlu0 %v1482, 104
        %v1496 = vpop.permute.xlu0 %1495
        %1497 = vrot.lane.b32.xlu0 %v1483, 104
        %v1498 = vpop.permute.xlu0 %1497
        %1499 = vrot.lane.b32.xlu0 %v1484, 104
        %v1500 = vpop.permute.xlu0 %1499
        %v1502 = vsel %vm611, %v1444, 0
        %v1505 = vsel %vm611, %v1486, 0
        %v1508 = vsel %vm611, %v1488, 0
        %v1511 = vsel %vm611, %v1490, 0
        %v1514 = vsel %vm611, %v1492, 0
        %v1517 = vsel %vm611, %v1494, 0
        %v1520 = vsel %vm611, %v1496, 0
        %v1523 = vsel %vm611, %v1498, 0
        %v1526 = vsel %vm611, %v1500, 0
        %1528 = vmatprep.subr.bf16.mxu0 0
        %1529 = vmatpush1.bf16.xpose.msra.mxu0 %v1526
        %1530 = vmatprep.subr.bf16.mxu0 0
        %1531 = vmatpush1.bf16.xpose.msra.mxu0 %v1523
        %1532 = vmatprep.subr.bf16.mxu0 0
        %1533 = vmatpush1.bf16.xpose.msra.mxu0 %v1520
        %1534 = vmatprep.subr.bf16.mxu0 0
        %1535 = vmatpush1.bf16.xpose.msra.mxu0 %v1517
        %1536 = vmatprep.subr.bf16.mxu0 0
        %1537 = vmatpush1.bf16.xpose.msra.mxu0 %v1514
        %1538 = vmatprep.subr.bf16.mxu0 0
        %1539 = vmatpush1.bf16.xpose.msra.mxu0 %v1511
        %1540 = vmatprep.subr.bf16.mxu0 0
        %1541 = vmatpush1.bf16.xpose.msra.mxu0 %v1508
        %1542 = vmatprep.subr.bf16.mxu0 0
        %1543 = vmatpush1.bf16.xpose.msra.mxu0 %v1505
        %1544 = vmatprep.subr.bf16.mxu0 0
        %1545 = vmatpush2.bf16.xpose.msra.mxu0 0
        %1546 = vmatprep.subr.bf16.mxu0 0
        %1547 = vmatpush2.bf16.xpose.msra.mxu0 0
        %1548 = vmatprep.subr.bf16.mxu0 0
        %1549 = vmatpush2.bf16.xpose.msra.mxu0 0
        %1550 = vmatprep.subr.bf16.mxu0 0
        %1551 = vmatpush2.bf16.xpose.msra.mxu0 0
        %1552 = vmatprep.subr.bf16.mxu0 0
        %1553 = vmatpush2.bf16.xpose.msra.mxu0 0
        %1554 = vmatprep.subr.bf16.mxu0 0
        %1555 = vmatpush2.bf16.xpose.msra.mxu0 0
        %1556 = vmatprep.subr.bf16.mxu0 0
        %1557 = vmatpush2.bf16.xpose.msra.mxu0 0
        %1558 = vmatprep.subr.bf16.mxu0 0
        %1559 = vmatpush2.bf16.xpose.msra.mxu0 0
        %1560 = vmatprep.mubr.bf16.mxu0 0
        %1561 = vmatmul.mubr.bf16.gmra.mxu0 %v1502
        %v1562 = vpop.f32.mrf.mxu0
        %v1563 = vadd.f32 %v569, %v1562
        %v1564 = vpop.f32.mrf.mxu0
        %v1565 = vpop.f32.mrf.mxu0
        %v1566 = vpop.f32.mrf.mxu0
        %1567 = vdwg.mxu0
        %s1568 = scalar_lea.vmem [#allocation2], 24
        %v1569 = vld [vmem:[%s1568] sm:$0xff]
        %1570 = vmax.xlane.f32.xlu0 %v1563
        %v1571 = vpop.xlane.xlu0 %1570
        %v1572 = vmax.f32 %v1569, %v1571
        %v1573 = vsub.f32 %v1569, %v1572
        %v1574 = vmul.f32 %v1573, 1.442695
        %v1575 = vpow.pop %v1574
        %1577 = vset.pattern.permute.xlu0 0
        %1578 = vperm.xlu0 %1577, %v1572
        %v1579 = vpop.permute.xlu0 %1578
        %v1581 = vsub.f32 %v1563, %v1579
        %v1582 = vmul.f32 %v1581, 1.442695
        %v1583 = vpow.pop %v1582
        %s1584 = scalar_lea.vmem [#allocation3], 24
        %v1585 = vld [vmem:[%s1584] sm:$0xff]
        %v1586 = vmul.f32 %v1575, %v1585
        %1587 = vadd.xlane.f32.xlu0 %v1583
        %v1588 = vpop.xlane.xlu0 %1587
        %v1589 = vadd.f32 %v1586, %v1588
        %1590 = vst [vmem:[%s1584] sm:$0xff] %v1589
        %1591 = vst [vmem:[%s1568] sm:$0xff] %v1572
        %v1592 = vpack.c.bf16 %v1583, %v1583
        %v1609 = vunpack.c.l.b16 %v1424
        %v1610 = vunpack.c.l.b16 %v1425
        %v1611 = vunpack.c.l.b16 %v1426
        %v1612 = vunpack.c.l.b16 %v1427
        %v1613 = vunpack.c.l.b16 %v1428
        %v1614 = vunpack.c.l.b16 %v1429
        %v1615 = vunpack.c.l.b16 %v1430
        %v1616 = vunpack.c.l.b16 %v1431
        %v1617 = vunpack.c.l.b16 %v1432
        %v1618 = vunpack.c.l.b16 %v1433
        %v1619 = vunpack.c.l.b16 %v1434
        %v1620 = vunpack.c.l.b16 %v1435
        %v1621 = vunpack.c.l.b16 %v1436
        %v1622 = vunpack.c.l.b16 %v1437
        %v1623 = vunpack.c.l.b16 %v1438
        %v1624 = vunpack.c.l.b16 %v1439
        %v1625 = vpack.c.b16 %v1610, %v1609
        %v1626 = vpack.c.b16 %v1612, %v1611
        %v1627 = vpack.c.b16 %v1614, %v1613
        %v1628 = vpack.c.b16 %v1616, %v1615
        %v1629 = vpack.c.b16 %v1618, %v1617
        %v1630 = vpack.c.b16 %v1620, %v1619
        %v1631 = vpack.c.b16 %v1622, %v1621
        %v1632 = vpack.c.b16 %v1624, %v1623
        %1633 = vrot.lane.b32.xlu0 %v1625, 104
        %v1634 = vpop.permute.xlu0 %1633
        %1635 = vrot.lane.b32.xlu0 %v1626, 104
        %v1636 = vpop.permute.xlu0 %1635
        %1637 = vrot.lane.b32.xlu0 %v1627, 104
        %v1638 = vpop.permute.xlu0 %1637
        %1639 = vrot.lane.b32.xlu0 %v1628, 104
        %v1640 = vpop.permute.xlu0 %1639
        %1641 = vrot.lane.b32.xlu0 %v1629, 104
        %v1642 = vpop.permute.xlu0 %1641
        %1643 = vrot.lane.b32.xlu0 %v1630, 104
        %v1644 = vpop.permute.xlu0 %1643
        %1645 = vrot.lane.b32.xlu0 %v1631, 104
        %v1646 = vpop.permute.xlu0 %1645
        %1647 = vrot.lane.b32.xlu0 %v1632, 104
        %v1648 = vpop.permute.xlu0 %1647
        %1657 = vmatprep.subr.bf16.mxu0 0
        %1658 = vmatpush1.bf16.msra.mxu0 %v1648
        %1659 = vmatprep.subr.bf16.mxu0 0
        %1660 = vmatpush1.bf16.msra.mxu0 %v1646
        %1661 = vmatprep.subr.bf16.mxu0 0
        %1662 = vmatpush1.bf16.msra.mxu0 %v1644
        %1663 = vmatprep.subr.bf16.mxu0 0
        %1664 = vmatpush1.bf16.msra.mxu0 %v1642
        %1665 = vmatprep.subr.bf16.mxu0 0
        %1666 = vmatpush1.bf16.msra.mxu0 %v1640
        %1667 = vmatprep.subr.bf16.mxu0 0
        %1668 = vmatpush1.bf16.msra.mxu0 %v1638
        %1669 = vmatprep.subr.bf16.mxu0 0
        %1670 = vmatpush1.bf16.msra.mxu0 %v1636
        %1671 = vmatprep.subr.bf16.mxu0 0
        %1672 = vmatpush1.bf16.msra.mxu0 %v1634
        %1673 = vmatprep.subr.bf16.mxu0 0
        %1674 = vmatpush2.bf16.msra.mxu0 0
        %1675 = vmatprep.subr.bf16.mxu0 0
        %1676 = vmatpush2.bf16.msra.mxu0 0
        %1677 = vmatprep.subr.bf16.mxu0 0
        %1678 = vmatpush2.bf16.msra.mxu0 0
        %1679 = vmatprep.subr.bf16.mxu0 0
        %1680 = vmatpush2.bf16.msra.mxu0 0
        %1681 = vmatprep.subr.bf16.mxu0 0
        %1682 = vmatpush2.bf16.msra.mxu0 0
        %1683 = vmatprep.subr.bf16.mxu0 0
        %1684 = vmatpush2.bf16.msra.mxu0 0
        %1685 = vmatprep.subr.bf16.mxu0 0
        %1686 = vmatpush2.bf16.msra.mxu0 0
        %1687 = vmatprep.subr.bf16.mxu0 0
        %1688 = vmatpush2.bf16.msra.mxu0 0
        %1689 = vmatprep.mubr.bf16.mxu0 0
        %1690 = vmatmul.mubr.bf16.gmra.mxu0 %v1592
        %v1691 = vpop.f32.mrf.mxu0
        %v1692 = vadd.f32 0.0, %v1691
        %v1693 = vpop.f32.mrf.mxu0
        %v1694 = vpop.f32.mrf.mxu0
        %v1695 = vpop.f32.mrf.mxu0
        %1696 = vdwg.mxu0
        %v1697 = vld [vmem:[#allocation4] sm:$0xff]
        %1699 = vset.pattern.permute.xlu0 0
        %1700 = vperm.xlu0 %1699, %v1575
        %v1701 = vpop.permute.xlu0 %1700
        %v1703 = vmul.f32 %v1701, %v1697
        %1705 = vrot.lane.b32.xlu0 %v1692, 24
        %v1706 = vpop.permute.xlu0 %1705
        %v1708 = vadd.f32 %v1703, %v1706
        %vm1709 = vcmask 261312
        %1710 = vst.msk [vmem:[#allocation4] sm:$0xff] %vm1709, %v1708
        // Predicated region
        $region123: #{transformer_forward.48} parent=109 // pred_check
          %p1711 = pneg %p518
        $region124: #{transformer_forward.48} parent=109 // pred_check_branch
          %1713 = sbr.rel (%p1711) target = $region126
        $region125: #{transformer_forward.48} parent=109 // pred_region
          %vm1714 = vcmask 1043712
          %1715 = vst.msk [vmem:[%s516] sm:$0xf] %vm1714, 0
          %v1716 = vld [vmem:[#allocation3] sm:$0xff]
          %v1717 = vrcp.pop %v1716
          %v1718 = vld [vmem:[#allocation4] sm:$0xff]
          %1720 = vset.pattern.permute.xlu0 0
          %1721 = vperm.xlu0 %1720, %v1717
          %v1722 = vpop.permute.xlu0 %1721
          %v1724 = vmul.f32 %v1718, %v1722
          %v1725 = vpack.c.bf16 %v1724, %v1724
          %vm1726 = vcmask 60416
          %1727 = vst.msk [vmem:[%s516] sm:$0xf] %vm1726, %v1725
          %v1728 = vld [vmem:[%s976] sm:$0xff]
          %v1729 = vrcp.pop %v1728
          %v1730 = vld [vmem:[#allocation4] sm:$0xff]
          %1732 = vset.pattern.permute.xlu0 0
          %1733 = vperm.xlu0 %1732, %v1729
          %v1734 = vpop.permute.xlu0 %1733
          %v1736 = vmul.f32 %v1730, %v1734
          %v1737 = vpack.c.bf16 %v1736, %v1736
          %vm1738 = vcmask 126016
          %1739 = vst.msk [vmem:[%s516] sm:$0xf] %vm1738, %v1737
          %v1740 = vld [vmem:[%s1280] sm:$0xff]
          %v1741 = vrcp.pop %v1740
          %v1742 = vld [vmem:[#allocation4] sm:$0xff]
          %1744 = vset.pattern.permute.xlu0 0
          %1745 = vperm.xlu0 %1744, %v1741
          %v1746 = vpop.permute.xlu0 %1745
          %v1748 = vmul.f32 %v1742, %v1746
          %v1749 = vpack.c.bf16 %v1748, %v1748
          %vm1750 = vcmask 191616
          %1751 = vst.msk [vmem:[%s516] sm:$0xf] %vm1750, %v1749
          %v1752 = vld [vmem:[%s1584] sm:$0xff]
          %v1753 = vrcp.pop %v1752
          %v1754 = vld [vmem:[#allocation4] sm:$0xff]
          %1756 = vset.pattern.permute.xlu0 0
          %1757 = vperm.xlu0 %1756, %v1753
          %v1758 = vpop.permute.xlu0 %1757
          %v1760 = vmul.f32 %v1754, %v1758
          %v1761 = vpack.c.bf16 %v1760, %v1760
          %vm1762 = vcmask 257216
          %1763 = vst.msk [vmem:[%s516] sm:$0xf] %vm1762, %v1761
        $region126: #{transformer_forward.48} parent=109 // pred_fallthru
          _
        %p1764 = scmp.lt.s32.totalorder %s20, 1
        %s1765 = scalar_select %p1764, %s20, 1
        %p1766 = scmp.lt.s32.totalorder %s21, 0
        %s1767 = scalar_select %p1766, %s21, 0
        %s1768 = sadd.s32 %s1767, %s1765
        %s1769 = smul.addr %s1768, 4
        %s1770 = scalar_lea.vmem %s4, %s1769
        // Predicated region
        $region127: #{transformer_forward.48} parent=109 // pred_check
          %p1771 = pneg %p166
        $region128: #{transformer_forward.48} parent=109 // pred_check_branch
          %1773 = sbr.rel (%p1771) target = $region130
        $region129: #{transformer_forward.48} parent=109 // pred_region
          _
        $region130: #{transformer_forward.48} parent=109 // pred_fallthru
          _
      $region110: #{transformer_forward.48} parent=5 // pred_fallthru
        _
      %p1774 = scmp.le.s32.totalorder 2, %s10
      // Predicated region
      $region131: #{transformer_forward.48} parent=5 // pred_check
        %p1775 = pneg %p1774
      $region132: #{transformer_forward.48} parent=5 // pred_check_branch
        %1777 = sbr.rel (%p1775) target = $region134
      $region133: #{transformer_forward.48} parent=5 // pred_region
        %s1778 = ssub.s32 %s10, 2
        // Predicated region
        $region135: #{transformer_forward.48} parent=133 // pred_check
          %p1779 = pneg %p172
        $region136: #{transformer_forward.48} parent=133 // pred_check_branch
          %1781 = sbr.rel (%p1779) target = $region138
        $region137: #{transformer_forward.48} parent=133 // pred_region
          %p1782 = scmp.lt.s32.totalorder %s23, 1
          %s1783 = scalar_select %p1782, %s23, 1
          %p1784 = scmp.lt.s32.totalorder %s24, 0
          %s1785 = scalar_select %p1784, %s24, 0
          %s1786 = sadd.s32 %s1785, %s1783
          %s1787 = smul.addr %s1786, 4
          %s1788 = scalar_lea.vmem %s4, %s1787
        $region138: #{transformer_forward.48} parent=133 // pred_fallthru
          _
      $region134: #{transformer_forward.48} parent=5 // pred_fallthru
        _
    $region6: #{transformer_forward.48} parent=1 // loop_footer
      %s14 = sadd.s32 1, %s10
    $region7: #{transformer_forward.48} parent=1 // loop_footer_branch
      %9 = sbr.rel target = $region3
    $region8: #{transformer_forward.48} parent=1 // loop_exit
      _

</llo_original>
